<compile_context>
chip_gen: v6e
topology: v6e:2x2x1
jax: 0.10.0
libtpu: 0.0.40
codegen_flags: <defaults>
</compile_context>

<pallas_src>
import jax
import jax.numpy as jnp
from jax import lax
from jax.experimental import pallas as pl
from jax.experimental.pallas import tpu as pltpu


# ---------------------------------------------------------------------------
# Fused kernel: conv(3x3, 1->3) + maxpool(3,3)/ReLU + Linear(192,10) + log_softmax
# ---------------------------------------------------------------------------
def fused_convnet_kernel(w_ref, b_ref, x_ref, fcw_ref, fcb_ref, out_ref, tap_ref):
    # w_ref   : SMEM (27,)            conv weight, flattened [c, du, dv]
    # b_ref   : SMEM (3,)             conv bias
    # x_ref   : VMEM (5, 5, 64, Bt)   bf16 taps; x_ref[u, v, i*8+j, b] = img_b[3i+u, 3j+v]
    # fcw_ref : VMEM (3, 10, 64)      fc weight split per conv channel (resident)
    # fcb_ref : VMEM (10, 1)          fc bias
    # out_ref : VMEM (10, Bt)         log-softmax logits, class-major (batch on lanes)
    # tap_ref : VMEM scratch (5, 5, 64, Bt) f32 working copy of the taps

    # One bulk upcast of the bf16 DMA stream into f32 working memory
    # (conv math stays f32 on all generations; +~5% VPU ops).
    for u in range(5):
        for v in range(5):
            tap_ref[u, v] = x_ref[u, v].astype(jnp.float32)

    w = [w_ref[k] for k in range(27)]          # 27 SMEM scalars (sregs, cheap)

    logits_acc = None
    for c in range(3):
        pool_max = None
        for pi in range(3):
            for pj in range(3):
                # Conv output tile at pool-window offset (pi, pj), shape (64, Bt).
                # 3 independent per-row partial sums for ILP across VALU slots;
                # taps indexed straight from the scratch ref (no value hoist).
                r0 = (w[c * 9 + 0] * tap_ref[pi + 0, pj + 0]
                      + w[c * 9 + 1] * tap_ref[pi + 0, pj + 1]
                      + w[c * 9 + 2] * tap_ref[pi + 0, pj + 2])
                r1 = (w[c * 9 + 3] * tap_ref[pi + 1, pj + 0]
                      + w[c * 9 + 4] * tap_ref[pi + 1, pj + 1]
                      + w[c * 9 + 5] * tap_ref[pi + 1, pj + 2])
                r2 = (w[c * 9 + 6] * tap_ref[pi + 2, pj + 0]
                      + w[c * 9 + 7] * tap_ref[pi + 2, pj + 1]
                      + w[c * 9 + 8] * tap_ref[pi + 2, pj + 2])
                cv = r0 + r1 + r2
                pool_max = cv if pool_max is None else jnp.maximum(pool_max, cv)
        # Bias is constant per channel -> add once after the max; then ReLU.
        pooled = jnp.maximum(pool_max + b_ref[c], 0.0)        # (64, Bt), rows = i*8 + j
        # Per-channel FC contribution on the MXU (no feats scratch round trip).
        part = jnp.dot(fcw_ref[c], pooled, preferred_element_type=jnp.float32)  # (10, Bt)
        logits_acc = part if logits_acc is None else logits_acc + part

    logits = logits_acc + fcb_ref[...]                        # (10, Bt)
    # Numerically stable log-softmax over the class (sublane) axis.
    m = jnp.max(logits, axis=0, keepdims=True)
    s = logits - m
    lse = jnp.log(jnp.sum(jnp.exp(s), axis=0, keepdims=True))
    out_ref[...] = s - lse


# ---------------------------------------------------------------------------
# Wrapper
# ---------------------------------------------------------------------------
def convnet_forward(x, conv_w, conv_b, fc_w, fc_b):
    B = x.shape[0]
    assert x.shape[1:] == (1, 28, 28), x.shape

    # --- batch tiling: always lane-dense (multiple of 128), tile up to 512.
    LANE = 128
    BT_MAX = 512
    bpad = max(LANE, -(-B // LANE) * LANE)     # round batch up to a multiple of 128
    bt = min(BT_MAX, bpad)
    bpad = -(-bpad // bt) * bt                 # make bpad a multiple of the tile

    # --- wrapper-side layout plumbing (bf16 to halve HBM traffic):
    #     taps[u, v, i*8 + j, b] = image_b[3*i + u, 3*j + v],  u,v in [0,5), i,j in [0,8)
    xb = x[:, 0].astype(jnp.bfloat16)                              # (B, 28, 28)
    if bpad != B:
        xb = jnp.pad(xb, ((0, bpad - B), (0, 0), (0, 0)))
    x_t = jnp.transpose(xb, (1, 2, 0))                             # (28, 28, Bpad)
    taps = jnp.stack(
        [jnp.stack([x_t[u:u + 22:3, v:v + 22:3, :].reshape(64, bpad)
                    for v in range(5)], axis=0)
         for u in range(5)], axis=0)                               # (5, 5, 64, Bpad) bf16

    w_flat = conv_w.reshape(27).astype(jnp.float32)
    b_flat = conv_b.astype(jnp.float32)
    # fc weight split per conv channel: fcw3[c] == fc_w[:, c*64:(c+1)*64]
    fcw3 = jnp.transpose(fc_w.reshape(10, 3, 64), (1, 0, 2)).astype(jnp.float32)  # (3,10,64)
    fcb = fc_b.reshape(10, 1).astype(jnp.float32)                  # (10, 1)

    out_t = pl.pallas_call(
        fused_convnet_kernel,
        out_shape=jax.ShapeDtypeStruct((10, bpad), jnp.float32),
        grid=(bpad // bt,),
        in_specs=[
            pl.BlockSpec(memory_space=pltpu.MemorySpace.SMEM),           # conv w (27,)
            pl.BlockSpec(memory_space=pltpu.MemorySpace.SMEM),           # conv b (3,)
            pl.BlockSpec((5, 5, 64, bt), lambda b: (0, 0, 0, b)),        # bf16 taps
            pl.BlockSpec((3, 10, 64), lambda b: (0, 0, 0)),              # fc w, resident
            pl.BlockSpec((10, 1), lambda b: (0, 0)),                     # fc b, resident
        ],
        out_specs=pl.BlockSpec((10, bt), lambda b: (0, b)),
        scratch_shapes=[pltpu.VMEM((5, 5, 64, bt), jnp.float32)],        # f32 tap copy
        compiler_params=pltpu.CompilerParams(
            dimension_semantics=("parallel",),
            vmem_limit_bytes=32 * 1024 * 1024),
    )(w_flat, b_flat, taps, fcw3, fcb)

    # (10, Bpad) -> (B, 10), matching the PyTorch output layout.
    return jnp.transpose(out_t)[:B]


# ---------------------------------------------------------------------------
# Pure-JAX reference (for correctness check only)
# ---------------------------------------------------------------------------
def reference_forward(x, conv_w, conv_b, fc_w, fc_b):
    conv = lax.conv_general_dilated(
        x, conv_w, window_strides=(1, 1), padding="VALID",
        dimension_numbers=("NCHW", "OIHW", "NCHW")) + conv_b[None, :, None, None]
    pooled = lax.reduce_window(conv, -jnp.inf, lax.max,
                               (1, 1, 3, 3), (1, 1, 3, 3), "VALID")
    h = jnp.maximum(pooled, 0.0).reshape(x.shape[0], 192)
    logits = h @ fc_w.T + fc_b
    return jax.nn.log_softmax(logits, axis=1)


if __name__ == "__main__":
    key = jax.random.PRNGKey(0)
    k1, k2, k3, k4, k5 = jax.random.split(key, 5)
    B = 2
    # 28x28 input is required by the module (x.view(-1, 192) => 3 * 8 * 8).
    x = jax.random.normal(k1, (B, 1, 28, 28), jnp.float32)
    conv_w = jax.random.normal(k2, (3, 1, 3, 3), jnp.float32) * 0.3
    conv_b = jax.random.normal(k3, (3,), jnp.float32) * 0.1
    fc_w = jax.random.normal(k4, (10, 192), jnp.float32) * 0.05
    fc_b = jax.random.normal(k5, (10,), jnp.float32) * 0.1

    out = jax.jit(convnet_forward)(x, conv_w, conv_b, fc_w, fc_b)
    out = jax.block_until_ready(out)
    assert out.shape == (B, 10)

    # Kernel-math fidelity: reference fed the same bf16-rounded image (the only
    # approximation in the kernel is the bf16 input transfer; compute is f32).
    x_q = x.astype(jnp.bfloat16).astype(jnp.float32)
    ref_q = reference_forward(x_q, conv_w, conv_b, fc_w, fc_b)
    assert jnp.allclose(out, ref_q, atol=2e-3, rtol=2e-3), (out, ref_q)

    # Semantic check vs the full-f32 module (difference = bf16 input rounding only).
    ref = reference_forward(x, conv_w, conv_b, fc_w, fc_b)
    assert jnp.allclose(out, ref, atol=1e-2, rtol=1e-2), (out, ref)

    print("KERNEL_OK")
</pallas_src>

<mosaic_0001>
module attributes {stable_mosaic.version = 11 : i64} {
  func.func @fused_convnet_kernel(%arg0: i32, %arg1: memref<27xf32, #tpu.memory_space<smem>>, %arg2: memref<3xf32, #tpu.memory_space<smem>>, %arg3: memref<5x5x64x128xbf16, #tpu.memory_space<vmem>>, %arg4: memref<3x10x64xf32, #tpu.memory_space<vmem>>, %arg5: memref<10x1xf32, #tpu.memory_space<vmem>>, %arg6: memref<10x128xf32, #tpu.memory_space<vmem>>, %arg7: memref<5x5x64x128xf32, #tpu.memory_space<vmem>>) attributes {dimension_semantics = [#tpu.dimension_semantics<parallel>], iteration_bounds = array<i64: 1>, scalar_prefetch = 0 : i64, scratch_operands = 1 : i64, tpu.core_type = #tpu.core_type<tc>, window_params = [{transform_indices = @transform_0, window_bounds = array<i64: 27>}, {transform_indices = @transform_1, window_bounds = array<i64: 3>}, {transform_indices = @transform_2, window_bounds = array<i64: 5, 5, 64, 128>}, {pipeline_mode = #tpu.pipeline_mode<synchronous>, transform_indices = @transform_3, window_bounds = array<i64: 3, 10, 64>}, {pipeline_mode = #tpu.pipeline_mode<synchronous>, transform_indices = @transform_4, window_bounds = array<i64: 10, 1>}, {transform_indices = @transform_5, window_bounds = array<i64: 10, 128>}]} {
    %c0 = arith.constant 0 : index
    %c0_0 = arith.constant 0 : index
    %c0_1 = arith.constant 0 : index
    %c0_2 = arith.constant 0 : index
    %0 = vector.load %arg3[%c0, %c0_0, %c0_1, %c0_2] : memref<5x5x64x128xbf16, #tpu.memory_space<vmem>>, vector<1x1x64x128xbf16>
    %1 = vector.shape_cast %0 : vector<1x1x64x128xbf16> to vector<64x128xbf16>
    %2 = arith.extf %1 : vector<64x128xbf16> to vector<64x128xf32>
    %c0_3 = arith.constant 0 : index
    %c0_4 = arith.constant 0 : index
    %c0_5 = arith.constant 0 : index
    %c0_6 = arith.constant 0 : index
    %3 = vector.load %arg7[%c0_3, %c0_4, %c0_5, %c0_6] : memref<5x5x64x128xf32, #tpu.memory_space<vmem>>, vector<1x1x64x128xf32>
    %4 = vector.shape_cast %3 : vector<1x1x64x128xf32> to vector<64x128xf32>
    %5 = vector.shape_cast %2 : vector<64x128xf32> to vector<1x1x64x128xf32>
    tpu.vector_store %arg7[%c0_3, %c0_4, %c0_5, %c0_6], %5 {strides = array<i32>} : memref<5x5x64x128xf32, #tpu.memory_space<vmem>>, vector<1x1x64x128xf32>,
    %c0_7 = arith.constant 0 : index
    %c1 = arith.constant 1 : index
    %c0_8 = arith.constant 0 : index
    %c0_9 = arith.constant 0 : index
    %6 = vector.load %arg3[%c0_7, %c1, %c0_8, %c0_9] : memref<5x5x64x128xbf16, #tpu.memory_space<vmem>>, vector<1x1x64x128xbf16>
    %7 = vector.shape_cast %6 : vector<1x1x64x128xbf16> to vector<64x128xbf16>
    %8 = arith.extf %7 : vector<64x128xbf16> to vector<64x128xf32>
    %c0_10 = arith.constant 0 : index
    %c1_11 = arith.constant 1 : index
    %c0_12 = arith.constant 0 : index
    %c0_13 = arith.constant 0 : index
    %9 = vector.load %arg7[%c0_10, %c1_11, %c0_12, %c0_13] : memref<5x5x64x128xf32, #tpu.memory_space<vmem>>, vector<1x1x64x128xf32>
    %10 = vector.shape_cast %9 : vector<1x1x64x128xf32> to vector<64x128xf32>
    %11 = vector.shape_cast %8 : vector<64x128xf32> to vector<1x1x64x128xf32>
    tpu.vector_store %arg7[%c0_10, %c1_11, %c0_12, %c0_13], %11 {strides = array<i32>} : memref<5x5x64x128xf32, #tpu.memory_space<vmem>>, vector<1x1x64x128xf32>,
    %c0_14 = arith.constant 0 : index
    %c2 = arith.constant 2 : index
    %c0_15 = arith.constant 0 : index
    %c0_16 = arith.constant 0 : index
    %12 = vector.load %arg3[%c0_14, %c2, %c0_15, %c0_16] : memref<5x5x64x128xbf16, #tpu.memory_space<vmem>>, vector<1x1x64x128xbf16>
    %13 = vector.shape_cast %12 : vector<1x1x64x128xbf16> to vector<64x128xbf16>
    %14 = arith.extf %13 : vector<64x128xbf16> to vector<64x128xf32>
    %c0_17 = arith.constant 0 : index
    %c2_18 = arith.constant 2 : index
    %c0_19 = arith.constant 0 : index
    %c0_20 = arith.constant 0 : index
    %15 = vector.load %arg7[%c0_17, %c2_18, %c0_19, %c0_20] : memref<5x5x64x128xf32, #tpu.memory_space<vmem>>, vector<1x1x64x128xf32>
    %16 = vector.shape_cast %15 : vector<1x1x64x128xf32> to vector<64x128xf32>
    %17 = vector.shape_cast %14 : vector<64x128xf32> to vector<1x1x64x128xf32>
    tpu.vector_store %arg7[%c0_17, %c2_18, %c0_19, %c0_20], %17 {strides = array<i32>} : memref<5x5x64x128xf32, #tpu.memory_space<vmem>>, vector<1x1x64x128xf32>,
    %c0_21 = arith.constant 0 : index
    %c3 = arith.constant 3 : index
    %c0_22 = arith.constant 0 : index
    %c0_23 = arith.constant 0 : index
    %18 = vector.load %arg3[%c0_21, %c3, %c0_22, %c0_23] : memref<5x5x64x128xbf16, #tpu.memory_space<vmem>>, vector<1x1x64x128xbf16>
    %19 = vector.shape_cast %18 : vector<1x1x64x128xbf16> to vector<64x128xbf16>
    %20 = arith.extf %19 : vector<64x128xbf16> to vector<64x128xf32>
    %c0_24 = arith.constant 0 : index
    %c3_25 = arith.constant 3 : index
    %c0_26 = arith.constant 0 : index
    %c0_27 = arith.constant 0 : index
    %21 = vector.load %arg7[%c0_24, %c3_25, %c0_26, %c0_27] : memref<5x5x64x128xf32, #tpu.memory_space<vmem>>, vector<1x1x64x128xf32>
    %22 = vector.shape_cast %21 : vector<1x1x64x128xf32> to vector<64x128xf32>
    %23 = vector.shape_cast %20 : vector<64x128xf32> to vector<1x1x64x128xf32>
    tpu.vector_store %arg7[%c0_24, %c3_25, %c0_26, %c0_27], %23 {strides = array<i32>} : memref<5x5x64x128xf32, #tpu.memory_space<vmem>>, vector<1x1x64x128xf32>,
    %c0_28 = arith.constant 0 : index
    %c4 = arith.constant 4 : index
    %c0_29 = arith.constant 0 : index
    %c0_30 = arith.constant 0 : index
    %24 = vector.load %arg3[%c0_28, %c4, %c0_29, %c0_30] : memref<5x5x64x128xbf16, #tpu.memory_space<vmem>>, vector<1x1x64x128xbf16>
    %25 = vector.shape_cast %24 : vector<1x1x64x128xbf16> to vector<64x128xbf16>
    %26 = arith.extf %25 : vector<64x128xbf16> to vector<64x128xf32>
    %c0_31 = arith.constant 0 : index
    %c4_32 = arith.constant 4 : index
    %c0_33 = arith.constant 0 : index
    %c0_34 = arith.constant 0 : index
    %27 = vector.load %arg7[%c0_31, %c4_32, %c0_33, %c0_34] : memref<5x5x64x128xf32, #tpu.memory_space<vmem>>, vector<1x1x64x128xf32>
    %28 = vector.shape_cast %27 : vector<1x1x64x128xf32> to vector<64x128xf32>
    %29 = vector.shape_cast %26 : vector<64x128xf32> to vector<1x1x64x128xf32>
    tpu.vector_store %arg7[%c0_31, %c4_32, %c0_33, %c0_34], %29 {strides = array<i32>} : memref<5x5x64x128xf32, #tpu.memory_space<vmem>>, vector<1x1x64x128xf32>,
    %c1_35 = arith.constant 1 : index
    %c0_36 = arith.constant 0 : index
    %c0_37 = arith.constant 0 : index
    %c0_38 = arith.constant 0 : index
    %30 = vector.load %arg3[%c1_35, %c0_36, %c0_37, %c0_38] : memref<5x5x64x128xbf16, #tpu.memory_space<vmem>>, vector<1x1x64x128xbf16>
    %31 = vector.shape_cast %30 : vector<1x1x64x128xbf16> to vector<64x128xbf16>
    %32 = arith.extf %31 : vector<64x128xbf16> to vector<64x128xf32>
    %c1_39 = arith.constant 1 : index
    %c0_40 = arith.constant 0 : index
    %c0_41 = arith.constant 0 : index
    %c0_42 = arith.constant 0 : index
    %33 = vector.load %arg7[%c1_39, %c0_40, %c0_41, %c0_42] : memref<5x5x64x128xf32, #tpu.memory_space<vmem>>, vector<1x1x64x128xf32>
    %34 = vector.shape_cast %33 : vector<1x1x64x128xf32> to vector<64x128xf32>
    %35 = vector.shape_cast %32 : vector<64x128xf32> to vector<1x1x64x128xf32>
    tpu.vector_store %arg7[%c1_39, %c0_40, %c0_41, %c0_42], %35 {strides = array<i32>} : memref<5x5x64x128xf32, #tpu.memory_space<vmem>>, vector<1x1x64x128xf32>,
    %c1_43 = arith.constant 1 : index
    %c1_44 = arith.constant 1 : index
    %c0_45 = arith.constant 0 : index
    %c0_46 = arith.constant 0 : index
    %36 = vector.load %arg3[%c1_43, %c1_44, %c0_45, %c0_46] : memref<5x5x64x128xbf16, #tpu.memory_space<vmem>>, vector<1x1x64x128xbf16>
    %37 = vector.shape_cast %36 : vector<1x1x64x128xbf16> to vector<64x128xbf16>
    %38 = arith.extf %37 : vector<64x128xbf16> to vector<64x128xf32>
    %c1_47 = arith.constant 1 : index
    %c1_48 = arith.constant 1 : index
    %c0_49 = arith.constant 0 : index
    %c0_50 = arith.constant 0 : index
    %39 = vector.load %arg7[%c1_47, %c1_48, %c0_49, %c0_50] : memref<5x5x64x128xf32, #tpu.memory_space<vmem>>, vector<1x1x64x128xf32>
    %40 = vector.shape_cast %39 : vector<1x1x64x128xf32> to vector<64x128xf32>
    %41 = vector.shape_cast %38 : vector<64x128xf32> to vector<1x1x64x128xf32>
    tpu.vector_store %arg7[%c1_47, %c1_48, %c0_49, %c0_50], %41 {strides = array<i32>} : memref<5x5x64x128xf32, #tpu.memory_space<vmem>>, vector<1x1x64x128xf32>,
    %c1_51 = arith.constant 1 : index
    %c2_52 = arith.constant 2 : index
    %c0_53 = arith.constant 0 : index
    %c0_54 = arith.constant 0 : index
    %42 = vector.load %arg3[%c1_51, %c2_52, %c0_53, %c0_54] : memref<5x5x64x128xbf16, #tpu.memory_space<vmem>>, vector<1x1x64x128xbf16>
    %43 = vector.shape_cast %42 : vector<1x1x64x128xbf16> to vector<64x128xbf16>
    %44 = arith.extf %43 : vector<64x128xbf16> to vector<64x128xf32>
    %c1_55 = arith.constant 1 : index
    %c2_56 = arith.constant 2 : index
    %c0_57 = arith.constant 0 : index
    %c0_58 = arith.constant 0 : index
    %45 = vector.load %arg7[%c1_55, %c2_56, %c0_57, %c0_58] : memref<5x5x64x128xf32, #tpu.memory_space<vmem>>, vector<1x1x64x128xf32>
    %46 = vector.shape_cast %45 : vector<1x1x64x128xf32> to vector<64x128xf32>
    %47 = vector.shape_cast %44 : vector<64x128xf32> to vector<1x1x64x128xf32>
    tpu.vector_store %arg7[%c1_55, %c2_56, %c0_57, %c0_58], %47 {strides = array<i32>} : memref<5x5x64x128xf32, #tpu.memory_space<vmem>>, vector<1x1x64x128xf32>,
    %c1_59 = arith.constant 1 : index
    %c3_60 = arith.constant 3 : index
    %c0_61 = arith.constant 0 : index
    %c0_62 = arith.constant 0 : index
    %48 = vector.load %arg3[%c1_59, %c3_60, %c0_61, %c0_62] : memref<5x5x64x128xbf16, #tpu.memory_space<vmem>>, vector<1x1x64x128xbf16>
    %49 = vector.shape_cast %48 : vector<1x1x64x128xbf16> to vector<64x128xbf16>
    %50 = arith.extf %49 : vector<64x128xbf16> to vector<64x128xf32>
    %c1_63 = arith.constant 1 : index
    %c3_64 = arith.constant 3 : index
    %c0_65 = arith.constant 0 : index
    %c0_66 = arith.constant 0 : index
    %51 = vector.load %arg7[%c1_63, %c3_64, %c0_65, %c0_66] : memref<5x5x64x128xf32, #tpu.memory_space<vmem>>, vector<1x1x64x128xf32>
    %52 = vector.shape_cast %51 : vector<1x1x64x128xf32> to vector<64x128xf32>
    %53 = vector.shape_cast %50 : vector<64x128xf32> to vector<1x1x64x128xf32>
    tpu.vector_store %arg7[%c1_63, %c3_64, %c0_65, %c0_66], %53 {strides = array<i32>} : memref<5x5x64x128xf32, #tpu.memory_space<vmem>>, vector<1x1x64x128xf32>,
    %c1_67 = arith.constant 1 : index
    %c4_68 = arith.constant 4 : index
    %c0_69 = arith.constant 0 : index
    %c0_70 = arith.constant 0 : index
    %54 = vector.load %arg3[%c1_67, %c4_68, %c0_69, %c0_70] : memref<5x5x64x128xbf16, #tpu.memory_space<vmem>>, vector<1x1x64x128xbf16>
    %55 = vector.shape_cast %54 : vector<1x1x64x128xbf16> to vector<64x128xbf16>
    %56 = arith.extf %55 : vector<64x128xbf16> to vector<64x128xf32>
    %c1_71 = arith.constant 1 : index
    %c4_72 = arith.constant 4 : index
    %c0_73 = arith.constant 0 : index
    %c0_74 = arith.constant 0 : index
    %57 = vector.load %arg7[%c1_71, %c4_72, %c0_73, %c0_74] : memref<5x5x64x128xf32, #tpu.memory_space<vmem>>, vector<1x1x64x128xf32>
    %58 = vector.shape_cast %57 : vector<1x1x64x128xf32> to vector<64x128xf32>
    %59 = vector.shape_cast %56 : vector<64x128xf32> to vector<1x1x64x128xf32>
    tpu.vector_store %arg7[%c1_71, %c4_72, %c0_73, %c0_74], %59 {strides = array<i32>} : memref<5x5x64x128xf32, #tpu.memory_space<vmem>>, vector<1x1x64x128xf32>,
    %c2_75 = arith.constant 2 : index
    %c0_76 = arith.constant 0 : index
    %c0_77 = arith.constant 0 : index
    %c0_78 = arith.constant 0 : index
    %60 = vector.load %arg3[%c2_75, %c0_76, %c0_77, %c0_78] : memref<5x5x64x128xbf16, #tpu.memory_space<vmem>>, vector<1x1x64x128xbf16>
    %61 = vector.shape_cast %60 : vector<1x1x64x128xbf16> to vector<64x128xbf16>
    %62 = arith.extf %61 : vector<64x128xbf16> to vector<64x128xf32>
    %c2_79 = arith.constant 2 : index
    %c0_80 = arith.constant 0 : index
    %c0_81 = arith.constant 0 : index
    %c0_82 = arith.constant 0 : index
    %63 = vector.load %arg7[%c2_79, %c0_80, %c0_81, %c0_82] : memref<5x5x64x128xf32, #tpu.memory_space<vmem>>, vector<1x1x64x128xf32>
    %64 = vector.shape_cast %63 : vector<1x1x64x128xf32> to vector<64x128xf32>
    %65 = vector.shape_cast %62 : vector<64x128xf32> to vector<1x1x64x128xf32>
    tpu.vector_store %arg7[%c2_79, %c0_80, %c0_81, %c0_82], %65 {strides = array<i32>} : memref<5x5x64x128xf32, #tpu.memory_space<vmem>>, vector<1x1x64x128xf32>,
    %c2_83 = arith.constant 2 : index
    %c1_84 = arith.constant 1 : index
    %c0_85 = arith.constant 0 : index
    %c0_86 = arith.constant 0 : index
    %66 = vector.load %arg3[%c2_83, %c1_84, %c0_85, %c0_86] : memref<5x5x64x128xbf16, #tpu.memory_space<vmem>>, vector<1x1x64x128xbf16>
    %67 = vector.shape_cast %66 : vector<1x1x64x128xbf16> to vector<64x128xbf16>
    %68 = arith.extf %67 : vector<64x128xbf16> to vector<64x128xf32>
    %c2_87 = arith.constant 2 : index
    %c1_88 = arith.constant 1 : index
    %c0_89 = arith.constant 0 : index
    %c0_90 = arith.constant 0 : index
    %69 = vector.load %arg7[%c2_87, %c1_88, %c0_89, %c0_90] : memref<5x5x64x128xf32, #tpu.memory_space<vmem>>, vector<1x1x64x128xf32>
    %70 = vector.shape_cast %69 : vector<1x1x64x128xf32> to vector<64x128xf32>
    %71 = vector.shape_cast %68 : vector<64x128xf32> to vector<1x1x64x128xf32>
    tpu.vector_store %arg7[%c2_87, %c1_88, %c0_89, %c0_90], %71 {strides = array<i32>} : memref<5x5x64x128xf32, #tpu.memory_space<vmem>>, vector<1x1x64x128xf32>,
    %c2_91 = arith.constant 2 : index
    %c2_92 = arith.constant 2 : index
    %c0_93 = arith.constant 0 : index
    %c0_94 = arith.constant 0 : index
    %72 = vector.load %arg3[%c2_91, %c2_92, %c0_93, %c0_94] : memref<5x5x64x128xbf16, #tpu.memory_space<vmem>>, vector<1x1x64x128xbf16>
    %73 = vector.shape_cast %72 : vector<1x1x64x128xbf16> to vector<64x128xbf16>
    %74 = arith.extf %73 : vector<64x128xbf16> to vector<64x128xf32>
    %c2_95 = arith.constant 2 : index
    %c2_96 = arith.constant 2 : index
    %c0_97 = arith.constant 0 : index
    %c0_98 = arith.constant 0 : index
    %75 = vector.load %arg7[%c2_95, %c2_96, %c0_97, %c0_98] : memref<5x5x64x128xf32, #tpu.memory_space<vmem>>, vector<1x1x64x128xf32>
    %76 = vector.shape_cast %75 : vector<1x1x64x128xf32> to vector<64x128xf32>
    %77 = vector.shape_cast %74 : vector<64x128xf32> to vector<1x1x64x128xf32>
    tpu.vector_store %arg7[%c2_95, %c2_96, %c0_97, %c0_98], %77 {strides = array<i32>} : memref<5x5x64x128xf32, #tpu.memory_space<vmem>>, vector<1x1x64x128xf32>,
    %c2_99 = arith.constant 2 : index
    %c3_100 = arith.constant 3 : index
    %c0_101 = arith.constant 0 : index
    %c0_102 = arith.constant 0 : index
    %78 = vector.load %arg3[%c2_99, %c3_100, %c0_101, %c0_102] : memref<5x5x64x128xbf16, #tpu.memory_space<vmem>>, vector<1x1x64x128xbf16>
    %79 = vector.shape_cast %78 : vector<1x1x64x128xbf16> to vector<64x128xbf16>
    %80 = arith.extf %79 : vector<64x128xbf16> to vector<64x128xf32>
    %c2_103 = arith.constant 2 : index
    %c3_104 = arith.constant 3 : index
    %c0_105 = arith.constant 0 : index
    %c0_106 = arith.constant 0 : index
    %81 = vector.load %arg7[%c2_103, %c3_104, %c0_105, %c0_106] : memref<5x5x64x128xf32, #tpu.memory_space<vmem>>, vector<1x1x64x128xf32>
    %82 = vector.shape_cast %81 : vector<1x1x64x128xf32> to vector<64x128xf32>
    %83 = vector.shape_cast %80 : vector<64x128xf32> to vector<1x1x64x128xf32>
    tpu.vector_store %arg7[%c2_103, %c3_104, %c0_105, %c0_106], %83 {strides = array<i32>} : memref<5x5x64x128xf32, #tpu.memory_space<vmem>>, vector<1x1x64x128xf32>,
    %c2_107 = arith.constant 2 : index
    %c4_108 = arith.constant 4 : index
    %c0_109 = arith.constant 0 : index
    %c0_110 = arith.constant 0 : index
    %84 = vector.load %arg3[%c2_107, %c4_108, %c0_109, %c0_110] : memref<5x5x64x128xbf16, #tpu.memory_space<vmem>>, vector<1x1x64x128xbf16>
    %85 = vector.shape_cast %84 : vector<1x1x64x128xbf16> to vector<64x128xbf16>
    %86 = arith.extf %85 : vector<64x128xbf16> to vector<64x128xf32>
    %c2_111 = arith.constant 2 : index
    %c4_112 = arith.constant 4 : index
    %c0_113 = arith.constant 0 : index
    %c0_114 = arith.constant 0 : index
    %87 = vector.load %arg7[%c2_111, %c4_112, %c0_113, %c0_114] : memref<5x5x64x128xf32, #tpu.memory_space<vmem>>, vector<1x1x64x128xf32>
    %88 = vector.shape_cast %87 : vector<1x1x64x128xf32> to vector<64x128xf32>
    %89 = vector.shape_cast %86 : vector<64x128xf32> to vector<1x1x64x128xf32>
    tpu.vector_store %arg7[%c2_111, %c4_112, %c0_113, %c0_114], %89 {strides = array<i32>} : memref<5x5x64x128xf32, #tpu.memory_space<vmem>>, vector<1x1x64x128xf32>,
    %c3_115 = arith.constant 3 : index
    %c0_116 = arith.constant 0 : index
    %c0_117 = arith.constant 0 : index
    %c0_118 = arith.constant 0 : index
    %90 = vector.load %arg3[%c3_115, %c0_116, %c0_117, %c0_118] : memref<5x5x64x128xbf16, #tpu.memory_space<vmem>>, vector<1x1x64x128xbf16>
    %91 = vector.shape_cast %90 : vector<1x1x64x128xbf16> to vector<64x128xbf16>
    %92 = arith.extf %91 : vector<64x128xbf16> to vector<64x128xf32>
    %c3_119 = arith.constant 3 : index
    %c0_120 = arith.constant 0 : index
    %c0_121 = arith.constant 0 : index
    %c0_122 = arith.constant 0 : index
    %93 = vector.load %arg7[%c3_119, %c0_120, %c0_121, %c0_122] : memref<5x5x64x128xf32, #tpu.memory_space<vmem>>, vector<1x1x64x128xf32>
    %94 = vector.shape_cast %93 : vector<1x1x64x128xf32> to vector<64x128xf32>
    %95 = vector.shape_cast %92 : vector<64x128xf32> to vector<1x1x64x128xf32>
    tpu.vector_store %arg7[%c3_119, %c0_120, %c0_121, %c0_122], %95 {strides = array<i32>} : memref<5x5x64x128xf32, #tpu.memory_space<vmem>>, vector<1x1x64x128xf32>,
    %c3_123 = arith.constant 3 : index
    %c1_124 = arith.constant 1 : index
    %c0_125 = arith.constant 0 : index
    %c0_126 = arith.constant 0 : index
    %96 = vector.load %arg3[%c3_123, %c1_124, %c0_125, %c0_126] : memref<5x5x64x128xbf16, #tpu.memory_space<vmem>>, vector<1x1x64x128xbf16>
    %97 = vector.shape_cast %96 : vector<1x1x64x128xbf16> to vector<64x128xbf16>
    %98 = arith.extf %97 : vector<64x128xbf16> to vector<64x128xf32>
    %c3_127 = arith.constant 3 : index
    %c1_128 = arith.constant 1 : index
    %c0_129 = arith.constant 0 : index
    %c0_130 = arith.constant 0 : index
    %99 = vector.load %arg7[%c3_127, %c1_128, %c0_129, %c0_130] : memref<5x5x64x128xf32, #tpu.memory_space<vmem>>, vector<1x1x64x128xf32>
    %100 = vector.shape_cast %99 : vector<1x1x64x128xf32> to vector<64x128xf32>
    %101 = vector.shape_cast %98 : vector<64x128xf32> to vector<1x1x64x128xf32>
    tpu.vector_store %arg7[%c3_127, %c1_128, %c0_129, %c0_130], %101 {strides = array<i32>} : memref<5x5x64x128xf32, #tpu.memory_space<vmem>>, vector<1x1x64x128xf32>,
    %c3_131 = arith.constant 3 : index
    %c2_132 = arith.constant 2 : index
    %c0_133 = arith.constant 0 : index
    %c0_134 = arith.constant 0 : index
    %102 = vector.load %arg3[%c3_131, %c2_132, %c0_133, %c0_134] : memref<5x5x64x128xbf16, #tpu.memory_space<vmem>>, vector<1x1x64x128xbf16>
    %103 = vector.shape_cast %102 : vector<1x1x64x128xbf16> to vector<64x128xbf16>
    %104 = arith.extf %103 : vector<64x128xbf16> to vector<64x128xf32>
    %c3_135 = arith.constant 3 : index
    %c2_136 = arith.constant 2 : index
    %c0_137 = arith.constant 0 : index
    %c0_138 = arith.constant 0 : index
    %105 = vector.load %arg7[%c3_135, %c2_136, %c0_137, %c0_138] : memref<5x5x64x128xf32, #tpu.memory_space<vmem>>, vector<1x1x64x128xf32>
    %106 = vector.shape_cast %105 : vector<1x1x64x128xf32> to vector<64x128xf32>
    %107 = vector.shape_cast %104 : vector<64x128xf32> to vector<1x1x64x128xf32>
    tpu.vector_store %arg7[%c3_135, %c2_136, %c0_137, %c0_138], %107 {strides = array<i32>} : memref<5x5x64x128xf32, #tpu.memory_space<vmem>>, vector<1x1x64x128xf32>,
    %c3_139 = arith.constant 3 : index
    %c3_140 = arith.constant 3 : index
    %c0_141 = arith.constant 0 : index
    %c0_142 = arith.constant 0 : index
    %108 = vector.load %arg3[%c3_139, %c3_140, %c0_141, %c0_142] : memref<5x5x64x128xbf16, #tpu.memory_space<vmem>>, vector<1x1x64x128xbf16>
    %109 = vector.shape_cast %108 : vector<1x1x64x128xbf16> to vector<64x128xbf16>
    %110 = arith.extf %109 : vector<64x128xbf16> to vector<64x128xf32>
    %c3_143 = arith.constant 3 : index
    %c3_144 = arith.constant 3 : index
    %c0_145 = arith.constant 0 : index
    %c0_146 = arith.constant 0 : index
    %111 = vector.load %arg7[%c3_143, %c3_144, %c0_145, %c0_146] : memref<5x5x64x128xf32, #tpu.memory_space<vmem>>, vector<1x1x64x128xf32>
    %112 = vector.shape_cast %111 : vector<1x1x64x128xf32> to vector<64x128xf32>
    %113 = vector.shape_cast %110 : vector<64x128xf32> to vector<1x1x64x128xf32>
    tpu.vector_store %arg7[%c3_143, %c3_144, %c0_145, %c0_146], %113 {strides = array<i32>} : memref<5x5x64x128xf32, #tpu.memory_space<vmem>>, vector<1x1x64x128xf32>,
    %c3_147 = arith.constant 3 : index
    %c4_148 = arith.constant 4 : index
    %c0_149 = arith.constant 0 : index
    %c0_150 = arith.constant 0 : index
    %114 = vector.load %arg3[%c3_147, %c4_148, %c0_149, %c0_150] : memref<5x5x64x128xbf16, #tpu.memory_space<vmem>>, vector<1x1x64x128xbf16>
    %115 = vector.shape_cast %114 : vector<1x1x64x128xbf16> to vector<64x128xbf16>
    %116 = arith.extf %115 : vector<64x128xbf16> to vector<64x128xf32>
    %c3_151 = arith.constant 3 : index
    %c4_152 = arith.constant 4 : index
    %c0_153 = arith.constant 0 : index
    %c0_154 = arith.constant 0 : index
    %117 = vector.load %arg7[%c3_151, %c4_152, %c0_153, %c0_154] : memref<5x5x64x128xf32, #tpu.memory_space<vmem>>, vector<1x1x64x128xf32>
    %118 = vector.shape_cast %117 : vector<1x1x64x128xf32> to vector<64x128xf32>
    %119 = vector.shape_cast %116 : vector<64x128xf32> to vector<1x1x64x128xf32>
    tpu.vector_store %arg7[%c3_151, %c4_152, %c0_153, %c0_154], %119 {strides = array<i32>} : memref<5x5x64x128xf32, #tpu.memory_space<vmem>>, vector<1x1x64x128xf32>,
    %c4_155 = arith.constant 4 : index
    %c0_156 = arith.constant 0 : index
    %c0_157 = arith.constant 0 : index
    %c0_158 = arith.constant 0 : index
    %120 = vector.load %arg3[%c4_155, %c0_156, %c0_157, %c0_158] : memref<5x5x64x128xbf16, #tpu.memory_space<vmem>>, vector<1x1x64x128xbf16>
    %121 = vector.shape_cast %120 : vector<1x1x64x128xbf16> to vector<64x128xbf16>
    %122 = arith.extf %121 : vector<64x128xbf16> to vector<64x128xf32>
    %c4_159 = arith.constant 4 : index
    %c0_160 = arith.constant 0 : index
    %c0_161 = arith.constant 0 : index
    %c0_162 = arith.constant 0 : index
    %123 = vector.load %arg7[%c4_159, %c0_160, %c0_161, %c0_162] : memref<5x5x64x128xf32, #tpu.memory_space<vmem>>, vector<1x1x64x128xf32>
    %124 = vector.shape_cast %123 : vector<1x1x64x128xf32> to vector<64x128xf32>
    %125 = vector.shape_cast %122 : vector<64x128xf32> to vector<1x1x64x128xf32>
    tpu.vector_store %arg7[%c4_159, %c0_160, %c0_161, %c0_162], %125 {strides = array<i32>} : memref<5x5x64x128xf32, #tpu.memory_space<vmem>>, vector<1x1x64x128xf32>,
    %c4_163 = arith.constant 4 : index
    %c1_164 = arith.constant 1 : index
    %c0_165 = arith.constant 0 : index
    %c0_166 = arith.constant 0 : index
    %126 = vector.load %arg3[%c4_163, %c1_164, %c0_165, %c0_166] : memref<5x5x64x128xbf16, #tpu.memory_space<vmem>>, vector<1x1x64x128xbf16>
    %127 = vector.shape_cast %126 : vector<1x1x64x128xbf16> to vector<64x128xbf16>
    %128 = arith.extf %127 : vector<64x128xbf16> to vector<64x128xf32>
    %c4_167 = arith.constant 4 : index
    %c1_168 = arith.constant 1 : index
    %c0_169 = arith.constant 0 : index
    %c0_170 = arith.constant 0 : index
    %129 = vector.load %arg7[%c4_167, %c1_168, %c0_169, %c0_170] : memref<5x5x64x128xf32, #tpu.memory_space<vmem>>, vector<1x1x64x128xf32>
    %130 = vector.shape_cast %129 : vector<1x1x64x128xf32> to vector<64x128xf32>
    %131 = vector.shape_cast %128 : vector<64x128xf32> to vector<1x1x64x128xf32>
    tpu.vector_store %arg7[%c4_167, %c1_168, %c0_169, %c0_170], %131 {strides = array<i32>} : memref<5x5x64x128xf32, #tpu.memory_space<vmem>>, vector<1x1x64x128xf32>,
    %c4_171 = arith.constant 4 : index
    %c2_172 = arith.constant 2 : index
    %c0_173 = arith.constant 0 : index
    %c0_174 = arith.constant 0 : index
    %132 = vector.load %arg3[%c4_171, %c2_172, %c0_173, %c0_174] : memref<5x5x64x128xbf16, #tpu.memory_space<vmem>>, vector<1x1x64x128xbf16>
    %133 = vector.shape_cast %132 : vector<1x1x64x128xbf16> to vector<64x128xbf16>
    %134 = arith.extf %133 : vector<64x128xbf16> to vector<64x128xf32>
    %c4_175 = arith.constant 4 : index
    %c2_176 = arith.constant 2 : index
    %c0_177 = arith.constant 0 : index
    %c0_178 = arith.constant 0 : index
    %135 = vector.load %arg7[%c4_175, %c2_176, %c0_177, %c0_178] : memref<5x5x64x128xf32, #tpu.memory_space<vmem>>, vector<1x1x64x128xf32>
    %136 = vector.shape_cast %135 : vector<1x1x64x128xf32> to vector<64x128xf32>
    %137 = vector.shape_cast %134 : vector<64x128xf32> to vector<1x1x64x128xf32>
    tpu.vector_store %arg7[%c4_175, %c2_176, %c0_177, %c0_178], %137 {strides = array<i32>} : memref<5x5x64x128xf32, #tpu.memory_space<vmem>>, vector<1x1x64x128xf32>,
    %c4_179 = arith.constant 4 : index
    %c3_180 = arith.constant 3 : index
    %c0_181 = arith.constant 0 : index
    %c0_182 = arith.constant 0 : index
    %138 = vector.load %arg3[%c4_179, %c3_180, %c0_181, %c0_182] : memref<5x5x64x128xbf16, #tpu.memory_space<vmem>>, vector<1x1x64x128xbf16>
    %139 = vector.shape_cast %138 : vector<1x1x64x128xbf16> to vector<64x128xbf16>
    %140 = arith.extf %139 : vector<64x128xbf16> to vector<64x128xf32>
    %c4_183 = arith.constant 4 : index
    %c3_184 = arith.constant 3 : index
    %c0_185 = arith.constant 0 : index
    %c0_186 = arith.constant 0 : index
    %141 = vector.load %arg7[%c4_183, %c3_184, %c0_185, %c0_186] : memref<5x5x64x128xf32, #tpu.memory_space<vmem>>, vector<1x1x64x128xf32>
    %142 = vector.shape_cast %141 : vector<1x1x64x128xf32> to vector<64x128xf32>
    %143 = vector.shape_cast %140 : vector<64x128xf32> to vector<1x1x64x128xf32>
    tpu.vector_store %arg7[%c4_183, %c3_184, %c0_185, %c0_186], %143 {strides = array<i32>} : memref<5x5x64x128xf32, #tpu.memory_space<vmem>>, vector<1x1x64x128xf32>,
    %c4_187 = arith.constant 4 : index
    %c4_188 = arith.constant 4 : index
    %c0_189 = arith.constant 0 : index
    %c0_190 = arith.constant 0 : index
    %144 = vector.load %arg3[%c4_187, %c4_188, %c0_189, %c0_190] : memref<5x5x64x128xbf16, #tpu.memory_space<vmem>>, vector<1x1x64x128xbf16>
    %145 = vector.shape_cast %144 : vector<1x1x64x128xbf16> to vector<64x128xbf16>
    %146 = arith.extf %145 : vector<64x128xbf16> to vector<64x128xf32>
    %c4_191 = arith.constant 4 : index
    %c4_192 = arith.constant 4 : index
    %c0_193 = arith.constant 0 : index
    %c0_194 = arith.constant 0 : index
    %147 = vector.load %arg7[%c4_191, %c4_192, %c0_193, %c0_194] : memref<5x5x64x128xf32, #tpu.memory_space<vmem>>, vector<1x1x64x128xf32>
    %148 = vector.shape_cast %147 : vector<1x1x64x128xf32> to vector<64x128xf32>
    %149 = vector.shape_cast %146 : vector<64x128xf32> to vector<1x1x64x128xf32>
    tpu.vector_store %arg7[%c4_191, %c4_192, %c0_193, %c0_194], %149 {strides = array<i32>} : memref<5x5x64x128xf32, #tpu.memory_space<vmem>>, vector<1x1x64x128xf32>,
    %c0_195 = arith.constant 0 : index
    %150 = memref.load %arg1[%c0_195] : memref<27xf32, #tpu.memory_space<smem>>
    %c1_196 = arith.constant 1 : index
    %151 = memref.load %arg1[%c1_196] : memref<27xf32, #tpu.memory_space<smem>>
    %c2_197 = arith.constant 2 : index
    %152 = memref.load %arg1[%c2_197] : memref<27xf32, #tpu.memory_space<smem>>
    %c3_198 = arith.constant 3 : index
    %153 = memref.load %arg1[%c3_198] : memref<27xf32, #tpu.memory_space<smem>>
    %c4_199 = arith.constant 4 : index
    %154 = memref.load %arg1[%c4_199] : memref<27xf32, #tpu.memory_space<smem>>
    %c5 = arith.constant 5 : index
    %155 = memref.load %arg1[%c5] : memref<27xf32, #tpu.memory_space<smem>>
    %c6 = arith.constant 6 : index
    %156 = memref.load %arg1[%c6] : memref<27xf32, #tpu.memory_space<smem>>
    %c7 = arith.constant 7 : index
    %157 = memref.load %arg1[%c7] : memref<27xf32, #tpu.memory_space<smem>>
    %c8 = arith.constant 8 : index
    %158 = memref.load %arg1[%c8] : memref<27xf32, #tpu.memory_space<smem>>
    %c9 = arith.constant 9 : index
    %159 = memref.load %arg1[%c9] : memref<27xf32, #tpu.memory_space<smem>>
    %c10 = arith.constant 10 : index
    %160 = memref.load %arg1[%c10] : memref<27xf32, #tpu.memory_space<smem>>
    %c11 = arith.constant 11 : index
    %161 = memref.load %arg1[%c11] : memref<27xf32, #tpu.memory_space<smem>>
    %c12 = arith.constant 12 : index
    %162 = memref.load %arg1[%c12] : memref<27xf32, #tpu.memory_space<smem>>
    %c13 = arith.constant 13 : index
    %163 = memref.load %arg1[%c13] : memref<27xf32, #tpu.memory_space<smem>>
    %c14 = arith.constant 14 : index
    %164 = memref.load %arg1[%c14] : memref<27xf32, #tpu.memory_space<smem>>
    %c15 = arith.constant 15 : index
    %165 = memref.load %arg1[%c15] : memref<27xf32, #tpu.memory_space<smem>>
    %c16 = arith.constant 16 : index
    %166 = memref.load %arg1[%c16] : memref<27xf32, #tpu.memory_space<smem>>
    %c17 = arith.constant 17 : index
    %167 = memref.load %arg1[%c17] : memref<27xf32, #tpu.memory_space<smem>>
    %c18 = arith.constant 18 : index
    %168 = memref.load %arg1[%c18] : memref<27xf32, #tpu.memory_space<smem>>
    %c19 = arith.constant 19 : index
    %169 = memref.load %arg1[%c19] : memref<27xf32, #tpu.memory_space<smem>>
    %c20 = arith.constant 20 : index
    %170 = memref.load %arg1[%c20] : memref<27xf32, #tpu.memory_space<smem>>
    %c21 = arith.constant 21 : index
    %171 = memref.load %arg1[%c21] : memref<27xf32, #tpu.memory_space<smem>>
    %c22 = arith.constant 22 : index
    %172 = memref.load %arg1[%c22] : memref<27xf32, #tpu.memory_space<smem>>
    %c23 = arith.constant 23 : index
    %173 = memref.load %arg1[%c23] : memref<27xf32, #tpu.memory_space<smem>>
    %c24 = arith.constant 24 : index
    %174 = memref.load %arg1[%c24] : memref<27xf32, #tpu.memory_space<smem>>
    %c25 = arith.constant 25 : index
    %175 = memref.load %arg1[%c25] : memref<27xf32, #tpu.memory_space<smem>>
    %c26 = arith.constant 26 : index
    %176 = memref.load %arg1[%c26] : memref<27xf32, #tpu.memory_space<smem>>
    %c0_200 = arith.constant 0 : index
    %c0_201 = arith.constant 0 : index
    %c0_202 = arith.constant 0 : index
    %c0_203 = arith.constant 0 : index
    %177 = vector.load %arg7[%c0_200, %c0_201, %c0_202, %c0_203] : memref<5x5x64x128xf32, #tpu.memory_space<vmem>>, vector<1x1x64x128xf32>
    %178 = vector.shape_cast %177 : vector<1x1x64x128xf32> to vector<64x128xf32>
    %179 = vector.broadcast %150 : f32 to vector<64x128xf32>
    %180 = arith.mulf %179, %178 : vector<64x128xf32>
    %c0_204 = arith.constant 0 : index
    %c1_205 = arith.constant 1 : index
    %c0_206 = arith.constant 0 : index
    %c0_207 = arith.constant 0 : index
    %181 = vector.load %arg7[%c0_204, %c1_205, %c0_206, %c0_207] : memref<5x5x64x128xf32, #tpu.memory_space<vmem>>, vector<1x1x64x128xf32>
    %182 = vector.shape_cast %181 : vector<1x1x64x128xf32> to vector<64x128xf32>
    %183 = vector.broadcast %151 : f32 to vector<64x128xf32>
    %184 = arith.mulf %183, %182 : vector<64x128xf32>
    %185 = arith.addf %180, %184 : vector<64x128xf32>
    %c0_208 = arith.constant 0 : index
    %c2_209 = arith.constant 2 : index
    %c0_210 = arith.constant 0 : index
    %c0_211 = arith.constant 0 : index
    %186 = vector.load %arg7[%c0_208, %c2_209, %c0_210, %c0_211] : memref<5x5x64x128xf32, #tpu.memory_space<vmem>>, vector<1x1x64x128xf32>
    %187 = vector.shape_cast %186 : vector<1x1x64x128xf32> to vector<64x128xf32>
    %188 = vector.broadcast %152 : f32 to vector<64x128xf32>
    %189 = arith.mulf %188, %187 : vector<64x128xf32>
    %190 = arith.addf %185, %189 : vector<64x128xf32>
    %c1_212 = arith.constant 1 : index
    %c0_213 = arith.constant 0 : index
    %c0_214 = arith.constant 0 : index
    %c0_215 = arith.constant 0 : index
    %191 = vector.load %arg7[%c1_212, %c0_213, %c0_214, %c0_215] : memref<5x5x64x128xf32, #tpu.memory_space<vmem>>, vector<1x1x64x128xf32>
    %192 = vector.shape_cast %191 : vector<1x1x64x128xf32> to vector<64x128xf32>
    %193 = vector.broadcast %153 : f32 to vector<64x128xf32>
    %194 = arith.mulf %193, %192 : vector<64x128xf32>
    %c1_216 = arith.constant 1 : index
    %c1_217 = arith.constant 1 : index
    %c0_218 = arith.constant 0 : index
    %c0_219 = arith.constant 0 : index
    %195 = vector.load %arg7[%c1_216, %c1_217, %c0_218, %c0_219] : memref<5x5x64x128xf32, #tpu.memory_space<vmem>>, vector<1x1x64x128xf32>
    %196 = vector.shape_cast %195 : vector<1x1x64x128xf32> to vector<64x128xf32>
    %197 = vector.broadcast %154 : f32 to vector<64x128xf32>
    %198 = arith.mulf %197, %196 : vector<64x128xf32>
    %199 = arith.addf %194, %198 : vector<64x128xf32>
    %c1_220 = arith.constant 1 : index
    %c2_221 = arith.constant 2 : index
    %c0_222 = arith.constant 0 : index
    %c0_223 = arith.constant 0 : index
    %200 = vector.load %arg7[%c1_220, %c2_221, %c0_222, %c0_223] : memref<5x5x64x128xf32, #tpu.memory_space<vmem>>, vector<1x1x64x128xf32>
    %201 = vector.shape_cast %200 : vector<1x1x64x128xf32> to vector<64x128xf32>
    %202 = vector.broadcast %155 : f32 to vector<64x128xf32>
    %203 = arith.mulf %202, %201 : vector<64x128xf32>
    %204 = arith.addf %199, %203 : vector<64x128xf32>
    %c2_224 = arith.constant 2 : index
    %c0_225 = arith.constant 0 : index
    %c0_226 = arith.constant 0 : index
    %c0_227 = arith.constant 0 : index
    %205 = vector.load %arg7[%c2_224, %c0_225, %c0_226, %c0_227] : memref<5x5x64x128xf32, #tpu.memory_space<vmem>>, vector<1x1x64x128xf32>
    %206 = vector.shape_cast %205 : vector<1x1x64x128xf32> to vector<64x128xf32>
    %207 = vector.broadcast %156 : f32 to vector<64x128xf32>
    %208 = arith.mulf %207, %206 : vector<64x128xf32>
    %c2_228 = arith.constant 2 : index
    %c1_229 = arith.constant 1 : index
    %c0_230 = arith.constant 0 : index
    %c0_231 = arith.constant 0 : index
    %209 = vector.load %arg7[%c2_228, %c1_229, %c0_230, %c0_231] : memref<5x5x64x128xf32, #tpu.memory_space<vmem>>, vector<1x1x64x128xf32>
    %210 = vector.shape_cast %209 : vector<1x1x64x128xf32> to vector<64x128xf32>
    %211 = vector.broadcast %157 : f32 to vector<64x128xf32>
    %212 = arith.mulf %211, %210 : vector<64x128xf32>
    %213 = arith.addf %208, %212 : vector<64x128xf32>
    %c2_232 = arith.constant 2 : index
    %c2_233 = arith.constant 2 : index
    %c0_234 = arith.constant 0 : index
    %c0_235 = arith.constant 0 : index
    %214 = vector.load %arg7[%c2_232, %c2_233, %c0_234, %c0_235] : memref<5x5x64x128xf32, #tpu.memory_space<vmem>>, vector<1x1x64x128xf32>
    %215 = vector.shape_cast %214 : vector<1x1x64x128xf32> to vector<64x128xf32>
    %216 = vector.broadcast %158 : f32 to vector<64x128xf32>
    %217 = arith.mulf %216, %215 : vector<64x128xf32>
    %218 = arith.addf %213, %217 : vector<64x128xf32>
    %219 = arith.addf %190, %204 : vector<64x128xf32>
    %220 = arith.addf %219, %218 : vector<64x128xf32>
    %c0_236 = arith.constant 0 : index
    %c1_237 = arith.constant 1 : index
    %c0_238 = arith.constant 0 : index
    %c0_239 = arith.constant 0 : index
    %221 = vector.load %arg7[%c0_236, %c1_237, %c0_238, %c0_239] : memref<5x5x64x128xf32, #tpu.memory_space<vmem>>, vector<1x1x64x128xf32>
    %222 = vector.shape_cast %221 : vector<1x1x64x128xf32> to vector<64x128xf32>
    %223 = vector.broadcast %150 : f32 to vector<64x128xf32>
    %224 = arith.mulf %223, %222 : vector<64x128xf32>
    %c0_240 = arith.constant 0 : index
    %c2_241 = arith.constant 2 : index
    %c0_242 = arith.constant 0 : index
    %c0_243 = arith.constant 0 : index
    %225 = vector.load %arg7[%c0_240, %c2_241, %c0_242, %c0_243] : memref<5x5x64x128xf32, #tpu.memory_space<vmem>>, vector<1x1x64x128xf32>
    %226 = vector.shape_cast %225 : vector<1x1x64x128xf32> to vector<64x128xf32>
    %227 = vector.broadcast %151 : f32 to vector<64x128xf32>
    %228 = arith.mulf %227, %226 : vector<64x128xf32>
    %229 = arith.addf %224, %228 : vector<64x128xf32>
    %c0_244 = arith.constant 0 : index
    %c3_245 = arith.constant 3 : index
    %c0_246 = arith.constant 0 : index
    %c0_247 = arith.constant 0 : index
    %230 = vector.load %arg7[%c0_244, %c3_245, %c0_246, %c0_247] : memref<5x5x64x128xf32, #tpu.memory_space<vmem>>, vector<1x1x64x128xf32>
    %231 = vector.shape_cast %230 : vector<1x1x64x128xf32> to vector<64x128xf32>
    %232 = vector.broadcast %152 : f32 to vector<64x128xf32>
    %233 = arith.mulf %232, %231 : vector<64x128xf32>
    %234 = arith.addf %229, %233 : vector<64x128xf32>
    %c1_248 = arith.constant 1 : index
    %c1_249 = arith.constant 1 : index
    %c0_250 = arith.constant 0 : index
    %c0_251 = arith.constant 0 : index
    %235 = vector.load %arg7[%c1_248, %c1_249, %c0_250, %c0_251] : memref<5x5x64x128xf32, #tpu.memory_space<vmem>>, vector<1x1x64x128xf32>
    %236 = vector.shape_cast %235 : vector<1x1x64x128xf32> to vector<64x128xf32>
    %237 = vector.broadcast %153 : f32 to vector<64x128xf32>
    %238 = arith.mulf %237, %236 : vector<64x128xf32>
    %c1_252 = arith.constant 1 : index
    %c2_253 = arith.constant 2 : index
    %c0_254 = arith.constant 0 : index
    %c0_255 = arith.constant 0 : index
    %239 = vector.load %arg7[%c1_252, %c2_253, %c0_254, %c0_255] : memref<5x5x64x128xf32, #tpu.memory_space<vmem>>, vector<1x1x64x128xf32>
    %240 = vector.shape_cast %239 : vector<1x1x64x128xf32> to vector<64x128xf32>
    %241 = vector.broadcast %154 : f32 to vector<64x128xf32>
    %242 = arith.mulf %241, %240 : vector<64x128xf32>
    %243 = arith.addf %238, %242 : vector<64x128xf32>
    %c1_256 = arith.constant 1 : index
    %c3_257 = arith.constant 3 : index
    %c0_258 = arith.constant 0 : index
    %c0_259 = arith.constant 0 : index
    %244 = vector.load %arg7[%c1_256, %c3_257, %c0_258, %c0_259] : memref<5x5x64x128xf32, #tpu.memory_space<vmem>>, vector<1x1x64x128xf32>
    %245 = vector.shape_cast %244 : vector<1x1x64x128xf32> to vector<64x128xf32>
    %246 = vector.broadcast %155 : f32 to vector<64x128xf32>
    %247 = arith.mulf %246, %245 : vector<64x128xf32>
    %248 = arith.addf %243, %247 : vector<64x128xf32>
    %c2_260 = arith.constant 2 : index
    %c1_261 = arith.constant 1 : index
    %c0_262 = arith.constant 0 : index
    %c0_263 = arith.constant 0 : index
    %249 = vector.load %arg7[%c2_260, %c1_261, %c0_262, %c0_263] : memref<5x5x64x128xf32, #tpu.memory_space<vmem>>, vector<1x1x64x128xf32>
    %250 = vector.shape_cast %249 : vector<1x1x64x128xf32> to vector<64x128xf32>
    %251 = vector.broadcast %156 : f32 to vector<64x128xf32>
    %252 = arith.mulf %251, %250 : vector<64x128xf32>
    %c2_264 = arith.constant 2 : index
    %c2_265 = arith.constant 2 : index
    %c0_266 = arith.constant 0 : index
    %c0_267 = arith.constant 0 : index
    %253 = vector.load %arg7[%c2_264, %c2_265, %c0_266, %c0_267] : memref<5x5x64x128xf32, #tpu.memory_space<vmem>>, vector<1x1x64x128xf32>
    %254 = vector.shape_cast %253 : vector<1x1x64x128xf32> to vector<64x128xf32>
    %255 = vector.broadcast %157 : f32 to vector<64x128xf32>
    %256 = arith.mulf %255, %254 : vector<64x128xf32>
    %257 = arith.addf %252, %256 : vector<64x128xf32>
    %c2_268 = arith.constant 2 : index
    %c3_269 = arith.constant 3 : index
    %c0_270 = arith.constant 0 : index
    %c0_271 = arith.constant 0 : index
    %258 = vector.load %arg7[%c2_268, %c3_269, %c0_270, %c0_271] : memref<5x5x64x128xf32, #tpu.memory_space<vmem>>, vector<1x1x64x128xf32>
    %259 = vector.shape_cast %258 : vector<1x1x64x128xf32> to vector<64x128xf32>
    %260 = vector.broadcast %158 : f32 to vector<64x128xf32>
    %261 = arith.mulf %260, %259 : vector<64x128xf32>
    %262 = arith.addf %257, %261 : vector<64x128xf32>
    %263 = arith.addf %234, %248 : vector<64x128xf32>
    %264 = arith.addf %263, %262 : vector<64x128xf32>
    %265 = arith.maximumf %220, %264 : vector<64x128xf32>
    %c0_272 = arith.constant 0 : index
    %c2_273 = arith.constant 2 : index
    %c0_274 = arith.constant 0 : index
    %c0_275 = arith.constant 0 : index
    %266 = vector.load %arg7[%c0_272, %c2_273, %c0_274, %c0_275] : memref<5x5x64x128xf32, #tpu.memory_space<vmem>>, vector<1x1x64x128xf32>
    %267 = vector.shape_cast %266 : vector<1x1x64x128xf32> to vector<64x128xf32>
    %268 = vector.broadcast %150 : f32 to vector<64x128xf32>
    %269 = arith.mulf %268, %267 : vector<64x128xf32>
    %c0_276 = arith.constant 0 : index
    %c3_277 = arith.constant 3 : index
    %c0_278 = arith.constant 0 : index
    %c0_279 = arith.constant 0 : index
    %270 = vector.load %arg7[%c0_276, %c3_277, %c0_278, %c0_279] : memref<5x5x64x128xf32, #tpu.memory_space<vmem>>, vector<1x1x64x128xf32>
    %271 = vector.shape_cast %270 : vector<1x1x64x128xf32> to vector<64x128xf32>
    %272 = vector.broadcast %151 : f32 to vector<64x128xf32>
    %273 = arith.mulf %272, %271 : vector<64x128xf32>
    %274 = arith.addf %269, %273 : vector<64x128xf32>
    %c0_280 = arith.constant 0 : index
    %c4_281 = arith.constant 4 : index
    %c0_282 = arith.constant 0 : index
    %c0_283 = arith.constant 0 : index
    %275 = vector.load %arg7[%c0_280, %c4_281, %c0_282, %c0_283] : memref<5x5x64x128xf32, #tpu.memory_space<vmem>>, vector<1x1x64x128xf32>
    %276 = vector.shape_cast %275 : vector<1x1x64x128xf32> to vector<64x128xf32>
    %277 = vector.broadcast %152 : f32 to vector<64x128xf32>
    %278 = arith.mulf %277, %276 : vector<64x128xf32>
    %279 = arith.addf %274, %278 : vector<64x128xf32>
    %c1_284 = arith.constant 1 : index
    %c2_285 = arith.constant 2 : index
    %c0_286 = arith.constant 0 : index
    %c0_287 = arith.constant 0 : index
    %280 = vector.load %arg7[%c1_284, %c2_285, %c0_286, %c0_287] : memref<5x5x64x128xf32, #tpu.memory_space<vmem>>, vector<1x1x64x128xf32>
    %281 = vector.shape_cast %280 : vector<1x1x64x128xf32> to vector<64x128xf32>
    %282 = vector.broadcast %153 : f32 to vector<64x128xf32>
    %283 = arith.mulf %282, %281 : vector<64x128xf32>
    %c1_288 = arith.constant 1 : index
    %c3_289 = arith.constant 3 : index
    %c0_290 = arith.constant 0 : index
    %c0_291 = arith.constant 0 : index
    %284 = vector.load %arg7[%c1_288, %c3_289, %c0_290, %c0_291] : memref<5x5x64x128xf32, #tpu.memory_space<vmem>>, vector<1x1x64x128xf32>
    %285 = vector.shape_cast %284 : vector<1x1x64x128xf32> to vector<64x128xf32>
    %286 = vector.broadcast %154 : f32 to vector<64x128xf32>
    %287 = arith.mulf %286, %285 : vector<64x128xf32>
    %288 = arith.addf %283, %287 : vector<64x128xf32>
    %c1_292 = arith.constant 1 : index
    %c4_293 = arith.constant 4 : index
    %c0_294 = arith.constant 0 : index
    %c0_295 = arith.constant 0 : index
    %289 = vector.load %arg7[%c1_292, %c4_293, %c0_294, %c0_295] : memref<5x5x64x128xf32, #tpu.memory_space<vmem>>, vector<1x1x64x128xf32>
    %290 = vector.shape_cast %289 : vector<1x1x64x128xf32> to vector<64x128xf32>
    %291 = vector.broadcast %155 : f32 to vector<64x128xf32>
    %292 = arith.mulf %291, %290 : vector<64x128xf32>
    %293 = arith.addf %288, %292 : vector<64x128xf32>
    %c2_296 = arith.constant 2 : index
    %c2_297 = arith.constant 2 : index
    %c0_298 = arith.constant 0 : index
    %c0_299 = arith.constant 0 : index
    %294 = vector.load %arg7[%c2_296, %c2_297, %c0_298, %c0_299] : memref<5x5x64x128xf32, #tpu.memory_space<vmem>>, vector<1x1x64x128xf32>
    %295 = vector.shape_cast %294 : vector<1x1x64x128xf32> to vector<64x128xf32>
    %296 = vector.broadcast %156 : f32 to vector<64x128xf32>
    %297 = arith.mulf %296, %295 : vector<64x128xf32>
    %c2_300 = arith.constant 2 : index
    %c3_301 = arith.constant 3 : index
    %c0_302 = arith.constant 0 : index
    %c0_303 = arith.constant 0 : index
    %298 = vector.load %arg7[%c2_300, %c3_301, %c0_302, %c0_303] : memref<5x5x64x128xf32, #tpu.memory_space<vmem>>, vector<1x1x64x128xf32>
    %299 = vector.shape_cast %298 : vector<1x1x64x128xf32> to vector<64x128xf32>
    %300 = vector.broadcast %157 : f32 to vector<64x128xf32>
    %301 = arith.mulf %300, %299 : vector<64x128xf32>
    %302 = arith.addf %297, %301 : vector<64x128xf32>
    %c2_304 = arith.constant 2 : index
    %c4_305 = arith.constant 4 : index
    %c0_306 = arith.constant 0 : index
    %c0_307 = arith.constant 0 : index
    %303 = vector.load %arg7[%c2_304, %c4_305, %c0_306, %c0_307] : memref<5x5x64x128xf32, #tpu.memory_space<vmem>>, vector<1x1x64x128xf32>
    %304 = vector.shape_cast %303 : vector<1x1x64x128xf32> to vector<64x128xf32>
    %305 = vector.broadcast %158 : f32 to vector<64x128xf32>
    %306 = arith.mulf %305, %304 : vector<64x128xf32>
    %307 = arith.addf %302, %306 : vector<64x128xf32>
    %308 = arith.addf %279, %293 : vector<64x128xf32>
    %309 = arith.addf %308, %307 : vector<64x128xf32>
    %310 = arith.maximumf %265, %309 : vector<64x128xf32>
    %c1_308 = arith.constant 1 : index
    %c0_309 = arith.constant 0 : index
    %c0_310 = arith.constant 0 : index
    %c0_311 = arith.constant 0 : index
    %311 = vector.load %arg7[%c1_308, %c0_309, %c0_310, %c0_311] : memref<5x5x64x128xf32, #tpu.memory_space<vmem>>, vector<1x1x64x128xf32>
    %312 = vector.shape_cast %311 : vector<1x1x64x128xf32> to vector<64x128xf32>
    %313 = vector.broadcast %150 : f32 to vector<64x128xf32>
    %314 = arith.mulf %313, %312 : vector<64x128xf32>
    %c1_312 = arith.constant 1 : index
    %c1_313 = arith.constant 1 : index
    %c0_314 = arith.constant 0 : index
    %c0_315 = arith.constant 0 : index
    %315 = vector.load %arg7[%c1_312, %c1_313, %c0_314, %c0_315] : memref<5x5x64x128xf32, #tpu.memory_space<vmem>>, vector<1x1x64x128xf32>
    %316 = vector.shape_cast %315 : vector<1x1x64x128xf32> to vector<64x128xf32>
    %317 = vector.broadcast %151 : f32 to vector<64x128xf32>
    %318 = arith.mulf %317, %316 : vector<64x128xf32>
    %319 = arith.addf %314, %318 : vector<64x128xf32>
    %c1_316 = arith.constant 1 : index
    %c2_317 = arith.constant 2 : index
    %c0_318 = arith.constant 0 : index
    %c0_319 = arith.constant 0 : index
    %320 = vector.load %arg7[%c1_316, %c2_317, %c0_318, %c0_319] : memref<5x5x64x128xf32, #tpu.memory_space<vmem>>, vector<1x1x64x128xf32>
    %321 = vector.shape_cast %320 : vector<1x1x64x128xf32> to vector<64x128xf32>
    %322 = vector.broadcast %152 : f32 to vector<64x128xf32>
    %323 = arith.mulf %322, %321 : vector<64x128xf32>
    %324 = arith.addf %319, %323 : vector<64x128xf32>
    %c2_320 = arith.constant 2 : index
    %c0_321 = arith.constant 0 : index
    %c0_322 = arith.constant 0 : index
    %c0_323 = arith.constant 0 : index
    %325 = vector.load %arg7[%c2_320, %c0_321, %c0_322, %c0_323] : memref<5x5x64x128xf32, #tpu.memory_space<vmem>>, vector<1x1x64x128xf32>
    %326 = vector.shape_cast %325 : vector<1x1x64x128xf32> to vector<64x128xf32>
    %327 = vector.broadcast %153 : f32 to vector<64x128xf32>
    %328 = arith.mulf %327, %326 : vector<64x128xf32>
    %c2_324 = arith.constant 2 : index
    %c1_325 = arith.constant 1 : index
    %c0_326 = arith.constant 0 : index
    %c0_327 = arith.constant 0 : index
    %329 = vector.load %arg7[%c2_324, %c1_325, %c0_326, %c0_327] : memref<5x5x64x128xf32, #tpu.memory_space<vmem>>, vector<1x1x64x128xf32>
    %330 = vector.shape_cast %329 : vector<1x1x64x128xf32> to vector<64x128xf32>
    %331 = vector.broadcast %154 : f32 to vector<64x128xf32>
    %332 = arith.mulf %331, %330 : vector<64x128xf32>
    %333 = arith.addf %328, %332 : vector<64x128xf32>
    %c2_328 = arith.constant 2 : index
    %c2_329 = arith.constant 2 : index
    %c0_330 = arith.constant 0 : index
    %c0_331 = arith.constant 0 : index
    %334 = vector.load %arg7[%c2_328, %c2_329, %c0_330, %c0_331] : memref<5x5x64x128xf32, #tpu.memory_space<vmem>>, vector<1x1x64x128xf32>
    %335 = vector.shape_cast %334 : vector<1x1x64x128xf32> to vector<64x128xf32>
    %336 = vector.broadcast %155 : f32 to vector<64x128xf32>
    %337 = arith.mulf %336, %335 : vector<64x128xf32>
    %338 = arith.addf %333, %337 : vector<64x128xf32>
    %c3_332 = arith.constant 3 : index
    %c0_333 = arith.constant 0 : index
    %c0_334 = arith.constant 0 : index
    %c0_335 = arith.constant 0 : index
    %339 = vector.load %arg7[%c3_332, %c0_333, %c0_334, %c0_335] : memref<5x5x64x128xf32, #tpu.memory_space<vmem>>, vector<1x1x64x128xf32>
    %340 = vector.shape_cast %339 : vector<1x1x64x128xf32> to vector<64x128xf32>
    %341 = vector.broadcast %156 : f32 to vector<64x128xf32>
    %342 = arith.mulf %341, %340 : vector<64x128xf32>
    %c3_336 = arith.constant 3 : index
    %c1_337 = arith.constant 1 : index
    %c0_338 = arith.constant 0 : index
    %c0_339 = arith.constant 0 : index
    %343 = vector.load %arg7[%c3_336, %c1_337, %c0_338, %c0_339] : memref<5x5x64x128xf32, #tpu.memory_space<vmem>>, vector<1x1x64x128xf32>
    %344 = vector.shape_cast %343 : vector<1x1x64x128xf32> to vector<64x128xf32>
    %345 = vector.broadcast %157 : f32 to vector<64x128xf32>
    %346 = arith.mulf %345, %344 : vector<64x128xf32>
    %347 = arith.addf %342, %346 : vector<64x128xf32>
    %c3_340 = arith.constant 3 : index
    %c2_341 = arith.constant 2 : index
    %c0_342 = arith.constant 0 : index
    %c0_343 = arith.constant 0 : index
    %348 = vector.load %arg7[%c3_340, %c2_341, %c0_342, %c0_343] : memref<5x5x64x128xf32, #tpu.memory_space<vmem>>, vector<1x1x64x128xf32>
    %349 = vector.shape_cast %348 : vector<1x1x64x128xf32> to vector<64x128xf32>
    %350 = vector.broadcast %158 : f32 to vector<64x128xf32>
    %351 = arith.mulf %350, %349 : vector<64x128xf32>
    %352 = arith.addf %347, %351 : vector<64x128xf32>
    %353 = arith.addf %324, %338 : vector<64x128xf32>
    %354 = arith.addf %353, %352 : vector<64x128xf32>
    %355 = arith.maximumf %310, %354 : vector<64x128xf32>
    %c1_344 = arith.constant 1 : index
    %c1_345 = arith.constant 1 : index
    %c0_346 = arith.constant 0 : index
    %c0_347 = arith.constant 0 : index
    %356 = vector.load %arg7[%c1_344, %c1_345, %c0_346, %c0_347] : memref<5x5x64x128xf32, #tpu.memory_space<vmem>>, vector<1x1x64x128xf32>
    %357 = vector.shape_cast %356 : vector<1x1x64x128xf32> to vector<64x128xf32>
    %358 = vector.broadcast %150 : f32 to vector<64x128xf32>
    %359 = arith.mulf %358, %357 : vector<64x128xf32>
    %c1_348 = arith.constant 1 : index
    %c2_349 = arith.constant 2 : index
    %c0_350 = arith.constant 0 : index
    %c0_351 = arith.constant 0 : index
    %360 = vector.load %arg7[%c1_348, %c2_349, %c0_350, %c0_351] : memref<5x5x64x128xf32, #tpu.memory_space<vmem>>, vector<1x1x64x128xf32>
    %361 = vector.shape_cast %360 : vector<1x1x64x128xf32> to vector<64x128xf32>
    %362 = vector.broadcast %151 : f32 to vector<64x128xf32>
    %363 = arith.mulf %362, %361 : vector<64x128xf32>
    %364 = arith.addf %359, %363 : vector<64x128xf32>
    %c1_352 = arith.constant 1 : index
    %c3_353 = arith.constant 3 : index
    %c0_354 = arith.constant 0 : index
    %c0_355 = arith.constant 0 : index
    %365 = vector.load %arg7[%c1_352, %c3_353, %c0_354, %c0_355] : memref<5x5x64x128xf32, #tpu.memory_space<vmem>>, vector<1x1x64x128xf32>
    %366 = vector.shape_cast %365 : vector<1x1x64x128xf32> to vector<64x128xf32>
    %367 = vector.broadcast %152 : f32 to vector<64x128xf32>
    %368 = arith.mulf %367, %366 : vector<64x128xf32>
    %369 = arith.addf %364, %368 : vector<64x128xf32>
    %c2_356 = arith.constant 2 : index
    %c1_357 = arith.constant 1 : index
    %c0_358 = arith.constant 0 : index
    %c0_359 = arith.constant 0 : index
    %370 = vector.load %arg7[%c2_356, %c1_357, %c0_358, %c0_359] : memref<5x5x64x128xf32, #tpu.memory_space<vmem>>, vector<1x1x64x128xf32>
    %371 = vector.shape_cast %370 : vector<1x1x64x128xf32> to vector<64x128xf32>
    %372 = vector.broadcast %153 : f32 to vector<64x128xf32>
    %373 = arith.mulf %372, %371 : vector<64x128xf32>
    %c2_360 = arith.constant 2 : index
    %c2_361 = arith.constant 2 : index
    %c0_362 = arith.constant 0 : index
    %c0_363 = arith.constant 0 : index
    %374 = vector.load %arg7[%c2_360, %c2_361, %c0_362, %c0_363] : memref<5x5x64x128xf32, #tpu.memory_space<vmem>>, vector<1x1x64x128xf32>
    %375 = vector.shape_cast %374 : vector<1x1x64x128xf32> to vector<64x128xf32>
    %376 = vector.broadcast %154 : f32 to vector<64x128xf32>
    %377 = arith.mulf %376, %375 : vector<64x128xf32>
    %378 = arith.addf %373, %377 : vector<64x128xf32>
    %c2_364 = arith.constant 2 : index
    %c3_365 = arith.constant 3 : index
    %c0_366 = arith.constant 0 : index
    %c0_367 = arith.constant 0 : index
    %379 = vector.load %arg7[%c2_364, %c3_365, %c0_366, %c0_367] : memref<5x5x64x128xf32, #tpu.memory_space<vmem>>, vector<1x1x64x128xf32>
    %380 = vector.shape_cast %379 : vector<1x1x64x128xf32> to vector<64x128xf32>
    %381 = vector.broadcast %155 : f32 to vector<64x128xf32>
    %382 = arith.mulf %381, %380 : vector<64x128xf32>
    %383 = arith.addf %378, %382 : vector<64x128xf32>
    %c3_368 = arith.constant 3 : index
    %c1_369 = arith.constant 1 : index
    %c0_370 = arith.constant 0 : index
    %c0_371 = arith.constant 0 : index
    %384 = vector.load %arg7[%c3_368, %c1_369, %c0_370, %c0_371] : memref<5x5x64x128xf32, #tpu.memory_space<vmem>>, vector<1x1x64x128xf32>
    %385 = vector.shape_cast %384 : vector<1x1x64x128xf32> to vector<64x128xf32>
    %386 = vector.broadcast %156 : f32 to vector<64x128xf32>
    %387 = arith.mulf %386, %385 : vector<64x128xf32>
    %c3_372 = arith.constant 3 : index
    %c2_373 = arith.constant 2 : index
    %c0_374 = arith.constant 0 : index
    %c0_375 = arith.constant 0 : index
    %388 = vector.load %arg7[%c3_372, %c2_373, %c0_374, %c0_375] : memref<5x5x64x128xf32, #tpu.memory_space<vmem>>, vector<1x1x64x128xf32>
    %389 = vector.shape_cast %388 : vector<1x1x64x128xf32> to vector<64x128xf32>
    %390 = vector.broadcast %157 : f32 to vector<64x128xf32>
    %391 = arith.mulf %390, %389 : vector<64x128xf32>
    %392 = arith.addf %387, %391 : vector<64x128xf32>
    %c3_376 = arith.constant 3 : index
    %c3_377 = arith.constant 3 : index
    %c0_378 = arith.constant 0 : index
    %c0_379 = arith.constant 0 : index
    %393 = vector.load %arg7[%c3_376, %c3_377, %c0_378, %c0_379] : memref<5x5x64x128xf32, #tpu.memory_space<vmem>>, vector<1x1x64x128xf32>
    %394 = vector.shape_cast %393 : vector<1x1x64x128xf32> to vector<64x128xf32>
    %395 = vector.broadcast %158 : f32 to vector<64x128xf32>
    %396 = arith.mulf %395, %394 : vector<64x128xf32>
    %397 = arith.addf %392, %396 : vector<64x128xf32>
    %398 = arith.addf %369, %383 : vector<64x128xf32>
    %399 = arith.addf %398, %397 : vector<64x128xf32>
    %400 = arith.maximumf %355, %399 : vector<64x128xf32>
    %c1_380 = arith.constant 1 : index
    %c2_381 = arith.constant 2 : index
    %c0_382 = arith.constant 0 : index
    %c0_383 = arith.constant 0 : index
    %401 = vector.load %arg7[%c1_380, %c2_381, %c0_382, %c0_383] : memref<5x5x64x128xf32, #tpu.memory_space<vmem>>, vector<1x1x64x128xf32>
    %402 = vector.shape_cast %401 : vector<1x1x64x128xf32> to vector<64x128xf32>
    %403 = vector.broadcast %150 : f32 to vector<64x128xf32>
    %404 = arith.mulf %403, %402 : vector<64x128xf32>
    %c1_384 = arith.constant 1 : index
    %c3_385 = arith.constant 3 : index
    %c0_386 = arith.constant 0 : index
    %c0_387 = arith.constant 0 : index
    %405 = vector.load %arg7[%c1_384, %c3_385, %c0_386, %c0_387] : memref<5x5x64x128xf32, #tpu.memory_space<vmem>>, vector<1x1x64x128xf32>
    %406 = vector.shape_cast %405 : vector<1x1x64x128xf32> to vector<64x128xf32>
    %407 = vector.broadcast %151 : f32 to vector<64x128xf32>
    %408 = arith.mulf %407, %406 : vector<64x128xf32>
    %409 = arith.addf %404, %408 : vector<64x128xf32>
    %c1_388 = arith.constant 1 : index
    %c4_389 = arith.constant 4 : index
    %c0_390 = arith.constant 0 : index
    %c0_391 = arith.constant 0 : index
    %410 = vector.load %arg7[%c1_388, %c4_389, %c0_390, %c0_391] : memref<5x5x64x128xf32, #tpu.memory_space<vmem>>, vector<1x1x64x128xf32>
    %411 = vector.shape_cast %410 : vector<1x1x64x128xf32> to vector<64x128xf32>
    %412 = vector.broadcast %152 : f32 to vector<64x128xf32>
    %413 = arith.mulf %412, %411 : vector<64x128xf32>
    %414 = arith.addf %409, %413 : vector<64x128xf32>
    %c2_392 = arith.constant 2 : index
    %c2_393 = arith.constant 2 : index
    %c0_394 = arith.constant 0 : index
    %c0_395 = arith.constant 0 : index
    %415 = vector.load %arg7[%c2_392, %c2_393, %c0_394, %c0_395] : memref<5x5x64x128xf32, #tpu.memory_space<vmem>>, vector<1x1x64x128xf32>
    %416 = vector.shape_cast %415 : vector<1x1x64x128xf32> to vector<64x128xf32>
    %417 = vector.broadcast %153 : f32 to vector<64x128xf32>
    %418 = arith.mulf %417, %416 : vector<64x128xf32>
    %c2_396 = arith.constant 2 : index
    %c3_397 = arith.constant 3 : index
    %c0_398 = arith.constant 0 : index
    %c0_399 = arith.constant 0 : index
    %419 = vector.load %arg7[%c2_396, %c3_397, %c0_398, %c0_399] : memref<5x5x64x128xf32, #tpu.memory_space<vmem>>, vector<1x1x64x128xf32>
    %420 = vector.shape_cast %419 : vector<1x1x64x128xf32> to vector<64x128xf32>
    %421 = vector.broadcast %154 : f32 to vector<64x128xf32>
    %422 = arith.mulf %421, %420 : vector<64x128xf32>
    %423 = arith.addf %418, %422 : vector<64x128xf32>
    %c2_400 = arith.constant 2 : index
    %c4_401 = arith.constant 4 : index
    %c0_402 = arith.constant 0 : index
    %c0_403 = arith.constant 0 : index
    %424 = vector.load %arg7[%c2_400, %c4_401, %c0_402, %c0_403] : memref<5x5x64x128xf32, #tpu.memory_space<vmem>>, vector<1x1x64x128xf32>
    %425 = vector.shape_cast %424 : vector<1x1x64x128xf32> to vector<64x128xf32>
    %426 = vector.broadcast %155 : f32 to vector<64x128xf32>
    %427 = arith.mulf %426, %425 : vector<64x128xf32>
    %428 = arith.addf %423, %427 : vector<64x128xf32>
    %c3_404 = arith.constant 3 : index
    %c2_405 = arith.constant 2 : index
    %c0_406 = arith.constant 0 : index
    %c0_407 = arith.constant 0 : index
    %429 = vector.load %arg7[%c3_404, %c2_405, %c0_406, %c0_407] : memref<5x5x64x128xf32, #tpu.memory_space<vmem>>, vector<1x1x64x128xf32>
    %430 = vector.shape_cast %429 : vector<1x1x64x128xf32> to vector<64x128xf32>
    %431 = vector.broadcast %156 : f32 to vector<64x128xf32>
    %432 = arith.mulf %431, %430 : vector<64x128xf32>
    %c3_408 = arith.constant 3 : index
    %c3_409 = arith.constant 3 : index
    %c0_410 = arith.constant 0 : index
    %c0_411 = arith.constant 0 : index
    %433 = vector.load %arg7[%c3_408, %c3_409, %c0_410, %c0_411] : memref<5x5x64x128xf32, #tpu.memory_space<vmem>>, vector<1x1x64x128xf32>
    %434 = vector.shape_cast %433 : vector<1x1x64x128xf32> to vector<64x128xf32>
    %435 = vector.broadcast %157 : f32 to vector<64x128xf32>
    %436 = arith.mulf %435, %434 : vector<64x128xf32>
    %437 = arith.addf %432, %436 : vector<64x128xf32>
    %c3_412 = arith.constant 3 : index
    %c4_413 = arith.constant 4 : index
    %c0_414 = arith.constant 0 : index
    %c0_415 = arith.constant 0 : index
    %438 = vector.load %arg7[%c3_412, %c4_413, %c0_414, %c0_415] : memref<5x5x64x128xf32, #tpu.memory_space<vmem>>, vector<1x1x64x128xf32>
    %439 = vector.shape_cast %438 : vector<1x1x64x128xf32> to vector<64x128xf32>
    %440 = vector.broadcast %158 : f32 to vector<64x128xf32>
    %441 = arith.mulf %440, %439 : vector<64x128xf32>
    %442 = arith.addf %437, %441 : vector<64x128xf32>
    %443 = arith.addf %414, %428 : vector<64x128xf32>
    %444 = arith.addf %443, %442 : vector<64x128xf32>
    %445 = arith.maximumf %400, %444 : vector<64x128xf32>
    %c2_416 = arith.constant 2 : index
    %c0_417 = arith.constant 0 : index
    %c0_418 = arith.constant 0 : index
    %c0_419 = arith.constant 0 : index
    %446 = vector.load %arg7[%c2_416, %c0_417, %c0_418, %c0_419] : memref<5x5x64x128xf32, #tpu.memory_space<vmem>>, vector<1x1x64x128xf32>
    %447 = vector.shape_cast %446 : vector<1x1x64x128xf32> to vector<64x128xf32>
    %448 = vector.broadcast %150 : f32 to vector<64x128xf32>
    %449 = arith.mulf %448, %447 : vector<64x128xf32>
    %c2_420 = arith.constant 2 : index
    %c1_421 = arith.constant 1 : index
    %c0_422 = arith.constant 0 : index
    %c0_423 = arith.constant 0 : index
    %450 = vector.load %arg7[%c2_420, %c1_421, %c0_422, %c0_423] : memref<5x5x64x128xf32, #tpu.memory_space<vmem>>, vector<1x1x64x128xf32>
    %451 = vector.shape_cast %450 : vector<1x1x64x128xf32> to vector<64x128xf32>
    %452 = vector.broadcast %151 : f32 to vector<64x128xf32>
    %453 = arith.mulf %452, %451 : vector<64x128xf32>
    %454 = arith.addf %449, %453 : vector<64x128xf32>
    %c2_424 = arith.constant 2 : index
    %c2_425 = arith.constant 2 : index
    %c0_426 = arith.constant 0 : index
    %c0_427 = arith.constant 0 : index
    %455 = vector.load %arg7[%c2_424, %c2_425, %c0_426, %c0_427] : memref<5x5x64x128xf32, #tpu.memory_space<vmem>>, vector<1x1x64x128xf32>
    %456 = vector.shape_cast %455 : vector<1x1x64x128xf32> to vector<64x128xf32>
    %457 = vector.broadcast %152 : f32 to vector<64x128xf32>
    %458 = arith.mulf %457, %456 : vector<64x128xf32>
    %459 = arith.addf %454, %458 : vector<64x128xf32>
    %c3_428 = arith.constant 3 : index
    %c0_429 = arith.constant 0 : index
    %c0_430 = arith.constant 0 : index
    %c0_431 = arith.constant 0 : index
    %460 = vector.load %arg7[%c3_428, %c0_429, %c0_430, %c0_431] : memref<5x5x64x128xf32, #tpu.memory_space<vmem>>, vector<1x1x64x128xf32>
    %461 = vector.shape_cast %460 : vector<1x1x64x128xf32> to vector<64x128xf32>
    %462 = vector.broadcast %153 : f32 to vector<64x128xf32>
    %463 = arith.mulf %462, %461 : vector<64x128xf32>
    %c3_432 = arith.constant 3 : index
    %c1_433 = arith.constant 1 : index
    %c0_434 = arith.constant 0 : index
    %c0_435 = arith.constant 0 : index
    %464 = vector.load %arg7[%c3_432, %c1_433, %c0_434, %c0_435] : memref<5x5x64x128xf32, #tpu.memory_space<vmem>>, vector<1x1x64x128xf32>
    %465 = vector.shape_cast %464 : vector<1x1x64x128xf32> to vector<64x128xf32>
    %466 = vector.broadcast %154 : f32 to vector<64x128xf32>
    %467 = arith.mulf %466, %465 : vector<64x128xf32>
    %468 = arith.addf %463, %467 : vector<64x128xf32>
    %c3_436 = arith.constant 3 : index
    %c2_437 = arith.constant 2 : index
    %c0_438 = arith.constant 0 : index
    %c0_439 = arith.constant 0 : index
    %469 = vector.load %arg7[%c3_436, %c2_437, %c0_438, %c0_439] : memref<5x5x64x128xf32, #tpu.memory_space<vmem>>, vector<1x1x64x128xf32>
    %470 = vector.shape_cast %469 : vector<1x1x64x128xf32> to vector<64x128xf32>
    %471 = vector.broadcast %155 : f32 to vector<64x128xf32>
    %472 = arith.mulf %471, %470 : vector<64x128xf32>
    %473 = arith.addf %468, %472 : vector<64x128xf32>
    %c4_440 = arith.constant 4 : index
    %c0_441 = arith.constant 0 : index
    %c0_442 = arith.constant 0 : index
    %c0_443 = arith.constant 0 : index
    %474 = vector.load %arg7[%c4_440, %c0_441, %c0_442, %c0_443] : memref<5x5x64x128xf32, #tpu.memory_space<vmem>>, vector<1x1x64x128xf32>
    %475 = vector.shape_cast %474 : vector<1x1x64x128xf32> to vector<64x128xf32>
    %476 = vector.broadcast %156 : f32 to vector<64x128xf32>
    %477 = arith.mulf %476, %475 : vector<64x128xf32>
    %c4_444 = arith.constant 4 : index
    %c1_445 = arith.constant 1 : index
    %c0_446 = arith.constant 0 : index
    %c0_447 = arith.constant 0 : index
    %478 = vector.load %arg7[%c4_444, %c1_445, %c0_446, %c0_447] : memref<5x5x64x128xf32, #tpu.memory_space<vmem>>, vector<1x1x64x128xf32>
    %479 = vector.shape_cast %478 : vector<1x1x64x128xf32> to vector<64x128xf32>
    %480 = vector.broadcast %157 : f32 to vector<64x128xf32>
    %481 = arith.mulf %480, %479 : vector<64x128xf32>
    %482 = arith.addf %477, %481 : vector<64x128xf32>
    %c4_448 = arith.constant 4 : index
    %c2_449 = arith.constant 2 : index
    %c0_450 = arith.constant 0 : index
    %c0_451 = arith.constant 0 : index
    %483 = vector.load %arg7[%c4_448, %c2_449, %c0_450, %c0_451] : memref<5x5x64x128xf32, #tpu.memory_space<vmem>>, vector<1x1x64x128xf32>
    %484 = vector.shape_cast %483 : vector<1x1x64x128xf32> to vector<64x128xf32>
    %485 = vector.broadcast %158 : f32 to vector<64x128xf32>
    %486 = arith.mulf %485, %484 : vector<64x128xf32>
    %487 = arith.addf %482, %486 : vector<64x128xf32>
    %488 = arith.addf %459, %473 : vector<64x128xf32>
    %489 = arith.addf %488, %487 : vector<64x128xf32>
    %490 = arith.maximumf %445, %489 : vector<64x128xf32>
    %c2_452 = arith.constant 2 : index
    %c1_453 = arith.constant 1 : index
    %c0_454 = arith.constant 0 : index
    %c0_455 = arith.constant 0 : index
    %491 = vector.load %arg7[%c2_452, %c1_453, %c0_454, %c0_455] : memref<5x5x64x128xf32, #tpu.memory_space<vmem>>, vector<1x1x64x128xf32>
    %492 = vector.shape_cast %491 : vector<1x1x64x128xf32> to vector<64x128xf32>
    %493 = vector.broadcast %150 : f32 to vector<64x128xf32>
    %494 = arith.mulf %493, %492 : vector<64x128xf32>
    %c2_456 = arith.constant 2 : index
    %c2_457 = arith.constant 2 : index
    %c0_458 = arith.constant 0 : index
    %c0_459 = arith.constant 0 : index
    %495 = vector.load %arg7[%c2_456, %c2_457, %c0_458, %c0_459] : memref<5x5x64x128xf32, #tpu.memory_space<vmem>>, vector<1x1x64x128xf32>
    %496 = vector.shape_cast %495 : vector<1x1x64x128xf32> to vector<64x128xf32>
    %497 = vector.broadcast %151 : f32 to vector<64x128xf32>
    %498 = arith.mulf %497, %496 : vector<64x128xf32>
    %499 = arith.addf %494, %498 : vector<64x128xf32>
    %c2_460 = arith.constant 2 : index
    %c3_461 = arith.constant 3 : index
    %c0_462 = arith.constant 0 : index
    %c0_463 = arith.constant 0 : index
    %500 = vector.load %arg7[%c2_460, %c3_461, %c0_462, %c0_463] : memref<5x5x64x128xf32, #tpu.memory_space<vmem>>, vector<1x1x64x128xf32>
    %501 = vector.shape_cast %500 : vector<1x1x64x128xf32> to vector<64x128xf32>
    %502 = vector.broadcast %152 : f32 to vector<64x128xf32>
    %503 = arith.mulf %502, %501 : vector<64x128xf32>
    %504 = arith.addf %499, %503 : vector<64x128xf32>
    %c3_464 = arith.constant 3 : index
    %c1_465 = arith.constant 1 : index
    %c0_466 = arith.constant 0 : index
    %c0_467 = arith.constant 0 : index
    %505 = vector.load %arg7[%c3_464, %c1_465, %c0_466, %c0_467] : memref<5x5x64x128xf32, #tpu.memory_space<vmem>>, vector<1x1x64x128xf32>
    %506 = vector.shape_cast %505 : vector<1x1x64x128xf32> to vector<64x128xf32>
    %507 = vector.broadcast %153 : f32 to vector<64x128xf32>
    %508 = arith.mulf %507, %506 : vector<64x128xf32>
    %c3_468 = arith.constant 3 : index
    %c2_469 = arith.constant 2 : index
    %c0_470 = arith.constant 0 : index
    %c0_471 = arith.constant 0 : index
    %509 = vector.load %arg7[%c3_468, %c2_469, %c0_470, %c0_471] : memref<5x5x64x128xf32, #tpu.memory_space<vmem>>, vector<1x1x64x128xf32>
    %510 = vector.shape_cast %509 : vector<1x1x64x128xf32> to vector<64x128xf32>
    %511 = vector.broadcast %154 : f32 to vector<64x128xf32>
    %512 = arith.mulf %511, %510 : vector<64x128xf32>
    %513 = arith.addf %508, %512 : vector<64x128xf32>
    %c3_472 = arith.constant 3 : index
    %c3_473 = arith.constant 3 : index
    %c0_474 = arith.constant 0 : index
    %c0_475 = arith.constant 0 : index
    %514 = vector.load %arg7[%c3_472, %c3_473, %c0_474, %c0_475] : memref<5x5x64x128xf32, #tpu.memory_space<vmem>>, vector<1x1x64x128xf32>
    %515 = vector.shape_cast %514 : vector<1x1x64x128xf32> to vector<64x128xf32>
    %516 = vector.broadcast %155 : f32 to vector<64x128xf32>
    %517 = arith.mulf %516, %515 : vector<64x128xf32>
    %518 = arith.addf %513, %517 : vector<64x128xf32>
    %c4_476 = arith.constant 4 : index
    %c1_477 = arith.constant 1 : index
    %c0_478 = arith.constant 0 : index
    %c0_479 = arith.constant 0 : index
    %519 = vector.load %arg7[%c4_476, %c1_477, %c0_478, %c0_479] : memref<5x5x64x128xf32, #tpu.memory_space<vmem>>, vector<1x1x64x128xf32>
    %520 = vector.shape_cast %519 : vector<1x1x64x128xf32> to vector<64x128xf32>
    %521 = vector.broadcast %156 : f32 to vector<64x128xf32>
    %522 = arith.mulf %521, %520 : vector<64x128xf32>
    %c4_480 = arith.constant 4 : index
    %c2_481 = arith.constant 2 : index
    %c0_482 = arith.constant 0 : index
    %c0_483 = arith.constant 0 : index
    %523 = vector.load %arg7[%c4_480, %c2_481, %c0_482, %c0_483] : memref<5x5x64x128xf32, #tpu.memory_space<vmem>>, vector<1x1x64x128xf32>
    %524 = vector.shape_cast %523 : vector<1x1x64x128xf32> to vector<64x128xf32>
    %525 = vector.broadcast %157 : f32 to vector<64x128xf32>
    %526 = arith.mulf %525, %524 : vector<64x128xf32>
    %527 = arith.addf %522, %526 : vector<64x128xf32>
    %c4_484 = arith.constant 4 : index
    %c3_485 = arith.constant 3 : index
    %c0_486 = arith.constant 0 : index
    %c0_487 = arith.constant 0 : index
    %528 = vector.load %arg7[%c4_484, %c3_485, %c0_486, %c0_487] : memref<5x5x64x128xf32, #tpu.memory_space<vmem>>, vector<1x1x64x128xf32>
    %529 = vector.shape_cast %528 : vector<1x1x64x128xf32> to vector<64x128xf32>
    %530 = vector.broadcast %158 : f32 to vector<64x128xf32>
    %531 = arith.mulf %530, %529 : vector<64x128xf32>
    %532 = arith.addf %527, %531 : vector<64x128xf32>
    %533 = arith.addf %504, %518 : vector<64x128xf32>
    %534 = arith.addf %533, %532 : vector<64x128xf32>
    %535 = arith.maximumf %490, %534 : vector<64x128xf32>
    %c2_488 = arith.constant 2 : index
    %c2_489 = arith.constant 2 : index
    %c0_490 = arith.constant 0 : index
    %c0_491 = arith.constant 0 : index
    %536 = vector.load %arg7[%c2_488, %c2_489, %c0_490, %c0_491] : memref<5x5x64x128xf32, #tpu.memory_space<vmem>>, vector<1x1x64x128xf32>
    %537 = vector.shape_cast %536 : vector<1x1x64x128xf32> to vector<64x128xf32>
    %538 = vector.broadcast %150 : f32 to vector<64x128xf32>
    %539 = arith.mulf %538, %537 : vector<64x128xf32>
    %c2_492 = arith.constant 2 : index
    %c3_493 = arith.constant 3 : index
    %c0_494 = arith.constant 0 : index
    %c0_495 = arith.constant 0 : index
    %540 = vector.load %arg7[%c2_492, %c3_493, %c0_494, %c0_495] : memref<5x5x64x128xf32, #tpu.memory_space<vmem>>, vector<1x1x64x128xf32>
    %541 = vector.shape_cast %540 : vector<1x1x64x128xf32> to vector<64x128xf32>
    %542 = vector.broadcast %151 : f32 to vector<64x128xf32>
    %543 = arith.mulf %542, %541 : vector<64x128xf32>
    %544 = arith.addf %539, %543 : vector<64x128xf32>
    %c2_496 = arith.constant 2 : index
    %c4_497 = arith.constant 4 : index
    %c0_498 = arith.constant 0 : index
    %c0_499 = arith.constant 0 : index
    %545 = vector.load %arg7[%c2_496, %c4_497, %c0_498, %c0_499] : memref<5x5x64x128xf32, #tpu.memory_space<vmem>>, vector<1x1x64x128xf32>
    %546 = vector.shape_cast %545 : vector<1x1x64x128xf32> to vector<64x128xf32>
    %547 = vector.broadcast %152 : f32 to vector<64x128xf32>
    %548 = arith.mulf %547, %546 : vector<64x128xf32>
    %549 = arith.addf %544, %548 : vector<64x128xf32>
    %c3_500 = arith.constant 3 : index
    %c2_501 = arith.constant 2 : index
    %c0_502 = arith.constant 0 : index
    %c0_503 = arith.constant 0 : index
    %550 = vector.load %arg7[%c3_500, %c2_501, %c0_502, %c0_503] : memref<5x5x64x128xf32, #tpu.memory_space<vmem>>, vector<1x1x64x128xf32>
    %551 = vector.shape_cast %550 : vector<1x1x64x128xf32> to vector<64x128xf32>
    %552 = vector.broadcast %153 : f32 to vector<64x128xf32>
    %553 = arith.mulf %552, %551 : vector<64x128xf32>
    %c3_504 = arith.constant 3 : index
    %c3_505 = arith.constant 3 : index
    %c0_506 = arith.constant 0 : index
    %c0_507 = arith.constant 0 : index
    %554 = vector.load %arg7[%c3_504, %c3_505, %c0_506, %c0_507] : memref<5x5x64x128xf32, #tpu.memory_space<vmem>>, vector<1x1x64x128xf32>
    %555 = vector.shape_cast %554 : vector<1x1x64x128xf32> to vector<64x128xf32>
    %556 = vector.broadcast %154 : f32 to vector<64x128xf32>
    %557 = arith.mulf %556, %555 : vector<64x128xf32>
    %558 = arith.addf %553, %557 : vector<64x128xf32>
    %c3_508 = arith.constant 3 : index
    %c4_509 = arith.constant 4 : index
    %c0_510 = arith.constant 0 : index
    %c0_511 = arith.constant 0 : index
    %559 = vector.load %arg7[%c3_508, %c4_509, %c0_510, %c0_511] : memref<5x5x64x128xf32, #tpu.memory_space<vmem>>, vector<1x1x64x128xf32>
    %560 = vector.shape_cast %559 : vector<1x1x64x128xf32> to vector<64x128xf32>
    %561 = vector.broadcast %155 : f32 to vector<64x128xf32>
    %562 = arith.mulf %561, %560 : vector<64x128xf32>
    %563 = arith.addf %558, %562 : vector<64x128xf32>
    %c4_512 = arith.constant 4 : index
    %c2_513 = arith.constant 2 : index
    %c0_514 = arith.constant 0 : index
    %c0_515 = arith.constant 0 : index
    %564 = vector.load %arg7[%c4_512, %c2_513, %c0_514, %c0_515] : memref<5x5x64x128xf32, #tpu.memory_space<vmem>>, vector<1x1x64x128xf32>
    %565 = vector.shape_cast %564 : vector<1x1x64x128xf32> to vector<64x128xf32>
    %566 = vector.broadcast %156 : f32 to vector<64x128xf32>
    %567 = arith.mulf %566, %565 : vector<64x128xf32>
    %c4_516 = arith.constant 4 : index
    %c3_517 = arith.constant 3 : index
    %c0_518 = arith.constant 0 : index
    %c0_519 = arith.constant 0 : index
    %568 = vector.load %arg7[%c4_516, %c3_517, %c0_518, %c0_519] : memref<5x5x64x128xf32, #tpu.memory_space<vmem>>, vector<1x1x64x128xf32>
    %569 = vector.shape_cast %568 : vector<1x1x64x128xf32> to vector<64x128xf32>
    %570 = vector.broadcast %157 : f32 to vector<64x128xf32>
    %571 = arith.mulf %570, %569 : vector<64x128xf32>
    %572 = arith.addf %567, %571 : vector<64x128xf32>
    %c4_520 = arith.constant 4 : index
    %c4_521 = arith.constant 4 : index
    %c0_522 = arith.constant 0 : index
    %c0_523 = arith.constant 0 : index
    %573 = vector.load %arg7[%c4_520, %c4_521, %c0_522, %c0_523] : memref<5x5x64x128xf32, #tpu.memory_space<vmem>>, vector<1x1x64x128xf32>
    %574 = vector.shape_cast %573 : vector<1x1x64x128xf32> to vector<64x128xf32>
    %575 = vector.broadcast %158 : f32 to vector<64x128xf32>
    %576 = arith.mulf %575, %574 : vector<64x128xf32>
    %577 = arith.addf %572, %576 : vector<64x128xf32>
    %578 = arith.addf %549, %563 : vector<64x128xf32>
    %579 = arith.addf %578, %577 : vector<64x128xf32>
    %580 = arith.maximumf %535, %579 : vector<64x128xf32>
    %c0_524 = arith.constant 0 : index
    %581 = memref.load %arg2[%c0_524] : memref<3xf32, #tpu.memory_space<smem>>
    %582 = vector.broadcast %581 : f32 to vector<64x128xf32>
    %583 = arith.addf %580, %582 : vector<64x128xf32>
    %cst = arith.constant 0.000000e+00 : f32
    %584 = vector.broadcast %cst : f32 to vector<64x128xf32>
    %585 = arith.maximumf %583, %584 : vector<64x128xf32>
    %c0_525 = arith.constant 0 : index
    %c0_526 = arith.constant 0 : index
    %c0_527 = arith.constant 0 : index
    %586 = vector.load %arg4[%c0_525, %c0_526, %c0_527] : memref<3x10x64xf32, #tpu.memory_space<vmem>>, vector<1x10x64xf32>
    %587 = vector.shape_cast %586 : vector<1x10x64xf32> to vector<10x64xf32>
    %cst_528 = arith.constant dense<0.000000e+00> : vector<10x128xf32>
    %588 = tpu.matmul %587, %585, %cst_528 {dimension_numbers = #tpu.dot_dimension_numbers<[1], [0], [0], [1], [0, 0, 1, 1], [], []>} : vector<10x64xf32>, vector<64x128xf32>, vector<10x128xf32> -> vector<10x128xf32>
    %c0_529 = arith.constant 0 : index
    %c0_530 = arith.constant 0 : index
    %c0_531 = arith.constant 0 : index
    %c0_532 = arith.constant 0 : index
    %589 = vector.load %arg7[%c0_529, %c0_530, %c0_531, %c0_532] : memref<5x5x64x128xf32, #tpu.memory_space<vmem>>, vector<1x1x64x128xf32>
    %590 = vector.shape_cast %589 : vector<1x1x64x128xf32> to vector<64x128xf32>
    %591 = vector.broadcast %159 : f32 to vector<64x128xf32>
    %592 = arith.mulf %591, %590 : vector<64x128xf32>
    %c0_533 = arith.constant 0 : index
    %c1_534 = arith.constant 1 : index
    %c0_535 = arith.constant 0 : index
    %c0_536 = arith.constant 0 : index
    %593 = vector.load %arg7[%c0_533, %c1_534, %c0_535, %c0_536] : memref<5x5x64x128xf32, #tpu.memory_space<vmem>>, vector<1x1x64x128xf32>
    %594 = vector.shape_cast %593 : vector<1x1x64x128xf32> to vector<64x128xf32>
    %595 = vector.broadcast %160 : f32 to vector<64x128xf32>
    %596 = arith.mulf %595, %594 : vector<64x128xf32>
    %597 = arith.addf %592, %596 : vector<64x128xf32>
    %c0_537 = arith.constant 0 : index
    %c2_538 = arith.constant 2 : index
    %c0_539 = arith.constant 0 : index
    %c0_540 = arith.constant 0 : index
    %598 = vector.load %arg7[%c0_537, %c2_538, %c0_539, %c0_540] : memref<5x5x64x128xf32, #tpu.memory_space<vmem>>, vector<1x1x64x128xf32>
    %599 = vector.shape_cast %598 : vector<1x1x64x128xf32> to vector<64x128xf32>
    %600 = vector.broadcast %161 : f32 to vector<64x128xf32>
    %601 = arith.mulf %600, %599 : vector<64x128xf32>
    %602 = arith.addf %597, %601 : vector<64x128xf32>
    %c1_541 = arith.constant 1 : index
    %c0_542 = arith.constant 0 : index
    %c0_543 = arith.constant 0 : index
    %c0_544 = arith.constant 0 : index
    %603 = vector.load %arg7[%c1_541, %c0_542, %c0_543, %c0_544] : memref<5x5x64x128xf32, #tpu.memory_space<vmem>>, vector<1x1x64x128xf32>
    %604 = vector.shape_cast %603 : vector<1x1x64x128xf32> to vector<64x128xf32>
    %605 = vector.broadcast %162 : f32 to vector<64x128xf32>
    %606 = arith.mulf %605, %604 : vector<64x128xf32>
    %c1_545 = arith.constant 1 : index
    %c1_546 = arith.constant 1 : index
    %c0_547 = arith.constant 0 : index
    %c0_548 = arith.constant 0 : index
    %607 = vector.load %arg7[%c1_545, %c1_546, %c0_547, %c0_548] : memref<5x5x64x128xf32, #tpu.memory_space<vmem>>, vector<1x1x64x128xf32>
    %608 = vector.shape_cast %607 : vector<1x1x64x128xf32> to vector<64x128xf32>
    %609 = vector.broadcast %163 : f32 to vector<64x128xf32>
    %610 = arith.mulf %609, %608 : vector<64x128xf32>
    %611 = arith.addf %606, %610 : vector<64x128xf32>
    %c1_549 = arith.constant 1 : index
    %c2_550 = arith.constant 2 : index
    %c0_551 = arith.constant 0 : index
    %c0_552 = arith.constant 0 : index
    %612 = vector.load %arg7[%c1_549, %c2_550, %c0_551, %c0_552] : memref<5x5x64x128xf32, #tpu.memory_space<vmem>>, vector<1x1x64x128xf32>
    %613 = vector.shape_cast %612 : vector<1x1x64x128xf32> to vector<64x128xf32>
    %614 = vector.broadcast %164 : f32 to vector<64x128xf32>
    %615 = arith.mulf %614, %613 : vector<64x128xf32>
    %616 = arith.addf %611, %615 : vector<64x128xf32>
    %c2_553 = arith.constant 2 : index
    %c0_554 = arith.constant 0 : index
    %c0_555 = arith.constant 0 : index
    %c0_556 = arith.constant 0 : index
    %617 = vector.load %arg7[%c2_553, %c0_554, %c0_555, %c0_556] : memref<5x5x64x128xf32, #tpu.memory_space<vmem>>, vector<1x1x64x128xf32>
    %618 = vector.shape_cast %617 : vector<1x1x64x128xf32> to vector<64x128xf32>
    %619 = vector.broadcast %165 : f32 to vector<64x128xf32>
    %620 = arith.mulf %619, %618 : vector<64x128xf32>
    %c2_557 = arith.constant 2 : index
    %c1_558 = arith.constant 1 : index
    %c0_559 = arith.constant 0 : index
    %c0_560 = arith.constant 0 : index
    %621 = vector.load %arg7[%c2_557, %c1_558, %c0_559, %c0_560] : memref<5x5x64x128xf32, #tpu.memory_space<vmem>>, vector<1x1x64x128xf32>
    %622 = vector.shape_cast %621 : vector<1x1x64x128xf32> to vector<64x128xf32>
    %623 = vector.broadcast %166 : f32 to vector<64x128xf32>
    %624 = arith.mulf %623, %622 : vector<64x128xf32>
    %625 = arith.addf %620, %624 : vector<64x128xf32>
    %c2_561 = arith.constant 2 : index
    %c2_562 = arith.constant 2 : index
    %c0_563 = arith.constant 0 : index
    %c0_564 = arith.constant 0 : index
    %626 = vector.load %arg7[%c2_561, %c2_562, %c0_563, %c0_564] : memref<5x5x64x128xf32, #tpu.memory_space<vmem>>, vector<1x1x64x128xf32>
    %627 = vector.shape_cast %626 : vector<1x1x64x128xf32> to vector<64x128xf32>
    %628 = vector.broadcast %167 : f32 to vector<64x128xf32>
    %629 = arith.mulf %628, %627 : vector<64x128xf32>
    %630 = arith.addf %625, %629 : vector<64x128xf32>
    %631 = arith.addf %602, %616 : vector<64x128xf32>
    %632 = arith.addf %631, %630 : vector<64x128xf32>
    %c0_565 = arith.constant 0 : index
    %c1_566 = arith.constant 1 : index
    %c0_567 = arith.constant 0 : index
    %c0_568 = arith.constant 0 : index
    %633 = vector.load %arg7[%c0_565, %c1_566, %c0_567, %c0_568] : memref<5x5x64x128xf32, #tpu.memory_space<vmem>>, vector<1x1x64x128xf32>
    %634 = vector.shape_cast %633 : vector<1x1x64x128xf32> to vector<64x128xf32>
    %635 = vector.broadcast %159 : f32 to vector<64x128xf32>
    %636 = arith.mulf %635, %634 : vector<64x128xf32>
    %c0_569 = arith.constant 0 : index
    %c2_570 = arith.constant 2 : index
    %c0_571 = arith.constant 0 : index
    %c0_572 = arith.constant 0 : index
    %637 = vector.load %arg7[%c0_569, %c2_570, %c0_571, %c0_572] : memref<5x5x64x128xf32, #tpu.memory_space<vmem>>, vector<1x1x64x128xf32>
    %638 = vector.shape_cast %637 : vector<1x1x64x128xf32> to vector<64x128xf32>
    %639 = vector.broadcast %160 : f32 to vector<64x128xf32>
    %640 = arith.mulf %639, %638 : vector<64x128xf32>
    %641 = arith.addf %636, %640 : vector<64x128xf32>
    %c0_573 = arith.constant 0 : index
    %c3_574 = arith.constant 3 : index
    %c0_575 = arith.constant 0 : index
    %c0_576 = arith.constant 0 : index
    %642 = vector.load %arg7[%c0_573, %c3_574, %c0_575, %c0_576] : memref<5x5x64x128xf32, #tpu.memory_space<vmem>>, vector<1x1x64x128xf32>
    %643 = vector.shape_cast %642 : vector<1x1x64x128xf32> to vector<64x128xf32>
    %644 = vector.broadcast %161 : f32 to vector<64x128xf32>
    %645 = arith.mulf %644, %643 : vector<64x128xf32>
    %646 = arith.addf %641, %645 : vector<64x128xf32>
    %c1_577 = arith.constant 1 : index
    %c1_578 = arith.constant 1 : index
    %c0_579 = arith.constant 0 : index
    %c0_580 = arith.constant 0 : index
    %647 = vector.load %arg7[%c1_577, %c1_578, %c0_579, %c0_580] : memref<5x5x64x128xf32, #tpu.memory_space<vmem>>, vector<1x1x64x128xf32>
    %648 = vector.shape_cast %647 : vector<1x1x64x128xf32> to vector<64x128xf32>
    %649 = vector.broadcast %162 : f32 to vector<64x128xf32>
    %650 = arith.mulf %649, %648 : vector<64x128xf32>
    %c1_581 = arith.constant 1 : index
    %c2_582 = arith.constant 2 : index
    %c0_583 = arith.constant 0 : index
    %c0_584 = arith.constant 0 : index
    %651 = vector.load %arg7[%c1_581, %c2_582, %c0_583, %c0_584] : memref<5x5x64x128xf32, #tpu.memory_space<vmem>>, vector<1x1x64x128xf32>
    %652 = vector.shape_cast %651 : vector<1x1x64x128xf32> to vector<64x128xf32>
    %653 = vector.broadcast %163 : f32 to vector<64x128xf32>
    %654 = arith.mulf %653, %652 : vector<64x128xf32>
    %655 = arith.addf %650, %654 : vector<64x128xf32>
    %c1_585 = arith.constant 1 : index
    %c3_586 = arith.constant 3 : index
    %c0_587 = arith.constant 0 : index
    %c0_588 = arith.constant 0 : index
    %656 = vector.load %arg7[%c1_585, %c3_586, %c0_587, %c0_588] : memref<5x5x64x128xf32, #tpu.memory_space<vmem>>, vector<1x1x64x128xf32>
    %657 = vector.shape_cast %656 : vector<1x1x64x128xf32> to vector<64x128xf32>
    %658 = vector.broadcast %164 : f32 to vector<64x128xf32>
    %659 = arith.mulf %658, %657 : vector<64x128xf32>
    %660 = arith.addf %655, %659 : vector<64x128xf32>
    %c2_589 = arith.constant 2 : index
    %c1_590 = arith.constant 1 : index
    %c0_591 = arith.constant 0 : index
    %c0_592 = arith.constant 0 : index
    %661 = vector.load %arg7[%c2_589, %c1_590, %c0_591, %c0_592] : memref<5x5x64x128xf32, #tpu.memory_space<vmem>>, vector<1x1x64x128xf32>
    %662 = vector.shape_cast %661 : vector<1x1x64x128xf32> to vector<64x128xf32>
    %663 = vector.broadcast %165 : f32 to vector<64x128xf32>
    %664 = arith.mulf %663, %662 : vector<64x128xf32>
    %c2_593 = arith.constant 2 : index
    %c2_594 = arith.constant 2 : index
    %c0_595 = arith.constant 0 : index
    %c0_596 = arith.constant 0 : index
    %665 = vector.load %arg7[%c2_593, %c2_594, %c0_595, %c0_596] : memref<5x5x64x128xf32, #tpu.memory_space<vmem>>, vector<1x1x64x128xf32>
    %666 = vector.shape_cast %665 : vector<1x1x64x128xf32> to vector<64x128xf32>
    %667 = vector.broadcast %166 : f32 to vector<64x128xf32>
    %668 = arith.mulf %667, %666 : vector<64x128xf32>
    %669 = arith.addf %664, %668 : vector<64x128xf32>
    %c2_597 = arith.constant 2 : index
    %c3_598 = arith.constant 3 : index
    %c0_599 = arith.constant 0 : index
    %c0_600 = arith.constant 0 : index
    %670 = vector.load %arg7[%c2_597, %c3_598, %c0_599, %c0_600] : memref<5x5x64x128xf32, #tpu.memory_space<vmem>>, vector<1x1x64x128xf32>
    %671 = vector.shape_cast %670 : vector<1x1x64x128xf32> to vector<64x128xf32>
    %672 = vector.broadcast %167 : f32 to vector<64x128xf32>
    %673 = arith.mulf %672, %671 : vector<64x128xf32>
    %674 = arith.addf %669, %673 : vector<64x128xf32>
    %675 = arith.addf %646, %660 : vector<64x128xf32>
    %676 = arith.addf %675, %674 : vector<64x128xf32>
    %677 = arith.maximumf %632, %676 : vector<64x128xf32>
    %c0_601 = arith.constant 0 : index
    %c2_602 = arith.constant 2 : index
    %c0_603 = arith.constant 0 : index
    %c0_604 = arith.constant 0 : index
    %678 = vector.load %arg7[%c0_601, %c2_602, %c0_603, %c0_604] : memref<5x5x64x128xf32, #tpu.memory_space<vmem>>, vector<1x1x64x128xf32>
    %679 = vector.shape_cast %678 : vector<1x1x64x128xf32> to vector<64x128xf32>
    %680 = vector.broadcast %159 : f32 to vector<64x128xf32>
    %681 = arith.mulf %680, %679 : vector<64x128xf32>
    %c0_605 = arith.constant 0 : index
    %c3_606 = arith.constant 3 : index
    %c0_607 = arith.constant 0 : index
    %c0_608 = arith.constant 0 : index
    %682 = vector.load %arg7[%c0_605, %c3_606, %c0_607, %c0_608] : memref<5x5x64x128xf32, #tpu.memory_space<vmem>>, vector<1x1x64x128xf32>
    %683 = vector.shape_cast %682 : vector<1x1x64x128xf32> to vector<64x128xf32>
    %684 = vector.broadcast %160 : f32 to vector<64x128xf32>
    %685 = arith.mulf %684, %683 : vector<64x128xf32>
    %686 = arith.addf %681, %685 : vector<64x128xf32>
    %c0_609 = arith.constant 0 : index
    %c4_610 = arith.constant 4 : index
    %c0_611 = arith.constant 0 : index
    %c0_612 = arith.constant 0 : index
    %687 = vector.load %arg7[%c0_609, %c4_610, %c0_611, %c0_612] : memref<5x5x64x128xf32, #tpu.memory_space<vmem>>, vector<1x1x64x128xf32>
    %688 = vector.shape_cast %687 : vector<1x1x64x128xf32> to vector<64x128xf32>
    %689 = vector.broadcast %161 : f32 to vector<64x128xf32>
    %690 = arith.mulf %689, %688 : vector<64x128xf32>
    %691 = arith.addf %686, %690 : vector<64x128xf32>
    %c1_613 = arith.constant 1 : index
    %c2_614 = arith.constant 2 : index
    %c0_615 = arith.constant 0 : index
    %c0_616 = arith.constant 0 : index
    %692 = vector.load %arg7[%c1_613, %c2_614, %c0_615, %c0_616] : memref<5x5x64x128xf32, #tpu.memory_space<vmem>>, vector<1x1x64x128xf32>
    %693 = vector.shape_cast %692 : vector<1x1x64x128xf32> to vector<64x128xf32>
    %694 = vector.broadcast %162 : f32 to vector<64x128xf32>
    %695 = arith.mulf %694, %693 : vector<64x128xf32>
    %c1_617 = arith.constant 1 : index
    %c3_618 = arith.constant 3 : index
    %c0_619 = arith.constant 0 : index
    %c0_620 = arith.constant 0 : index
    %696 = vector.load %arg7[%c1_617, %c3_618, %c0_619, %c0_620] : memref<5x5x64x128xf32, #tpu.memory_space<vmem>>, vector<1x1x64x128xf32>
    %697 = vector.shape_cast %696 : vector<1x1x64x128xf32> to vector<64x128xf32>
    %698 = vector.broadcast %163 : f32 to vector<64x128xf32>
    %699 = arith.mulf %698, %697 : vector<64x128xf32>
    %700 = arith.addf %695, %699 : vector<64x128xf32>
    %c1_621 = arith.constant 1 : index
    %c4_622 = arith.constant 4 : index
    %c0_623 = arith.constant 0 : index
    %c0_624 = arith.constant 0 : index
    %701 = vector.load %arg7[%c1_621, %c4_622, %c0_623, %c0_624] : memref<5x5x64x128xf32, #tpu.memory_space<vmem>>, vector<1x1x64x128xf32>
    %702 = vector.shape_cast %701 : vector<1x1x64x128xf32> to vector<64x128xf32>
    %703 = vector.broadcast %164 : f32 to vector<64x128xf32>
    %704 = arith.mulf %703, %702 : vector<64x128xf32>
    %705 = arith.addf %700, %704 : vector<64x128xf32>
    %c2_625 = arith.constant 2 : index
    %c2_626 = arith.constant 2 : index
    %c0_627 = arith.constant 0 : index
    %c0_628 = arith.constant 0 : index
    %706 = vector.load %arg7[%c2_625, %c2_626, %c0_627, %c0_628] : memref<5x5x64x128xf32, #tpu.memory_space<vmem>>, vector<1x1x64x128xf32>
    %707 = vector.shape_cast %706 : vector<1x1x64x128xf32> to vector<64x128xf32>
    %708 = vector.broadcast %165 : f32 to vector<64x128xf32>
    %709 = arith.mulf %708, %707 : vector<64x128xf32>
    %c2_629 = arith.constant 2 : index
    %c3_630 = arith.constant 3 : index
    %c0_631 = arith.constant 0 : index
    %c0_632 = arith.constant 0 : index
    %710 = vector.load %arg7[%c2_629, %c3_630, %c0_631, %c0_632] : memref<5x5x64x128xf32, #tpu.memory_space<vmem>>, vector<1x1x64x128xf32>
    %711 = vector.shape_cast %710 : vector<1x1x64x128xf32> to vector<64x128xf32>
    %712 = vector.broadcast %166 : f32 to vector<64x128xf32>
    %713 = arith.mulf %712, %711 : vector<64x128xf32>
    %714 = arith.addf %709, %713 : vector<64x128xf32>
    %c2_633 = arith.constant 2 : index
    %c4_634 = arith.constant 4 : index
    %c0_635 = arith.constant 0 : index
    %c0_636 = arith.constant 0 : index
    %715 = vector.load %arg7[%c2_633, %c4_634, %c0_635, %c0_636] : memref<5x5x64x128xf32, #tpu.memory_space<vmem>>, vector<1x1x64x128xf32>
    %716 = vector.shape_cast %715 : vector<1x1x64x128xf32> to vector<64x128xf32>
    %717 = vector.broadcast %167 : f32 to vector<64x128xf32>
    %718 = arith.mulf %717, %716 : vector<64x128xf32>
    %719 = arith.addf %714, %718 : vector<64x128xf32>
    %720 = arith.addf %691, %705 : vector<64x128xf32>
    %721 = arith.addf %720, %719 : vector<64x128xf32>
    %722 = arith.maximumf %677, %721 : vector<64x128xf32>
    %c1_637 = arith.constant 1 : index
    %c0_638 = arith.constant 0 : index
    %c0_639 = arith.constant 0 : index
    %c0_640 = arith.constant 0 : index
    %723 = vector.load %arg7[%c1_637, %c0_638, %c0_639, %c0_640] : memref<5x5x64x128xf32, #tpu.memory_space<vmem>>, vector<1x1x64x128xf32>
    %724 = vector.shape_cast %723 : vector<1x1x64x128xf32> to vector<64x128xf32>
    %725 = vector.broadcast %159 : f32 to vector<64x128xf32>
    %726 = arith.mulf %725, %724 : vector<64x128xf32>
    %c1_641 = arith.constant 1 : index
    %c1_642 = arith.constant 1 : index
    %c0_643 = arith.constant 0 : index
    %c0_644 = arith.constant 0 : index
    %727 = vector.load %arg7[%c1_641, %c1_642, %c0_643, %c0_644] : memref<5x5x64x128xf32, #tpu.memory_space<vmem>>, vector<1x1x64x128xf32>
    %728 = vector.shape_cast %727 : vector<1x1x64x128xf32> to vector<64x128xf32>
    %729 = vector.broadcast %160 : f32 to vector<64x128xf32>
    %730 = arith.mulf %729, %728 : vector<64x128xf32>
    %731 = arith.addf %726, %730 : vector<64x128xf32>
    %c1_645 = arith.constant 1 : index
    %c2_646 = arith.constant 2 : index
    %c0_647 = arith.constant 0 : index
    %c0_648 = arith.constant 0 : index
    %732 = vector.load %arg7[%c1_645, %c2_646, %c0_647, %c0_648] : memref<5x5x64x128xf32, #tpu.memory_space<vmem>>, vector<1x1x64x128xf32>
    %733 = vector.shape_cast %732 : vector<1x1x64x128xf32> to vector<64x128xf32>
    %734 = vector.broadcast %161 : f32 to vector<64x128xf32>
    %735 = arith.mulf %734, %733 : vector<64x128xf32>
    %736 = arith.addf %731, %735 : vector<64x128xf32>
    %c2_649 = arith.constant 2 : index
    %c0_650 = arith.constant 0 : index
    %c0_651 = arith.constant 0 : index
    %c0_652 = arith.constant 0 : index
    %737 = vector.load %arg7[%c2_649, %c0_650, %c0_651, %c0_652] : memref<5x5x64x128xf32, #tpu.memory_space<vmem>>, vector<1x1x64x128xf32>
    %738 = vector.shape_cast %737 : vector<1x1x64x128xf32> to vector<64x128xf32>
    %739 = vector.broadcast %162 : f32 to vector<64x128xf32>
    %740 = arith.mulf %739, %738 : vector<64x128xf32>
    %c2_653 = arith.constant 2 : index
    %c1_654 = arith.constant 1 : index
    %c0_655 = arith.constant 0 : index
    %c0_656 = arith.constant 0 : index
    %741 = vector.load %arg7[%c2_653, %c1_654, %c0_655, %c0_656] : memref<5x5x64x128xf32, #tpu.memory_space<vmem>>, vector<1x1x64x128xf32>
    %742 = vector.shape_cast %741 : vector<1x1x64x128xf32> to vector<64x128xf32>
    %743 = vector.broadcast %163 : f32 to vector<64x128xf32>
    %744 = arith.mulf %743, %742 : vector<64x128xf32>
    %745 = arith.addf %740, %744 : vector<64x128xf32>
    %c2_657 = arith.constant 2 : index
    %c2_658 = arith.constant 2 : index
    %c0_659 = arith.constant 0 : index
    %c0_660 = arith.constant 0 : index
    %746 = vector.load %arg7[%c2_657, %c2_658, %c0_659, %c0_660] : memref<5x5x64x128xf32, #tpu.memory_space<vmem>>, vector<1x1x64x128xf32>
    %747 = vector.shape_cast %746 : vector<1x1x64x128xf32> to vector<64x128xf32>
    %748 = vector.broadcast %164 : f32 to vector<64x128xf32>
    %749 = arith.mulf %748, %747 : vector<64x128xf32>
    %750 = arith.addf %745, %749 : vector<64x128xf32>
    %c3_661 = arith.constant 3 : index
    %c0_662 = arith.constant 0 : index
    %c0_663 = arith.constant 0 : index
    %c0_664 = arith.constant 0 : index
    %751 = vector.load %arg7[%c3_661, %c0_662, %c0_663, %c0_664] : memref<5x5x64x128xf32, #tpu.memory_space<vmem>>, vector<1x1x64x128xf32>
    %752 = vector.shape_cast %751 : vector<1x1x64x128xf32> to vector<64x128xf32>
    %753 = vector.broadcast %165 : f32 to vector<64x128xf32>
    %754 = arith.mulf %753, %752 : vector<64x128xf32>
    %c3_665 = arith.constant 3 : index
    %c1_666 = arith.constant 1 : index
    %c0_667 = arith.constant 0 : index
    %c0_668 = arith.constant 0 : index
    %755 = vector.load %arg7[%c3_665, %c1_666, %c0_667, %c0_668] : memref<5x5x64x128xf32, #tpu.memory_space<vmem>>, vector<1x1x64x128xf32>
    %756 = vector.shape_cast %755 : vector<1x1x64x128xf32> to vector<64x128xf32>
    %757 = vector.broadcast %166 : f32 to vector<64x128xf32>
    %758 = arith.mulf %757, %756 : vector<64x128xf32>
    %759 = arith.addf %754, %758 : vector<64x128xf32>
    %c3_669 = arith.constant 3 : index
    %c2_670 = arith.constant 2 : index
    %c0_671 = arith.constant 0 : index
    %c0_672 = arith.constant 0 : index
    %760 = vector.load %arg7[%c3_669, %c2_670, %c0_671, %c0_672] : memref<5x5x64x128xf32, #tpu.memory_space<vmem>>, vector<1x1x64x128xf32>
    %761 = vector.shape_cast %760 : vector<1x1x64x128xf32> to vector<64x128xf32>
    %762 = vector.broadcast %167 : f32 to vector<64x128xf32>
    %763 = arith.mulf %762, %761 : vector<64x128xf32>
    %764 = arith.addf %759, %763 : vector<64x128xf32>
    %765 = arith.addf %736, %750 : vector<64x128xf32>
    %766 = arith.addf %765, %764 : vector<64x128xf32>
    %767 = arith.maximumf %722, %766 : vector<64x128xf32>
    %c1_673 = arith.constant 1 : index
    %c1_674 = arith.constant 1 : index
    %c0_675 = arith.constant 0 : index
    %c0_676 = arith.constant 0 : index
    %768 = vector.load %arg7[%c1_673, %c1_674, %c0_675, %c0_676] : memref<5x5x64x128xf32, #tpu.memory_space<vmem>>, vector<1x1x64x128xf32>
    %769 = vector.shape_cast %768 : vector<1x1x64x128xf32> to vector<64x128xf32>
    %770 = vector.broadcast %159 : f32 to vector<64x128xf32>
    %771 = arith.mulf %770, %769 : vector<64x128xf32>
    %c1_677 = arith.constant 1 : index
    %c2_678 = arith.constant 2 : index
    %c0_679 = arith.constant 0 : index
    %c0_680 = arith.constant 0 : index
    %772 = vector.load %arg7[%c1_677, %c2_678, %c0_679, %c0_680] : memref<5x5x64x128xf32, #tpu.memory_space<vmem>>, vector<1x1x64x128xf32>
    %773 = vector.shape_cast %772 : vector<1x1x64x128xf32> to vector<64x128xf32>
    %774 = vector.broadcast %160 : f32 to vector<64x128xf32>
    %775 = arith.mulf %774, %773 : vector<64x128xf32>
    %776 = arith.addf %771, %775 : vector<64x128xf32>
    %c1_681 = arith.constant 1 : index
    %c3_682 = arith.constant 3 : index
    %c0_683 = arith.constant 0 : index
    %c0_684 = arith.constant 0 : index
    %777 = vector.load %arg7[%c1_681, %c3_682, %c0_683, %c0_684] : memref<5x5x64x128xf32, #tpu.memory_space<vmem>>, vector<1x1x64x128xf32>
    %778 = vector.shape_cast %777 : vector<1x1x64x128xf32> to vector<64x128xf32>
    %779 = vector.broadcast %161 : f32 to vector<64x128xf32>
    %780 = arith.mulf %779, %778 : vector<64x128xf32>
    %781 = arith.addf %776, %780 : vector<64x128xf32>
    %c2_685 = arith.constant 2 : index
    %c1_686 = arith.constant 1 : index
    %c0_687 = arith.constant 0 : index
    %c0_688 = arith.constant 0 : index
    %782 = vector.load %arg7[%c2_685, %c1_686, %c0_687, %c0_688] : memref<5x5x64x128xf32, #tpu.memory_space<vmem>>, vector<1x1x64x128xf32>
    %783 = vector.shape_cast %782 : vector<1x1x64x128xf32> to vector<64x128xf32>
    %784 = vector.broadcast %162 : f32 to vector<64x128xf32>
    %785 = arith.mulf %784, %783 : vector<64x128xf32>
    %c2_689 = arith.constant 2 : index
    %c2_690 = arith.constant 2 : index
    %c0_691 = arith.constant 0 : index
    %c0_692 = arith.constant 0 : index
    %786 = vector.load %arg7[%c2_689, %c2_690, %c0_691, %c0_692] : memref<5x5x64x128xf32, #tpu.memory_space<vmem>>, vector<1x1x64x128xf32>
    %787 = vector.shape_cast %786 : vector<1x1x64x128xf32> to vector<64x128xf32>
    %788 = vector.broadcast %163 : f32 to vector<64x128xf32>
    %789 = arith.mulf %788, %787 : vector<64x128xf32>
    %790 = arith.addf %785, %789 : vector<64x128xf32>
    %c2_693 = arith.constant 2 : index
    %c3_694 = arith.constant 3 : index
    %c0_695 = arith.constant 0 : index
    %c0_696 = arith.constant 0 : index
    %791 = vector.load %arg7[%c2_693, %c3_694, %c0_695, %c0_696] : memref<5x5x64x128xf32, #tpu.memory_space<vmem>>, vector<1x1x64x128xf32>
    %792 = vector.shape_cast %791 : vector<1x1x64x128xf32> to vector<64x128xf32>
    %793 = vector.broadcast %164 : f32 to vector<64x128xf32>
    %794 = arith.mulf %793, %792 : vector<64x128xf32>
    %795 = arith.addf %790, %794 : vector<64x128xf32>
    %c3_697 = arith.constant 3 : index
    %c1_698 = arith.constant 1 : index
    %c0_699 = arith.constant 0 : index
    %c0_700 = arith.constant 0 : index
    %796 = vector.load %arg7[%c3_697, %c1_698, %c0_699, %c0_700] : memref<5x5x64x128xf32, #tpu.memory_space<vmem>>, vector<1x1x64x128xf32>
    %797 = vector.shape_cast %796 : vector<1x1x64x128xf32> to vector<64x128xf32>
    %798 = vector.broadcast %165 : f32 to vector<64x128xf32>
    %799 = arith.mulf %798, %797 : vector<64x128xf32>
    %c3_701 = arith.constant 3 : index
    %c2_702 = arith.constant 2 : index
    %c0_703 = arith.constant 0 : index
    %c0_704 = arith.constant 0 : index
    %800 = vector.load %arg7[%c3_701, %c2_702, %c0_703, %c0_704] : memref<5x5x64x128xf32, #tpu.memory_space<vmem>>, vector<1x1x64x128xf32>
    %801 = vector.shape_cast %800 : vector<1x1x64x128xf32> to vector<64x128xf32>
    %802 = vector.broadcast %166 : f32 to vector<64x128xf32>
    %803 = arith.mulf %802, %801 : vector<64x128xf32>
    %804 = arith.addf %799, %803 : vector<64x128xf32>
    %c3_705 = arith.constant 3 : index
    %c3_706 = arith.constant 3 : index
    %c0_707 = arith.constant 0 : index
    %c0_708 = arith.constant 0 : index
    %805 = vector.load %arg7[%c3_705, %c3_706, %c0_707, %c0_708] : memref<5x5x64x128xf32, #tpu.memory_space<vmem>>, vector<1x1x64x128xf32>
    %806 = vector.shape_cast %805 : vector<1x1x64x128xf32> to vector<64x128xf32>
    %807 = vector.broadcast %167 : f32 to vector<64x128xf32>
    %808 = arith.mulf %807, %806 : vector<64x128xf32>
    %809 = arith.addf %804, %808 : vector<64x128xf32>
    %810 = arith.addf %781, %795 : vector<64x128xf32>
    %811 = arith.addf %810, %809 : vector<64x128xf32>
    %812 = arith.maximumf %767, %811 : vector<64x128xf32>
    %c1_709 = arith.constant 1 : index
    %c2_710 = arith.constant 2 : index
    %c0_711 = arith.constant 0 : index
    %c0_712 = arith.constant 0 : index
    %813 = vector.load %arg7[%c1_709, %c2_710, %c0_711, %c0_712] : memref<5x5x64x128xf32, #tpu.memory_space<vmem>>, vector<1x1x64x128xf32>
    %814 = vector.shape_cast %813 : vector<1x1x64x128xf32> to vector<64x128xf32>
    %815 = vector.broadcast %159 : f32 to vector<64x128xf32>
    %816 = arith.mulf %815, %814 : vector<64x128xf32>
    %c1_713 = arith.constant 1 : index
    %c3_714 = arith.constant 3 : index
    %c0_715 = arith.constant 0 : index
    %c0_716 = arith.constant 0 : index
    %817 = vector.load %arg7[%c1_713, %c3_714, %c0_715, %c0_716] : memref<5x5x64x128xf32, #tpu.memory_space<vmem>>, vector<1x1x64x128xf32>
    %818 = vector.shape_cast %817 : vector<1x1x64x128xf32> to vector<64x128xf32>
    %819 = vector.broadcast %160 : f32 to vector<64x128xf32>
    %820 = arith.mulf %819, %818 : vector<64x128xf32>
    %821 = arith.addf %816, %820 : vector<64x128xf32>
    %c1_717 = arith.constant 1 : index
    %c4_718 = arith.constant 4 : index
    %c0_719 = arith.constant 0 : index
    %c0_720 = arith.constant 0 : index
    %822 = vector.load %arg7[%c1_717, %c4_718, %c0_719, %c0_720] : memref<5x5x64x128xf32, #tpu.memory_space<vmem>>, vector<1x1x64x128xf32>
    %823 = vector.shape_cast %822 : vector<1x1x64x128xf32> to vector<64x128xf32>
    %824 = vector.broadcast %161 : f32 to vector<64x128xf32>
    %825 = arith.mulf %824, %823 : vector<64x128xf32>
    %826 = arith.addf %821, %825 : vector<64x128xf32>
    %c2_721 = arith.constant 2 : index
    %c2_722 = arith.constant 2 : index
    %c0_723 = arith.constant 0 : index
    %c0_724 = arith.constant 0 : index
    %827 = vector.load %arg7[%c2_721, %c2_722, %c0_723, %c0_724] : memref<5x5x64x128xf32, #tpu.memory_space<vmem>>, vector<1x1x64x128xf32>
    %828 = vector.shape_cast %827 : vector<1x1x64x128xf32> to vector<64x128xf32>
    %829 = vector.broadcast %162 : f32 to vector<64x128xf32>
    %830 = arith.mulf %829, %828 : vector<64x128xf32>
    %c2_725 = arith.constant 2 : index
    %c3_726 = arith.constant 3 : index
    %c0_727 = arith.constant 0 : index
    %c0_728 = arith.constant 0 : index
    %831 = vector.load %arg7[%c2_725, %c3_726, %c0_727, %c0_728] : memref<5x5x64x128xf32, #tpu.memory_space<vmem>>, vector<1x1x64x128xf32>
    %832 = vector.shape_cast %831 : vector<1x1x64x128xf32> to vector<64x128xf32>
    %833 = vector.broadcast %163 : f32 to vector<64x128xf32>
    %834 = arith.mulf %833, %832 : vector<64x128xf32>
    %835 = arith.addf %830, %834 : vector<64x128xf32>
    %c2_729 = arith.constant 2 : index
    %c4_730 = arith.constant 4 : index
    %c0_731 = arith.constant 0 : index
    %c0_732 = arith.constant 0 : index
    %836 = vector.load %arg7[%c2_729, %c4_730, %c0_731, %c0_732] : memref<5x5x64x128xf32, #tpu.memory_space<vmem>>, vector<1x1x64x128xf32>
    %837 = vector.shape_cast %836 : vector<1x1x64x128xf32> to vector<64x128xf32>
    %838 = vector.broadcast %164 : f32 to vector<64x128xf32>
    %839 = arith.mulf %838, %837 : vector<64x128xf32>
    %840 = arith.addf %835, %839 : vector<64x128xf32>
    %c3_733 = arith.constant 3 : index
    %c2_734 = arith.constant 2 : index
    %c0_735 = arith.constant 0 : index
    %c0_736 = arith.constant 0 : index
    %841 = vector.load %arg7[%c3_733, %c2_734, %c0_735, %c0_736] : memref<5x5x64x128xf32, #tpu.memory_space<vmem>>, vector<1x1x64x128xf32>
    %842 = vector.shape_cast %841 : vector<1x1x64x128xf32> to vector<64x128xf32>
    %843 = vector.broadcast %165 : f32 to vector<64x128xf32>
    %844 = arith.mulf %843, %842 : vector<64x128xf32>
    %c3_737 = arith.constant 3 : index
    %c3_738 = arith.constant 3 : index
    %c0_739 = arith.constant 0 : index
    %c0_740 = arith.constant 0 : index
    %845 = vector.load %arg7[%c3_737, %c3_738, %c0_739, %c0_740] : memref<5x5x64x128xf32, #tpu.memory_space<vmem>>, vector<1x1x64x128xf32>
    %846 = vector.shape_cast %845 : vector<1x1x64x128xf32> to vector<64x128xf32>
    %847 = vector.broadcast %166 : f32 to vector<64x128xf32>
    %848 = arith.mulf %847, %846 : vector<64x128xf32>
    %849 = arith.addf %844, %848 : vector<64x128xf32>
    %c3_741 = arith.constant 3 : index
    %c4_742 = arith.constant 4 : index
    %c0_743 = arith.constant 0 : index
    %c0_744 = arith.constant 0 : index
    %850 = vector.load %arg7[%c3_741, %c4_742, %c0_743, %c0_744] : memref<5x5x64x128xf32, #tpu.memory_space<vmem>>, vector<1x1x64x128xf32>
    %851 = vector.shape_cast %850 : vector<1x1x64x128xf32> to vector<64x128xf32>
    %852 = vector.broadcast %167 : f32 to vector<64x128xf32>
    %853 = arith.mulf %852, %851 : vector<64x128xf32>
    %854 = arith.addf %849, %853 : vector<64x128xf32>
    %855 = arith.addf %826, %840 : vector<64x128xf32>
    %856 = arith.addf %855, %854 : vector<64x128xf32>
    %857 = arith.maximumf %812, %856 : vector<64x128xf32>
    %c2_745 = arith.constant 2 : index
    %c0_746 = arith.constant 0 : index
    %c0_747 = arith.constant 0 : index
    %c0_748 = arith.constant 0 : index
    %858 = vector.load %arg7[%c2_745, %c0_746, %c0_747, %c0_748] : memref<5x5x64x128xf32, #tpu.memory_space<vmem>>, vector<1x1x64x128xf32>
    %859 = vector.shape_cast %858 : vector<1x1x64x128xf32> to vector<64x128xf32>
    %860 = vector.broadcast %159 : f32 to vector<64x128xf32>
    %861 = arith.mulf %860, %859 : vector<64x128xf32>
    %c2_749 = arith.constant 2 : index
    %c1_750 = arith.constant 1 : index
    %c0_751 = arith.constant 0 : index
    %c0_752 = arith.constant 0 : index
    %862 = vector.load %arg7[%c2_749, %c1_750, %c0_751, %c0_752] : memref<5x5x64x128xf32, #tpu.memory_space<vmem>>, vector<1x1x64x128xf32>
    %863 = vector.shape_cast %862 : vector<1x1x64x128xf32> to vector<64x128xf32>
    %864 = vector.broadcast %160 : f32 to vector<64x128xf32>
    %865 = arith.mulf %864, %863 : vector<64x128xf32>
    %866 = arith.addf %861, %865 : vector<64x128xf32>
    %c2_753 = arith.constant 2 : index
    %c2_754 = arith.constant 2 : index
    %c0_755 = arith.constant 0 : index
    %c0_756 = arith.constant 0 : index
    %867 = vector.load %arg7[%c2_753, %c2_754, %c0_755, %c0_756] : memref<5x5x64x128xf32, #tpu.memory_space<vmem>>, vector<1x1x64x128xf32>
    %868 = vector.shape_cast %867 : vector<1x1x64x128xf32> to vector<64x128xf32>
    %869 = vector.broadcast %161 : f32 to vector<64x128xf32>
    %870 = arith.mulf %869, %868 : vector<64x128xf32>
    %871 = arith.addf %866, %870 : vector<64x128xf32>
    %c3_757 = arith.constant 3 : index
    %c0_758 = arith.constant 0 : index
    %c0_759 = arith.constant 0 : index
    %c0_760 = arith.constant 0 : index
    %872 = vector.load %arg7[%c3_757, %c0_758, %c0_759, %c0_760] : memref<5x5x64x128xf32, #tpu.memory_space<vmem>>, vector<1x1x64x128xf32>
    %873 = vector.shape_cast %872 : vector<1x1x64x128xf32> to vector<64x128xf32>
    %874 = vector.broadcast %162 : f32 to vector<64x128xf32>
    %875 = arith.mulf %874, %873 : vector<64x128xf32>
    %c3_761 = arith.constant 3 : index
    %c1_762 = arith.constant 1 : index
    %c0_763 = arith.constant 0 : index
    %c0_764 = arith.constant 0 : index
    %876 = vector.load %arg7[%c3_761, %c1_762, %c0_763, %c0_764] : memref<5x5x64x128xf32, #tpu.memory_space<vmem>>, vector<1x1x64x128xf32>
    %877 = vector.shape_cast %876 : vector<1x1x64x128xf32> to vector<64x128xf32>
    %878 = vector.broadcast %163 : f32 to vector<64x128xf32>
    %879 = arith.mulf %878, %877 : vector<64x128xf32>
    %880 = arith.addf %875, %879 : vector<64x128xf32>
    %c3_765 = arith.constant 3 : index
    %c2_766 = arith.constant 2 : index
    %c0_767 = arith.constant 0 : index
    %c0_768 = arith.constant 0 : index
    %881 = vector.load %arg7[%c3_765, %c2_766, %c0_767, %c0_768] : memref<5x5x64x128xf32, #tpu.memory_space<vmem>>, vector<1x1x64x128xf32>
    %882 = vector.shape_cast %881 : vector<1x1x64x128xf32> to vector<64x128xf32>
    %883 = vector.broadcast %164 : f32 to vector<64x128xf32>
    %884 = arith.mulf %883, %882 : vector<64x128xf32>
    %885 = arith.addf %880, %884 : vector<64x128xf32>
    %c4_769 = arith.constant 4 : index
    %c0_770 = arith.constant 0 : index
    %c0_771 = arith.constant 0 : index
    %c0_772 = arith.constant 0 : index
    %886 = vector.load %arg7[%c4_769, %c0_770, %c0_771, %c0_772] : memref<5x5x64x128xf32, #tpu.memory_space<vmem>>, vector<1x1x64x128xf32>
    %887 = vector.shape_cast %886 : vector<1x1x64x128xf32> to vector<64x128xf32>
    %888 = vector.broadcast %165 : f32 to vector<64x128xf32>
    %889 = arith.mulf %888, %887 : vector<64x128xf32>
    %c4_773 = arith.constant 4 : index
    %c1_774 = arith.constant 1 : index
    %c0_775 = arith.constant 0 : index
    %c0_776 = arith.constant 0 : index
    %890 = vector.load %arg7[%c4_773, %c1_774, %c0_775, %c0_776] : memref<5x5x64x128xf32, #tpu.memory_space<vmem>>, vector<1x1x64x128xf32>
    %891 = vector.shape_cast %890 : vector<1x1x64x128xf32> to vector<64x128xf32>
    %892 = vector.broadcast %166 : f32 to vector<64x128xf32>
    %893 = arith.mulf %892, %891 : vector<64x128xf32>
    %894 = arith.addf %889, %893 : vector<64x128xf32>
    %c4_777 = arith.constant 4 : index
    %c2_778 = arith.constant 2 : index
    %c0_779 = arith.constant 0 : index
    %c0_780 = arith.constant 0 : index
    %895 = vector.load %arg7[%c4_777, %c2_778, %c0_779, %c0_780] : memref<5x5x64x128xf32, #tpu.memory_space<vmem>>, vector<1x1x64x128xf32>
    %896 = vector.shape_cast %895 : vector<1x1x64x128xf32> to vector<64x128xf32>
    %897 = vector.broadcast %167 : f32 to vector<64x128xf32>
    %898 = arith.mulf %897, %896 : vector<64x128xf32>
    %899 = arith.addf %894, %898 : vector<64x128xf32>
    %900 = arith.addf %871, %885 : vector<64x128xf32>
    %901 = arith.addf %900, %899 : vector<64x128xf32>
    %902 = arith.maximumf %857, %901 : vector<64x128xf32>
    %c2_781 = arith.constant 2 : index
    %c1_782 = arith.constant 1 : index
    %c0_783 = arith.constant 0 : index
    %c0_784 = arith.constant 0 : index
    %903 = vector.load %arg7[%c2_781, %c1_782, %c0_783, %c0_784] : memref<5x5x64x128xf32, #tpu.memory_space<vmem>>, vector<1x1x64x128xf32>
    %904 = vector.shape_cast %903 : vector<1x1x64x128xf32> to vector<64x128xf32>
    %905 = vector.broadcast %159 : f32 to vector<64x128xf32>
    %906 = arith.mulf %905, %904 : vector<64x128xf32>
    %c2_785 = arith.constant 2 : index
    %c2_786 = arith.constant 2 : index
    %c0_787 = arith.constant 0 : index
    %c0_788 = arith.constant 0 : index
    %907 = vector.load %arg7[%c2_785, %c2_786, %c0_787, %c0_788] : memref<5x5x64x128xf32, #tpu.memory_space<vmem>>, vector<1x1x64x128xf32>
    %908 = vector.shape_cast %907 : vector<1x1x64x128xf32> to vector<64x128xf32>
    %909 = vector.broadcast %160 : f32 to vector<64x128xf32>
    %910 = arith.mulf %909, %908 : vector<64x128xf32>
    %911 = arith.addf %906, %910 : vector<64x128xf32>
    %c2_789 = arith.constant 2 : index
    %c3_790 = arith.constant 3 : index
    %c0_791 = arith.constant 0 : index
    %c0_792 = arith.constant 0 : index
    %912 = vector.load %arg7[%c2_789, %c3_790, %c0_791, %c0_792] : memref<5x5x64x128xf32, #tpu.memory_space<vmem>>, vector<1x1x64x128xf32>
    %913 = vector.shape_cast %912 : vector<1x1x64x128xf32> to vector<64x128xf32>
    %914 = vector.broadcast %161 : f32 to vector<64x128xf32>
    %915 = arith.mulf %914, %913 : vector<64x128xf32>
    %916 = arith.addf %911, %915 : vector<64x128xf32>
    %c3_793 = arith.constant 3 : index
    %c1_794 = arith.constant 1 : index
    %c0_795 = arith.constant 0 : index
    %c0_796 = arith.constant 0 : index
    %917 = vector.load %arg7[%c3_793, %c1_794, %c0_795, %c0_796] : memref<5x5x64x128xf32, #tpu.memory_space<vmem>>, vector<1x1x64x128xf32>
    %918 = vector.shape_cast %917 : vector<1x1x64x128xf32> to vector<64x128xf32>
    %919 = vector.broadcast %162 : f32 to vector<64x128xf32>
    %920 = arith.mulf %919, %918 : vector<64x128xf32>
    %c3_797 = arith.constant 3 : index
    %c2_798 = arith.constant 2 : index
    %c0_799 = arith.constant 0 : index
    %c0_800 = arith.constant 0 : index
    %921 = vector.load %arg7[%c3_797, %c2_798, %c0_799, %c0_800] : memref<5x5x64x128xf32, #tpu.memory_space<vmem>>, vector<1x1x64x128xf32>
    %922 = vector.shape_cast %921 : vector<1x1x64x128xf32> to vector<64x128xf32>
    %923 = vector.broadcast %163 : f32 to vector<64x128xf32>
    %924 = arith.mulf %923, %922 : vector<64x128xf32>
    %925 = arith.addf %920, %924 : vector<64x128xf32>
    %c3_801 = arith.constant 3 : index
    %c3_802 = arith.constant 3 : index
    %c0_803 = arith.constant 0 : index
    %c0_804 = arith.constant 0 : index
    %926 = vector.load %arg7[%c3_801, %c3_802, %c0_803, %c0_804] : memref<5x5x64x128xf32, #tpu.memory_space<vmem>>, vector<1x1x64x128xf32>
    %927 = vector.shape_cast %926 : vector<1x1x64x128xf32> to vector<64x128xf32>
    %928 = vector.broadcast %164 : f32 to vector<64x128xf32>
    %929 = arith.mulf %928, %927 : vector<64x128xf32>
    %930 = arith.addf %925, %929 : vector<64x128xf32>
    %c4_805 = arith.constant 4 : index
    %c1_806 = arith.constant 1 : index
    %c0_807 = arith.constant 0 : index
    %c0_808 = arith.constant 0 : index
    %931 = vector.load %arg7[%c4_805, %c1_806, %c0_807, %c0_808] : memref<5x5x64x128xf32, #tpu.memory_space<vmem>>, vector<1x1x64x128xf32>
    %932 = vector.shape_cast %931 : vector<1x1x64x128xf32> to vector<64x128xf32>
    %933 = vector.broadcast %165 : f32 to vector<64x128xf32>
    %934 = arith.mulf %933, %932 : vector<64x128xf32>
    %c4_809 = arith.constant 4 : index
    %c2_810 = arith.constant 2 : index
    %c0_811 = arith.constant 0 : index
    %c0_812 = arith.constant 0 : index
    %935 = vector.load %arg7[%c4_809, %c2_810, %c0_811, %c0_812] : memref<5x5x64x128xf32, #tpu.memory_space<vmem>>, vector<1x1x64x128xf32>
    %936 = vector.shape_cast %935 : vector<1x1x64x128xf32> to vector<64x128xf32>
    %937 = vector.broadcast %166 : f32 to vector<64x128xf32>
    %938 = arith.mulf %937, %936 : vector<64x128xf32>
    %939 = arith.addf %934, %938 : vector<64x128xf32>
    %c4_813 = arith.constant 4 : index
    %c3_814 = arith.constant 3 : index
    %c0_815 = arith.constant 0 : index
    %c0_816 = arith.constant 0 : index
    %940 = vector.load %arg7[%c4_813, %c3_814, %c0_815, %c0_816] : memref<5x5x64x128xf32, #tpu.memory_space<vmem>>, vector<1x1x64x128xf32>
    %941 = vector.shape_cast %940 : vector<1x1x64x128xf32> to vector<64x128xf32>
    %942 = vector.broadcast %167 : f32 to vector<64x128xf32>
    %943 = arith.mulf %942, %941 : vector<64x128xf32>
    %944 = arith.addf %939, %943 : vector<64x128xf32>
    %945 = arith.addf %916, %930 : vector<64x128xf32>
    %946 = arith.addf %945, %944 : vector<64x128xf32>
    %947 = arith.maximumf %902, %946 : vector<64x128xf32>
    %c2_817 = arith.constant 2 : index
    %c2_818 = arith.constant 2 : index
    %c0_819 = arith.constant 0 : index
    %c0_820 = arith.constant 0 : index
    %948 = vector.load %arg7[%c2_817, %c2_818, %c0_819, %c0_820] : memref<5x5x64x128xf32, #tpu.memory_space<vmem>>, vector<1x1x64x128xf32>
    %949 = vector.shape_cast %948 : vector<1x1x64x128xf32> to vector<64x128xf32>
    %950 = vector.broadcast %159 : f32 to vector<64x128xf32>
    %951 = arith.mulf %950, %949 : vector<64x128xf32>
    %c2_821 = arith.constant 2 : index
    %c3_822 = arith.constant 3 : index
    %c0_823 = arith.constant 0 : index
    %c0_824 = arith.constant 0 : index
    %952 = vector.load %arg7[%c2_821, %c3_822, %c0_823, %c0_824] : memref<5x5x64x128xf32, #tpu.memory_space<vmem>>, vector<1x1x64x128xf32>
    %953 = vector.shape_cast %952 : vector<1x1x64x128xf32> to vector<64x128xf32>
    %954 = vector.broadcast %160 : f32 to vector<64x128xf32>
    %955 = arith.mulf %954, %953 : vector<64x128xf32>
    %956 = arith.addf %951, %955 : vector<64x128xf32>
    %c2_825 = arith.constant 2 : index
    %c4_826 = arith.constant 4 : index
    %c0_827 = arith.constant 0 : index
    %c0_828 = arith.constant 0 : index
    %957 = vector.load %arg7[%c2_825, %c4_826, %c0_827, %c0_828] : memref<5x5x64x128xf32, #tpu.memory_space<vmem>>, vector<1x1x64x128xf32>
    %958 = vector.shape_cast %957 : vector<1x1x64x128xf32> to vector<64x128xf32>
    %959 = vector.broadcast %161 : f32 to vector<64x128xf32>
    %960 = arith.mulf %959, %958 : vector<64x128xf32>
    %961 = arith.addf %956, %960 : vector<64x128xf32>
    %c3_829 = arith.constant 3 : index
    %c2_830 = arith.constant 2 : index
    %c0_831 = arith.constant 0 : index
    %c0_832 = arith.constant 0 : index
    %962 = vector.load %arg7[%c3_829, %c2_830, %c0_831, %c0_832] : memref<5x5x64x128xf32, #tpu.memory_space<vmem>>, vector<1x1x64x128xf32>
    %963 = vector.shape_cast %962 : vector<1x1x64x128xf32> to vector<64x128xf32>
    %964 = vector.broadcast %162 : f32 to vector<64x128xf32>
    %965 = arith.mulf %964, %963 : vector<64x128xf32>
    %c3_833 = arith.constant 3 : index
    %c3_834 = arith.constant 3 : index
    %c0_835 = arith.constant 0 : index
    %c0_836 = arith.constant 0 : index
    %966 = vector.load %arg7[%c3_833, %c3_834, %c0_835, %c0_836] : memref<5x5x64x128xf32, #tpu.memory_space<vmem>>, vector<1x1x64x128xf32>
    %967 = vector.shape_cast %966 : vector<1x1x64x128xf32> to vector<64x128xf32>
    %968 = vector.broadcast %163 : f32 to vector<64x128xf32>
    %969 = arith.mulf %968, %967 : vector<64x128xf32>
    %970 = arith.addf %965, %969 : vector<64x128xf32>
    %c3_837 = arith.constant 3 : index
    %c4_838 = arith.constant 4 : index
    %c0_839 = arith.constant 0 : index
    %c0_840 = arith.constant 0 : index
    %971 = vector.load %arg7[%c3_837, %c4_838, %c0_839, %c0_840] : memref<5x5x64x128xf32, #tpu.memory_space<vmem>>, vector<1x1x64x128xf32>
    %972 = vector.shape_cast %971 : vector<1x1x64x128xf32> to vector<64x128xf32>
    %973 = vector.broadcast %164 : f32 to vector<64x128xf32>
    %974 = arith.mulf %973, %972 : vector<64x128xf32>
    %975 = arith.addf %970, %974 : vector<64x128xf32>
    %c4_841 = arith.constant 4 : index
    %c2_842 = arith.constant 2 : index
    %c0_843 = arith.constant 0 : index
    %c0_844 = arith.constant 0 : index
    %976 = vector.load %arg7[%c4_841, %c2_842, %c0_843, %c0_844] : memref<5x5x64x128xf32, #tpu.memory_space<vmem>>, vector<1x1x64x128xf32>
    %977 = vector.shape_cast %976 : vector<1x1x64x128xf32> to vector<64x128xf32>
    %978 = vector.broadcast %165 : f32 to vector<64x128xf32>
    %979 = arith.mulf %978, %977 : vector<64x128xf32>
    %c4_845 = arith.constant 4 : index
    %c3_846 = arith.constant 3 : index
    %c0_847 = arith.constant 0 : index
    %c0_848 = arith.constant 0 : index
    %980 = vector.load %arg7[%c4_845, %c3_846, %c0_847, %c0_848] : memref<5x5x64x128xf32, #tpu.memory_space<vmem>>, vector<1x1x64x128xf32>
    %981 = vector.shape_cast %980 : vector<1x1x64x128xf32> to vector<64x128xf32>
    %982 = vector.broadcast %166 : f32 to vector<64x128xf32>
    %983 = arith.mulf %982, %981 : vector<64x128xf32>
    %984 = arith.addf %979, %983 : vector<64x128xf32>
    %c4_849 = arith.constant 4 : index
    %c4_850 = arith.constant 4 : index
    %c0_851 = arith.constant 0 : index
    %c0_852 = arith.constant 0 : index
    %985 = vector.load %arg7[%c4_849, %c4_850, %c0_851, %c0_852] : memref<5x5x64x128xf32, #tpu.memory_space<vmem>>, vector<1x1x64x128xf32>
    %986 = vector.shape_cast %985 : vector<1x1x64x128xf32> to vector<64x128xf32>
    %987 = vector.broadcast %167 : f32 to vector<64x128xf32>
    %988 = arith.mulf %987, %986 : vector<64x128xf32>
    %989 = arith.addf %984, %988 : vector<64x128xf32>
    %990 = arith.addf %961, %975 : vector<64x128xf32>
    %991 = arith.addf %990, %989 : vector<64x128xf32>
    %992 = arith.maximumf %947, %991 : vector<64x128xf32>
    %c1_853 = arith.constant 1 : index
    %993 = memref.load %arg2[%c1_853] : memref<3xf32, #tpu.memory_space<smem>>
    %994 = vector.broadcast %993 : f32 to vector<64x128xf32>
    %995 = arith.addf %992, %994 : vector<64x128xf32>
    %cst_854 = arith.constant 0.000000e+00 : f32
    %996 = vector.broadcast %cst_854 : f32 to vector<64x128xf32>
    %997 = arith.maximumf %995, %996 : vector<64x128xf32>
    %c1_855 = arith.constant 1 : index
    %c0_856 = arith.constant 0 : index
    %c0_857 = arith.constant 0 : index
    %998 = vector.load %arg4[%c1_855, %c0_856, %c0_857] : memref<3x10x64xf32, #tpu.memory_space<vmem>>, vector<1x10x64xf32>
    %999 = vector.shape_cast %998 : vector<1x10x64xf32> to vector<10x64xf32>
    %cst_858 = arith.constant dense<0.000000e+00> : vector<10x128xf32>
    %1000 = tpu.matmul %999, %997, %cst_858 {dimension_numbers = #tpu.dot_dimension_numbers<[1], [0], [0], [1], [0, 0, 1, 1], [], []>} : vector<10x64xf32>, vector<64x128xf32>, vector<10x128xf32> -> vector<10x128xf32>
    %1001 = arith.addf %588, %1000 : vector<10x128xf32>
    %c0_859 = arith.constant 0 : index
    %c0_860 = arith.constant 0 : index
    %c0_861 = arith.constant 0 : index
    %c0_862 = arith.constant 0 : index
    %1002 = vector.load %arg7[%c0_859, %c0_860, %c0_861, %c0_862] : memref<5x5x64x128xf32, #tpu.memory_space<vmem>>, vector<1x1x64x128xf32>
    %1003 = vector.shape_cast %1002 : vector<1x1x64x128xf32> to vector<64x128xf32>
    %1004 = vector.broadcast %168 : f32 to vector<64x128xf32>
    %1005 = arith.mulf %1004, %1003 : vector<64x128xf32>
    %c0_863 = arith.constant 0 : index
    %c1_864 = arith.constant 1 : index
    %c0_865 = arith.constant 0 : index
    %c0_866 = arith.constant 0 : index
    %1006 = vector.load %arg7[%c0_863, %c1_864, %c0_865, %c0_866] : memref<5x5x64x128xf32, #tpu.memory_space<vmem>>, vector<1x1x64x128xf32>
    %1007 = vector.shape_cast %1006 : vector<1x1x64x128xf32> to vector<64x128xf32>
    %1008 = vector.broadcast %169 : f32 to vector<64x128xf32>
    %1009 = arith.mulf %1008, %1007 : vector<64x128xf32>
    %1010 = arith.addf %1005, %1009 : vector<64x128xf32>
    %c0_867 = arith.constant 0 : index
    %c2_868 = arith.constant 2 : index
    %c0_869 = arith.constant 0 : index
    %c0_870 = arith.constant 0 : index
    %1011 = vector.load %arg7[%c0_867, %c2_868, %c0_869, %c0_870] : memref<5x5x64x128xf32, #tpu.memory_space<vmem>>, vector<1x1x64x128xf32>
    %1012 = vector.shape_cast %1011 : vector<1x1x64x128xf32> to vector<64x128xf32>
    %1013 = vector.broadcast %170 : f32 to vector<64x128xf32>
    %1014 = arith.mulf %1013, %1012 : vector<64x128xf32>
    %1015 = arith.addf %1010, %1014 : vector<64x128xf32>
    %c1_871 = arith.constant 1 : index
    %c0_872 = arith.constant 0 : index
    %c0_873 = arith.constant 0 : index
    %c0_874 = arith.constant 0 : index
    %1016 = vector.load %arg7[%c1_871, %c0_872, %c0_873, %c0_874] : memref<5x5x64x128xf32, #tpu.memory_space<vmem>>, vector<1x1x64x128xf32>
    %1017 = vector.shape_cast %1016 : vector<1x1x64x128xf32> to vector<64x128xf32>
    %1018 = vector.broadcast %171 : f32 to vector<64x128xf32>
    %1019 = arith.mulf %1018, %1017 : vector<64x128xf32>
    %c1_875 = arith.constant 1 : index
    %c1_876 = arith.constant 1 : index
    %c0_877 = arith.constant 0 : index
    %c0_878 = arith.constant 0 : index
    %1020 = vector.load %arg7[%c1_875, %c1_876, %c0_877, %c0_878] : memref<5x5x64x128xf32, #tpu.memory_space<vmem>>, vector<1x1x64x128xf32>
    %1021 = vector.shape_cast %1020 : vector<1x1x64x128xf32> to vector<64x128xf32>
    %1022 = vector.broadcast %172 : f32 to vector<64x128xf32>
    %1023 = arith.mulf %1022, %1021 : vector<64x128xf32>
    %1024 = arith.addf %1019, %1023 : vector<64x128xf32>
    %c1_879 = arith.constant 1 : index
    %c2_880 = arith.constant 2 : index
    %c0_881 = arith.constant 0 : index
    %c0_882 = arith.constant 0 : index
    %1025 = vector.load %arg7[%c1_879, %c2_880, %c0_881, %c0_882] : memref<5x5x64x128xf32, #tpu.memory_space<vmem>>, vector<1x1x64x128xf32>
    %1026 = vector.shape_cast %1025 : vector<1x1x64x128xf32> to vector<64x128xf32>
    %1027 = vector.broadcast %173 : f32 to vector<64x128xf32>
    %1028 = arith.mulf %1027, %1026 : vector<64x128xf32>
    %1029 = arith.addf %1024, %1028 : vector<64x128xf32>
    %c2_883 = arith.constant 2 : index
    %c0_884 = arith.constant 0 : index
    %c0_885 = arith.constant 0 : index
    %c0_886 = arith.constant 0 : index
    %1030 = vector.load %arg7[%c2_883, %c0_884, %c0_885, %c0_886] : memref<5x5x64x128xf32, #tpu.memory_space<vmem>>, vector<1x1x64x128xf32>
    %1031 = vector.shape_cast %1030 : vector<1x1x64x128xf32> to vector<64x128xf32>
    %1032 = vector.broadcast %174 : f32 to vector<64x128xf32>
    %1033 = arith.mulf %1032, %1031 : vector<64x128xf32>
    %c2_887 = arith.constant 2 : index
    %c1_888 = arith.constant 1 : index
    %c0_889 = arith.constant 0 : index
    %c0_890 = arith.constant 0 : index
    %1034 = vector.load %arg7[%c2_887, %c1_888, %c0_889, %c0_890] : memref<5x5x64x128xf32, #tpu.memory_space<vmem>>, vector<1x1x64x128xf32>
    %1035 = vector.shape_cast %1034 : vector<1x1x64x128xf32> to vector<64x128xf32>
    %1036 = vector.broadcast %175 : f32 to vector<64x128xf32>
    %1037 = arith.mulf %1036, %1035 : vector<64x128xf32>
    %1038 = arith.addf %1033, %1037 : vector<64x128xf32>
    %c2_891 = arith.constant 2 : index
    %c2_892 = arith.constant 2 : index
    %c0_893 = arith.constant 0 : index
    %c0_894 = arith.constant 0 : index
    %1039 = vector.load %arg7[%c2_891, %c2_892, %c0_893, %c0_894] : memref<5x5x64x128xf32, #tpu.memory_space<vmem>>, vector<1x1x64x128xf32>
    %1040 = vector.shape_cast %1039 : vector<1x1x64x128xf32> to vector<64x128xf32>
    %1041 = vector.broadcast %176 : f32 to vector<64x128xf32>
    %1042 = arith.mulf %1041, %1040 : vector<64x128xf32>
    %1043 = arith.addf %1038, %1042 : vector<64x128xf32>
    %1044 = arith.addf %1015, %1029 : vector<64x128xf32>
    %1045 = arith.addf %1044, %1043 : vector<64x128xf32>
    %c0_895 = arith.constant 0 : index
    %c1_896 = arith.constant 1 : index
    %c0_897 = arith.constant 0 : index
    %c0_898 = arith.constant 0 : index
    %1046 = vector.load %arg7[%c0_895, %c1_896, %c0_897, %c0_898] : memref<5x5x64x128xf32, #tpu.memory_space<vmem>>, vector<1x1x64x128xf32>
    %1047 = vector.shape_cast %1046 : vector<1x1x64x128xf32> to vector<64x128xf32>
    %1048 = vector.broadcast %168 : f32 to vector<64x128xf32>
    %1049 = arith.mulf %1048, %1047 : vector<64x128xf32>
    %c0_899 = arith.constant 0 : index
    %c2_900 = arith.constant 2 : index
    %c0_901 = arith.constant 0 : index
    %c0_902 = arith.constant 0 : index
    %1050 = vector.load %arg7[%c0_899, %c2_900, %c0_901, %c0_902] : memref<5x5x64x128xf32, #tpu.memory_space<vmem>>, vector<1x1x64x128xf32>
    %1051 = vector.shape_cast %1050 : vector<1x1x64x128xf32> to vector<64x128xf32>
    %1052 = vector.broadcast %169 : f32 to vector<64x128xf32>
    %1053 = arith.mulf %1052, %1051 : vector<64x128xf32>
    %1054 = arith.addf %1049, %1053 : vector<64x128xf32>
    %c0_903 = arith.constant 0 : index
    %c3_904 = arith.constant 3 : index
    %c0_905 = arith.constant 0 : index
    %c0_906 = arith.constant 0 : index
    %1055 = vector.load %arg7[%c0_903, %c3_904, %c0_905, %c0_906] : memref<5x5x64x128xf32, #tpu.memory_space<vmem>>, vector<1x1x64x128xf32>
    %1056 = vector.shape_cast %1055 : vector<1x1x64x128xf32> to vector<64x128xf32>
    %1057 = vector.broadcast %170 : f32 to vector<64x128xf32>
    %1058 = arith.mulf %1057, %1056 : vector<64x128xf32>
    %1059 = arith.addf %1054, %1058 : vector<64x128xf32>
    %c1_907 = arith.constant 1 : index
    %c1_908 = arith.constant 1 : index
    %c0_909 = arith.constant 0 : index
    %c0_910 = arith.constant 0 : index
    %1060 = vector.load %arg7[%c1_907, %c1_908, %c0_909, %c0_910] : memref<5x5x64x128xf32, #tpu.memory_space<vmem>>, vector<1x1x64x128xf32>
    %1061 = vector.shape_cast %1060 : vector<1x1x64x128xf32> to vector<64x128xf32>
    %1062 = vector.broadcast %171 : f32 to vector<64x128xf32>
    %1063 = arith.mulf %1062, %1061 : vector<64x128xf32>
    %c1_911 = arith.constant 1 : index
    %c2_912 = arith.constant 2 : index
    %c0_913 = arith.constant 0 : index
    %c0_914 = arith.constant 0 : index
    %1064 = vector.load %arg7[%c1_911, %c2_912, %c0_913, %c0_914] : memref<5x5x64x128xf32, #tpu.memory_space<vmem>>, vector<1x1x64x128xf32>
    %1065 = vector.shape_cast %1064 : vector<1x1x64x128xf32> to vector<64x128xf32>
    %1066 = vector.broadcast %172 : f32 to vector<64x128xf32>
    %1067 = arith.mulf %1066, %1065 : vector<64x128xf32>
    %1068 = arith.addf %1063, %1067 : vector<64x128xf32>
    %c1_915 = arith.constant 1 : index
    %c3_916 = arith.constant 3 : index
    %c0_917 = arith.constant 0 : index
    %c0_918 = arith.constant 0 : index
    %1069 = vector.load %arg7[%c1_915, %c3_916, %c0_917, %c0_918] : memref<5x5x64x128xf32, #tpu.memory_space<vmem>>, vector<1x1x64x128xf32>
    %1070 = vector.shape_cast %1069 : vector<1x1x64x128xf32> to vector<64x128xf32>
    %1071 = vector.broadcast %173 : f32 to vector<64x128xf32>
    %1072 = arith.mulf %1071, %1070 : vector<64x128xf32>
    %1073 = arith.addf %1068, %1072 : vector<64x128xf32>
    %c2_919 = arith.constant 2 : index
    %c1_920 = arith.constant 1 : index
    %c0_921 = arith.constant 0 : index
    %c0_922 = arith.constant 0 : index
    %1074 = vector.load %arg7[%c2_919, %c1_920, %c0_921, %c0_922] : memref<5x5x64x128xf32, #tpu.memory_space<vmem>>, vector<1x1x64x128xf32>
    %1075 = vector.shape_cast %1074 : vector<1x1x64x128xf32> to vector<64x128xf32>
    %1076 = vector.broadcast %174 : f32 to vector<64x128xf32>
    %1077 = arith.mulf %1076, %1075 : vector<64x128xf32>
    %c2_923 = arith.constant 2 : index
    %c2_924 = arith.constant 2 : index
    %c0_925 = arith.constant 0 : index
    %c0_926 = arith.constant 0 : index
    %1078 = vector.load %arg7[%c2_923, %c2_924, %c0_925, %c0_926] : memref<5x5x64x128xf32, #tpu.memory_space<vmem>>, vector<1x1x64x128xf32>
    %1079 = vector.shape_cast %1078 : vector<1x1x64x128xf32> to vector<64x128xf32>
    %1080 = vector.broadcast %175 : f32 to vector<64x128xf32>
    %1081 = arith.mulf %1080, %1079 : vector<64x128xf32>
    %1082 = arith.addf %1077, %1081 : vector<64x128xf32>
    %c2_927 = arith.constant 2 : index
    %c3_928 = arith.constant 3 : index
    %c0_929 = arith.constant 0 : index
    %c0_930 = arith.constant 0 : index
    %1083 = vector.load %arg7[%c2_927, %c3_928, %c0_929, %c0_930] : memref<5x5x64x128xf32, #tpu.memory_space<vmem>>, vector<1x1x64x128xf32>
    %1084 = vector.shape_cast %1083 : vector<1x1x64x128xf32> to vector<64x128xf32>
    %1085 = vector.broadcast %176 : f32 to vector<64x128xf32>
    %1086 = arith.mulf %1085, %1084 : vector<64x128xf32>
    %1087 = arith.addf %1082, %1086 : vector<64x128xf32>
    %1088 = arith.addf %1059, %1073 : vector<64x128xf32>
    %1089 = arith.addf %1088, %1087 : vector<64x128xf32>
    %1090 = arith.maximumf %1045, %1089 : vector<64x128xf32>
    %c0_931 = arith.constant 0 : index
    %c2_932 = arith.constant 2 : index
    %c0_933 = arith.constant 0 : index
    %c0_934 = arith.constant 0 : index
    %1091 = vector.load %arg7[%c0_931, %c2_932, %c0_933, %c0_934] : memref<5x5x64x128xf32, #tpu.memory_space<vmem>>, vector<1x1x64x128xf32>
    %1092 = vector.shape_cast %1091 : vector<1x1x64x128xf32> to vector<64x128xf32>
    %1093 = vector.broadcast %168 : f32 to vector<64x128xf32>
    %1094 = arith.mulf %1093, %1092 : vector<64x128xf32>
    %c0_935 = arith.constant 0 : index
    %c3_936 = arith.constant 3 : index
    %c0_937 = arith.constant 0 : index
    %c0_938 = arith.constant 0 : index
    %1095 = vector.load %arg7[%c0_935, %c3_936, %c0_937, %c0_938] : memref<5x5x64x128xf32, #tpu.memory_space<vmem>>, vector<1x1x64x128xf32>
    %1096 = vector.shape_cast %1095 : vector<1x1x64x128xf32> to vector<64x128xf32>
    %1097 = vector.broadcast %169 : f32 to vector<64x128xf32>
    %1098 = arith.mulf %1097, %1096 : vector<64x128xf32>
    %1099 = arith.addf %1094, %1098 : vector<64x128xf32>
    %c0_939 = arith.constant 0 : index
    %c4_940 = arith.constant 4 : index
    %c0_941 = arith.constant 0 : index
    %c0_942 = arith.constant 0 : index
    %1100 = vector.load %arg7[%c0_939, %c4_940, %c0_941, %c0_942] : memref<5x5x64x128xf32, #tpu.memory_space<vmem>>, vector<1x1x64x128xf32>
    %1101 = vector.shape_cast %1100 : vector<1x1x64x128xf32> to vector<64x128xf32>
    %1102 = vector.broadcast %170 : f32 to vector<64x128xf32>
    %1103 = arith.mulf %1102, %1101 : vector<64x128xf32>
    %1104 = arith.addf %1099, %1103 : vector<64x128xf32>
    %c1_943 = arith.constant 1 : index
    %c2_944 = arith.constant 2 : index
    %c0_945 = arith.constant 0 : index
    %c0_946 = arith.constant 0 : index
    %1105 = vector.load %arg7[%c1_943, %c2_944, %c0_945, %c0_946] : memref<5x5x64x128xf32, #tpu.memory_space<vmem>>, vector<1x1x64x128xf32>
    %1106 = vector.shape_cast %1105 : vector<1x1x64x128xf32> to vector<64x128xf32>
    %1107 = vector.broadcast %171 : f32 to vector<64x128xf32>
    %1108 = arith.mulf %1107, %1106 : vector<64x128xf32>
    %c1_947 = arith.constant 1 : index
    %c3_948 = arith.constant 3 : index
    %c0_949 = arith.constant 0 : index
    %c0_950 = arith.constant 0 : index
    %1109 = vector.load %arg7[%c1_947, %c3_948, %c0_949, %c0_950] : memref<5x5x64x128xf32, #tpu.memory_space<vmem>>, vector<1x1x64x128xf32>
    %1110 = vector.shape_cast %1109 : vector<1x1x64x128xf32> to vector<64x128xf32>
    %1111 = vector.broadcast %172 : f32 to vector<64x128xf32>
    %1112 = arith.mulf %1111, %1110 : vector<64x128xf32>
    %1113 = arith.addf %1108, %1112 : vector<64x128xf32>
    %c1_951 = arith.constant 1 : index
    %c4_952 = arith.constant 4 : index
    %c0_953 = arith.constant 0 : index
    %c0_954 = arith.constant 0 : index
    %1114 = vector.load %arg7[%c1_951, %c4_952, %c0_953, %c0_954] : memref<5x5x64x128xf32, #tpu.memory_space<vmem>>, vector<1x1x64x128xf32>
    %1115 = vector.shape_cast %1114 : vector<1x1x64x128xf32> to vector<64x128xf32>
    %1116 = vector.broadcast %173 : f32 to vector<64x128xf32>
    %1117 = arith.mulf %1116, %1115 : vector<64x128xf32>
    %1118 = arith.addf %1113, %1117 : vector<64x128xf32>
    %c2_955 = arith.constant 2 : index
    %c2_956 = arith.constant 2 : index
    %c0_957 = arith.constant 0 : index
    %c0_958 = arith.constant 0 : index
    %1119 = vector.load %arg7[%c2_955, %c2_956, %c0_957, %c0_958] : memref<5x5x64x128xf32, #tpu.memory_space<vmem>>, vector<1x1x64x128xf32>
    %1120 = vector.shape_cast %1119 : vector<1x1x64x128xf32> to vector<64x128xf32>
    %1121 = vector.broadcast %174 : f32 to vector<64x128xf32>
    %1122 = arith.mulf %1121, %1120 : vector<64x128xf32>
    %c2_959 = arith.constant 2 : index
    %c3_960 = arith.constant 3 : index
    %c0_961 = arith.constant 0 : index
    %c0_962 = arith.constant 0 : index
    %1123 = vector.load %arg7[%c2_959, %c3_960, %c0_961, %c0_962] : memref<5x5x64x128xf32, #tpu.memory_space<vmem>>, vector<1x1x64x128xf32>
    %1124 = vector.shape_cast %1123 : vector<1x1x64x128xf32> to vector<64x128xf32>
    %1125 = vector.broadcast %175 : f32 to vector<64x128xf32>
    %1126 = arith.mulf %1125, %1124 : vector<64x128xf32>
    %1127 = arith.addf %1122, %1126 : vector<64x128xf32>
    %c2_963 = arith.constant 2 : index
    %c4_964 = arith.constant 4 : index
    %c0_965 = arith.constant 0 : index
    %c0_966 = arith.constant 0 : index
    %1128 = vector.load %arg7[%c2_963, %c4_964, %c0_965, %c0_966] : memref<5x5x64x128xf32, #tpu.memory_space<vmem>>, vector<1x1x64x128xf32>
    %1129 = vector.shape_cast %1128 : vector<1x1x64x128xf32> to vector<64x128xf32>
    %1130 = vector.broadcast %176 : f32 to vector<64x128xf32>
    %1131 = arith.mulf %1130, %1129 : vector<64x128xf32>
    %1132 = arith.addf %1127, %1131 : vector<64x128xf32>
    %1133 = arith.addf %1104, %1118 : vector<64x128xf32>
    %1134 = arith.addf %1133, %1132 : vector<64x128xf32>
    %1135 = arith.maximumf %1090, %1134 : vector<64x128xf32>
    %c1_967 = arith.constant 1 : index
    %c0_968 = arith.constant 0 : index
    %c0_969 = arith.constant 0 : index
    %c0_970 = arith.constant 0 : index
    %1136 = vector.load %arg7[%c1_967, %c0_968, %c0_969, %c0_970] : memref<5x5x64x128xf32, #tpu.memory_space<vmem>>, vector<1x1x64x128xf32>
    %1137 = vector.shape_cast %1136 : vector<1x1x64x128xf32> to vector<64x128xf32>
    %1138 = vector.broadcast %168 : f32 to vector<64x128xf32>
    %1139 = arith.mulf %1138, %1137 : vector<64x128xf32>
    %c1_971 = arith.constant 1 : index
    %c1_972 = arith.constant 1 : index
    %c0_973 = arith.constant 0 : index
    %c0_974 = arith.constant 0 : index
    %1140 = vector.load %arg7[%c1_971, %c1_972, %c0_973, %c0_974] : memref<5x5x64x128xf32, #tpu.memory_space<vmem>>, vector<1x1x64x128xf32>
    %1141 = vector.shape_cast %1140 : vector<1x1x64x128xf32> to vector<64x128xf32>
    %1142 = vector.broadcast %169 : f32 to vector<64x128xf32>
    %1143 = arith.mulf %1142, %1141 : vector<64x128xf32>
    %1144 = arith.addf %1139, %1143 : vector<64x128xf32>
    %c1_975 = arith.constant 1 : index
    %c2_976 = arith.constant 2 : index
    %c0_977 = arith.constant 0 : index
    %c0_978 = arith.constant 0 : index
    %1145 = vector.load %arg7[%c1_975, %c2_976, %c0_977, %c0_978] : memref<5x5x64x128xf32, #tpu.memory_space<vmem>>, vector<1x1x64x128xf32>
    %1146 = vector.shape_cast %1145 : vector<1x1x64x128xf32> to vector<64x128xf32>
    %1147 = vector.broadcast %170 : f32 to vector<64x128xf32>
    %1148 = arith.mulf %1147, %1146 : vector<64x128xf32>
    %1149 = arith.addf %1144, %1148 : vector<64x128xf32>
    %c2_979 = arith.constant 2 : index
    %c0_980 = arith.constant 0 : index
    %c0_981 = arith.constant 0 : index
    %c0_982 = arith.constant 0 : index
    %1150 = vector.load %arg7[%c2_979, %c0_980, %c0_981, %c0_982] : memref<5x5x64x128xf32, #tpu.memory_space<vmem>>, vector<1x1x64x128xf32>
    %1151 = vector.shape_cast %1150 : vector<1x1x64x128xf32> to vector<64x128xf32>
    %1152 = vector.broadcast %171 : f32 to vector<64x128xf32>
    %1153 = arith.mulf %1152, %1151 : vector<64x128xf32>
    %c2_983 = arith.constant 2 : index
    %c1_984 = arith.constant 1 : index
    %c0_985 = arith.constant 0 : index
    %c0_986 = arith.constant 0 : index
    %1154 = vector.load %arg7[%c2_983, %c1_984, %c0_985, %c0_986] : memref<5x5x64x128xf32, #tpu.memory_space<vmem>>, vector<1x1x64x128xf32>
    %1155 = vector.shape_cast %1154 : vector<1x1x64x128xf32> to vector<64x128xf32>
    %1156 = vector.broadcast %172 : f32 to vector<64x128xf32>
    %1157 = arith.mulf %1156, %1155 : vector<64x128xf32>
    %1158 = arith.addf %1153, %1157 : vector<64x128xf32>
    %c2_987 = arith.constant 2 : index
    %c2_988 = arith.constant 2 : index
    %c0_989 = arith.constant 0 : index
    %c0_990 = arith.constant 0 : index
    %1159 = vector.load %arg7[%c2_987, %c2_988, %c0_989, %c0_990] : memref<5x5x64x128xf32, #tpu.memory_space<vmem>>, vector<1x1x64x128xf32>
    %1160 = vector.shape_cast %1159 : vector<1x1x64x128xf32> to vector<64x128xf32>
    %1161 = vector.broadcast %173 : f32 to vector<64x128xf32>
    %1162 = arith.mulf %1161, %1160 : vector<64x128xf32>
    %1163 = arith.addf %1158, %1162 : vector<64x128xf32>
    %c3_991 = arith.constant 3 : index
    %c0_992 = arith.constant 0 : index
    %c0_993 = arith.constant 0 : index
    %c0_994 = arith.constant 0 : index
    %1164 = vector.load %arg7[%c3_991, %c0_992, %c0_993, %c0_994] : memref<5x5x64x128xf32, #tpu.memory_space<vmem>>, vector<1x1x64x128xf32>
    %1165 = vector.shape_cast %1164 : vector<1x1x64x128xf32> to vector<64x128xf32>
    %1166 = vector.broadcast %174 : f32 to vector<64x128xf32>
    %1167 = arith.mulf %1166, %1165 : vector<64x128xf32>
    %c3_995 = arith.constant 3 : index
    %c1_996 = arith.constant 1 : index
    %c0_997 = arith.constant 0 : index
    %c0_998 = arith.constant 0 : index
    %1168 = vector.load %arg7[%c3_995, %c1_996, %c0_997, %c0_998] : memref<5x5x64x128xf32, #tpu.memory_space<vmem>>, vector<1x1x64x128xf32>
    %1169 = vector.shape_cast %1168 : vector<1x1x64x128xf32> to vector<64x128xf32>
    %1170 = vector.broadcast %175 : f32 to vector<64x128xf32>
    %1171 = arith.mulf %1170, %1169 : vector<64x128xf32>
    %1172 = arith.addf %1167, %1171 : vector<64x128xf32>
    %c3_999 = arith.constant 3 : index
    %c2_1000 = arith.constant 2 : index
    %c0_1001 = arith.constant 0 : index
    %c0_1002 = arith.constant 0 : index
    %1173 = vector.load %arg7[%c3_999, %c2_1000, %c0_1001, %c0_1002] : memref<5x5x64x128xf32, #tpu.memory_space<vmem>>, vector<1x1x64x128xf32>
    %1174 = vector.shape_cast %1173 : vector<1x1x64x128xf32> to vector<64x128xf32>
    %1175 = vector.broadcast %176 : f32 to vector<64x128xf32>
    %1176 = arith.mulf %1175, %1174 : vector<64x128xf32>
    %1177 = arith.addf %1172, %1176 : vector<64x128xf32>
    %1178 = arith.addf %1149, %1163 : vector<64x128xf32>
    %1179 = arith.addf %1178, %1177 : vector<64x128xf32>
    %1180 = arith.maximumf %1135, %1179 : vector<64x128xf32>
    %c1_1003 = arith.constant 1 : index
    %c1_1004 = arith.constant 1 : index
    %c0_1005 = arith.constant 0 : index
    %c0_1006 = arith.constant 0 : index
    %1181 = vector.load %arg7[%c1_1003, %c1_1004, %c0_1005, %c0_1006] : memref<5x5x64x128xf32, #tpu.memory_space<vmem>>, vector<1x1x64x128xf32>
    %1182 = vector.shape_cast %1181 : vector<1x1x64x128xf32> to vector<64x128xf32>
    %1183 = vector.broadcast %168 : f32 to vector<64x128xf32>
    %1184 = arith.mulf %1183, %1182 : vector<64x128xf32>
    %c1_1007 = arith.constant 1 : index
    %c2_1008 = arith.constant 2 : index
    %c0_1009 = arith.constant 0 : index
    %c0_1010 = arith.constant 0 : index
    %1185 = vector.load %arg7[%c1_1007, %c2_1008, %c0_1009, %c0_1010] : memref<5x5x64x128xf32, #tpu.memory_space<vmem>>, vector<1x1x64x128xf32>
    %1186 = vector.shape_cast %1185 : vector<1x1x64x128xf32> to vector<64x128xf32>
    %1187 = vector.broadcast %169 : f32 to vector<64x128xf32>
    %1188 = arith.mulf %1187, %1186 : vector<64x128xf32>
    %1189 = arith.addf %1184, %1188 : vector<64x128xf32>
    %c1_1011 = arith.constant 1 : index
    %c3_1012 = arith.constant 3 : index
    %c0_1013 = arith.constant 0 : index
    %c0_1014 = arith.constant 0 : index
    %1190 = vector.load %arg7[%c1_1011, %c3_1012, %c0_1013, %c0_1014] : memref<5x5x64x128xf32, #tpu.memory_space<vmem>>, vector<1x1x64x128xf32>
    %1191 = vector.shape_cast %1190 : vector<1x1x64x128xf32> to vector<64x128xf32>
    %1192 = vector.broadcast %170 : f32 to vector<64x128xf32>
    %1193 = arith.mulf %1192, %1191 : vector<64x128xf32>
    %1194 = arith.addf %1189, %1193 : vector<64x128xf32>
    %c2_1015 = arith.constant 2 : index
    %c1_1016 = arith.constant 1 : index
    %c0_1017 = arith.constant 0 : index
    %c0_1018 = arith.constant 0 : index
    %1195 = vector.load %arg7[%c2_1015, %c1_1016, %c0_1017, %c0_1018] : memref<5x5x64x128xf32, #tpu.memory_space<vmem>>, vector<1x1x64x128xf32>
    %1196 = vector.shape_cast %1195 : vector<1x1x64x128xf32> to vector<64x128xf32>
    %1197 = vector.broadcast %171 : f32 to vector<64x128xf32>
    %1198 = arith.mulf %1197, %1196 : vector<64x128xf32>
    %c2_1019 = arith.constant 2 : index
    %c2_1020 = arith.constant 2 : index
    %c0_1021 = arith.constant 0 : index
    %c0_1022 = arith.constant 0 : index
    %1199 = vector.load %arg7[%c2_1019, %c2_1020, %c0_1021, %c0_1022] : memref<5x5x64x128xf32, #tpu.memory_space<vmem>>, vector<1x1x64x128xf32>
    %1200 = vector.shape_cast %1199 : vector<1x1x64x128xf32> to vector<64x128xf32>
    %1201 = vector.broadcast %172 : f32 to vector<64x128xf32>
    %1202 = arith.mulf %1201, %1200 : vector<64x128xf32>
    %1203 = arith.addf %1198, %1202 : vector<64x128xf32>
    %c2_1023 = arith.constant 2 : index
    %c3_1024 = arith.constant 3 : index
    %c0_1025 = arith.constant 0 : index
    %c0_1026 = arith.constant 0 : index
    %1204 = vector.load %arg7[%c2_1023, %c3_1024, %c0_1025, %c0_1026] : memref<5x5x64x128xf32, #tpu.memory_space<vmem>>, vector<1x1x64x128xf32>
    %1205 = vector.shape_cast %1204 : vector<1x1x64x128xf32> to vector<64x128xf32>
    %1206 = vector.broadcast %173 : f32 to vector<64x128xf32>
    %1207 = arith.mulf %1206, %1205 : vector<64x128xf32>
    %1208 = arith.addf %1203, %1207 : vector<64x128xf32>
    %c3_1027 = arith.constant 3 : index
    %c1_1028 = arith.constant 1 : index
    %c0_1029 = arith.constant 0 : index
    %c0_1030 = arith.constant 0 : index
    %1209 = vector.load %arg7[%c3_1027, %c1_1028, %c0_1029, %c0_1030] : memref<5x5x64x128xf32, #tpu.memory_space<vmem>>, vector<1x1x64x128xf32>
    %1210 = vector.shape_cast %1209 : vector<1x1x64x128xf32> to vector<64x128xf32>
    %1211 = vector.broadcast %174 : f32 to vector<64x128xf32>
    %1212 = arith.mulf %1211, %1210 : vector<64x128xf32>
    %c3_1031 = arith.constant 3 : index
    %c2_1032 = arith.constant 2 : index
    %c0_1033 = arith.constant 0 : index
    %c0_1034 = arith.constant 0 : index
    %1213 = vector.load %arg7[%c3_1031, %c2_1032, %c0_1033, %c0_1034] : memref<5x5x64x128xf32, #tpu.memory_space<vmem>>, vector<1x1x64x128xf32>
    %1214 = vector.shape_cast %1213 : vector<1x1x64x128xf32> to vector<64x128xf32>
    %1215 = vector.broadcast %175 : f32 to vector<64x128xf32>
    %1216 = arith.mulf %1215, %1214 : vector<64x128xf32>
    %1217 = arith.addf %1212, %1216 : vector<64x128xf32>
    %c3_1035 = arith.constant 3 : index
    %c3_1036 = arith.constant 3 : index
    %c0_1037 = arith.constant 0 : index
    %c0_1038 = arith.constant 0 : index
    %1218 = vector.load %arg7[%c3_1035, %c3_1036, %c0_1037, %c0_1038] : memref<5x5x64x128xf32, #tpu.memory_space<vmem>>, vector<1x1x64x128xf32>
    %1219 = vector.shape_cast %1218 : vector<1x1x64x128xf32> to vector<64x128xf32>
    %1220 = vector.broadcast %176 : f32 to vector<64x128xf32>
    %1221 = arith.mulf %1220, %1219 : vector<64x128xf32>
    %1222 = arith.addf %1217, %1221 : vector<64x128xf32>
    %1223 = arith.addf %1194, %1208 : vector<64x128xf32>
    %1224 = arith.addf %1223, %1222 : vector<64x128xf32>
    %1225 = arith.maximumf %1180, %1224 : vector<64x128xf32>
    %c1_1039 = arith.constant 1 : index
    %c2_1040 = arith.constant 2 : index
    %c0_1041 = arith.constant 0 : index
    %c0_1042 = arith.constant 0 : index
    %1226 = vector.load %arg7[%c1_1039, %c2_1040, %c0_1041, %c0_1042] : memref<5x5x64x128xf32, #tpu.memory_space<vmem>>, vector<1x1x64x128xf32>
    %1227 = vector.shape_cast %1226 : vector<1x1x64x128xf32> to vector<64x128xf32>
    %1228 = vector.broadcast %168 : f32 to vector<64x128xf32>
    %1229 = arith.mulf %1228, %1227 : vector<64x128xf32>
    %c1_1043 = arith.constant 1 : index
    %c3_1044 = arith.constant 3 : index
    %c0_1045 = arith.constant 0 : index
    %c0_1046 = arith.constant 0 : index
    %1230 = vector.load %arg7[%c1_1043, %c3_1044, %c0_1045, %c0_1046] : memref<5x5x64x128xf32, #tpu.memory_space<vmem>>, vector<1x1x64x128xf32>
    %1231 = vector.shape_cast %1230 : vector<1x1x64x128xf32> to vector<64x128xf32>
    %1232 = vector.broadcast %169 : f32 to vector<64x128xf32>
    %1233 = arith.mulf %1232, %1231 : vector<64x128xf32>
    %1234 = arith.addf %1229, %1233 : vector<64x128xf32>
    %c1_1047 = arith.constant 1 : index
    %c4_1048 = arith.constant 4 : index
    %c0_1049 = arith.constant 0 : index
    %c0_1050 = arith.constant 0 : index
    %1235 = vector.load %arg7[%c1_1047, %c4_1048, %c0_1049, %c0_1050] : memref<5x5x64x128xf32, #tpu.memory_space<vmem>>, vector<1x1x64x128xf32>
    %1236 = vector.shape_cast %1235 : vector<1x1x64x128xf32> to vector<64x128xf32>
    %1237 = vector.broadcast %170 : f32 to vector<64x128xf32>
    %1238 = arith.mulf %1237, %1236 : vector<64x128xf32>
    %1239 = arith.addf %1234, %1238 : vector<64x128xf32>
    %c2_1051 = arith.constant 2 : index
    %c2_1052 = arith.constant 2 : index
    %c0_1053 = arith.constant 0 : index
    %c0_1054 = arith.constant 0 : index
    %1240 = vector.load %arg7[%c2_1051, %c2_1052, %c0_1053, %c0_1054] : memref<5x5x64x128xf32, #tpu.memory_space<vmem>>, vector<1x1x64x128xf32>
    %1241 = vector.shape_cast %1240 : vector<1x1x64x128xf32> to vector<64x128xf32>
    %1242 = vector.broadcast %171 : f32 to vector<64x128xf32>
    %1243 = arith.mulf %1242, %1241 : vector<64x128xf32>
    %c2_1055 = arith.constant 2 : index
    %c3_1056 = arith.constant 3 : index
    %c0_1057 = arith.constant 0 : index
    %c0_1058 = arith.constant 0 : index
    %1244 = vector.load %arg7[%c2_1055, %c3_1056, %c0_1057, %c0_1058] : memref<5x5x64x128xf32, #tpu.memory_space<vmem>>, vector<1x1x64x128xf32>
    %1245 = vector.shape_cast %1244 : vector<1x1x64x128xf32> to vector<64x128xf32>
    %1246 = vector.broadcast %172 : f32 to vector<64x128xf32>
    %1247 = arith.mulf %1246, %1245 : vector<64x128xf32>
    %1248 = arith.addf %1243, %1247 : vector<64x128xf32>
    %c2_1059 = arith.constant 2 : index
    %c4_1060 = arith.constant 4 : index
    %c0_1061 = arith.constant 0 : index
    %c0_1062 = arith.constant 0 : index
    %1249 = vector.load %arg7[%c2_1059, %c4_1060, %c0_1061, %c0_1062] : memref<5x5x64x128xf32, #tpu.memory_space<vmem>>, vector<1x1x64x128xf32>
    %1250 = vector.shape_cast %1249 : vector<1x1x64x128xf32> to vector<64x128xf32>
    %1251 = vector.broadcast %173 : f32 to vector<64x128xf32>
    %1252 = arith.mulf %1251, %1250 : vector<64x128xf32>
    %1253 = arith.addf %1248, %1252 : vector<64x128xf32>
    %c3_1063 = arith.constant 3 : index
    %c2_1064 = arith.constant 2 : index
    %c0_1065 = arith.constant 0 : index
    %c0_1066 = arith.constant 0 : index
    %1254 = vector.load %arg7[%c3_1063, %c2_1064, %c0_1065, %c0_1066] : memref<5x5x64x128xf32, #tpu.memory_space<vmem>>, vector<1x1x64x128xf32>
    %1255 = vector.shape_cast %1254 : vector<1x1x64x128xf32> to vector<64x128xf32>
    %1256 = vector.broadcast %174 : f32 to vector<64x128xf32>
    %1257 = arith.mulf %1256, %1255 : vector<64x128xf32>
    %c3_1067 = arith.constant 3 : index
    %c3_1068 = arith.constant 3 : index
    %c0_1069 = arith.constant 0 : index
    %c0_1070 = arith.constant 0 : index
    %1258 = vector.load %arg7[%c3_1067, %c3_1068, %c0_1069, %c0_1070] : memref<5x5x64x128xf32, #tpu.memory_space<vmem>>, vector<1x1x64x128xf32>
    %1259 = vector.shape_cast %1258 : vector<1x1x64x128xf32> to vector<64x128xf32>
    %1260 = vector.broadcast %175 : f32 to vector<64x128xf32>
    %1261 = arith.mulf %1260, %1259 : vector<64x128xf32>
    %1262 = arith.addf %1257, %1261 : vector<64x128xf32>
    %c3_1071 = arith.constant 3 : index
    %c4_1072 = arith.constant 4 : index
    %c0_1073 = arith.constant 0 : index
    %c0_1074 = arith.constant 0 : index
    %1263 = vector.load %arg7[%c3_1071, %c4_1072, %c0_1073, %c0_1074] : memref<5x5x64x128xf32, #tpu.memory_space<vmem>>, vector<1x1x64x128xf32>
    %1264 = vector.shape_cast %1263 : vector<1x1x64x128xf32> to vector<64x128xf32>
    %1265 = vector.broadcast %176 : f32 to vector<64x128xf32>
    %1266 = arith.mulf %1265, %1264 : vector<64x128xf32>
    %1267 = arith.addf %1262, %1266 : vector<64x128xf32>
    %1268 = arith.addf %1239, %1253 : vector<64x128xf32>
    %1269 = arith.addf %1268, %1267 : vector<64x128xf32>
    %1270 = arith.maximumf %1225, %1269 : vector<64x128xf32>
    %c2_1075 = arith.constant 2 : index
    %c0_1076 = arith.constant 0 : index
    %c0_1077 = arith.constant 0 : index
    %c0_1078 = arith.constant 0 : index
    %1271 = vector.load %arg7[%c2_1075, %c0_1076, %c0_1077, %c0_1078] : memref<5x5x64x128xf32, #tpu.memory_space<vmem>>, vector<1x1x64x128xf32>
    %1272 = vector.shape_cast %1271 : vector<1x1x64x128xf32> to vector<64x128xf32>
    %1273 = vector.broadcast %168 : f32 to vector<64x128xf32>
    %1274 = arith.mulf %1273, %1272 : vector<64x128xf32>
    %c2_1079 = arith.constant 2 : index
    %c1_1080 = arith.constant 1 : index
    %c0_1081 = arith.constant 0 : index
    %c0_1082 = arith.constant 0 : index
    %1275 = vector.load %arg7[%c2_1079, %c1_1080, %c0_1081, %c0_1082] : memref<5x5x64x128xf32, #tpu.memory_space<vmem>>, vector<1x1x64x128xf32>
    %1276 = vector.shape_cast %1275 : vector<1x1x64x128xf32> to vector<64x128xf32>
    %1277 = vector.broadcast %169 : f32 to vector<64x128xf32>
    %1278 = arith.mulf %1277, %1276 : vector<64x128xf32>
    %1279 = arith.addf %1274, %1278 : vector<64x128xf32>
    %c2_1083 = arith.constant 2 : index
    %c2_1084 = arith.constant 2 : index
    %c0_1085 = arith.constant 0 : index
    %c0_1086 = arith.constant 0 : index
    %1280 = vector.load %arg7[%c2_1083, %c2_1084, %c0_1085, %c0_1086] : memref<5x5x64x128xf32, #tpu.memory_space<vmem>>, vector<1x1x64x128xf32>
    %1281 = vector.shape_cast %1280 : vector<1x1x64x128xf32> to vector<64x128xf32>
    %1282 = vector.broadcast %170 : f32 to vector<64x128xf32>
    %1283 = arith.mulf %1282, %1281 : vector<64x128xf32>
    %1284 = arith.addf %1279, %1283 : vector<64x128xf32>
    %c3_1087 = arith.constant 3 : index
    %c0_1088 = arith.constant 0 : index
    %c0_1089 = arith.constant 0 : index
    %c0_1090 = arith.constant 0 : index
    %1285 = vector.load %arg7[%c3_1087, %c0_1088, %c0_1089, %c0_1090] : memref<5x5x64x128xf32, #tpu.memory_space<vmem>>, vector<1x1x64x128xf32>
    %1286 = vector.shape_cast %1285 : vector<1x1x64x128xf32> to vector<64x128xf32>
    %1287 = vector.broadcast %171 : f32 to vector<64x128xf32>
    %1288 = arith.mulf %1287, %1286 : vector<64x128xf32>
    %c3_1091 = arith.constant 3 : index
    %c1_1092 = arith.constant 1 : index
    %c0_1093 = arith.constant 0 : index
    %c0_1094 = arith.constant 0 : index
    %1289 = vector.load %arg7[%c3_1091, %c1_1092, %c0_1093, %c0_1094] : memref<5x5x64x128xf32, #tpu.memory_space<vmem>>, vector<1x1x64x128xf32>
    %1290 = vector.shape_cast %1289 : vector<1x1x64x128xf32> to vector<64x128xf32>
    %1291 = vector.broadcast %172 : f32 to vector<64x128xf32>
    %1292 = arith.mulf %1291, %1290 : vector<64x128xf32>
    %1293 = arith.addf %1288, %1292 : vector<64x128xf32>
    %c3_1095 = arith.constant 3 : index
    %c2_1096 = arith.constant 2 : index
    %c0_1097 = arith.constant 0 : index
    %c0_1098 = arith.constant 0 : index
    %1294 = vector.load %arg7[%c3_1095, %c2_1096, %c0_1097, %c0_1098] : memref<5x5x64x128xf32, #tpu.memory_space<vmem>>, vector<1x1x64x128xf32>
    %1295 = vector.shape_cast %1294 : vector<1x1x64x128xf32> to vector<64x128xf32>
    %1296 = vector.broadcast %173 : f32 to vector<64x128xf32>
    %1297 = arith.mulf %1296, %1295 : vector<64x128xf32>
    %1298 = arith.addf %1293, %1297 : vector<64x128xf32>
    %c4_1099 = arith.constant 4 : index
    %c0_1100 = arith.constant 0 : index
    %c0_1101 = arith.constant 0 : index
    %c0_1102 = arith.constant 0 : index
    %1299 = vector.load %arg7[%c4_1099, %c0_1100, %c0_1101, %c0_1102] : memref<5x5x64x128xf32, #tpu.memory_space<vmem>>, vector<1x1x64x128xf32>
    %1300 = vector.shape_cast %1299 : vector<1x1x64x128xf32> to vector<64x128xf32>
    %1301 = vector.broadcast %174 : f32 to vector<64x128xf32>
    %1302 = arith.mulf %1301, %1300 : vector<64x128xf32>
    %c4_1103 = arith.constant 4 : index
    %c1_1104 = arith.constant 1 : index
    %c0_1105 = arith.constant 0 : index
    %c0_1106 = arith.constant 0 : index
    %1303 = vector.load %arg7[%c4_1103, %c1_1104, %c0_1105, %c0_1106] : memref<5x5x64x128xf32, #tpu.memory_space<vmem>>, vector<1x1x64x128xf32>
    %1304 = vector.shape_cast %1303 : vector<1x1x64x128xf32> to vector<64x128xf32>
    %1305 = vector.broadcast %175 : f32 to vector<64x128xf32>
    %1306 = arith.mulf %1305, %1304 : vector<64x128xf32>
    %1307 = arith.addf %1302, %1306 : vector<64x128xf32>
    %c4_1107 = arith.constant 4 : index
    %c2_1108 = arith.constant 2 : index
    %c0_1109 = arith.constant 0 : index
    %c0_1110 = arith.constant 0 : index
    %1308 = vector.load %arg7[%c4_1107, %c2_1108, %c0_1109, %c0_1110] : memref<5x5x64x128xf32, #tpu.memory_space<vmem>>, vector<1x1x64x128xf32>
    %1309 = vector.shape_cast %1308 : vector<1x1x64x128xf32> to vector<64x128xf32>
    %1310 = vector.broadcast %176 : f32 to vector<64x128xf32>
    %1311 = arith.mulf %1310, %1309 : vector<64x128xf32>
    %1312 = arith.addf %1307, %1311 : vector<64x128xf32>
    %1313 = arith.addf %1284, %1298 : vector<64x128xf32>
    %1314 = arith.addf %1313, %1312 : vector<64x128xf32>
    %1315 = arith.maximumf %1270, %1314 : vector<64x128xf32>
    %c2_1111 = arith.constant 2 : index
    %c1_1112 = arith.constant 1 : index
    %c0_1113 = arith.constant 0 : index
    %c0_1114 = arith.constant 0 : index
    %1316 = vector.load %arg7[%c2_1111, %c1_1112, %c0_1113, %c0_1114] : memref<5x5x64x128xf32, #tpu.memory_space<vmem>>, vector<1x1x64x128xf32>
    %1317 = vector.shape_cast %1316 : vector<1x1x64x128xf32> to vector<64x128xf32>
    %1318 = vector.broadcast %168 : f32 to vector<64x128xf32>
    %1319 = arith.mulf %1318, %1317 : vector<64x128xf32>
    %c2_1115 = arith.constant 2 : index
    %c2_1116 = arith.constant 2 : index
    %c0_1117 = arith.constant 0 : index
    %c0_1118 = arith.constant 0 : index
    %1320 = vector.load %arg7[%c2_1115, %c2_1116, %c0_1117, %c0_1118] : memref<5x5x64x128xf32, #tpu.memory_space<vmem>>, vector<1x1x64x128xf32>
    %1321 = vector.shape_cast %1320 : vector<1x1x64x128xf32> to vector<64x128xf32>
    %1322 = vector.broadcast %169 : f32 to vector<64x128xf32>
    %1323 = arith.mulf %1322, %1321 : vector<64x128xf32>
    %1324 = arith.addf %1319, %1323 : vector<64x128xf32>
    %c2_1119 = arith.constant 2 : index
    %c3_1120 = arith.constant 3 : index
    %c0_1121 = arith.constant 0 : index
    %c0_1122 = arith.constant 0 : index
    %1325 = vector.load %arg7[%c2_1119, %c3_1120, %c0_1121, %c0_1122] : memref<5x5x64x128xf32, #tpu.memory_space<vmem>>, vector<1x1x64x128xf32>
    %1326 = vector.shape_cast %1325 : vector<1x1x64x128xf32> to vector<64x128xf32>
    %1327 = vector.broadcast %170 : f32 to vector<64x128xf32>
    %1328 = arith.mulf %1327, %1326 : vector<64x128xf32>
    %1329 = arith.addf %1324, %1328 : vector<64x128xf32>
    %c3_1123 = arith.constant 3 : index
    %c1_1124 = arith.constant 1 : index
    %c0_1125 = arith.constant 0 : index
    %c0_1126 = arith.constant 0 : index
    %1330 = vector.load %arg7[%c3_1123, %c1_1124, %c0_1125, %c0_1126] : memref<5x5x64x128xf32, #tpu.memory_space<vmem>>, vector<1x1x64x128xf32>
    %1331 = vector.shape_cast %1330 : vector<1x1x64x128xf32> to vector<64x128xf32>
    %1332 = vector.broadcast %171 : f32 to vector<64x128xf32>
    %1333 = arith.mulf %1332, %1331 : vector<64x128xf32>
    %c3_1127 = arith.constant 3 : index
    %c2_1128 = arith.constant 2 : index
    %c0_1129 = arith.constant 0 : index
    %c0_1130 = arith.constant 0 : index
    %1334 = vector.load %arg7[%c3_1127, %c2_1128, %c0_1129, %c0_1130] : memref<5x5x64x128xf32, #tpu.memory_space<vmem>>, vector<1x1x64x128xf32>
    %1335 = vector.shape_cast %1334 : vector<1x1x64x128xf32> to vector<64x128xf32>
    %1336 = vector.broadcast %172 : f32 to vector<64x128xf32>
    %1337 = arith.mulf %1336, %1335 : vector<64x128xf32>
    %1338 = arith.addf %1333, %1337 : vector<64x128xf32>
    %c3_1131 = arith.constant 3 : index
    %c3_1132 = arith.constant 3 : index
    %c0_1133 = arith.constant 0 : index
    %c0_1134 = arith.constant 0 : index
    %1339 = vector.load %arg7[%c3_1131, %c3_1132, %c0_1133, %c0_1134] : memref<5x5x64x128xf32, #tpu.memory_space<vmem>>, vector<1x1x64x128xf32>
    %1340 = vector.shape_cast %1339 : vector<1x1x64x128xf32> to vector<64x128xf32>
    %1341 = vector.broadcast %173 : f32 to vector<64x128xf32>
    %1342 = arith.mulf %1341, %1340 : vector<64x128xf32>
    %1343 = arith.addf %1338, %1342 : vector<64x128xf32>
    %c4_1135 = arith.constant 4 : index
    %c1_1136 = arith.constant 1 : index
    %c0_1137 = arith.constant 0 : index
    %c0_1138 = arith.constant 0 : index
    %1344 = vector.load %arg7[%c4_1135, %c1_1136, %c0_1137, %c0_1138] : memref<5x5x64x128xf32, #tpu.memory_space<vmem>>, vector<1x1x64x128xf32>
    %1345 = vector.shape_cast %1344 : vector<1x1x64x128xf32> to vector<64x128xf32>
    %1346 = vector.broadcast %174 : f32 to vector<64x128xf32>
    %1347 = arith.mulf %1346, %1345 : vector<64x128xf32>
    %c4_1139 = arith.constant 4 : index
    %c2_1140 = arith.constant 2 : index
    %c0_1141 = arith.constant 0 : index
    %c0_1142 = arith.constant 0 : index
    %1348 = vector.load %arg7[%c4_1139, %c2_1140, %c0_1141, %c0_1142] : memref<5x5x64x128xf32, #tpu.memory_space<vmem>>, vector<1x1x64x128xf32>
    %1349 = vector.shape_cast %1348 : vector<1x1x64x128xf32> to vector<64x128xf32>
    %1350 = vector.broadcast %175 : f32 to vector<64x128xf32>
    %1351 = arith.mulf %1350, %1349 : vector<64x128xf32>
    %1352 = arith.addf %1347, %1351 : vector<64x128xf32>
    %c4_1143 = arith.constant 4 : index
    %c3_1144 = arith.constant 3 : index
    %c0_1145 = arith.constant 0 : index
    %c0_1146 = arith.constant 0 : index
    %1353 = vector.load %arg7[%c4_1143, %c3_1144, %c0_1145, %c0_1146] : memref<5x5x64x128xf32, #tpu.memory_space<vmem>>, vector<1x1x64x128xf32>
    %1354 = vector.shape_cast %1353 : vector<1x1x64x128xf32> to vector<64x128xf32>
    %1355 = vector.broadcast %176 : f32 to vector<64x128xf32>
    %1356 = arith.mulf %1355, %1354 : vector<64x128xf32>
    %1357 = arith.addf %1352, %1356 : vector<64x128xf32>
    %1358 = arith.addf %1329, %1343 : vector<64x128xf32>
    %1359 = arith.addf %1358, %1357 : vector<64x128xf32>
    %1360 = arith.maximumf %1315, %1359 : vector<64x128xf32>
    %c2_1147 = arith.constant 2 : index
    %c2_1148 = arith.constant 2 : index
    %c0_1149 = arith.constant 0 : index
    %c0_1150 = arith.constant 0 : index
    %1361 = vector.load %arg7[%c2_1147, %c2_1148, %c0_1149, %c0_1150] : memref<5x5x64x128xf32, #tpu.memory_space<vmem>>, vector<1x1x64x128xf32>
    %1362 = vector.shape_cast %1361 : vector<1x1x64x128xf32> to vector<64x128xf32>
    %1363 = vector.broadcast %168 : f32 to vector<64x128xf32>
    %1364 = arith.mulf %1363, %1362 : vector<64x128xf32>
    %c2_1151 = arith.constant 2 : index
    %c3_1152 = arith.constant 3 : index
    %c0_1153 = arith.constant 0 : index
    %c0_1154 = arith.constant 0 : index
    %1365 = vector.load %arg7[%c2_1151, %c3_1152, %c0_1153, %c0_1154] : memref<5x5x64x128xf32, #tpu.memory_space<vmem>>, vector<1x1x64x128xf32>
    %1366 = vector.shape_cast %1365 : vector<1x1x64x128xf32> to vector<64x128xf32>
    %1367 = vector.broadcast %169 : f32 to vector<64x128xf32>
    %1368 = arith.mulf %1367, %1366 : vector<64x128xf32>
    %1369 = arith.addf %1364, %1368 : vector<64x128xf32>
    %c2_1155 = arith.constant 2 : index
    %c4_1156 = arith.constant 4 : index
    %c0_1157 = arith.constant 0 : index
    %c0_1158 = arith.constant 0 : index
    %1370 = vector.load %arg7[%c2_1155, %c4_1156, %c0_1157, %c0_1158] : memref<5x5x64x128xf32, #tpu.memory_space<vmem>>, vector<1x1x64x128xf32>
    %1371 = vector.shape_cast %1370 : vector<1x1x64x128xf32> to vector<64x128xf32>
    %1372 = vector.broadcast %170 : f32 to vector<64x128xf32>
    %1373 = arith.mulf %1372, %1371 : vector<64x128xf32>
    %1374 = arith.addf %1369, %1373 : vector<64x128xf32>
    %c3_1159 = arith.constant 3 : index
    %c2_1160 = arith.constant 2 : index
    %c0_1161 = arith.constant 0 : index
    %c0_1162 = arith.constant 0 : index
    %1375 = vector.load %arg7[%c3_1159, %c2_1160, %c0_1161, %c0_1162] : memref<5x5x64x128xf32, #tpu.memory_space<vmem>>, vector<1x1x64x128xf32>
    %1376 = vector.shape_cast %1375 : vector<1x1x64x128xf32> to vector<64x128xf32>
    %1377 = vector.broadcast %171 : f32 to vector<64x128xf32>
    %1378 = arith.mulf %1377, %1376 : vector<64x128xf32>
    %c3_1163 = arith.constant 3 : index
    %c3_1164 = arith.constant 3 : index
    %c0_1165 = arith.constant 0 : index
    %c0_1166 = arith.constant 0 : index
    %1379 = vector.load %arg7[%c3_1163, %c3_1164, %c0_1165, %c0_1166] : memref<5x5x64x128xf32, #tpu.memory_space<vmem>>, vector<1x1x64x128xf32>
    %1380 = vector.shape_cast %1379 : vector<1x1x64x128xf32> to vector<64x128xf32>
    %1381 = vector.broadcast %172 : f32 to vector<64x128xf32>
    %1382 = arith.mulf %1381, %1380 : vector<64x128xf32>
    %1383 = arith.addf %1378, %1382 : vector<64x128xf32>
    %c3_1167 = arith.constant 3 : index
    %c4_1168 = arith.constant 4 : index
    %c0_1169 = arith.constant 0 : index
    %c0_1170 = arith.constant 0 : index
    %1384 = vector.load %arg7[%c3_1167, %c4_1168, %c0_1169, %c0_1170] : memref<5x5x64x128xf32, #tpu.memory_space<vmem>>, vector<1x1x64x128xf32>
    %1385 = vector.shape_cast %1384 : vector<1x1x64x128xf32> to vector<64x128xf32>
    %1386 = vector.broadcast %173 : f32 to vector<64x128xf32>
    %1387 = arith.mulf %1386, %1385 : vector<64x128xf32>
    %1388 = arith.addf %1383, %1387 : vector<64x128xf32>
    %c4_1171 = arith.constant 4 : index
    %c2_1172 = arith.constant 2 : index
    %c0_1173 = arith.constant 0 : index
    %c0_1174 = arith.constant 0 : index
    %1389 = vector.load %arg7[%c4_1171, %c2_1172, %c0_1173, %c0_1174] : memref<5x5x64x128xf32, #tpu.memory_space<vmem>>, vector<1x1x64x128xf32>
    %1390 = vector.shape_cast %1389 : vector<1x1x64x128xf32> to vector<64x128xf32>
    %1391 = vector.broadcast %174 : f32 to vector<64x128xf32>
    %1392 = arith.mulf %1391, %1390 : vector<64x128xf32>
    %c4_1175 = arith.constant 4 : index
    %c3_1176 = arith.constant 3 : index
    %c0_1177 = arith.constant 0 : index
    %c0_1178 = arith.constant 0 : index
    %1393 = vector.load %arg7[%c4_1175, %c3_1176, %c0_1177, %c0_1178] : memref<5x5x64x128xf32, #tpu.memory_space<vmem>>, vector<1x1x64x128xf32>
    %1394 = vector.shape_cast %1393 : vector<1x1x64x128xf32> to vector<64x128xf32>
    %1395 = vector.broadcast %175 : f32 to vector<64x128xf32>
    %1396 = arith.mulf %1395, %1394 : vector<64x128xf32>
    %1397 = arith.addf %1392, %1396 : vector<64x128xf32>
    %c4_1179 = arith.constant 4 : index
    %c4_1180 = arith.constant 4 : index
    %c0_1181 = arith.constant 0 : index
    %c0_1182 = arith.constant 0 : index
    %1398 = vector.load %arg7[%c4_1179, %c4_1180, %c0_1181, %c0_1182] : memref<5x5x64x128xf32, #tpu.memory_space<vmem>>, vector<1x1x64x128xf32>
    %1399 = vector.shape_cast %1398 : vector<1x1x64x128xf32> to vector<64x128xf32>
    %1400 = vector.broadcast %176 : f32 to vector<64x128xf32>
    %1401 = arith.mulf %1400, %1399 : vector<64x128xf32>
    %1402 = arith.addf %1397, %1401 : vector<64x128xf32>
    %1403 = arith.addf %1374, %1388 : vector<64x128xf32>
    %1404 = arith.addf %1403, %1402 : vector<64x128xf32>
    %1405 = arith.maximumf %1360, %1404 : vector<64x128xf32>
    %c2_1183 = arith.constant 2 : index
    %1406 = memref.load %arg2[%c2_1183] : memref<3xf32, #tpu.memory_space<smem>>
    %1407 = vector.broadcast %1406 : f32 to vector<64x128xf32>
    %1408 = arith.addf %1405, %1407 : vector<64x128xf32>
    %cst_1184 = arith.constant 0.000000e+00 : f32
    %1409 = vector.broadcast %cst_1184 : f32 to vector<64x128xf32>
    %1410 = arith.maximumf %1408, %1409 : vector<64x128xf32>
    %c2_1185 = arith.constant 2 : index
    %c0_1186 = arith.constant 0 : index
    %c0_1187 = arith.constant 0 : index
    %1411 = vector.load %arg4[%c2_1185, %c0_1186, %c0_1187] : memref<3x10x64xf32, #tpu.memory_space<vmem>>, vector<1x10x64xf32>
    %1412 = vector.shape_cast %1411 : vector<1x10x64xf32> to vector<10x64xf32>
    %cst_1188 = arith.constant dense<0.000000e+00> : vector<10x128xf32>
    %1413 = tpu.matmul %1412, %1410, %cst_1188 {dimension_numbers = #tpu.dot_dimension_numbers<[1], [0], [0], [1], [0, 0, 1, 1], [], []>} : vector<10x64xf32>, vector<64x128xf32>, vector<10x128xf32> -> vector<10x128xf32>
    %1414 = arith.addf %1001, %1413 : vector<10x128xf32>
    %c0_1189 = arith.constant 0 : index
    %c0_1190 = arith.constant 0 : index
    %1415 = vector.load %arg5[%c0_1189, %c0_1190] : memref<10x1xf32, #tpu.memory_space<vmem>>, vector<10x1xf32>
    %1416 = vector.broadcast %1415 : vector<10x1xf32> to vector<10x128xf32>
    %1417 = arith.addf %1414, %1416 : vector<10x128xf32>
    %cst_1191 = arith.constant dense<0xFF800000> : vector<128xf32>
    %1418 = vector.multi_reduction <maximumf>, %1417, %cst_1191 [0] : vector<10x128xf32> to vector<128xf32>
    %1419 = vector.shape_cast %1418 : vector<128xf32> to vector<1x128xf32>
    %1420 = vector.broadcast %1419 : vector<1x128xf32> to vector<10x128xf32>
    %1421 = arith.subf %1417, %1420 : vector<10x128xf32>
    %1422 = math.exp %1421 : vector<10x128xf32>
    %cst_1192 = arith.constant dense<0.000000e+00> : vector<128xf32>
    %1423 = vector.multi_reduction <add>, %1422, %cst_1192 [0] : vector<10x128xf32> to vector<128xf32>
    %1424 = vector.shape_cast %1423 : vector<128xf32> to vector<1x128xf32>
    %1425 = math.log %1424 : vector<1x128xf32>
    %1426 = vector.broadcast %1425 : vector<1x128xf32> to vector<10x128xf32>
    %1427 = arith.subf %1421, %1426 : vector<10x128xf32>
    %c0_1193 = arith.constant 0 : index
    %c0_1194 = arith.constant 0 : index
    %1428 = vector.load %arg6[%c0_1193, %c0_1194] : memref<10x128xf32, #tpu.memory_space<vmem>>, vector<10x128xf32>
    tpu.vector_store %arg6[%c0_1193, %c0_1194], %1427 {strides = array<i32>} : memref<10x128xf32, #tpu.memory_space<vmem>>, vector<10x128xf32>,
    return
  }
  func.func @transform_0(%arg0: i32) -> i32 {
    %c0_i32 = arith.constant 0 : i32
    %c0_i32_0 = arith.constant 0 : i32
    return %c0_i32 : i32
  }
  func.func @transform_1(%arg0: i32) -> i32 {
    %c0_i32 = arith.constant 0 : i32
    %c0_i32_0 = arith.constant 0 : i32
    return %c0_i32 : i32
  }
  func.func @transform_2(%arg0: i32) -> (i32, i32, i32, i32) {
    %c0_i32 = arith.constant 0 : i32
    %c0_i32_0 = arith.constant 0 : i32
    %c0_i32_1 = arith.constant 0 : i32
    %c0_i32_2 = arith.constant 0 : i32
    return %c0_i32, %c0_i32_0, %c0_i32_1, %arg0 : i32, i32, i32, i32
  }
  func.func @transform_3(%arg0: i32) -> (i32, i32, i32) {
    %c0_i32 = arith.constant 0 : i32
    %c0_i32_0 = arith.constant 0 : i32
    %c0_i32_1 = arith.constant 0 : i32
    %c0_i32_2 = arith.constant 0 : i32
    return %c0_i32, %c0_i32_0, %c0_i32_1 : i32, i32, i32
  }
  func.func @transform_4(%arg0: i32) -> (i32, i32) {
    %c0_i32 = arith.constant 0 : i32
    %c0_i32_0 = arith.constant 0 : i32
    %c0_i32_1 = arith.constant 0 : i32
    return %c0_i32, %c0_i32_0 : i32, i32
  }
  func.func @transform_5(%arg0: i32) -> (i32, i32) {
    %c0_i32 = arith.constant 0 : i32
    %c0_i32_0 = arith.constant 0 : i32
    return %c0_i32, %arg0 : i32, i32
  }
}

</mosaic_0001>

<llo_original>
// kernel: convnet_forward.1
$region0: #{convnet_forward.1}
  #allocation0 [shape = 'u32[]', space=smem, size = 0x4, offset = 0x4, fixed_abs, tag = 'smem constant byte address 0x4 - core index']
  #allocation1 [shape = 'u32[144,128]{1,0:T(1,128)}', space=vmem, size = 0x12000, scoped, tag = 'internal scratch']
  #allocation2 [shape = 'f32[5,5,64,128]{3,2,1,0:T(8,128)}', space=vmem, size = 0xc8000, scoped, tag = 'scratch operand']
  %s0 = inlined_call_operand.vmem [shape: f32[27], index: 0, kind: input, shape index: {}]
  %s1 = inlined_call_operand.vmem [shape: f32[3], index: 1, kind: input, shape index: {}]
  %s2 = inlined_call_operand.vmem [shape: bf16[5,5,64,128], index: 2, kind: input, shape index: {}]
  %s3 = inlined_call_operand.vmem [shape: f32[3,10,64], index: 3, kind: input, shape index: {}]
  %s4 = inlined_call_operand.vmem [shape: f32[10,1], index: 4, kind: input, shape index: {}]
  %s5 = inlined_call_operand.vmem [shape: f32[10,128], index: 5, kind: output, shape index: {}]
  %s6 = sld [smem:[#allocation0]]
  $region38: #{convnet_forward.1} parent=0
    _
  %s8 = ssub.s32 1, %s6
  %s9 = scalar_select 0, %s8, %s6
  $region1: #{convnet_forward.1} parent=0
    #allocation3 [shape = 'u8[512]{0}', space=smem, size = 0x200, scoped, tag = 'input window, operand 0, single buffered']
    #allocation4 [shape = 's32[1]{0}', space=sflag, size = 0x4, scoped, tag = 'scoped memory for convnet_forward.1']
    #allocation5 [shape = 'u8[512]{0}', space=smem, size = 0x200, scoped, tag = 'input window, operand 1, single buffered']
    #allocation6 [shape = 's32[1]{0}', space=sflag, size = 0x4, scoped, tag = 'scoped memory for convnet_forward.1']
    %10 = vsyncpa [#allocation4], 0
    %11 = vsyncpa [#allocation6], 0
    // Predicated region
    $region2: #{convnet_forward.1} parent=1 // pred_check
      _
    $region3: #{convnet_forward.1} parent=1 // pred_check_branch
      %13 = sbr.rel (0) target = $region5
    $region4: #{convnet_forward.1} parent=1 // pred_region
      %s15 = ssub.s32 16, 16
      %16 = vsyncadd [#allocation4], %s15
      %s18 = sshll.u32 %s0, 4
      %s19 = int_to_ptr.vmem [resolvable:$true] %s18
      %21 = dma.vmem_to_smem %s19, 16, [#allocation3], [#allocation4]
    $region5: #{convnet_forward.1} parent=1 // pred_fallthru
      _
    // Predicated region
    $region6: #{convnet_forward.1} parent=1 // pred_check
      _
    $region7: #{convnet_forward.1} parent=1 // pred_check_branch
      %23 = sbr.rel (0) target = $region9
    $region8: #{convnet_forward.1} parent=1 // pred_region
      %s25 = ssub.s32 16, 16
      %26 = vsyncadd [#allocation6], %s25
      %s28 = sshll.u32 %s1, 4
      %s29 = int_to_ptr.vmem [resolvable:$true] %s28
      %31 = dma.vmem_to_smem %s29, 16, [#allocation5], [#allocation6]
    $region9: #{convnet_forward.1} parent=1 // pred_fallthru
      _
    // Predicated region
    $region10: #{convnet_forward.1} parent=1 // pred_check
      _
    $region11: #{convnet_forward.1} parent=1 // pred_check_branch
      %33 = sbr.rel (0) target = $region13
    $region12: #{convnet_forward.1} parent=1 // pred_region
      _
    $region13: #{convnet_forward.1} parent=1 // pred_fallthru
      _
    // Predicated region
    $region14: #{convnet_forward.1} parent=1 // pred_check
      _
    $region15: #{convnet_forward.1} parent=1 // pred_check_branch
      %35 = sbr.rel (0) target = $region17
    $region16: #{convnet_forward.1} parent=1 // pred_region
      _
    $region17: #{convnet_forward.1} parent=1 // pred_fallthru
      _
    // Predicated region
    $region18: #{convnet_forward.1} parent=1 // pred_check
      _
    $region19: #{convnet_forward.1} parent=1 // pred_check_branch
      %37 = sbr.rel (0) target = $region21
    $region20: #{convnet_forward.1} parent=1 // pred_region
      _
    $region21: #{convnet_forward.1} parent=1 // pred_fallthru
      _
    // Predicated region
    $region22: #{convnet_forward.1} parent=1 // pred_check
      _
    $region23: #{convnet_forward.1} parent=1 // pred_check_branch
      %39 = sbr.rel (0) target = $region25
    $region24: #{convnet_forward.1} parent=1 // pred_region
      %40 = dma.done [#allocation4], 16
    $region25: #{convnet_forward.1} parent=1 // pred_fallthru
      _
    // Predicated region
    $region26: #{convnet_forward.1} parent=1 // pred_check
      _
    $region27: #{convnet_forward.1} parent=1 // pred_check_branch
      %42 = sbr.rel (0) target = $region29
    $region28: #{convnet_forward.1} parent=1 // pred_region
      %43 = dma.done [#allocation6], 16
    $region29: #{convnet_forward.1} parent=1 // pred_fallthru
      _
    %44 = sfence
    %v45 = vld [vmem:[%s2] sm:$0xf]
    %v46 = vld [vmem:[%s2 + $0x4] sm:$0xf]
    %v47 = vld [vmem:[%s2 + $0x8] sm:$0xf]
    %v48 = vld [vmem:[%s2 + $0xc] sm:$0xf]
    %v49 = vld [vmem:[%s2 + $0x10] sm:$0xf]
    %v50 = vld [vmem:[%s2 + $0x14] sm:$0xf]
    %v51 = vld [vmem:[%s2 + $0x18] sm:$0xf]
    %v52 = vld [vmem:[%s2 + $0x1c] sm:$0xf]
    %v53 = vunpack.c.l.bf16 %v45
    %v54 = vunpack.c.l.bf16 %v46
    %v55 = vunpack.c.l.bf16 %v47
    %v56 = vunpack.c.l.bf16 %v48
    %v57 = vunpack.c.l.bf16 %v49
    %v58 = vunpack.c.l.bf16 %v50
    %v59 = vunpack.c.l.bf16 %v51
    %v60 = vunpack.c.l.bf16 %v52
    %61 = vst [vmem:[#allocation2] sm:$0xff] %v53
    %62 = vst [vmem:[#allocation2 + $0x8] sm:$0xff] %v54
    %63 = vst [vmem:[#allocation2 + $0x10] sm:$0xff] %v55
    %64 = vst [vmem:[#allocation2 + $0x18] sm:$0xff] %v56
    %65 = vst [vmem:[#allocation2 + $0x20] sm:$0xff] %v57
    %66 = vst [vmem:[#allocation2 + $0x28] sm:$0xff] %v58
    %67 = vst [vmem:[#allocation2 + $0x30] sm:$0xff] %v59
    %68 = vst [vmem:[#allocation2 + $0x38] sm:$0xff] %v60
    %s69 = scalar_lea.vmem %s2, 32
    %v70 = vld [vmem:[%s69] sm:$0xf]
    %v71 = vld [vmem:[%s69 + $0x4] sm:$0xf]
    %v72 = vld [vmem:[%s69 + $0x8] sm:$0xf]
    %v73 = vld [vmem:[%s69 + $0xc] sm:$0xf]
    %v74 = vld [vmem:[%s69 + $0x10] sm:$0xf]
    %v75 = vld [vmem:[%s69 + $0x14] sm:$0xf]
    %v76 = vld [vmem:[%s69 + $0x18] sm:$0xf]
    %v77 = vld [vmem:[%s69 + $0x1c] sm:$0xf]
    %v78 = vunpack.c.l.bf16 %v70
    %v79 = vunpack.c.l.bf16 %v71
    %v80 = vunpack.c.l.bf16 %v72
    %v81 = vunpack.c.l.bf16 %v73
    %v82 = vunpack.c.l.bf16 %v74
    %v83 = vunpack.c.l.bf16 %v75
    %v84 = vunpack.c.l.bf16 %v76
    %v85 = vunpack.c.l.bf16 %v77
    %s86 = scalar_lea.vmem [#allocation2], 64
    %87 = vst [vmem:[%s86] sm:$0xff] %v78
    %88 = vst [vmem:[%s86 + $0x8] sm:$0xff] %v79
    %89 = vst [vmem:[%s86 + $0x10] sm:$0xff] %v80
    %90 = vst [vmem:[%s86 + $0x18] sm:$0xff] %v81
    %91 = vst [vmem:[%s86 + $0x20] sm:$0xff] %v82
    %92 = vst [vmem:[%s86 + $0x28] sm:$0xff] %v83
    %93 = vst [vmem:[%s86 + $0x30] sm:$0xff] %v84
    %94 = vst [vmem:[%s86 + $0x38] sm:$0xff] %v85
    %s95 = scalar_lea.vmem %s2, 64
    %v96 = vld [vmem:[%s95] sm:$0xf]
    %v97 = vld [vmem:[%s95 + $0x4] sm:$0xf]
    %v98 = vld [vmem:[%s95 + $0x8] sm:$0xf]
    %v99 = vld [vmem:[%s95 + $0xc] sm:$0xf]
    %v100 = vld [vmem:[%s95 + $0x10] sm:$0xf]
    %v101 = vld [vmem:[%s95 + $0x14] sm:$0xf]
    %v102 = vld [vmem:[%s95 + $0x18] sm:$0xf]
    %v103 = vld [vmem:[%s95 + $0x1c] sm:$0xf]
    %v104 = vunpack.c.l.bf16 %v96
    %v105 = vunpack.c.l.bf16 %v97
    %v106 = vunpack.c.l.bf16 %v98
    %v107 = vunpack.c.l.bf16 %v99
    %v108 = vunpack.c.l.bf16 %v100
    %v109 = vunpack.c.l.bf16 %v101
    %v110 = vunpack.c.l.bf16 %v102
    %v111 = vunpack.c.l.bf16 %v103
    %s112 = scalar_lea.vmem [#allocation2], 128
    %113 = vst [vmem:[%s112] sm:$0xff] %v104
    %114 = vst [vmem:[%s112 + $0x8] sm:$0xff] %v105
    %115 = vst [vmem:[%s112 + $0x10] sm:$0xff] %v106
    %116 = vst [vmem:[%s112 + $0x18] sm:$0xff] %v107
    %117 = vst [vmem:[%s112 + $0x20] sm:$0xff] %v108
    %118 = vst [vmem:[%s112 + $0x28] sm:$0xff] %v109
    %119 = vst [vmem:[%s112 + $0x30] sm:$0xff] %v110
    %120 = vst [vmem:[%s112 + $0x38] sm:$0xff] %v111
    %s121 = scalar_lea.vmem %s2, 96
    %v122 = vld [vmem:[%s121] sm:$0xf]
    %v123 = vld [vmem:[%s121 + $0x4] sm:$0xf]
    %v124 = vld [vmem:[%s121 + $0x8] sm:$0xf]
    %v125 = vld [vmem:[%s121 + $0xc] sm:$0xf]
    %v126 = vld [vmem:[%s121 + $0x10] sm:$0xf]
    %v127 = vld [vmem:[%s121 + $0x14] sm:$0xf]
    %v128 = vld [vmem:[%s121 + $0x18] sm:$0xf]
    %v129 = vld [vmem:[%s121 + $0x1c] sm:$0xf]
    %v130 = vunpack.c.l.bf16 %v122
    %v131 = vunpack.c.l.bf16 %v123
    %v132 = vunpack.c.l.bf16 %v124
    %v133 = vunpack.c.l.bf16 %v125
    %v134 = vunpack.c.l.bf16 %v126
    %v135 = vunpack.c.l.bf16 %v127
    %v136 = vunpack.c.l.bf16 %v128
    %v137 = vunpack.c.l.bf16 %v129
    %s138 = scalar_lea.vmem [#allocation2], 192
    %139 = vst [vmem:[%s138] sm:$0xff] %v130
    %140 = vst [vmem:[%s138 + $0x8] sm:$0xff] %v131
    %141 = vst [vmem:[%s138 + $0x10] sm:$0xff] %v132
    %142 = vst [vmem:[%s138 + $0x18] sm:$0xff] %v133
    %143 = vst [vmem:[%s138 + $0x20] sm:$0xff] %v134
    %144 = vst [vmem:[%s138 + $0x28] sm:$0xff] %v135
    %145 = vst [vmem:[%s138 + $0x30] sm:$0xff] %v136
    %146 = vst [vmem:[%s138 + $0x38] sm:$0xff] %v137
    %s147 = scalar_lea.vmem %s2, 128
    %v148 = vld [vmem:[%s147] sm:$0xf]
    %v149 = vld [vmem:[%s147 + $0x4] sm:$0xf]
    %v150 = vld [vmem:[%s147 + $0x8] sm:$0xf]
    %v151 = vld [vmem:[%s147 + $0xc] sm:$0xf]
    %v152 = vld [vmem:[%s147 + $0x10] sm:$0xf]
    %v153 = vld [vmem:[%s147 + $0x14] sm:$0xf]
    %v154 = vld [vmem:[%s147 + $0x18] sm:$0xf]
    %v155 = vld [vmem:[%s147 + $0x1c] sm:$0xf]
    %v156 = vunpack.c.l.bf16 %v148
    %v157 = vunpack.c.l.bf16 %v149
    %v158 = vunpack.c.l.bf16 %v150
    %v159 = vunpack.c.l.bf16 %v151
    %v160 = vunpack.c.l.bf16 %v152
    %v161 = vunpack.c.l.bf16 %v153
    %v162 = vunpack.c.l.bf16 %v154
    %v163 = vunpack.c.l.bf16 %v155
    %s164 = scalar_lea.vmem [#allocation2], 256
    %165 = vst [vmem:[%s164] sm:$0xff] %v156
    %166 = vst [vmem:[%s164 + $0x8] sm:$0xff] %v157
    %167 = vst [vmem:[%s164 + $0x10] sm:$0xff] %v158
    %168 = vst [vmem:[%s164 + $0x18] sm:$0xff] %v159
    %169 = vst [vmem:[%s164 + $0x20] sm:$0xff] %v160
    %170 = vst [vmem:[%s164 + $0x28] sm:$0xff] %v161
    %171 = vst [vmem:[%s164 + $0x30] sm:$0xff] %v162
    %172 = vst [vmem:[%s164 + $0x38] sm:$0xff] %v163
    %s173 = scalar_lea.vmem %s2, 160
    %v174 = vld [vmem:[%s173] sm:$0xf]
    %v175 = vld [vmem:[%s173 + $0x4] sm:$0xf]
    %v176 = vld [vmem:[%s173 + $0x8] sm:$0xf]
    %v177 = vld [vmem:[%s173 + $0xc] sm:$0xf]
    %v178 = vld [vmem:[%s173 + $0x10] sm:$0xf]
    %v179 = vld [vmem:[%s173 + $0x14] sm:$0xf]
    %v180 = vld [vmem:[%s173 + $0x18] sm:$0xf]
    %v181 = vld [vmem:[%s173 + $0x1c] sm:$0xf]
    %v182 = vunpack.c.l.bf16 %v174
    %v183 = vunpack.c.l.bf16 %v175
    %v184 = vunpack.c.l.bf16 %v176
    %v185 = vunpack.c.l.bf16 %v177
    %v186 = vunpack.c.l.bf16 %v178
    %v187 = vunpack.c.l.bf16 %v179
    %v188 = vunpack.c.l.bf16 %v180
    %v189 = vunpack.c.l.bf16 %v181
    %s190 = scalar_lea.vmem [#allocation2], 320
    %191 = vst [vmem:[%s190] sm:$0xff] %v182
    %192 = vst [vmem:[%s190 + $0x8] sm:$0xff] %v183
    %193 = vst [vmem:[%s190 + $0x10] sm:$0xff] %v184
    %194 = vst [vmem:[%s190 + $0x18] sm:$0xff] %v185
    %195 = vst [vmem:[%s190 + $0x20] sm:$0xff] %v186
    %196 = vst [vmem:[%s190 + $0x28] sm:$0xff] %v187
    %197 = vst [vmem:[%s190 + $0x30] sm:$0xff] %v188
    %198 = vst [vmem:[%s190 + $0x38] sm:$0xff] %v189
    %s199 = scalar_lea.vmem %s2, 192
    %v200 = vld [vmem:[%s199] sm:$0xf]
    %v201 = vld [vmem:[%s199 + $0x4] sm:$0xf]
    %v202 = vld [vmem:[%s199 + $0x8] sm:$0xf]
    %v203 = vld [vmem:[%s199 + $0xc] sm:$0xf]
    %v204 = vld [vmem:[%s199 + $0x10] sm:$0xf]
    %v205 = vld [vmem:[%s199 + $0x14] sm:$0xf]
    %v206 = vld [vmem:[%s199 + $0x18] sm:$0xf]
    %v207 = vld [vmem:[%s199 + $0x1c] sm:$0xf]
    %v208 = vunpack.c.l.bf16 %v200
    %v209 = vunpack.c.l.bf16 %v201
    %v210 = vunpack.c.l.bf16 %v202
    %v211 = vunpack.c.l.bf16 %v203
    %v212 = vunpack.c.l.bf16 %v204
    %v213 = vunpack.c.l.bf16 %v205
    %v214 = vunpack.c.l.bf16 %v206
    %v215 = vunpack.c.l.bf16 %v207
    %s216 = scalar_lea.vmem [#allocation2], 384
    %217 = vst [vmem:[%s216] sm:$0xff] %v208
    %218 = vst [vmem:[%s216 + $0x8] sm:$0xff] %v209
    %219 = vst [vmem:[%s216 + $0x10] sm:$0xff] %v210
    %220 = vst [vmem:[%s216 + $0x18] sm:$0xff] %v211
    %221 = vst [vmem:[%s216 + $0x20] sm:$0xff] %v212
    %222 = vst [vmem:[%s216 + $0x28] sm:$0xff] %v213
    %223 = vst [vmem:[%s216 + $0x30] sm:$0xff] %v214
    %224 = vst [vmem:[%s216 + $0x38] sm:$0xff] %v215
    %s225 = scalar_lea.vmem %s2, 224
    %v226 = vld [vmem:[%s225] sm:$0xf]
    %v227 = vld [vmem:[%s225 + $0x4] sm:$0xf]
    %v228 = vld [vmem:[%s225 + $0x8] sm:$0xf]
    %v229 = vld [vmem:[%s225 + $0xc] sm:$0xf]
    %v230 = vld [vmem:[%s225 + $0x10] sm:$0xf]
    %v231 = vld [vmem:[%s225 + $0x14] sm:$0xf]
    %v232 = vld [vmem:[%s225 + $0x18] sm:$0xf]
    %v233 = vld [vmem:[%s225 + $0x1c] sm:$0xf]
    %v234 = vunpack.c.l.bf16 %v226
    %v235 = vunpack.c.l.bf16 %v227
    %v236 = vunpack.c.l.bf16 %v228
    %v237 = vunpack.c.l.bf16 %v229
    %v238 = vunpack.c.l.bf16 %v230
    %v239 = vunpack.c.l.bf16 %v231
    %v240 = vunpack.c.l.bf16 %v232
    %v241 = vunpack.c.l.bf16 %v233
    %s242 = scalar_lea.vmem [#allocation2], 448
    %243 = vst [vmem:[%s242] sm:$0xff] %v234
    %244 = vst [vmem:[%s242 + $0x8] sm:$0xff] %v235
    %245 = vst [vmem:[%s242 + $0x10] sm:$0xff] %v236
    %246 = vst [vmem:[%s242 + $0x18] sm:$0xff] %v237
    %247 = vst [vmem:[%s242 + $0x20] sm:$0xff] %v238
    %248 = vst [vmem:[%s242 + $0x28] sm:$0xff] %v239
    %249 = vst [vmem:[%s242 + $0x30] sm:$0xff] %v240
    %250 = vst [vmem:[%s242 + $0x38] sm:$0xff] %v241
    %s251 = scalar_lea.vmem %s2, 256
    %v252 = vld [vmem:[%s251] sm:$0xf]
    %v253 = vld [vmem:[%s251 + $0x4] sm:$0xf]
    %v254 = vld [vmem:[%s251 + $0x8] sm:$0xf]
    %v255 = vld [vmem:[%s251 + $0xc] sm:$0xf]
    %v256 = vld [vmem:[%s251 + $0x10] sm:$0xf]
    %v257 = vld [vmem:[%s251 + $0x14] sm:$0xf]
    %v258 = vld [vmem:[%s251 + $0x18] sm:$0xf]
    %v259 = vld [vmem:[%s251 + $0x1c] sm:$0xf]
    %v260 = vunpack.c.l.bf16 %v252
    %v261 = vunpack.c.l.bf16 %v253
    %v262 = vunpack.c.l.bf16 %v254
    %v263 = vunpack.c.l.bf16 %v255
    %v264 = vunpack.c.l.bf16 %v256
    %v265 = vunpack.c.l.bf16 %v257
    %v266 = vunpack.c.l.bf16 %v258
    %v267 = vunpack.c.l.bf16 %v259
    %s268 = scalar_lea.vmem [#allocation2], 512
    %269 = vst [vmem:[%s268] sm:$0xff] %v260
    %270 = vst [vmem:[%s268 + $0x8] sm:$0xff] %v261
    %271 = vst [vmem:[%s268 + $0x10] sm:$0xff] %v262
    %272 = vst [vmem:[%s268 + $0x18] sm:$0xff] %v263
    %273 = vst [vmem:[%s268 + $0x20] sm:$0xff] %v264
    %274 = vst [vmem:[%s268 + $0x28] sm:$0xff] %v265
    %275 = vst [vmem:[%s268 + $0x30] sm:$0xff] %v266
    %276 = vst [vmem:[%s268 + $0x38] sm:$0xff] %v267
    %s277 = scalar_lea.vmem %s2, 288
    %v278 = vld [vmem:[%s277] sm:$0xf]
    %v279 = vld [vmem:[%s277 + $0x4] sm:$0xf]
    %v280 = vld [vmem:[%s277 + $0x8] sm:$0xf]
    %v281 = vld [vmem:[%s277 + $0xc] sm:$0xf]
    %v282 = vld [vmem:[%s277 + $0x10] sm:$0xf]
    %v283 = vld [vmem:[%s277 + $0x14] sm:$0xf]
    %v284 = vld [vmem:[%s277 + $0x18] sm:$0xf]
    %v285 = vld [vmem:[%s277 + $0x1c] sm:$0xf]
    %v286 = vunpack.c.l.bf16 %v278
    %v287 = vunpack.c.l.bf16 %v279
    %v288 = vunpack.c.l.bf16 %v280
    %v289 = vunpack.c.l.bf16 %v281
    %v290 = vunpack.c.l.bf16 %v282
    %v291 = vunpack.c.l.bf16 %v283
    %v292 = vunpack.c.l.bf16 %v284
    %v293 = vunpack.c.l.bf16 %v285
    %s294 = scalar_lea.vmem [#allocation2], 576
    %295 = vst [vmem:[%s294] sm:$0xff] %v286
    %296 = vst [vmem:[%s294 + $0x8] sm:$0xff] %v287
    %297 = vst [vmem:[%s294 + $0x10] sm:$0xff] %v288
    %298 = vst [vmem:[%s294 + $0x18] sm:$0xff] %v289
    %299 = vst [vmem:[%s294 + $0x20] sm:$0xff] %v290
    %300 = vst [vmem:[%s294 + $0x28] sm:$0xff] %v291
    %301 = vst [vmem:[%s294 + $0x30] sm:$0xff] %v292
    %302 = vst [vmem:[%s294 + $0x38] sm:$0xff] %v293
    %s303 = scalar_lea.vmem %s2, 320
    %v304 = vld [vmem:[%s303] sm:$0xf]
    %v305 = vld [vmem:[%s303 + $0x4] sm:$0xf]
    %v306 = vld [vmem:[%s303 + $0x8] sm:$0xf]
    %v307 = vld [vmem:[%s303 + $0xc] sm:$0xf]
    %v308 = vld [vmem:[%s303 + $0x10] sm:$0xf]
    %v309 = vld [vmem:[%s303 + $0x14] sm:$0xf]
    %v310 = vld [vmem:[%s303 + $0x18] sm:$0xf]
    %v311 = vld [vmem:[%s303 + $0x1c] sm:$0xf]
    %v312 = vunpack.c.l.bf16 %v304
    %v313 = vunpack.c.l.bf16 %v305
    %v314 = vunpack.c.l.bf16 %v306
    %v315 = vunpack.c.l.bf16 %v307
    %v316 = vunpack.c.l.bf16 %v308
    %v317 = vunpack.c.l.bf16 %v309
    %v318 = vunpack.c.l.bf16 %v310
    %v319 = vunpack.c.l.bf16 %v311
    %s320 = scalar_lea.vmem [#allocation2], 640
    %321 = vst [vmem:[%s320] sm:$0xff] %v312
    %322 = vst [vmem:[%s320 + $0x8] sm:$0xff] %v313
    %323 = vst [vmem:[%s320 + $0x10] sm:$0xff] %v314
    %324 = vst [vmem:[%s320 + $0x18] sm:$0xff] %v315
    %325 = vst [vmem:[%s320 + $0x20] sm:$0xff] %v316
    %326 = vst [vmem:[%s320 + $0x28] sm:$0xff] %v317
    %327 = vst [vmem:[%s320 + $0x30] sm:$0xff] %v318
    %328 = vst [vmem:[%s320 + $0x38] sm:$0xff] %v319
    %s329 = scalar_lea.vmem %s2, 352
    %v330 = vld [vmem:[%s329] sm:$0xf]
    %v331 = vld [vmem:[%s329 + $0x4] sm:$0xf]
    %v332 = vld [vmem:[%s329 + $0x8] sm:$0xf]
    %v333 = vld [vmem:[%s329 + $0xc] sm:$0xf]
    %v334 = vld [vmem:[%s329 + $0x10] sm:$0xf]
    %v335 = vld [vmem:[%s329 + $0x14] sm:$0xf]
    %v336 = vld [vmem:[%s329 + $0x18] sm:$0xf]
    %v337 = vld [vmem:[%s329 + $0x1c] sm:$0xf]
    %v338 = vunpack.c.l.bf16 %v330
    %v339 = vunpack.c.l.bf16 %v331
    %v340 = vunpack.c.l.bf16 %v332
    %v341 = vunpack.c.l.bf16 %v333
    %v342 = vunpack.c.l.bf16 %v334
    %v343 = vunpack.c.l.bf16 %v335
    %v344 = vunpack.c.l.bf16 %v336
    %v345 = vunpack.c.l.bf16 %v337
    %s346 = scalar_lea.vmem [#allocation2], 704
    %347 = vst [vmem:[%s346] sm:$0xff] %v338
    %348 = vst [vmem:[%s346 + $0x8] sm:$0xff] %v339
    %349 = vst [vmem:[%s346 + $0x10] sm:$0xff] %v340
    %350 = vst [vmem:[%s346 + $0x18] sm:$0xff] %v341
    %351 = vst [vmem:[%s346 + $0x20] sm:$0xff] %v342
    %352 = vst [vmem:[%s346 + $0x28] sm:$0xff] %v343
    %353 = vst [vmem:[%s346 + $0x30] sm:$0xff] %v344
    %354 = vst [vmem:[%s346 + $0x38] sm:$0xff] %v345
    %s355 = scalar_lea.vmem %s2, 384
    %v356 = vld [vmem:[%s355] sm:$0xf]
    %v357 = vld [vmem:[%s355 + $0x4] sm:$0xf]
    %v358 = vld [vmem:[%s355 + $0x8] sm:$0xf]
    %v359 = vld [vmem:[%s355 + $0xc] sm:$0xf]
    %v360 = vld [vmem:[%s355 + $0x10] sm:$0xf]
    %v361 = vld [vmem:[%s355 + $0x14] sm:$0xf]
    %v362 = vld [vmem:[%s355 + $0x18] sm:$0xf]
    %v363 = vld [vmem:[%s355 + $0x1c] sm:$0xf]
    %v364 = vunpack.c.l.bf16 %v356
    %v365 = vunpack.c.l.bf16 %v357
    %v366 = vunpack.c.l.bf16 %v358
    %v367 = vunpack.c.l.bf16 %v359
    %v368 = vunpack.c.l.bf16 %v360
    %v369 = vunpack.c.l.bf16 %v361
    %v370 = vunpack.c.l.bf16 %v362
    %v371 = vunpack.c.l.bf16 %v363
    %s372 = scalar_lea.vmem [#allocation2], 768
    %373 = vst [vmem:[%s372] sm:$0xff] %v364
    %374 = vst [vmem:[%s372 + $0x8] sm:$0xff] %v365
    %375 = vst [vmem:[%s372 + $0x10] sm:$0xff] %v366
    %376 = vst [vmem:[%s372 + $0x18] sm:$0xff] %v367
    %377 = vst [vmem:[%s372 + $0x20] sm:$0xff] %v368
    %378 = vst [vmem:[%s372 + $0x28] sm:$0xff] %v369
    %379 = vst [vmem:[%s372 + $0x30] sm:$0xff] %v370
    %380 = vst [vmem:[%s372 + $0x38] sm:$0xff] %v371
    %s381 = scalar_lea.vmem %s2, 416
    %v382 = vld [vmem:[%s381] sm:$0xf]
    %v383 = vld [vmem:[%s381 + $0x4] sm:$0xf]
    %v384 = vld [vmem:[%s381 + $0x8] sm:$0xf]
    %v385 = vld [vmem:[%s381 + $0xc] sm:$0xf]
    %v386 = vld [vmem:[%s381 + $0x10] sm:$0xf]
    %v387 = vld [vmem:[%s381 + $0x14] sm:$0xf]
    %v388 = vld [vmem:[%s381 + $0x18] sm:$0xf]
    %v389 = vld [vmem:[%s381 + $0x1c] sm:$0xf]
    %v390 = vunpack.c.l.bf16 %v382
    %v391 = vunpack.c.l.bf16 %v383
    %v392 = vunpack.c.l.bf16 %v384
    %v393 = vunpack.c.l.bf16 %v385
    %v394 = vunpack.c.l.bf16 %v386
    %v395 = vunpack.c.l.bf16 %v387
    %v396 = vunpack.c.l.bf16 %v388
    %v397 = vunpack.c.l.bf16 %v389
    %s398 = scalar_lea.vmem [#allocation2], 832
    %399 = vst [vmem:[%s398] sm:$0xff] %v390
    %400 = vst [vmem:[%s398 + $0x8] sm:$0xff] %v391
    %401 = vst [vmem:[%s398 + $0x10] sm:$0xff] %v392
    %402 = vst [vmem:[%s398 + $0x18] sm:$0xff] %v393
    %403 = vst [vmem:[%s398 + $0x20] sm:$0xff] %v394
    %404 = vst [vmem:[%s398 + $0x28] sm:$0xff] %v395
    %405 = vst [vmem:[%s398 + $0x30] sm:$0xff] %v396
    %406 = vst [vmem:[%s398 + $0x38] sm:$0xff] %v397
    %s407 = scalar_lea.vmem %s2, 448
    %v408 = vld [vmem:[%s407] sm:$0xf]
    %v409 = vld [vmem:[%s407 + $0x4] sm:$0xf]
    %v410 = vld [vmem:[%s407 + $0x8] sm:$0xf]
    %v411 = vld [vmem:[%s407 + $0xc] sm:$0xf]
    %v412 = vld [vmem:[%s407 + $0x10] sm:$0xf]
    %v413 = vld [vmem:[%s407 + $0x14] sm:$0xf]
    %v414 = vld [vmem:[%s407 + $0x18] sm:$0xf]
    %v415 = vld [vmem:[%s407 + $0x1c] sm:$0xf]
    %v416 = vunpack.c.l.bf16 %v408
    %v417 = vunpack.c.l.bf16 %v409
    %v418 = vunpack.c.l.bf16 %v410
    %v419 = vunpack.c.l.bf16 %v411
    %v420 = vunpack.c.l.bf16 %v412
    %v421 = vunpack.c.l.bf16 %v413
    %v422 = vunpack.c.l.bf16 %v414
    %v423 = vunpack.c.l.bf16 %v415
    %s424 = scalar_lea.vmem [#allocation2], 896
    %425 = vst [vmem:[%s424] sm:$0xff] %v416
    %426 = vst [vmem:[%s424 + $0x8] sm:$0xff] %v417
    %427 = vst [vmem:[%s424 + $0x10] sm:$0xff] %v418
    %428 = vst [vmem:[%s424 + $0x18] sm:$0xff] %v419
    %429 = vst [vmem:[%s424 + $0x20] sm:$0xff] %v420
    %430 = vst [vmem:[%s424 + $0x28] sm:$0xff] %v421
    %431 = vst [vmem:[%s424 + $0x30] sm:$0xff] %v422
    %432 = vst [vmem:[%s424 + $0x38] sm:$0xff] %v423
    %s433 = scalar_lea.vmem %s2, 480
    %v434 = vld [vmem:[%s433] sm:$0xf]
    %v435 = vld [vmem:[%s433 + $0x4] sm:$0xf]
    %v436 = vld [vmem:[%s433 + $0x8] sm:$0xf]
    %v437 = vld [vmem:[%s433 + $0xc] sm:$0xf]
    %v438 = vld [vmem:[%s433 + $0x10] sm:$0xf]
    %v439 = vld [vmem:[%s433 + $0x14] sm:$0xf]
    %v440 = vld [vmem:[%s433 + $0x18] sm:$0xf]
    %v441 = vld [vmem:[%s433 + $0x1c] sm:$0xf]
    %v442 = vunpack.c.l.bf16 %v434
    %v443 = vunpack.c.l.bf16 %v435
    %v444 = vunpack.c.l.bf16 %v436
    %v445 = vunpack.c.l.bf16 %v437
    %v446 = vunpack.c.l.bf16 %v438
    %v447 = vunpack.c.l.bf16 %v439
    %v448 = vunpack.c.l.bf16 %v440
    %v449 = vunpack.c.l.bf16 %v441
    %s450 = scalar_lea.vmem [#allocation2], 960
    %451 = vst [vmem:[%s450] sm:$0xff] %v442
    %452 = vst [vmem:[%s450 + $0x8] sm:$0xff] %v443
    %453 = vst [vmem:[%s450 + $0x10] sm:$0xff] %v444
    %454 = vst [vmem:[%s450 + $0x18] sm:$0xff] %v445
    %455 = vst [vmem:[%s450 + $0x20] sm:$0xff] %v446
    %456 = vst [vmem:[%s450 + $0x28] sm:$0xff] %v447
    %457 = vst [vmem:[%s450 + $0x30] sm:$0xff] %v448
    %458 = vst [vmem:[%s450 + $0x38] sm:$0xff] %v449
    %s459 = scalar_lea.vmem %s2, 512
    %v460 = vld [vmem:[%s459] sm:$0xf]
    %v461 = vld [vmem:[%s459 + $0x4] sm:$0xf]
    %v462 = vld [vmem:[%s459 + $0x8] sm:$0xf]
    %v463 = vld [vmem:[%s459 + $0xc] sm:$0xf]
    %v464 = vld [vmem:[%s459 + $0x10] sm:$0xf]
    %v465 = vld [vmem:[%s459 + $0x14] sm:$0xf]
    %v466 = vld [vmem:[%s459 + $0x18] sm:$0xf]
    %v467 = vld [vmem:[%s459 + $0x1c] sm:$0xf]
    %v468 = vunpack.c.l.bf16 %v460
    %v469 = vunpack.c.l.bf16 %v461
    %v470 = vunpack.c.l.bf16 %v462
    %v471 = vunpack.c.l.bf16 %v463
    %v472 = vunpack.c.l.bf16 %v464
    %v473 = vunpack.c.l.bf16 %v465
    %v474 = vunpack.c.l.bf16 %v466
    %v475 = vunpack.c.l.bf16 %v467
    %s476 = scalar_lea.vmem [#allocation2], 1024
    %477 = vst [vmem:[%s476] sm:$0xff] %v468
    %478 = vst [vmem:[%s476 + $0x8] sm:$0xff] %v469
    %479 = vst [vmem:[%s476 + $0x10] sm:$0xff] %v470
    %480 = vst [vmem:[%s476 + $0x18] sm:$0xff] %v471
    %481 = vst [vmem:[%s476 + $0x20] sm:$0xff] %v472
    %482 = vst [vmem:[%s476 + $0x28] sm:$0xff] %v473
    %483 = vst [vmem:[%s476 + $0x30] sm:$0xff] %v474
    %484 = vst [vmem:[%s476 + $0x38] sm:$0xff] %v475
    %s485 = scalar_lea.vmem %s2, 544
    %v486 = vld [vmem:[%s485] sm:$0xf]
    %v487 = vld [vmem:[%s485 + $0x4] sm:$0xf]
    %v488 = vld [vmem:[%s485 + $0x8] sm:$0xf]
    %v489 = vld [vmem:[%s485 + $0xc] sm:$0xf]
    %v490 = vld [vmem:[%s485 + $0x10] sm:$0xf]
    %v491 = vld [vmem:[%s485 + $0x14] sm:$0xf]
    %v492 = vld [vmem:[%s485 + $0x18] sm:$0xf]
    %v493 = vld [vmem:[%s485 + $0x1c] sm:$0xf]
    %v494 = vunpack.c.l.bf16 %v486
    %v495 = vunpack.c.l.bf16 %v487
    %v496 = vunpack.c.l.bf16 %v488
    %v497 = vunpack.c.l.bf16 %v489
    %v498 = vunpack.c.l.bf16 %v490
    %v499 = vunpack.c.l.bf16 %v491
    %v500 = vunpack.c.l.bf16 %v492
    %v501 = vunpack.c.l.bf16 %v493
    %s502 = scalar_lea.vmem [#allocation2], 1088
    %503 = vst [vmem:[%s502] sm:$0xff] %v494
    %504 = vst [vmem:[%s502 + $0x8] sm:$0xff] %v495
    %505 = vst [vmem:[%s502 + $0x10] sm:$0xff] %v496
    %506 = vst [vmem:[%s502 + $0x18] sm:$0xff] %v497
    %507 = vst [vmem:[%s502 + $0x20] sm:$0xff] %v498
    %508 = vst [vmem:[%s502 + $0x28] sm:$0xff] %v499
    %509 = vst [vmem:[%s502 + $0x30] sm:$0xff] %v500
    %510 = vst [vmem:[%s502 + $0x38] sm:$0xff] %v501
    %s511 = scalar_lea.vmem %s2, 576
    %v512 = vld [vmem:[%s511] sm:$0xf]
    %v513 = vld [vmem:[%s511 + $0x4] sm:$0xf]
    %v514 = vld [vmem:[%s511 + $0x8] sm:$0xf]
    %v515 = vld [vmem:[%s511 + $0xc] sm:$0xf]
    %v516 = vld [vmem:[%s511 + $0x10] sm:$0xf]
    %v517 = vld [vmem:[%s511 + $0x14] sm:$0xf]
    %v518 = vld [vmem:[%s511 + $0x18] sm:$0xf]
    %v519 = vld [vmem:[%s511 + $0x1c] sm:$0xf]
    %v520 = vunpack.c.l.bf16 %v512
    %v521 = vunpack.c.l.bf16 %v513
    %v522 = vunpack.c.l.bf16 %v514
    %v523 = vunpack.c.l.bf16 %v515
    %v524 = vunpack.c.l.bf16 %v516
    %v525 = vunpack.c.l.bf16 %v517
    %v526 = vunpack.c.l.bf16 %v518
    %v527 = vunpack.c.l.bf16 %v519
    %s528 = scalar_lea.vmem [#allocation2], 1152
    %529 = vst [vmem:[%s528] sm:$0xff] %v520
    %530 = vst [vmem:[%s528 + $0x8] sm:$0xff] %v521
    %531 = vst [vmem:[%s528 + $0x10] sm:$0xff] %v522
    %532 = vst [vmem:[%s528 + $0x18] sm:$0xff] %v523
    %533 = vst [vmem:[%s528 + $0x20] sm:$0xff] %v524
    %534 = vst [vmem:[%s528 + $0x28] sm:$0xff] %v525
    %535 = vst [vmem:[%s528 + $0x30] sm:$0xff] %v526
    %536 = vst [vmem:[%s528 + $0x38] sm:$0xff] %v527
    %s537 = scalar_lea.vmem %s2, 608
    %v538 = vld [vmem:[%s537] sm:$0xf]
    %v539 = vld [vmem:[%s537 + $0x4] sm:$0xf]
    %v540 = vld [vmem:[%s537 + $0x8] sm:$0xf]
    %v541 = vld [vmem:[%s537 + $0xc] sm:$0xf]
    %v542 = vld [vmem:[%s537 + $0x10] sm:$0xf]
    %v543 = vld [vmem:[%s537 + $0x14] sm:$0xf]
    %v544 = vld [vmem:[%s537 + $0x18] sm:$0xf]
    %v545 = vld [vmem:[%s537 + $0x1c] sm:$0xf]
    %v546 = vunpack.c.l.bf16 %v538
    %v547 = vunpack.c.l.bf16 %v539
    %v548 = vunpack.c.l.bf16 %v540
    %v549 = vunpack.c.l.bf16 %v541
    %v550 = vunpack.c.l.bf16 %v542
    %v551 = vunpack.c.l.bf16 %v543
    %v552 = vunpack.c.l.bf16 %v544
    %v553 = vunpack.c.l.bf16 %v545
    %s554 = scalar_lea.vmem [#allocation2], 1216
    %555 = vst [vmem:[%s554] sm:$0xff] %v546
    %556 = vst [vmem:[%s554 + $0x8] sm:$0xff] %v547
    %557 = vst [vmem:[%s554 + $0x10] sm:$0xff] %v548
    %558 = vst [vmem:[%s554 + $0x18] sm:$0xff] %v549
    %559 = vst [vmem:[%s554 + $0x20] sm:$0xff] %v550
    %560 = vst [vmem:[%s554 + $0x28] sm:$0xff] %v551
    %561 = vst [vmem:[%s554 + $0x30] sm:$0xff] %v552
    %562 = vst [vmem:[%s554 + $0x38] sm:$0xff] %v553
    %s563 = scalar_lea.vmem %s2, 640
    %v564 = vld [vmem:[%s563] sm:$0xf]
    %v565 = vld [vmem:[%s563 + $0x4] sm:$0xf]
    %v566 = vld [vmem:[%s563 + $0x8] sm:$0xf]
    %v567 = vld [vmem:[%s563 + $0xc] sm:$0xf]
    %v568 = vld [vmem:[%s563 + $0x10] sm:$0xf]
    %v569 = vld [vmem:[%s563 + $0x14] sm:$0xf]
    %v570 = vld [vmem:[%s563 + $0x18] sm:$0xf]
    %v571 = vld [vmem:[%s563 + $0x1c] sm:$0xf]
    %v572 = vunpack.c.l.bf16 %v564
    %v573 = vunpack.c.l.bf16 %v565
    %v574 = vunpack.c.l.bf16 %v566
    %v575 = vunpack.c.l.bf16 %v567
    %v576 = vunpack.c.l.bf16 %v568
    %v577 = vunpack.c.l.bf16 %v569
    %v578 = vunpack.c.l.bf16 %v570
    %v579 = vunpack.c.l.bf16 %v571
    %s580 = scalar_lea.vmem [#allocation2], 1280
    %581 = vst [vmem:[%s580] sm:$0xff] %v572
    %582 = vst [vmem:[%s580 + $0x8] sm:$0xff] %v573
    %583 = vst [vmem:[%s580 + $0x10] sm:$0xff] %v574
    %584 = vst [vmem:[%s580 + $0x18] sm:$0xff] %v575
    %585 = vst [vmem:[%s580 + $0x20] sm:$0xff] %v576
    %586 = vst [vmem:[%s580 + $0x28] sm:$0xff] %v577
    %587 = vst [vmem:[%s580 + $0x30] sm:$0xff] %v578
    %588 = vst [vmem:[%s580 + $0x38] sm:$0xff] %v579
    %s589 = scalar_lea.vmem %s2, 672
    %v590 = vld [vmem:[%s589] sm:$0xf]
    %v591 = vld [vmem:[%s589 + $0x4] sm:$0xf]
    %v592 = vld [vmem:[%s589 + $0x8] sm:$0xf]
    %v593 = vld [vmem:[%s589 + $0xc] sm:$0xf]
    %v594 = vld [vmem:[%s589 + $0x10] sm:$0xf]
    %v595 = vld [vmem:[%s589 + $0x14] sm:$0xf]
    %v596 = vld [vmem:[%s589 + $0x18] sm:$0xf]
    %v597 = vld [vmem:[%s589 + $0x1c] sm:$0xf]
    %v598 = vunpack.c.l.bf16 %v590
    %v599 = vunpack.c.l.bf16 %v591
    %v600 = vunpack.c.l.bf16 %v592
    %v601 = vunpack.c.l.bf16 %v593
    %v602 = vunpack.c.l.bf16 %v594
    %v603 = vunpack.c.l.bf16 %v595
    %v604 = vunpack.c.l.bf16 %v596
    %v605 = vunpack.c.l.bf16 %v597
    %s606 = scalar_lea.vmem [#allocation2], 1344
    %607 = vst [vmem:[%s606] sm:$0xff] %v598
    %608 = vst [vmem:[%s606 + $0x8] sm:$0xff] %v599
    %609 = vst [vmem:[%s606 + $0x10] sm:$0xff] %v600
    %610 = vst [vmem:[%s606 + $0x18] sm:$0xff] %v601
    %611 = vst [vmem:[%s606 + $0x20] sm:$0xff] %v602
    %612 = vst [vmem:[%s606 + $0x28] sm:$0xff] %v603
    %613 = vst [vmem:[%s606 + $0x30] sm:$0xff] %v604
    %614 = vst [vmem:[%s606 + $0x38] sm:$0xff] %v605
    %s615 = scalar_lea.vmem %s2, 704
    %v616 = vld [vmem:[%s615] sm:$0xf]
    %v617 = vld [vmem:[%s615 + $0x4] sm:$0xf]
    %v618 = vld [vmem:[%s615 + $0x8] sm:$0xf]
    %v619 = vld [vmem:[%s615 + $0xc] sm:$0xf]
    %v620 = vld [vmem:[%s615 + $0x10] sm:$0xf]
    %v621 = vld [vmem:[%s615 + $0x14] sm:$0xf]
    %v622 = vld [vmem:[%s615 + $0x18] sm:$0xf]
    %v623 = vld [vmem:[%s615 + $0x1c] sm:$0xf]
    %v624 = vunpack.c.l.bf16 %v616
    %v625 = vunpack.c.l.bf16 %v617
    %v626 = vunpack.c.l.bf16 %v618
    %v627 = vunpack.c.l.bf16 %v619
    %v628 = vunpack.c.l.bf16 %v620
    %v629 = vunpack.c.l.bf16 %v621
    %v630 = vunpack.c.l.bf16 %v622
    %v631 = vunpack.c.l.bf16 %v623
    %s632 = scalar_lea.vmem [#allocation2], 1408
    %633 = vst [vmem:[%s632] sm:$0xff] %v624
    %634 = vst [vmem:[%s632 + $0x8] sm:$0xff] %v625
    %635 = vst [vmem:[%s632 + $0x10] sm:$0xff] %v626
    %636 = vst [vmem:[%s632 + $0x18] sm:$0xff] %v627
    %637 = vst [vmem:[%s632 + $0x20] sm:$0xff] %v628
    %638 = vst [vmem:[%s632 + $0x28] sm:$0xff] %v629
    %639 = vst [vmem:[%s632 + $0x30] sm:$0xff] %v630
    %640 = vst [vmem:[%s632 + $0x38] sm:$0xff] %v631
    %s641 = scalar_lea.vmem %s2, 736
    %v642 = vld [vmem:[%s641] sm:$0xf]
    %v643 = vld [vmem:[%s641 + $0x4] sm:$0xf]
    %v644 = vld [vmem:[%s641 + $0x8] sm:$0xf]
    %v645 = vld [vmem:[%s641 + $0xc] sm:$0xf]
    %v646 = vld [vmem:[%s641 + $0x10] sm:$0xf]
    %v647 = vld [vmem:[%s641 + $0x14] sm:$0xf]
    %v648 = vld [vmem:[%s641 + $0x18] sm:$0xf]
    %v649 = vld [vmem:[%s641 + $0x1c] sm:$0xf]
    %v650 = vunpack.c.l.bf16 %v642
    %v651 = vunpack.c.l.bf16 %v643
    %v652 = vunpack.c.l.bf16 %v644
    %v653 = vunpack.c.l.bf16 %v645
    %v654 = vunpack.c.l.bf16 %v646
    %v655 = vunpack.c.l.bf16 %v647
    %v656 = vunpack.c.l.bf16 %v648
    %v657 = vunpack.c.l.bf16 %v649
    %s658 = scalar_lea.vmem [#allocation2], 1472
    %659 = vst [vmem:[%s658] sm:$0xff] %v650
    %660 = vst [vmem:[%s658 + $0x8] sm:$0xff] %v651
    %661 = vst [vmem:[%s658 + $0x10] sm:$0xff] %v652
    %662 = vst [vmem:[%s658 + $0x18] sm:$0xff] %v653
    %663 = vst [vmem:[%s658 + $0x20] sm:$0xff] %v654
    %664 = vst [vmem:[%s658 + $0x28] sm:$0xff] %v655
    %665 = vst [vmem:[%s658 + $0x30] sm:$0xff] %v656
    %666 = vst [vmem:[%s658 + $0x38] sm:$0xff] %v657
    %s667 = scalar_lea.vmem %s2, 768
    %v668 = vld [vmem:[%s667] sm:$0xf]
    %v669 = vld [vmem:[%s667 + $0x4] sm:$0xf]
    %v670 = vld [vmem:[%s667 + $0x8] sm:$0xf]
    %v671 = vld [vmem:[%s667 + $0xc] sm:$0xf]
    %v672 = vld [vmem:[%s667 + $0x10] sm:$0xf]
    %v673 = vld [vmem:[%s667 + $0x14] sm:$0xf]
    %v674 = vld [vmem:[%s667 + $0x18] sm:$0xf]
    %v675 = vld [vmem:[%s667 + $0x1c] sm:$0xf]
    %v676 = vunpack.c.l.bf16 %v668
    %v677 = vunpack.c.l.bf16 %v669
    %v678 = vunpack.c.l.bf16 %v670
    %v679 = vunpack.c.l.bf16 %v671
    %v680 = vunpack.c.l.bf16 %v672
    %v681 = vunpack.c.l.bf16 %v673
    %v682 = vunpack.c.l.bf16 %v674
    %v683 = vunpack.c.l.bf16 %v675
    %s684 = scalar_lea.vmem [#allocation2], 1536
    %685 = vst [vmem:[%s684] sm:$0xff] %v676
    %686 = vst [vmem:[%s684 + $0x8] sm:$0xff] %v677
    %687 = vst [vmem:[%s684 + $0x10] sm:$0xff] %v678
    %688 = vst [vmem:[%s684 + $0x18] sm:$0xff] %v679
    %689 = vst [vmem:[%s684 + $0x20] sm:$0xff] %v680
    %690 = vst [vmem:[%s684 + $0x28] sm:$0xff] %v681
    %691 = vst [vmem:[%s684 + $0x30] sm:$0xff] %v682
    %692 = vst [vmem:[%s684 + $0x38] sm:$0xff] %v683
    %s693 = sld [smem:[#allocation3]]
    %s694 = sld [smem:[#allocation3 + $0x1]]
    %s695 = sld [smem:[#allocation3 + $0x2]]
    %s696 = sld [smem:[#allocation3 + $0x3]]
    %s697 = sld [smem:[#allocation3 + $0x4]]
    %s698 = sld [smem:[#allocation3 + $0x5]]
    %s699 = sld [smem:[#allocation3 + $0x6]]
    %s700 = sld [smem:[#allocation3 + $0x7]]
    %s701 = sld [smem:[#allocation3 + $0x8]]
    %s702 = sld [smem:[#allocation3 + $0x9]]
    %s703 = sld [smem:[#allocation3 + $0xa]]
    %s704 = sld [smem:[#allocation3 + $0xb]]
    %s705 = sld [smem:[#allocation3 + $0xc]]
    %s706 = sld [smem:[#allocation3 + $0xd]]
    %s707 = sld [smem:[#allocation3 + $0xe]]
    %s708 = sld [smem:[#allocation3 + $0xf]]
    %s709 = sld [smem:[#allocation3 + $0x10]]
    %s710 = sld [smem:[#allocation3 + $0x11]]
    %s711 = sld [smem:[#allocation3 + $0x12]]
    %s712 = sld [smem:[#allocation3 + $0x13]]
    %s713 = sld [smem:[#allocation3 + $0x14]]
    %s714 = sld [smem:[#allocation3 + $0x15]]
    %s715 = sld [smem:[#allocation3 + $0x16]]
    %s716 = sld [smem:[#allocation3 + $0x17]]
    %s717 = sld [smem:[#allocation3 + $0x18]]
    %s718 = sld [smem:[#allocation3 + $0x19]]
    %s719 = sld [smem:[#allocation3 + $0x1a]]
    %v720 = vld [vmem:[#allocation2] sm:$0xff]
    %v721 = vld [vmem:[#allocation2 + $0x8] sm:$0xff]
    %v722 = vld [vmem:[#allocation2 + $0x10] sm:$0xff]
    %v723 = vld [vmem:[#allocation2 + $0x18] sm:$0xff]
    %v724 = vld [vmem:[#allocation2 + $0x20] sm:$0xff]
    %v725 = vld [vmem:[#allocation2 + $0x28] sm:$0xff]
    %v726 = vld [vmem:[#allocation2 + $0x30] sm:$0xff]
    %v727 = vld [vmem:[#allocation2 + $0x38] sm:$0xff]
    %v728 = vstv %s693
    %v729 = vmul.f32 %v728, %v720
    %v730 = vmul.f32 %v728, %v721
    %v731 = vmul.f32 %v728, %v722
    %v732 = vmul.f32 %v728, %v723
    %v733 = vmul.f32 %v728, %v724
    %v734 = vmul.f32 %v728, %v725
    %v735 = vmul.f32 %v728, %v726
    %v736 = vmul.f32 %v728, %v727
    %v737 = vld [vmem:[%s86] sm:$0xff]
    %v738 = vld [vmem:[%s86 + $0x8] sm:$0xff]
    %v739 = vld [vmem:[%s86 + $0x10] sm:$0xff]
    %v740 = vld [vmem:[%s86 + $0x18] sm:$0xff]
    %v741 = vld [vmem:[%s86 + $0x20] sm:$0xff]
    %v742 = vld [vmem:[%s86 + $0x28] sm:$0xff]
    %v743 = vld [vmem:[%s86 + $0x30] sm:$0xff]
    %v744 = vld [vmem:[%s86 + $0x38] sm:$0xff]
    %v745 = vstv %s694
    %v746 = vmul.f32 %v745, %v737
    %v747 = vmul.f32 %v745, %v738
    %v748 = vmul.f32 %v745, %v739
    %v749 = vmul.f32 %v745, %v740
    %v750 = vmul.f32 %v745, %v741
    %v751 = vmul.f32 %v745, %v742
    %v752 = vmul.f32 %v745, %v743
    %v753 = vmul.f32 %v745, %v744
    %v754 = vadd.f32 %v729, %v746
    %v755 = vadd.f32 %v730, %v747
    %v756 = vadd.f32 %v731, %v748
    %v757 = vadd.f32 %v732, %v749
    %v758 = vadd.f32 %v733, %v750
    %v759 = vadd.f32 %v734, %v751
    %v760 = vadd.f32 %v735, %v752
    %v761 = vadd.f32 %v736, %v753
    %v762 = vld [vmem:[%s112] sm:$0xff]
    %v763 = vld [vmem:[%s112 + $0x8] sm:$0xff]
    %v764 = vld [vmem:[%s112 + $0x10] sm:$0xff]
    %v765 = vld [vmem:[%s112 + $0x18] sm:$0xff]
    %v766 = vld [vmem:[%s112 + $0x20] sm:$0xff]
    %v767 = vld [vmem:[%s112 + $0x28] sm:$0xff]
    %v768 = vld [vmem:[%s112 + $0x30] sm:$0xff]
    %v769 = vld [vmem:[%s112 + $0x38] sm:$0xff]
    %v770 = vstv %s695
    %v771 = vmul.f32 %v770, %v762
    %v772 = vmul.f32 %v770, %v763
    %v773 = vmul.f32 %v770, %v764
    %v774 = vmul.f32 %v770, %v765
    %v775 = vmul.f32 %v770, %v766
    %v776 = vmul.f32 %v770, %v767
    %v777 = vmul.f32 %v770, %v768
    %v778 = vmul.f32 %v770, %v769
    %v779 = vadd.f32 %v754, %v771
    %v780 = vadd.f32 %v755, %v772
    %v781 = vadd.f32 %v756, %v773
    %v782 = vadd.f32 %v757, %v774
    %v783 = vadd.f32 %v758, %v775
    %v784 = vadd.f32 %v759, %v776
    %v785 = vadd.f32 %v760, %v777
    %v786 = vadd.f32 %v761, %v778
    %v787 = vld [vmem:[%s190] sm:$0xff]
    %v788 = vld [vmem:[%s190 + $0x8] sm:$0xff]
    %v789 = vld [vmem:[%s190 + $0x10] sm:$0xff]
    %v790 = vld [vmem:[%s190 + $0x18] sm:$0xff]
    %v791 = vld [vmem:[%s190 + $0x20] sm:$0xff]
    %v792 = vld [vmem:[%s190 + $0x28] sm:$0xff]
    %v793 = vld [vmem:[%s190 + $0x30] sm:$0xff]
    %v794 = vld [vmem:[%s190 + $0x38] sm:$0xff]
    %v795 = vstv %s696
    %v796 = vmul.f32 %v795, %v787
    %v797 = vmul.f32 %v795, %v788
    %v798 = vmul.f32 %v795, %v789
    %v799 = vmul.f32 %v795, %v790
    %v800 = vmul.f32 %v795, %v791
    %v801 = vmul.f32 %v795, %v792
    %v802 = vmul.f32 %v795, %v793
    %v803 = vmul.f32 %v795, %v794
    %v804 = vld [vmem:[%s216] sm:$0xff]
    %v805 = vld [vmem:[%s216 + $0x8] sm:$0xff]
    %v806 = vld [vmem:[%s216 + $0x10] sm:$0xff]
    %v807 = vld [vmem:[%s216 + $0x18] sm:$0xff]
    %v808 = vld [vmem:[%s216 + $0x20] sm:$0xff]
    %v809 = vld [vmem:[%s216 + $0x28] sm:$0xff]
    %v810 = vld [vmem:[%s216 + $0x30] sm:$0xff]
    %v811 = vld [vmem:[%s216 + $0x38] sm:$0xff]
    %v812 = vstv %s697
    %v813 = vmul.f32 %v812, %v804
    %v814 = vmul.f32 %v812, %v805
    %v815 = vmul.f32 %v812, %v806
    %v816 = vmul.f32 %v812, %v807
    %v817 = vmul.f32 %v812, %v808
    %v818 = vmul.f32 %v812, %v809
    %v819 = vmul.f32 %v812, %v810
    %v820 = vmul.f32 %v812, %v811
    %v821 = vadd.f32 %v796, %v813
    %v822 = vadd.f32 %v797, %v814
    %v823 = vadd.f32 %v798, %v815
    %v824 = vadd.f32 %v799, %v816
    %v825 = vadd.f32 %v800, %v817
    %v826 = vadd.f32 %v801, %v818
    %v827 = vadd.f32 %v802, %v819
    %v828 = vadd.f32 %v803, %v820
    %v829 = vld [vmem:[%s242] sm:$0xff]
    %v830 = vld [vmem:[%s242 + $0x8] sm:$0xff]
    %v831 = vld [vmem:[%s242 + $0x10] sm:$0xff]
    %v832 = vld [vmem:[%s242 + $0x18] sm:$0xff]
    %v833 = vld [vmem:[%s242 + $0x20] sm:$0xff]
    %v834 = vld [vmem:[%s242 + $0x28] sm:$0xff]
    %v835 = vld [vmem:[%s242 + $0x30] sm:$0xff]
    %v836 = vld [vmem:[%s242 + $0x38] sm:$0xff]
    %v837 = vstv %s698
    %v838 = vmul.f32 %v837, %v829
    %v839 = vmul.f32 %v837, %v830
    %v840 = vmul.f32 %v837, %v831
    %v841 = vmul.f32 %v837, %v832
    %v842 = vmul.f32 %v837, %v833
    %v843 = vmul.f32 %v837, %v834
    %v844 = vmul.f32 %v837, %v835
    %v845 = vmul.f32 %v837, %v836
    %v846 = vadd.f32 %v821, %v838
    %v847 = vadd.f32 %v822, %v839
    %v848 = vadd.f32 %v823, %v840
    %v849 = vadd.f32 %v824, %v841
    %v850 = vadd.f32 %v825, %v842
    %v851 = vadd.f32 %v826, %v843
    %v852 = vadd.f32 %v827, %v844
    %v853 = vadd.f32 %v828, %v845
    %v854 = vld [vmem:[%s320] sm:$0xff]
    %v855 = vld [vmem:[%s320 + $0x8] sm:$0xff]
    %v856 = vld [vmem:[%s320 + $0x10] sm:$0xff]
    %v857 = vld [vmem:[%s320 + $0x18] sm:$0xff]
    %v858 = vld [vmem:[%s320 + $0x20] sm:$0xff]
    %v859 = vld [vmem:[%s320 + $0x28] sm:$0xff]
    %v860 = vld [vmem:[%s320 + $0x30] sm:$0xff]
    %v861 = vld [vmem:[%s320 + $0x38] sm:$0xff]
    %v862 = vstv %s699
    %v863 = vmul.f32 %v862, %v854
    %v864 = vmul.f32 %v862, %v855
    %v865 = vmul.f32 %v862, %v856
    %v866 = vmul.f32 %v862, %v857
    %v867 = vmul.f32 %v862, %v858
    %v868 = vmul.f32 %v862, %v859
    %v869 = vmul.f32 %v862, %v860
    %v870 = vmul.f32 %v862, %v861
    %v871 = vld [vmem:[%s346] sm:$0xff]
    %v872 = vld [vmem:[%s346 + $0x8] sm:$0xff]
    %v873 = vld [vmem:[%s346 + $0x10] sm:$0xff]
    %v874 = vld [vmem:[%s346 + $0x18] sm:$0xff]
    %v875 = vld [vmem:[%s346 + $0x20] sm:$0xff]
    %v876 = vld [vmem:[%s346 + $0x28] sm:$0xff]
    %v877 = vld [vmem:[%s346 + $0x30] sm:$0xff]
    %v878 = vld [vmem:[%s346 + $0x38] sm:$0xff]
    %v879 = vstv %s700
    %v880 = vmul.f32 %v879, %v871
    %v881 = vmul.f32 %v879, %v872
    %v882 = vmul.f32 %v879, %v873
    %v883 = vmul.f32 %v879, %v874
    %v884 = vmul.f32 %v879, %v875
    %v885 = vmul.f32 %v879, %v876
    %v886 = vmul.f32 %v879, %v877
    %v887 = vmul.f32 %v879, %v878
    %v888 = vadd.f32 %v863, %v880
    %v889 = vadd.f32 %v864, %v881
    %v890 = vadd.f32 %v865, %v882
    %v891 = vadd.f32 %v866, %v883
    %v892 = vadd.f32 %v867, %v884
    %v893 = vadd.f32 %v868, %v885
    %v894 = vadd.f32 %v869, %v886
    %v895 = vadd.f32 %v870, %v887
    %v896 = vld [vmem:[%s372] sm:$0xff]
    %v897 = vld [vmem:[%s372 + $0x8] sm:$0xff]
    %v898 = vld [vmem:[%s372 + $0x10] sm:$0xff]
    %v899 = vld [vmem:[%s372 + $0x18] sm:$0xff]
    %v900 = vld [vmem:[%s372 + $0x20] sm:$0xff]
    %v901 = vld [vmem:[%s372 + $0x28] sm:$0xff]
    %v902 = vld [vmem:[%s372 + $0x30] sm:$0xff]
    %v903 = vld [vmem:[%s372 + $0x38] sm:$0xff]
    %v904 = vstv %s701
    %v905 = vmul.f32 %v904, %v896
    %v906 = vmul.f32 %v904, %v897
    %v907 = vmul.f32 %v904, %v898
    %v908 = vmul.f32 %v904, %v899
    %v909 = vmul.f32 %v904, %v900
    %v910 = vmul.f32 %v904, %v901
    %v911 = vmul.f32 %v904, %v902
    %v912 = vmul.f32 %v904, %v903
    %v913 = vadd.f32 %v888, %v905
    %v914 = vadd.f32 %v889, %v906
    %v915 = vadd.f32 %v890, %v907
    %v916 = vadd.f32 %v891, %v908
    %v917 = vadd.f32 %v892, %v909
    %v918 = vadd.f32 %v893, %v910
    %v919 = vadd.f32 %v894, %v911
    %v920 = vadd.f32 %v895, %v912
    %v921 = vadd.f32 %v779, %v846
    %v922 = vadd.f32 %v780, %v847
    %v923 = vadd.f32 %v781, %v848
    %v924 = vadd.f32 %v782, %v849
    %v925 = vadd.f32 %v783, %v850
    %v926 = vadd.f32 %v784, %v851
    %v927 = vadd.f32 %v785, %v852
    %v928 = vadd.f32 %v786, %v853
    %v929 = vadd.f32 %v921, %v913
    %v930 = vadd.f32 %v922, %v914
    %v931 = vadd.f32 %v923, %v915
    %v932 = vadd.f32 %v924, %v916
    %v933 = vadd.f32 %v925, %v917
    %v934 = vadd.f32 %v926, %v918
    %v935 = vadd.f32 %v927, %v919
    %v936 = vadd.f32 %v928, %v920
    %v937 = vmul.f32 %v728, %v737
    %v938 = vmul.f32 %v728, %v738
    %v939 = vmul.f32 %v728, %v739
    %v940 = vmul.f32 %v728, %v740
    %v941 = vmul.f32 %v728, %v741
    %v942 = vmul.f32 %v728, %v742
    %v943 = vmul.f32 %v728, %v743
    %v944 = vmul.f32 %v728, %v744
    %v945 = vmul.f32 %v745, %v762
    %v946 = vmul.f32 %v745, %v763
    %v947 = vmul.f32 %v745, %v764
    %v948 = vmul.f32 %v745, %v765
    %v949 = vmul.f32 %v745, %v766
    %v950 = vmul.f32 %v745, %v767
    %v951 = vmul.f32 %v745, %v768
    %v952 = vmul.f32 %v745, %v769
    %v953 = vadd.f32 %v937, %v945
    %v954 = vadd.f32 %v938, %v946
    %v955 = vadd.f32 %v939, %v947
    %v956 = vadd.f32 %v940, %v948
    %v957 = vadd.f32 %v941, %v949
    %v958 = vadd.f32 %v942, %v950
    %v959 = vadd.f32 %v943, %v951
    %v960 = vadd.f32 %v944, %v952
    %v961 = vld [vmem:[%s138] sm:$0xff]
    %v962 = vld [vmem:[%s138 + $0x8] sm:$0xff]
    %v963 = vld [vmem:[%s138 + $0x10] sm:$0xff]
    %v964 = vld [vmem:[%s138 + $0x18] sm:$0xff]
    %v965 = vld [vmem:[%s138 + $0x20] sm:$0xff]
    %v966 = vld [vmem:[%s138 + $0x28] sm:$0xff]
    %v967 = vld [vmem:[%s138 + $0x30] sm:$0xff]
    %v968 = vld [vmem:[%s138 + $0x38] sm:$0xff]
    %v969 = vmul.f32 %v770, %v961
    %v970 = vmul.f32 %v770, %v962
    %v971 = vmul.f32 %v770, %v963
    %v972 = vmul.f32 %v770, %v964
    %v973 = vmul.f32 %v770, %v965
    %v974 = vmul.f32 %v770, %v966
    %v975 = vmul.f32 %v770, %v967
    %v976 = vmul.f32 %v770, %v968
    %v977 = vadd.f32 %v953, %v969
    %v978 = vadd.f32 %v954, %v970
    %v979 = vadd.f32 %v955, %v971
    %v980 = vadd.f32 %v956, %v972
    %v981 = vadd.f32 %v957, %v973
    %v982 = vadd.f32 %v958, %v974
    %v983 = vadd.f32 %v959, %v975
    %v984 = vadd.f32 %v960, %v976
    %v985 = vmul.f32 %v795, %v804
    %v986 = vmul.f32 %v795, %v805
    %v987 = vmul.f32 %v795, %v806
    %v988 = vmul.f32 %v795, %v807
    %v989 = vmul.f32 %v795, %v808
    %v990 = vmul.f32 %v795, %v809
    %v991 = vmul.f32 %v795, %v810
    %v992 = vmul.f32 %v795, %v811
    %v993 = vmul.f32 %v812, %v829
    %v994 = vmul.f32 %v812, %v830
    %v995 = vmul.f32 %v812, %v831
    %v996 = vmul.f32 %v812, %v832
    %v997 = vmul.f32 %v812, %v833
    %v998 = vmul.f32 %v812, %v834
    %v999 = vmul.f32 %v812, %v835
    %v1000 = vmul.f32 %v812, %v836
    %v1001 = vadd.f32 %v985, %v993
    %v1002 = vadd.f32 %v986, %v994
    %v1003 = vadd.f32 %v987, %v995
    %v1004 = vadd.f32 %v988, %v996
    %v1005 = vadd.f32 %v989, %v997
    %v1006 = vadd.f32 %v990, %v998
    %v1007 = vadd.f32 %v991, %v999
    %v1008 = vadd.f32 %v992, %v1000
    %v1009 = vld [vmem:[%s268] sm:$0xff]
    %v1010 = vld [vmem:[%s268 + $0x8] sm:$0xff]
    %v1011 = vld [vmem:[%s268 + $0x10] sm:$0xff]
    %v1012 = vld [vmem:[%s268 + $0x18] sm:$0xff]
    %v1013 = vld [vmem:[%s268 + $0x20] sm:$0xff]
    %v1014 = vld [vmem:[%s268 + $0x28] sm:$0xff]
    %v1015 = vld [vmem:[%s268 + $0x30] sm:$0xff]
    %v1016 = vld [vmem:[%s268 + $0x38] sm:$0xff]
    %v1017 = vmul.f32 %v837, %v1009
    %v1018 = vmul.f32 %v837, %v1010
    %v1019 = vmul.f32 %v837, %v1011
    %v1020 = vmul.f32 %v837, %v1012
    %v1021 = vmul.f32 %v837, %v1013
    %v1022 = vmul.f32 %v837, %v1014
    %v1023 = vmul.f32 %v837, %v1015
    %v1024 = vmul.f32 %v837, %v1016
    %v1025 = vadd.f32 %v1001, %v1017
    %v1026 = vadd.f32 %v1002, %v1018
    %v1027 = vadd.f32 %v1003, %v1019
    %v1028 = vadd.f32 %v1004, %v1020
    %v1029 = vadd.f32 %v1005, %v1021
    %v1030 = vadd.f32 %v1006, %v1022
    %v1031 = vadd.f32 %v1007, %v1023
    %v1032 = vadd.f32 %v1008, %v1024
    %v1033 = vmul.f32 %v862, %v871
    %v1034 = vmul.f32 %v862, %v872
    %v1035 = vmul.f32 %v862, %v873
    %v1036 = vmul.f32 %v862, %v874
    %v1037 = vmul.f32 %v862, %v875
    %v1038 = vmul.f32 %v862, %v876
    %v1039 = vmul.f32 %v862, %v877
    %v1040 = vmul.f32 %v862, %v878
    %v1041 = vmul.f32 %v879, %v896
    %v1042 = vmul.f32 %v879, %v897
    %v1043 = vmul.f32 %v879, %v898
    %v1044 = vmul.f32 %v879, %v899
    %v1045 = vmul.f32 %v879, %v900
    %v1046 = vmul.f32 %v879, %v901
    %v1047 = vmul.f32 %v879, %v902
    %v1048 = vmul.f32 %v879, %v903
    %v1049 = vadd.f32 %v1033, %v1041
    %v1050 = vadd.f32 %v1034, %v1042
    %v1051 = vadd.f32 %v1035, %v1043
    %v1052 = vadd.f32 %v1036, %v1044
    %v1053 = vadd.f32 %v1037, %v1045
    %v1054 = vadd.f32 %v1038, %v1046
    %v1055 = vadd.f32 %v1039, %v1047
    %v1056 = vadd.f32 %v1040, %v1048
    %v1057 = vld [vmem:[%s398] sm:$0xff]
    %v1058 = vld [vmem:[%s398 + $0x8] sm:$0xff]
    %v1059 = vld [vmem:[%s398 + $0x10] sm:$0xff]
    %v1060 = vld [vmem:[%s398 + $0x18] sm:$0xff]
    %v1061 = vld [vmem:[%s398 + $0x20] sm:$0xff]
    %v1062 = vld [vmem:[%s398 + $0x28] sm:$0xff]
    %v1063 = vld [vmem:[%s398 + $0x30] sm:$0xff]
    %v1064 = vld [vmem:[%s398 + $0x38] sm:$0xff]
    %v1065 = vmul.f32 %v904, %v1057
    %v1066 = vmul.f32 %v904, %v1058
    %v1067 = vmul.f32 %v904, %v1059
    %v1068 = vmul.f32 %v904, %v1060
    %v1069 = vmul.f32 %v904, %v1061
    %v1070 = vmul.f32 %v904, %v1062
    %v1071 = vmul.f32 %v904, %v1063
    %v1072 = vmul.f32 %v904, %v1064
    %v1073 = vadd.f32 %v1049, %v1065
    %v1074 = vadd.f32 %v1050, %v1066
    %v1075 = vadd.f32 %v1051, %v1067
    %v1076 = vadd.f32 %v1052, %v1068
    %v1077 = vadd.f32 %v1053, %v1069
    %v1078 = vadd.f32 %v1054, %v1070
    %v1079 = vadd.f32 %v1055, %v1071
    %v1080 = vadd.f32 %v1056, %v1072
    %v1081 = vadd.f32 %v977, %v1025
    %v1082 = vadd.f32 %v978, %v1026
    %v1083 = vadd.f32 %v979, %v1027
    %v1084 = vadd.f32 %v980, %v1028
    %v1085 = vadd.f32 %v981, %v1029
    %v1086 = vadd.f32 %v982, %v1030
    %v1087 = vadd.f32 %v983, %v1031
    %v1088 = vadd.f32 %v984, %v1032
    %v1089 = vadd.f32 %v1081, %v1073
    %v1090 = vadd.f32 %v1082, %v1074
    %v1091 = vadd.f32 %v1083, %v1075
    %v1092 = vadd.f32 %v1084, %v1076
    %v1093 = vadd.f32 %v1085, %v1077
    %v1094 = vadd.f32 %v1086, %v1078
    %v1095 = vadd.f32 %v1087, %v1079
    %v1096 = vadd.f32 %v1088, %v1080
    %v1097 = vmax.f32 %v929, %v1089
    %v1098 = vmax.f32 %v930, %v1090
    %v1099 = vmax.f32 %v931, %v1091
    %v1100 = vmax.f32 %v932, %v1092
    %v1101 = vmax.f32 %v933, %v1093
    %v1102 = vmax.f32 %v934, %v1094
    %v1103 = vmax.f32 %v935, %v1095
    %v1104 = vmax.f32 %v936, %v1096
    %v1105 = vmul.f32 %v728, %v762
    %v1106 = vmul.f32 %v728, %v763
    %v1107 = vmul.f32 %v728, %v764
    %v1108 = vmul.f32 %v728, %v765
    %v1109 = vmul.f32 %v728, %v766
    %v1110 = vmul.f32 %v728, %v767
    %v1111 = vmul.f32 %v728, %v768
    %v1112 = vmul.f32 %v728, %v769
    %v1113 = vmul.f32 %v745, %v961
    %v1114 = vmul.f32 %v745, %v962
    %v1115 = vmul.f32 %v745, %v963
    %v1116 = vmul.f32 %v745, %v964
    %v1117 = vmul.f32 %v745, %v965
    %v1118 = vmul.f32 %v745, %v966
    %v1119 = vmul.f32 %v745, %v967
    %v1120 = vmul.f32 %v745, %v968
    %v1121 = vadd.f32 %v1105, %v1113
    %v1122 = vadd.f32 %v1106, %v1114
    %v1123 = vadd.f32 %v1107, %v1115
    %v1124 = vadd.f32 %v1108, %v1116
    %v1125 = vadd.f32 %v1109, %v1117
    %v1126 = vadd.f32 %v1110, %v1118
    %v1127 = vadd.f32 %v1111, %v1119
    %v1128 = vadd.f32 %v1112, %v1120
    %v1129 = vld [vmem:[%s164] sm:$0xff]
    %v1130 = vld [vmem:[%s164 + $0x8] sm:$0xff]
    %v1131 = vld [vmem:[%s164 + $0x10] sm:$0xff]
    %v1132 = vld [vmem:[%s164 + $0x18] sm:$0xff]
    %v1133 = vld [vmem:[%s164 + $0x20] sm:$0xff]
    %v1134 = vld [vmem:[%s164 + $0x28] sm:$0xff]
    %v1135 = vld [vmem:[%s164 + $0x30] sm:$0xff]
    %v1136 = vld [vmem:[%s164 + $0x38] sm:$0xff]
    %v1137 = vmul.f32 %v770, %v1129
    %v1138 = vmul.f32 %v770, %v1130
    %v1139 = vmul.f32 %v770, %v1131
    %v1140 = vmul.f32 %v770, %v1132
    %v1141 = vmul.f32 %v770, %v1133
    %v1142 = vmul.f32 %v770, %v1134
    %v1143 = vmul.f32 %v770, %v1135
    %v1144 = vmul.f32 %v770, %v1136
    %v1145 = vadd.f32 %v1121, %v1137
    %v1146 = vadd.f32 %v1122, %v1138
    %v1147 = vadd.f32 %v1123, %v1139
    %v1148 = vadd.f32 %v1124, %v1140
    %v1149 = vadd.f32 %v1125, %v1141
    %v1150 = vadd.f32 %v1126, %v1142
    %v1151 = vadd.f32 %v1127, %v1143
    %v1152 = vadd.f32 %v1128, %v1144
    %v1153 = vmul.f32 %v795, %v829
    %v1154 = vmul.f32 %v795, %v830
    %v1155 = vmul.f32 %v795, %v831
    %v1156 = vmul.f32 %v795, %v832
    %v1157 = vmul.f32 %v795, %v833
    %v1158 = vmul.f32 %v795, %v834
    %v1159 = vmul.f32 %v795, %v835
    %v1160 = vmul.f32 %v795, %v836
    %v1161 = vmul.f32 %v812, %v1009
    %v1162 = vmul.f32 %v812, %v1010
    %v1163 = vmul.f32 %v812, %v1011
    %v1164 = vmul.f32 %v812, %v1012
    %v1165 = vmul.f32 %v812, %v1013
    %v1166 = vmul.f32 %v812, %v1014
    %v1167 = vmul.f32 %v812, %v1015
    %v1168 = vmul.f32 %v812, %v1016
    %v1169 = vadd.f32 %v1153, %v1161
    %v1170 = vadd.f32 %v1154, %v1162
    %v1171 = vadd.f32 %v1155, %v1163
    %v1172 = vadd.f32 %v1156, %v1164
    %v1173 = vadd.f32 %v1157, %v1165
    %v1174 = vadd.f32 %v1158, %v1166
    %v1175 = vadd.f32 %v1159, %v1167
    %v1176 = vadd.f32 %v1160, %v1168
    %v1177 = vld [vmem:[%s294] sm:$0xff]
    %v1178 = vld [vmem:[%s294 + $0x8] sm:$0xff]
    %v1179 = vld [vmem:[%s294 + $0x10] sm:$0xff]
    %v1180 = vld [vmem:[%s294 + $0x18] sm:$0xff]
    %v1181 = vld [vmem:[%s294 + $0x20] sm:$0xff]
    %v1182 = vld [vmem:[%s294 + $0x28] sm:$0xff]
    %v1183 = vld [vmem:[%s294 + $0x30] sm:$0xff]
    %v1184 = vld [vmem:[%s294 + $0x38] sm:$0xff]
    %v1185 = vmul.f32 %v837, %v1177
    %v1186 = vmul.f32 %v837, %v1178
    %v1187 = vmul.f32 %v837, %v1179
    %v1188 = vmul.f32 %v837, %v1180
    %v1189 = vmul.f32 %v837, %v1181
    %v1190 = vmul.f32 %v837, %v1182
    %v1191 = vmul.f32 %v837, %v1183
    %v1192 = vmul.f32 %v837, %v1184
    %v1193 = vadd.f32 %v1169, %v1185
    %v1194 = vadd.f32 %v1170, %v1186
    %v1195 = vadd.f32 %v1171, %v1187
    %v1196 = vadd.f32 %v1172, %v1188
    %v1197 = vadd.f32 %v1173, %v1189
    %v1198 = vadd.f32 %v1174, %v1190
    %v1199 = vadd.f32 %v1175, %v1191
    %v1200 = vadd.f32 %v1176, %v1192
    %v1201 = vmul.f32 %v862, %v896
    %v1202 = vmul.f32 %v862, %v897
    %v1203 = vmul.f32 %v862, %v898
    %v1204 = vmul.f32 %v862, %v899
    %v1205 = vmul.f32 %v862, %v900
    %v1206 = vmul.f32 %v862, %v901
    %v1207 = vmul.f32 %v862, %v902
    %v1208 = vmul.f32 %v862, %v903
    %v1209 = vmul.f32 %v879, %v1057
    %v1210 = vmul.f32 %v879, %v1058
    %v1211 = vmul.f32 %v879, %v1059
    %v1212 = vmul.f32 %v879, %v1060
    %v1213 = vmul.f32 %v879, %v1061
    %v1214 = vmul.f32 %v879, %v1062
    %v1215 = vmul.f32 %v879, %v1063
    %v1216 = vmul.f32 %v879, %v1064
    %v1217 = vadd.f32 %v1201, %v1209
    %v1218 = vadd.f32 %v1202, %v1210
    %v1219 = vadd.f32 %v1203, %v1211
    %v1220 = vadd.f32 %v1204, %v1212
    %v1221 = vadd.f32 %v1205, %v1213
    %v1222 = vadd.f32 %v1206, %v1214
    %v1223 = vadd.f32 %v1207, %v1215
    %v1224 = vadd.f32 %v1208, %v1216
    %v1225 = vld [vmem:[%s424] sm:$0xff]
    %v1226 = vld [vmem:[%s424 + $0x8] sm:$0xff]
    %v1227 = vld [vmem:[%s424 + $0x10] sm:$0xff]
    %v1228 = vld [vmem:[%s424 + $0x18] sm:$0xff]
    %v1229 = vld [vmem:[%s424 + $0x20] sm:$0xff]
    %v1230 = vld [vmem:[%s424 + $0x28] sm:$0xff]
    %v1231 = vld [vmem:[%s424 + $0x30] sm:$0xff]
    %v1232 = vld [vmem:[%s424 + $0x38] sm:$0xff]
    %v1233 = vmul.f32 %v904, %v1225
    %v1234 = vmul.f32 %v904, %v1226
    %v1235 = vmul.f32 %v904, %v1227
    %v1236 = vmul.f32 %v904, %v1228
    %v1237 = vmul.f32 %v904, %v1229
    %v1238 = vmul.f32 %v904, %v1230
    %v1239 = vmul.f32 %v904, %v1231
    %v1240 = vmul.f32 %v904, %v1232
    %v1241 = vadd.f32 %v1217, %v1233
    %v1242 = vadd.f32 %v1218, %v1234
    %v1243 = vadd.f32 %v1219, %v1235
    %v1244 = vadd.f32 %v1220, %v1236
    %v1245 = vadd.f32 %v1221, %v1237
    %v1246 = vadd.f32 %v1222, %v1238
    %v1247 = vadd.f32 %v1223, %v1239
    %v1248 = vadd.f32 %v1224, %v1240
    %v1249 = vadd.f32 %v1145, %v1193
    %v1250 = vadd.f32 %v1146, %v1194
    %v1251 = vadd.f32 %v1147, %v1195
    %v1252 = vadd.f32 %v1148, %v1196
    %v1253 = vadd.f32 %v1149, %v1197
    %v1254 = vadd.f32 %v1150, %v1198
    %v1255 = vadd.f32 %v1151, %v1199
    %v1256 = vadd.f32 %v1152, %v1200
    %v1257 = vadd.f32 %v1249, %v1241
    %v1258 = vadd.f32 %v1250, %v1242
    %v1259 = vadd.f32 %v1251, %v1243
    %v1260 = vadd.f32 %v1252, %v1244
    %v1261 = vadd.f32 %v1253, %v1245
    %v1262 = vadd.f32 %v1254, %v1246
    %v1263 = vadd.f32 %v1255, %v1247
    %v1264 = vadd.f32 %v1256, %v1248
    %v1265 = vmax.f32 %v1097, %v1257
    %v1266 = vmax.f32 %v1098, %v1258
    %v1267 = vmax.f32 %v1099, %v1259
    %v1268 = vmax.f32 %v1100, %v1260
    %v1269 = vmax.f32 %v1101, %v1261
    %v1270 = vmax.f32 %v1102, %v1262
    %v1271 = vmax.f32 %v1103, %v1263
    %v1272 = vmax.f32 %v1104, %v1264
    %v1273 = vmul.f32 %v728, %v787
    %v1274 = vmul.f32 %v728, %v788
    %v1275 = vmul.f32 %v728, %v789
    %v1276 = vmul.f32 %v728, %v790
    %v1277 = vmul.f32 %v728, %v791
    %v1278 = vmul.f32 %v728, %v792
    %v1279 = vmul.f32 %v728, %v793
    %v1280 = vmul.f32 %v728, %v794
    %v1281 = vmul.f32 %v745, %v804
    %v1282 = vmul.f32 %v745, %v805
    %v1283 = vmul.f32 %v745, %v806
    %v1284 = vmul.f32 %v745, %v807
    %v1285 = vmul.f32 %v745, %v808
    %v1286 = vmul.f32 %v745, %v809
    %v1287 = vmul.f32 %v745, %v810
    %v1288 = vmul.f32 %v745, %v811
    %v1289 = vadd.f32 %v1273, %v1281
    %v1290 = vadd.f32 %v1274, %v1282
    %v1291 = vadd.f32 %v1275, %v1283
    %v1292 = vadd.f32 %v1276, %v1284
    %v1293 = vadd.f32 %v1277, %v1285
    %v1294 = vadd.f32 %v1278, %v1286
    %v1295 = vadd.f32 %v1279, %v1287
    %v1296 = vadd.f32 %v1280, %v1288
    %v1297 = vmul.f32 %v770, %v829
    %v1298 = vmul.f32 %v770, %v830
    %v1299 = vmul.f32 %v770, %v831
    %v1300 = vmul.f32 %v770, %v832
    %v1301 = vmul.f32 %v770, %v833
    %v1302 = vmul.f32 %v770, %v834
    %v1303 = vmul.f32 %v770, %v835
    %v1304 = vmul.f32 %v770, %v836
    %v1305 = vadd.f32 %v1289, %v1297
    %v1306 = vadd.f32 %v1290, %v1298
    %v1307 = vadd.f32 %v1291, %v1299
    %v1308 = vadd.f32 %v1292, %v1300
    %v1309 = vadd.f32 %v1293, %v1301
    %v1310 = vadd.f32 %v1294, %v1302
    %v1311 = vadd.f32 %v1295, %v1303
    %v1312 = vadd.f32 %v1296, %v1304
    %v1313 = vmul.f32 %v795, %v854
    %v1314 = vmul.f32 %v795, %v855
    %v1315 = vmul.f32 %v795, %v856
    %v1316 = vmul.f32 %v795, %v857
    %v1317 = vmul.f32 %v795, %v858
    %v1318 = vmul.f32 %v795, %v859
    %v1319 = vmul.f32 %v795, %v860
    %v1320 = vmul.f32 %v795, %v861
    %v1321 = vmul.f32 %v812, %v871
    %v1322 = vmul.f32 %v812, %v872
    %v1323 = vmul.f32 %v812, %v873
    %v1324 = vmul.f32 %v812, %v874
    %v1325 = vmul.f32 %v812, %v875
    %v1326 = vmul.f32 %v812, %v876
    %v1327 = vmul.f32 %v812, %v877
    %v1328 = vmul.f32 %v812, %v878
    %v1329 = vadd.f32 %v1313, %v1321
    %v1330 = vadd.f32 %v1314, %v1322
    %v1331 = vadd.f32 %v1315, %v1323
    %v1332 = vadd.f32 %v1316, %v1324
    %v1333 = vadd.f32 %v1317, %v1325
    %v1334 = vadd.f32 %v1318, %v1326
    %v1335 = vadd.f32 %v1319, %v1327
    %v1336 = vadd.f32 %v1320, %v1328
    %v1337 = vmul.f32 %v837, %v896
    %v1338 = vmul.f32 %v837, %v897
    %v1339 = vmul.f32 %v837, %v898
    %v1340 = vmul.f32 %v837, %v899
    %v1341 = vmul.f32 %v837, %v900
    %v1342 = vmul.f32 %v837, %v901
    %v1343 = vmul.f32 %v837, %v902
    %v1344 = vmul.f32 %v837, %v903
    %v1345 = vadd.f32 %v1329, %v1337
    %v1346 = vadd.f32 %v1330, %v1338
    %v1347 = vadd.f32 %v1331, %v1339
    %v1348 = vadd.f32 %v1332, %v1340
    %v1349 = vadd.f32 %v1333, %v1341
    %v1350 = vadd.f32 %v1334, %v1342
    %v1351 = vadd.f32 %v1335, %v1343
    %v1352 = vadd.f32 %v1336, %v1344
    %v1353 = vld [vmem:[%s450] sm:$0xff]
    %v1354 = vld [vmem:[%s450 + $0x8] sm:$0xff]
    %v1355 = vld [vmem:[%s450 + $0x10] sm:$0xff]
    %v1356 = vld [vmem:[%s450 + $0x18] sm:$0xff]
    %v1357 = vld [vmem:[%s450 + $0x20] sm:$0xff]
    %v1358 = vld [vmem:[%s450 + $0x28] sm:$0xff]
    %v1359 = vld [vmem:[%s450 + $0x30] sm:$0xff]
    %v1360 = vld [vmem:[%s450 + $0x38] sm:$0xff]
    %v1361 = vmul.f32 %v862, %v1353
    %v1362 = vmul.f32 %v862, %v1354
    %v1363 = vmul.f32 %v862, %v1355
    %v1364 = vmul.f32 %v862, %v1356
    %v1365 = vmul.f32 %v862, %v1357
    %v1366 = vmul.f32 %v862, %v1358
    %v1367 = vmul.f32 %v862, %v1359
    %v1368 = vmul.f32 %v862, %v1360
    %v1369 = vld [vmem:[%s476] sm:$0xff]
    %v1370 = vld [vmem:[%s476 + $0x8] sm:$0xff]
    %v1371 = vld [vmem:[%s476 + $0x10] sm:$0xff]
    %v1372 = vld [vmem:[%s476 + $0x18] sm:$0xff]
    %v1373 = vld [vmem:[%s476 + $0x20] sm:$0xff]
    %v1374 = vld [vmem:[%s476 + $0x28] sm:$0xff]
    %v1375 = vld [vmem:[%s476 + $0x30] sm:$0xff]
    %v1376 = vld [vmem:[%s476 + $0x38] sm:$0xff]
    %v1377 = vmul.f32 %v879, %v1369
    %v1378 = vmul.f32 %v879, %v1370
    %v1379 = vmul.f32 %v879, %v1371
    %v1380 = vmul.f32 %v879, %v1372
    %v1381 = vmul.f32 %v879, %v1373
    %v1382 = vmul.f32 %v879, %v1374
    %v1383 = vmul.f32 %v879, %v1375
    %v1384 = vmul.f32 %v879, %v1376
    %v1385 = vadd.f32 %v1361, %v1377
    %v1386 = vadd.f32 %v1362, %v1378
    %v1387 = vadd.f32 %v1363, %v1379
    %v1388 = vadd.f32 %v1364, %v1380
    %v1389 = vadd.f32 %v1365, %v1381
    %v1390 = vadd.f32 %v1366, %v1382
    %v1391 = vadd.f32 %v1367, %v1383
    %v1392 = vadd.f32 %v1368, %v1384
    %v1393 = vld [vmem:[%s502] sm:$0xff]
    %v1394 = vld [vmem:[%s502 + $0x8] sm:$0xff]
    %v1395 = vld [vmem:[%s502 + $0x10] sm:$0xff]
    %v1396 = vld [vmem:[%s502 + $0x18] sm:$0xff]
    %v1397 = vld [vmem:[%s502 + $0x20] sm:$0xff]
    %v1398 = vld [vmem:[%s502 + $0x28] sm:$0xff]
    %v1399 = vld [vmem:[%s502 + $0x30] sm:$0xff]
    %v1400 = vld [vmem:[%s502 + $0x38] sm:$0xff]
    %v1401 = vmul.f32 %v904, %v1393
    %v1402 = vmul.f32 %v904, %v1394
    %v1403 = vmul.f32 %v904, %v1395
    %v1404 = vmul.f32 %v904, %v1396
    %v1405 = vmul.f32 %v904, %v1397
    %v1406 = vmul.f32 %v904, %v1398
    %v1407 = vmul.f32 %v904, %v1399
    %v1408 = vmul.f32 %v904, %v1400
    %v1409 = vadd.f32 %v1385, %v1401
    %v1410 = vadd.f32 %v1386, %v1402
    %v1411 = vadd.f32 %v1387, %v1403
    %v1412 = vadd.f32 %v1388, %v1404
    %v1413 = vadd.f32 %v1389, %v1405
    %v1414 = vadd.f32 %v1390, %v1406
    %v1415 = vadd.f32 %v1391, %v1407
    %v1416 = vadd.f32 %v1392, %v1408
    %v1417 = vadd.f32 %v1305, %v1345
    %v1418 = vadd.f32 %v1306, %v1346
    %v1419 = vadd.f32 %v1307, %v1347
    %v1420 = vadd.f32 %v1308, %v1348
    %v1421 = vadd.f32 %v1309, %v1349
    %v1422 = vadd.f32 %v1310, %v1350
    %v1423 = vadd.f32 %v1311, %v1351
    %v1424 = vadd.f32 %v1312, %v1352
    %v1425 = vadd.f32 %v1417, %v1409
    %v1426 = vadd.f32 %v1418, %v1410
    %v1427 = vadd.f32 %v1419, %v1411
    %v1428 = vadd.f32 %v1420, %v1412
    %v1429 = vadd.f32 %v1421, %v1413
    %v1430 = vadd.f32 %v1422, %v1414
    %v1431 = vadd.f32 %v1423, %v1415
    %v1432 = vadd.f32 %v1424, %v1416
    %v1433 = vmax.f32 %v1265, %v1425
    %v1434 = vmax.f32 %v1266, %v1426
    %v1435 = vmax.f32 %v1267, %v1427
    %v1436 = vmax.f32 %v1268, %v1428
    %v1437 = vmax.f32 %v1269, %v1429
    %v1438 = vmax.f32 %v1270, %v1430
    %v1439 = vmax.f32 %v1271, %v1431
    %v1440 = vmax.f32 %v1272, %v1432
    %v1441 = vmul.f32 %v728, %v804
    %v1442 = vmul.f32 %v728, %v805
    %v1443 = vmul.f32 %v728, %v806
    %v1444 = vmul.f32 %v728, %v807
    %v1445 = vmul.f32 %v728, %v808
    %v1446 = vmul.f32 %v728, %v809
    %v1447 = vmul.f32 %v728, %v810
    %v1448 = vmul.f32 %v728, %v811
    %v1449 = vmul.f32 %v745, %v829
    %v1450 = vmul.f32 %v745, %v830
    %v1451 = vmul.f32 %v745, %v831
    %v1452 = vmul.f32 %v745, %v832
    %v1453 = vmul.f32 %v745, %v833
    %v1454 = vmul.f32 %v745, %v834
    %v1455 = vmul.f32 %v745, %v835
    %v1456 = vmul.f32 %v745, %v836
    %v1457 = vadd.f32 %v1441, %v1449
    %v1458 = vadd.f32 %v1442, %v1450
    %v1459 = vadd.f32 %v1443, %v1451
    %v1460 = vadd.f32 %v1444, %v1452
    %v1461 = vadd.f32 %v1445, %v1453
    %v1462 = vadd.f32 %v1446, %v1454
    %v1463 = vadd.f32 %v1447, %v1455
    %v1464 = vadd.f32 %v1448, %v1456
    %v1465 = vmul.f32 %v770, %v1009
    %v1466 = vmul.f32 %v770, %v1010
    %v1467 = vmul.f32 %v770, %v1011
    %v1468 = vmul.f32 %v770, %v1012
    %v1469 = vmul.f32 %v770, %v1013
    %v1470 = vmul.f32 %v770, %v1014
    %v1471 = vmul.f32 %v770, %v1015
    %v1472 = vmul.f32 %v770, %v1016
    %v1473 = vadd.f32 %v1457, %v1465
    %v1474 = vadd.f32 %v1458, %v1466
    %v1475 = vadd.f32 %v1459, %v1467
    %v1476 = vadd.f32 %v1460, %v1468
    %v1477 = vadd.f32 %v1461, %v1469
    %v1478 = vadd.f32 %v1462, %v1470
    %v1479 = vadd.f32 %v1463, %v1471
    %v1480 = vadd.f32 %v1464, %v1472
    %v1481 = vmul.f32 %v795, %v871
    %v1482 = vmul.f32 %v795, %v872
    %v1483 = vmul.f32 %v795, %v873
    %v1484 = vmul.f32 %v795, %v874
    %v1485 = vmul.f32 %v795, %v875
    %v1486 = vmul.f32 %v795, %v876
    %v1487 = vmul.f32 %v795, %v877
    %v1488 = vmul.f32 %v795, %v878
    %v1489 = vmul.f32 %v812, %v896
    %v1490 = vmul.f32 %v812, %v897
    %v1491 = vmul.f32 %v812, %v898
    %v1492 = vmul.f32 %v812, %v899
    %v1493 = vmul.f32 %v812, %v900
    %v1494 = vmul.f32 %v812, %v901
    %v1495 = vmul.f32 %v812, %v902
    %v1496 = vmul.f32 %v812, %v903
    %v1497 = vadd.f32 %v1481, %v1489
    %v1498 = vadd.f32 %v1482, %v1490
    %v1499 = vadd.f32 %v1483, %v1491
    %v1500 = vadd.f32 %v1484, %v1492
    %v1501 = vadd.f32 %v1485, %v1493
    %v1502 = vadd.f32 %v1486, %v1494
    %v1503 = vadd.f32 %v1487, %v1495
    %v1504 = vadd.f32 %v1488, %v1496
    %v1505 = vmul.f32 %v837, %v1057
    %v1506 = vmul.f32 %v837, %v1058
    %v1507 = vmul.f32 %v837, %v1059
    %v1508 = vmul.f32 %v837, %v1060
    %v1509 = vmul.f32 %v837, %v1061
    %v1510 = vmul.f32 %v837, %v1062
    %v1511 = vmul.f32 %v837, %v1063
    %v1512 = vmul.f32 %v837, %v1064
    %v1513 = vadd.f32 %v1497, %v1505
    %v1514 = vadd.f32 %v1498, %v1506
    %v1515 = vadd.f32 %v1499, %v1507
    %v1516 = vadd.f32 %v1500, %v1508
    %v1517 = vadd.f32 %v1501, %v1509
    %v1518 = vadd.f32 %v1502, %v1510
    %v1519 = vadd.f32 %v1503, %v1511
    %v1520 = vadd.f32 %v1504, %v1512
    %v1521 = vmul.f32 %v862, %v1369
    %v1522 = vmul.f32 %v862, %v1370
    %v1523 = vmul.f32 %v862, %v1371
    %v1524 = vmul.f32 %v862, %v1372
    %v1525 = vmul.f32 %v862, %v1373
    %v1526 = vmul.f32 %v862, %v1374
    %v1527 = vmul.f32 %v862, %v1375
    %v1528 = vmul.f32 %v862, %v1376
    %v1529 = vmul.f32 %v879, %v1393
    %v1530 = vmul.f32 %v879, %v1394
    %v1531 = vmul.f32 %v879, %v1395
    %v1532 = vmul.f32 %v879, %v1396
    %v1533 = vmul.f32 %v879, %v1397
    %v1534 = vmul.f32 %v879, %v1398
    %v1535 = vmul.f32 %v879, %v1399
    %v1536 = vmul.f32 %v879, %v1400
    %v1537 = vadd.f32 %v1521, %v1529
    %v1538 = vadd.f32 %v1522, %v1530
    %v1539 = vadd.f32 %v1523, %v1531
    %v1540 = vadd.f32 %v1524, %v1532
    %v1541 = vadd.f32 %v1525, %v1533
    %v1542 = vadd.f32 %v1526, %v1534
    %v1543 = vadd.f32 %v1527, %v1535
    %v1544 = vadd.f32 %v1528, %v1536
    %v1545 = vld [vmem:[%s528] sm:$0xff]
    %v1546 = vld [vmem:[%s528 + $0x8] sm:$0xff]
    %v1547 = vld [vmem:[%s528 + $0x10] sm:$0xff]
    %v1548 = vld [vmem:[%s528 + $0x18] sm:$0xff]
    %v1549 = vld [vmem:[%s528 + $0x20] sm:$0xff]
    %v1550 = vld [vmem:[%s528 + $0x28] sm:$0xff]
    %v1551 = vld [vmem:[%s528 + $0x30] sm:$0xff]
    %v1552 = vld [vmem:[%s528 + $0x38] sm:$0xff]
    %v1553 = vmul.f32 %v904, %v1545
    %v1554 = vmul.f32 %v904, %v1546
    %v1555 = vmul.f32 %v904, %v1547
    %v1556 = vmul.f32 %v904, %v1548
    %v1557 = vmul.f32 %v904, %v1549
    %v1558 = vmul.f32 %v904, %v1550
    %v1559 = vmul.f32 %v904, %v1551
    %v1560 = vmul.f32 %v904, %v1552
    %v1561 = vadd.f32 %v1537, %v1553
    %v1562 = vadd.f32 %v1538, %v1554
    %v1563 = vadd.f32 %v1539, %v1555
    %v1564 = vadd.f32 %v1540, %v1556
    %v1565 = vadd.f32 %v1541, %v1557
    %v1566 = vadd.f32 %v1542, %v1558
    %v1567 = vadd.f32 %v1543, %v1559
    %v1568 = vadd.f32 %v1544, %v1560
    %v1569 = vadd.f32 %v1473, %v1513
    %v1570 = vadd.f32 %v1474, %v1514
    %v1571 = vadd.f32 %v1475, %v1515
    %v1572 = vadd.f32 %v1476, %v1516
    %v1573 = vadd.f32 %v1477, %v1517
    %v1574 = vadd.f32 %v1478, %v1518
    %v1575 = vadd.f32 %v1479, %v1519
    %v1576 = vadd.f32 %v1480, %v1520
    %v1577 = vadd.f32 %v1569, %v1561
    %v1578 = vadd.f32 %v1570, %v1562
    %v1579 = vadd.f32 %v1571, %v1563
    %v1580 = vadd.f32 %v1572, %v1564
    %v1581 = vadd.f32 %v1573, %v1565
    %v1582 = vadd.f32 %v1574, %v1566
    %v1583 = vadd.f32 %v1575, %v1567
    %v1584 = vadd.f32 %v1576, %v1568
    %v1585 = vmax.f32 %v1433, %v1577
    %v1586 = vmax.f32 %v1434, %v1578
    %v1587 = vmax.f32 %v1435, %v1579
    %v1588 = vmax.f32 %v1436, %v1580
    %v1589 = vmax.f32 %v1437, %v1581
    %v1590 = vmax.f32 %v1438, %v1582
    %v1591 = vmax.f32 %v1439, %v1583
    %v1592 = vmax.f32 %v1440, %v1584
    %v1593 = vmul.f32 %v728, %v829
    %v1594 = vmul.f32 %v728, %v830
    %v1595 = vmul.f32 %v728, %v831
    %v1596 = vmul.f32 %v728, %v832
    %v1597 = vmul.f32 %v728, %v833
    %v1598 = vmul.f32 %v728, %v834
    %v1599 = vmul.f32 %v728, %v835
    %v1600 = vmul.f32 %v728, %v836
    %v1601 = vmul.f32 %v745, %v1009
    %v1602 = vmul.f32 %v745, %v1010
    %v1603 = vmul.f32 %v745, %v1011
    %v1604 = vmul.f32 %v745, %v1012
    %v1605 = vmul.f32 %v745, %v1013
    %v1606 = vmul.f32 %v745, %v1014
    %v1607 = vmul.f32 %v745, %v1015
    %v1608 = vmul.f32 %v745, %v1016
    %v1609 = vadd.f32 %v1593, %v1601
    %v1610 = vadd.f32 %v1594, %v1602
    %v1611 = vadd.f32 %v1595, %v1603
    %v1612 = vadd.f32 %v1596, %v1604
    %v1613 = vadd.f32 %v1597, %v1605
    %v1614 = vadd.f32 %v1598, %v1606
    %v1615 = vadd.f32 %v1599, %v1607
    %v1616 = vadd.f32 %v1600, %v1608
    %v1617 = vmul.f32 %v770, %v1177
    %v1618 = vmul.f32 %v770, %v1178
    %v1619 = vmul.f32 %v770, %v1179
    %v1620 = vmul.f32 %v770, %v1180
    %v1621 = vmul.f32 %v770, %v1181
    %v1622 = vmul.f32 %v770, %v1182
    %v1623 = vmul.f32 %v770, %v1183
    %v1624 = vmul.f32 %v770, %v1184
    %v1625 = vadd.f32 %v1609, %v1617
    %v1626 = vadd.f32 %v1610, %v1618
    %v1627 = vadd.f32 %v1611, %v1619
    %v1628 = vadd.f32 %v1612, %v1620
    %v1629 = vadd.f32 %v1613, %v1621
    %v1630 = vadd.f32 %v1614, %v1622
    %v1631 = vadd.f32 %v1615, %v1623
    %v1632 = vadd.f32 %v1616, %v1624
    %v1633 = vmul.f32 %v795, %v896
    %v1634 = vmul.f32 %v795, %v897
    %v1635 = vmul.f32 %v795, %v898
    %v1636 = vmul.f32 %v795, %v899
    %v1637 = vmul.f32 %v795, %v900
    %v1638 = vmul.f32 %v795, %v901
    %v1639 = vmul.f32 %v795, %v902
    %v1640 = vmul.f32 %v795, %v903
    %v1641 = vmul.f32 %v812, %v1057
    %v1642 = vmul.f32 %v812, %v1058
    %v1643 = vmul.f32 %v812, %v1059
    %v1644 = vmul.f32 %v812, %v1060
    %v1645 = vmul.f32 %v812, %v1061
    %v1646 = vmul.f32 %v812, %v1062
    %v1647 = vmul.f32 %v812, %v1063
    %v1648 = vmul.f32 %v812, %v1064
    %v1649 = vadd.f32 %v1633, %v1641
    %v1650 = vadd.f32 %v1634, %v1642
    %v1651 = vadd.f32 %v1635, %v1643
    %v1652 = vadd.f32 %v1636, %v1644
    %v1653 = vadd.f32 %v1637, %v1645
    %v1654 = vadd.f32 %v1638, %v1646
    %v1655 = vadd.f32 %v1639, %v1647
    %v1656 = vadd.f32 %v1640, %v1648
    %v1657 = vmul.f32 %v837, %v1225
    %v1658 = vmul.f32 %v837, %v1226
    %v1659 = vmul.f32 %v837, %v1227
    %v1660 = vmul.f32 %v837, %v1228
    %v1661 = vmul.f32 %v837, %v1229
    %v1662 = vmul.f32 %v837, %v1230
    %v1663 = vmul.f32 %v837, %v1231
    %v1664 = vmul.f32 %v837, %v1232
    %v1665 = vadd.f32 %v1649, %v1657
    %v1666 = vadd.f32 %v1650, %v1658
    %v1667 = vadd.f32 %v1651, %v1659
    %v1668 = vadd.f32 %v1652, %v1660
    %v1669 = vadd.f32 %v1653, %v1661
    %v1670 = vadd.f32 %v1654, %v1662
    %v1671 = vadd.f32 %v1655, %v1663
    %v1672 = vadd.f32 %v1656, %v1664
    %v1673 = vmul.f32 %v862, %v1393
    %v1674 = vmul.f32 %v862, %v1394
    %v1675 = vmul.f32 %v862, %v1395
    %v1676 = vmul.f32 %v862, %v1396
    %v1677 = vmul.f32 %v862, %v1397
    %v1678 = vmul.f32 %v862, %v1398
    %v1679 = vmul.f32 %v862, %v1399
    %v1680 = vmul.f32 %v862, %v1400
    %v1681 = vmul.f32 %v879, %v1545
    %v1682 = vmul.f32 %v879, %v1546
    %v1683 = vmul.f32 %v879, %v1547
    %v1684 = vmul.f32 %v879, %v1548
    %v1685 = vmul.f32 %v879, %v1549
    %v1686 = vmul.f32 %v879, %v1550
    %v1687 = vmul.f32 %v879, %v1551
    %v1688 = vmul.f32 %v879, %v1552
    %v1689 = vadd.f32 %v1673, %v1681
    %v1690 = vadd.f32 %v1674, %v1682
    %v1691 = vadd.f32 %v1675, %v1683
    %v1692 = vadd.f32 %v1676, %v1684
    %v1693 = vadd.f32 %v1677, %v1685
    %v1694 = vadd.f32 %v1678, %v1686
    %v1695 = vadd.f32 %v1679, %v1687
    %v1696 = vadd.f32 %v1680, %v1688
    %v1697 = vld [vmem:[%s554] sm:$0xff]
    %v1698 = vld [vmem:[%s554 + $0x8] sm:$0xff]
    %v1699 = vld [vmem:[%s554 + $0x10] sm:$0xff]
    %v1700 = vld [vmem:[%s554 + $0x18] sm:$0xff]
    %v1701 = vld [vmem:[%s554 + $0x20] sm:$0xff]
    %v1702 = vld [vmem:[%s554 + $0x28] sm:$0xff]
    %v1703 = vld [vmem:[%s554 + $0x30] sm:$0xff]
    %v1704 = vld [vmem:[%s554 + $0x38] sm:$0xff]
    %v1705 = vmul.f32 %v904, %v1697
    %v1706 = vmul.f32 %v904, %v1698
    %v1707 = vmul.f32 %v904, %v1699
    %v1708 = vmul.f32 %v904, %v1700
    %v1709 = vmul.f32 %v904, %v1701
    %v1710 = vmul.f32 %v904, %v1702
    %v1711 = vmul.f32 %v904, %v1703
    %v1712 = vmul.f32 %v904, %v1704
    %v1713 = vadd.f32 %v1689, %v1705
    %v1714 = vadd.f32 %v1690, %v1706
    %v1715 = vadd.f32 %v1691, %v1707
    %v1716 = vadd.f32 %v1692, %v1708
    %v1717 = vadd.f32 %v1693, %v1709
    %v1718 = vadd.f32 %v1694, %v1710
    %v1719 = vadd.f32 %v1695, %v1711
    %v1720 = vadd.f32 %v1696, %v1712
    %v1721 = vadd.f32 %v1625, %v1665
    %v1722 = vadd.f32 %v1626, %v1666
    %v1723 = vadd.f32 %v1627, %v1667
    %v1724 = vadd.f32 %v1628, %v1668
    %v1725 = vadd.f32 %v1629, %v1669
    %v1726 = vadd.f32 %v1630, %v1670
    %v1727 = vadd.f32 %v1631, %v1671
    %v1728 = vadd.f32 %v1632, %v1672
    %v1729 = vadd.f32 %v1721, %v1713
    %v1730 = vadd.f32 %v1722, %v1714
    %v1731 = vadd.f32 %v1723, %v1715
    %v1732 = vadd.f32 %v1724, %v1716
    %v1733 = vadd.f32 %v1725, %v1717
    %v1734 = vadd.f32 %v1726, %v1718
    %v1735 = vadd.f32 %v1727, %v1719
    %v1736 = vadd.f32 %v1728, %v1720
    %v1737 = vmax.f32 %v1585, %v1729
    %v1738 = vmax.f32 %v1586, %v1730
    %v1739 = vmax.f32 %v1587, %v1731
    %v1740 = vmax.f32 %v1588, %v1732
    %v1741 = vmax.f32 %v1589, %v1733
    %v1742 = vmax.f32 %v1590, %v1734
    %v1743 = vmax.f32 %v1591, %v1735
    %v1744 = vmax.f32 %v1592, %v1736
    %v1745 = vmul.f32 %v728, %v854
    %v1746 = vmul.f32 %v728, %v855
    %v1747 = vmul.f32 %v728, %v856
    %v1748 = vmul.f32 %v728, %v857
    %v1749 = vmul.f32 %v728, %v858
    %v1750 = vmul.f32 %v728, %v859
    %v1751 = vmul.f32 %v728, %v860
    %v1752 = vmul.f32 %v728, %v861
    %v1753 = vmul.f32 %v745, %v871
    %v1754 = vmul.f32 %v745, %v872
    %v1755 = vmul.f32 %v745, %v873
    %v1756 = vmul.f32 %v745, %v874
    %v1757 = vmul.f32 %v745, %v875
    %v1758 = vmul.f32 %v745, %v876
    %v1759 = vmul.f32 %v745, %v877
    %v1760 = vmul.f32 %v745, %v878
    %v1761 = vadd.f32 %v1745, %v1753
    %v1762 = vadd.f32 %v1746, %v1754
    %v1763 = vadd.f32 %v1747, %v1755
    %v1764 = vadd.f32 %v1748, %v1756
    %v1765 = vadd.f32 %v1749, %v1757
    %v1766 = vadd.f32 %v1750, %v1758
    %v1767 = vadd.f32 %v1751, %v1759
    %v1768 = vadd.f32 %v1752, %v1760
    %v1769 = vmul.f32 %v770, %v896
    %v1770 = vmul.f32 %v770, %v897
    %v1771 = vmul.f32 %v770, %v898
    %v1772 = vmul.f32 %v770, %v899
    %v1773 = vmul.f32 %v770, %v900
    %v1774 = vmul.f32 %v770, %v901
    %v1775 = vmul.f32 %v770, %v902
    %v1776 = vmul.f32 %v770, %v903
    %v1777 = vadd.f32 %v1761, %v1769
    %v1778 = vadd.f32 %v1762, %v1770
    %v1779 = vadd.f32 %v1763, %v1771
    %v1780 = vadd.f32 %v1764, %v1772
    %v1781 = vadd.f32 %v1765, %v1773
    %v1782 = vadd.f32 %v1766, %v1774
    %v1783 = vadd.f32 %v1767, %v1775
    %v1784 = vadd.f32 %v1768, %v1776
    %v1785 = vmul.f32 %v795, %v1353
    %v1786 = vmul.f32 %v795, %v1354
    %v1787 = vmul.f32 %v795, %v1355
    %v1788 = vmul.f32 %v795, %v1356
    %v1789 = vmul.f32 %v795, %v1357
    %v1790 = vmul.f32 %v795, %v1358
    %v1791 = vmul.f32 %v795, %v1359
    %v1792 = vmul.f32 %v795, %v1360
    %v1793 = vmul.f32 %v812, %v1369
    %v1794 = vmul.f32 %v812, %v1370
    %v1795 = vmul.f32 %v812, %v1371
    %v1796 = vmul.f32 %v812, %v1372
    %v1797 = vmul.f32 %v812, %v1373
    %v1798 = vmul.f32 %v812, %v1374
    %v1799 = vmul.f32 %v812, %v1375
    %v1800 = vmul.f32 %v812, %v1376
    %v1801 = vadd.f32 %v1785, %v1793
    %v1802 = vadd.f32 %v1786, %v1794
    %v1803 = vadd.f32 %v1787, %v1795
    %v1804 = vadd.f32 %v1788, %v1796
    %v1805 = vadd.f32 %v1789, %v1797
    %v1806 = vadd.f32 %v1790, %v1798
    %v1807 = vadd.f32 %v1791, %v1799
    %v1808 = vadd.f32 %v1792, %v1800
    %v1809 = vmul.f32 %v837, %v1393
    %v1810 = vmul.f32 %v837, %v1394
    %v1811 = vmul.f32 %v837, %v1395
    %v1812 = vmul.f32 %v837, %v1396
    %v1813 = vmul.f32 %v837, %v1397
    %v1814 = vmul.f32 %v837, %v1398
    %v1815 = vmul.f32 %v837, %v1399
    %v1816 = vmul.f32 %v837, %v1400
    %v1817 = vadd.f32 %v1801, %v1809
    %v1818 = vadd.f32 %v1802, %v1810
    %v1819 = vadd.f32 %v1803, %v1811
    %v1820 = vadd.f32 %v1804, %v1812
    %v1821 = vadd.f32 %v1805, %v1813
    %v1822 = vadd.f32 %v1806, %v1814
    %v1823 = vadd.f32 %v1807, %v1815
    %v1824 = vadd.f32 %v1808, %v1816
    %v1825 = vld [vmem:[%s580] sm:$0xff]
    %v1826 = vld [vmem:[%s580 + $0x8] sm:$0xff]
    %v1827 = vld [vmem:[%s580 + $0x10] sm:$0xff]
    %v1828 = vld [vmem:[%s580 + $0x18] sm:$0xff]
    %v1829 = vld [vmem:[%s580 + $0x20] sm:$0xff]
    %v1830 = vld [vmem:[%s580 + $0x28] sm:$0xff]
    %v1831 = vld [vmem:[%s580 + $0x30] sm:$0xff]
    %v1832 = vld [vmem:[%s580 + $0x38] sm:$0xff]
    %v1833 = vmul.f32 %v862, %v1825
    %v1834 = vmul.f32 %v862, %v1826
    %v1835 = vmul.f32 %v862, %v1827
    %v1836 = vmul.f32 %v862, %v1828
    %v1837 = vmul.f32 %v862, %v1829
    %v1838 = vmul.f32 %v862, %v1830
    %v1839 = vmul.f32 %v862, %v1831
    %v1840 = vmul.f32 %v862, %v1832
    %v1841 = vld [vmem:[%s606] sm:$0xff]
    %v1842 = vld [vmem:[%s606 + $0x8] sm:$0xff]
    %v1843 = vld [vmem:[%s606 + $0x10] sm:$0xff]
    %v1844 = vld [vmem:[%s606 + $0x18] sm:$0xff]
    %v1845 = vld [vmem:[%s606 + $0x20] sm:$0xff]
    %v1846 = vld [vmem:[%s606 + $0x28] sm:$0xff]
    %v1847 = vld [vmem:[%s606 + $0x30] sm:$0xff]
    %v1848 = vld [vmem:[%s606 + $0x38] sm:$0xff]
    %v1849 = vmul.f32 %v879, %v1841
    %v1850 = vmul.f32 %v879, %v1842
    %v1851 = vmul.f32 %v879, %v1843
    %v1852 = vmul.f32 %v879, %v1844
    %v1853 = vmul.f32 %v879, %v1845
    %v1854 = vmul.f32 %v879, %v1846
    %v1855 = vmul.f32 %v879, %v1847
    %v1856 = vmul.f32 %v879, %v1848
    %v1857 = vadd.f32 %v1833, %v1849
    %v1858 = vadd.f32 %v1834, %v1850
    %v1859 = vadd.f32 %v1835, %v1851
    %v1860 = vadd.f32 %v1836, %v1852
    %v1861 = vadd.f32 %v1837, %v1853
    %v1862 = vadd.f32 %v1838, %v1854
    %v1863 = vadd.f32 %v1839, %v1855
    %v1864 = vadd.f32 %v1840, %v1856
    %v1865 = vld [vmem:[%s632] sm:$0xff]
    %v1866 = vld [vmem:[%s632 + $0x8] sm:$0xff]
    %v1867 = vld [vmem:[%s632 + $0x10] sm:$0xff]
    %v1868 = vld [vmem:[%s632 + $0x18] sm:$0xff]
    %v1869 = vld [vmem:[%s632 + $0x20] sm:$0xff]
    %v1870 = vld [vmem:[%s632 + $0x28] sm:$0xff]
    %v1871 = vld [vmem:[%s632 + $0x30] sm:$0xff]
    %v1872 = vld [vmem:[%s632 + $0x38] sm:$0xff]
    %v1873 = vmul.f32 %v904, %v1865
    %v1874 = vmul.f32 %v904, %v1866
    %v1875 = vmul.f32 %v904, %v1867
    %v1876 = vmul.f32 %v904, %v1868
    %v1877 = vmul.f32 %v904, %v1869
    %v1878 = vmul.f32 %v904, %v1870
    %v1879 = vmul.f32 %v904, %v1871
    %v1880 = vmul.f32 %v904, %v1872
    %v1881 = vadd.f32 %v1857, %v1873
    %v1882 = vadd.f32 %v1858, %v1874
    %v1883 = vadd.f32 %v1859, %v1875
    %v1884 = vadd.f32 %v1860, %v1876
    %v1885 = vadd.f32 %v1861, %v1877
    %v1886 = vadd.f32 %v1862, %v1878
    %v1887 = vadd.f32 %v1863, %v1879
    %v1888 = vadd.f32 %v1864, %v1880
    %v1889 = vadd.f32 %v1777, %v1817
    %v1890 = vadd.f32 %v1778, %v1818
    %v1891 = vadd.f32 %v1779, %v1819
    %v1892 = vadd.f32 %v1780, %v1820
    %v1893 = vadd.f32 %v1781, %v1821
    %v1894 = vadd.f32 %v1782, %v1822
    %v1895 = vadd.f32 %v1783, %v1823
    %v1896 = vadd.f32 %v1784, %v1824
    %v1897 = vadd.f32 %v1889, %v1881
    %v1898 = vadd.f32 %v1890, %v1882
    %v1899 = vadd.f32 %v1891, %v1883
    %v1900 = vadd.f32 %v1892, %v1884
    %v1901 = vadd.f32 %v1893, %v1885
    %v1902 = vadd.f32 %v1894, %v1886
    %v1903 = vadd.f32 %v1895, %v1887
    %v1904 = vadd.f32 %v1896, %v1888
    %v1905 = vmax.f32 %v1737, %v1897
    %v1906 = vmax.f32 %v1738, %v1898
    %v1907 = vmax.f32 %v1739, %v1899
    %v1908 = vmax.f32 %v1740, %v1900
    %v1909 = vmax.f32 %v1741, %v1901
    %v1910 = vmax.f32 %v1742, %v1902
    %v1911 = vmax.f32 %v1743, %v1903
    %v1912 = vmax.f32 %v1744, %v1904
    %v1913 = vmul.f32 %v728, %v871
    %v1914 = vmul.f32 %v728, %v872
    %v1915 = vmul.f32 %v728, %v873
    %v1916 = vmul.f32 %v728, %v874
    %v1917 = vmul.f32 %v728, %v875
    %v1918 = vmul.f32 %v728, %v876
    %v1919 = vmul.f32 %v728, %v877
    %v1920 = vmul.f32 %v728, %v878
    %v1921 = vmul.f32 %v745, %v896
    %v1922 = vmul.f32 %v745, %v897
    %v1923 = vmul.f32 %v745, %v898
    %v1924 = vmul.f32 %v745, %v899
    %v1925 = vmul.f32 %v745, %v900
    %v1926 = vmul.f32 %v745, %v901
    %v1927 = vmul.f32 %v745, %v902
    %v1928 = vmul.f32 %v745, %v903
    %v1929 = vadd.f32 %v1913, %v1921
    %v1930 = vadd.f32 %v1914, %v1922
    %v1931 = vadd.f32 %v1915, %v1923
    %v1932 = vadd.f32 %v1916, %v1924
    %v1933 = vadd.f32 %v1917, %v1925
    %v1934 = vadd.f32 %v1918, %v1926
    %v1935 = vadd.f32 %v1919, %v1927
    %v1936 = vadd.f32 %v1920, %v1928
    %v1937 = vmul.f32 %v770, %v1057
    %v1938 = vmul.f32 %v770, %v1058
    %v1939 = vmul.f32 %v770, %v1059
    %v1940 = vmul.f32 %v770, %v1060
    %v1941 = vmul.f32 %v770, %v1061
    %v1942 = vmul.f32 %v770, %v1062
    %v1943 = vmul.f32 %v770, %v1063
    %v1944 = vmul.f32 %v770, %v1064
    %v1945 = vadd.f32 %v1929, %v1937
    %v1946 = vadd.f32 %v1930, %v1938
    %v1947 = vadd.f32 %v1931, %v1939
    %v1948 = vadd.f32 %v1932, %v1940
    %v1949 = vadd.f32 %v1933, %v1941
    %v1950 = vadd.f32 %v1934, %v1942
    %v1951 = vadd.f32 %v1935, %v1943
    %v1952 = vadd.f32 %v1936, %v1944
    %v1953 = vmul.f32 %v795, %v1369
    %v1954 = vmul.f32 %v795, %v1370
    %v1955 = vmul.f32 %v795, %v1371
    %v1956 = vmul.f32 %v795, %v1372
    %v1957 = vmul.f32 %v795, %v1373
    %v1958 = vmul.f32 %v795, %v1374
    %v1959 = vmul.f32 %v795, %v1375
    %v1960 = vmul.f32 %v795, %v1376
    %v1961 = vmul.f32 %v812, %v1393
    %v1962 = vmul.f32 %v812, %v1394
    %v1963 = vmul.f32 %v812, %v1395
    %v1964 = vmul.f32 %v812, %v1396
    %v1965 = vmul.f32 %v812, %v1397
    %v1966 = vmul.f32 %v812, %v1398
    %v1967 = vmul.f32 %v812, %v1399
    %v1968 = vmul.f32 %v812, %v1400
    %v1969 = vadd.f32 %v1953, %v1961
    %v1970 = vadd.f32 %v1954, %v1962
    %v1971 = vadd.f32 %v1955, %v1963
    %v1972 = vadd.f32 %v1956, %v1964
    %v1973 = vadd.f32 %v1957, %v1965
    %v1974 = vadd.f32 %v1958, %v1966
    %v1975 = vadd.f32 %v1959, %v1967
    %v1976 = vadd.f32 %v1960, %v1968
    %v1977 = vmul.f32 %v837, %v1545
    %v1978 = vmul.f32 %v837, %v1546
    %v1979 = vmul.f32 %v837, %v1547
    %v1980 = vmul.f32 %v837, %v1548
    %v1981 = vmul.f32 %v837, %v1549
    %v1982 = vmul.f32 %v837, %v1550
    %v1983 = vmul.f32 %v837, %v1551
    %v1984 = vmul.f32 %v837, %v1552
    %v1985 = vadd.f32 %v1969, %v1977
    %v1986 = vadd.f32 %v1970, %v1978
    %v1987 = vadd.f32 %v1971, %v1979
    %v1988 = vadd.f32 %v1972, %v1980
    %v1989 = vadd.f32 %v1973, %v1981
    %v1990 = vadd.f32 %v1974, %v1982
    %v1991 = vadd.f32 %v1975, %v1983
    %v1992 = vadd.f32 %v1976, %v1984
    %v1993 = vmul.f32 %v862, %v1841
    %v1994 = vmul.f32 %v862, %v1842
    %v1995 = vmul.f32 %v862, %v1843
    %v1996 = vmul.f32 %v862, %v1844
    %v1997 = vmul.f32 %v862, %v1845
    %v1998 = vmul.f32 %v862, %v1846
    %v1999 = vmul.f32 %v862, %v1847
    %v2000 = vmul.f32 %v862, %v1848
    %v2001 = vmul.f32 %v879, %v1865
    %v2002 = vmul.f32 %v879, %v1866
    %v2003 = vmul.f32 %v879, %v1867
    %v2004 = vmul.f32 %v879, %v1868
    %v2005 = vmul.f32 %v879, %v1869
    %v2006 = vmul.f32 %v879, %v1870
    %v2007 = vmul.f32 %v879, %v1871
    %v2008 = vmul.f32 %v879, %v1872
    %v2009 = vadd.f32 %v1993, %v2001
    %v2010 = vadd.f32 %v1994, %v2002
    %v2011 = vadd.f32 %v1995, %v2003
    %v2012 = vadd.f32 %v1996, %v2004
    %v2013 = vadd.f32 %v1997, %v2005
    %v2014 = vadd.f32 %v1998, %v2006
    %v2015 = vadd.f32 %v1999, %v2007
    %v2016 = vadd.f32 %v2000, %v2008
    %v2017 = vld [vmem:[%s658] sm:$0xff]
    %v2018 = vld [vmem:[%s658 + $0x8] sm:$0xff]
    %v2019 = vld [vmem:[%s658 + $0x10] sm:$0xff]
    %v2020 = vld [vmem:[%s658 + $0x18] sm:$0xff]
    %v2021 = vld [vmem:[%s658 + $0x20] sm:$0xff]
    %v2022 = vld [vmem:[%s658 + $0x28] sm:$0xff]
    %v2023 = vld [vmem:[%s658 + $0x30] sm:$0xff]
    %v2024 = vld [vmem:[%s658 + $0x38] sm:$0xff]
    %v2025 = vmul.f32 %v904, %v2017
    %v2026 = vmul.f32 %v904, %v2018
    %v2027 = vmul.f32 %v904, %v2019
    %v2028 = vmul.f32 %v904, %v2020
    %v2029 = vmul.f32 %v904, %v2021
    %v2030 = vmul.f32 %v904, %v2022
    %v2031 = vmul.f32 %v904, %v2023
    %v2032 = vmul.f32 %v904, %v2024
    %v2033 = vadd.f32 %v2009, %v2025
    %v2034 = vadd.f32 %v2010, %v2026
    %v2035 = vadd.f32 %v2011, %v2027
    %v2036 = vadd.f32 %v2012, %v2028
    %v2037 = vadd.f32 %v2013, %v2029
    %v2038 = vadd.f32 %v2014, %v2030
    %v2039 = vadd.f32 %v2015, %v2031
    %v2040 = vadd.f32 %v2016, %v2032
    %v2041 = vadd.f32 %v1945, %v1985
    %v2042 = vadd.f32 %v1946, %v1986
    %v2043 = vadd.f32 %v1947, %v1987
    %v2044 = vadd.f32 %v1948, %v1988
    %v2045 = vadd.f32 %v1949, %v1989
    %v2046 = vadd.f32 %v1950, %v1990
    %v2047 = vadd.f32 %v1951, %v1991
    %v2048 = vadd.f32 %v1952, %v1992
    %v2049 = vadd.f32 %v2041, %v2033
    %v2050 = vadd.f32 %v2042, %v2034
    %v2051 = vadd.f32 %v2043, %v2035
    %v2052 = vadd.f32 %v2044, %v2036
    %v2053 = vadd.f32 %v2045, %v2037
    %v2054 = vadd.f32 %v2046, %v2038
    %v2055 = vadd.f32 %v2047, %v2039
    %v2056 = vadd.f32 %v2048, %v2040
    %v2057 = vmax.f32 %v1905, %v2049
    %v2058 = vmax.f32 %v1906, %v2050
    %v2059 = vmax.f32 %v1907, %v2051
    %v2060 = vmax.f32 %v1908, %v2052
    %v2061 = vmax.f32 %v1909, %v2053
    %v2062 = vmax.f32 %v1910, %v2054
    %v2063 = vmax.f32 %v1911, %v2055
    %v2064 = vmax.f32 %v1912, %v2056
    %v2065 = vmul.f32 %v728, %v896
    %v2066 = vmul.f32 %v728, %v897
    %v2067 = vmul.f32 %v728, %v898
    %v2068 = vmul.f32 %v728, %v899
    %v2069 = vmul.f32 %v728, %v900
    %v2070 = vmul.f32 %v728, %v901
    %v2071 = vmul.f32 %v728, %v902
    %v2072 = vmul.f32 %v728, %v903
    %v2073 = vmul.f32 %v745, %v1057
    %v2074 = vmul.f32 %v745, %v1058
    %v2075 = vmul.f32 %v745, %v1059
    %v2076 = vmul.f32 %v745, %v1060
    %v2077 = vmul.f32 %v745, %v1061
    %v2078 = vmul.f32 %v745, %v1062
    %v2079 = vmul.f32 %v745, %v1063
    %v2080 = vmul.f32 %v745, %v1064
    %v2081 = vadd.f32 %v2065, %v2073
    %v2082 = vadd.f32 %v2066, %v2074
    %v2083 = vadd.f32 %v2067, %v2075
    %v2084 = vadd.f32 %v2068, %v2076
    %v2085 = vadd.f32 %v2069, %v2077
    %v2086 = vadd.f32 %v2070, %v2078
    %v2087 = vadd.f32 %v2071, %v2079
    %v2088 = vadd.f32 %v2072, %v2080
    %v2089 = vmul.f32 %v770, %v1225
    %v2090 = vmul.f32 %v770, %v1226
    %v2091 = vmul.f32 %v770, %v1227
    %v2092 = vmul.f32 %v770, %v1228
    %v2093 = vmul.f32 %v770, %v1229
    %v2094 = vmul.f32 %v770, %v1230
    %v2095 = vmul.f32 %v770, %v1231
    %v2096 = vmul.f32 %v770, %v1232
    %v2097 = vadd.f32 %v2081, %v2089
    %v2098 = vadd.f32 %v2082, %v2090
    %v2099 = vadd.f32 %v2083, %v2091
    %v2100 = vadd.f32 %v2084, %v2092
    %v2101 = vadd.f32 %v2085, %v2093
    %v2102 = vadd.f32 %v2086, %v2094
    %v2103 = vadd.f32 %v2087, %v2095
    %v2104 = vadd.f32 %v2088, %v2096
    %v2105 = vmul.f32 %v795, %v1393
    %v2106 = vmul.f32 %v795, %v1394
    %v2107 = vmul.f32 %v795, %v1395
    %v2108 = vmul.f32 %v795, %v1396
    %v2109 = vmul.f32 %v795, %v1397
    %v2110 = vmul.f32 %v795, %v1398
    %v2111 = vmul.f32 %v795, %v1399
    %v2112 = vmul.f32 %v795, %v1400
    %v2113 = vmul.f32 %v812, %v1545
    %v2114 = vmul.f32 %v812, %v1546
    %v2115 = vmul.f32 %v812, %v1547
    %v2116 = vmul.f32 %v812, %v1548
    %v2117 = vmul.f32 %v812, %v1549
    %v2118 = vmul.f32 %v812, %v1550
    %v2119 = vmul.f32 %v812, %v1551
    %v2120 = vmul.f32 %v812, %v1552
    %v2121 = vadd.f32 %v2105, %v2113
    %v2122 = vadd.f32 %v2106, %v2114
    %v2123 = vadd.f32 %v2107, %v2115
    %v2124 = vadd.f32 %v2108, %v2116
    %v2125 = vadd.f32 %v2109, %v2117
    %v2126 = vadd.f32 %v2110, %v2118
    %v2127 = vadd.f32 %v2111, %v2119
    %v2128 = vadd.f32 %v2112, %v2120
    %v2129 = vmul.f32 %v837, %v1697
    %v2130 = vmul.f32 %v837, %v1698
    %v2131 = vmul.f32 %v837, %v1699
    %v2132 = vmul.f32 %v837, %v1700
    %v2133 = vmul.f32 %v837, %v1701
    %v2134 = vmul.f32 %v837, %v1702
    %v2135 = vmul.f32 %v837, %v1703
    %v2136 = vmul.f32 %v837, %v1704
    %v2137 = vadd.f32 %v2121, %v2129
    %v2138 = vadd.f32 %v2122, %v2130
    %v2139 = vadd.f32 %v2123, %v2131
    %v2140 = vadd.f32 %v2124, %v2132
    %v2141 = vadd.f32 %v2125, %v2133
    %v2142 = vadd.f32 %v2126, %v2134
    %v2143 = vadd.f32 %v2127, %v2135
    %v2144 = vadd.f32 %v2128, %v2136
    %v2145 = vmul.f32 %v862, %v1865
    %v2146 = vmul.f32 %v862, %v1866
    %v2147 = vmul.f32 %v862, %v1867
    %v2148 = vmul.f32 %v862, %v1868
    %v2149 = vmul.f32 %v862, %v1869
    %v2150 = vmul.f32 %v862, %v1870
    %v2151 = vmul.f32 %v862, %v1871
    %v2152 = vmul.f32 %v862, %v1872
    %v2153 = vmul.f32 %v879, %v2017
    %v2154 = vmul.f32 %v879, %v2018
    %v2155 = vmul.f32 %v879, %v2019
    %v2156 = vmul.f32 %v879, %v2020
    %v2157 = vmul.f32 %v879, %v2021
    %v2158 = vmul.f32 %v879, %v2022
    %v2159 = vmul.f32 %v879, %v2023
    %v2160 = vmul.f32 %v879, %v2024
    %v2161 = vadd.f32 %v2145, %v2153
    %v2162 = vadd.f32 %v2146, %v2154
    %v2163 = vadd.f32 %v2147, %v2155
    %v2164 = vadd.f32 %v2148, %v2156
    %v2165 = vadd.f32 %v2149, %v2157
    %v2166 = vadd.f32 %v2150, %v2158
    %v2167 = vadd.f32 %v2151, %v2159
    %v2168 = vadd.f32 %v2152, %v2160
    %v2169 = vld [vmem:[%s684] sm:$0xff]
    %v2170 = vld [vmem:[%s684 + $0x8] sm:$0xff]
    %v2171 = vld [vmem:[%s684 + $0x10] sm:$0xff]
    %v2172 = vld [vmem:[%s684 + $0x18] sm:$0xff]
    %v2173 = vld [vmem:[%s684 + $0x20] sm:$0xff]
    %v2174 = vld [vmem:[%s684 + $0x28] sm:$0xff]
    %v2175 = vld [vmem:[%s684 + $0x30] sm:$0xff]
    %v2176 = vld [vmem:[%s684 + $0x38] sm:$0xff]
    %v2177 = vmul.f32 %v904, %v2169
    %v2178 = vmul.f32 %v904, %v2170
    %v2179 = vmul.f32 %v904, %v2171
    %v2180 = vmul.f32 %v904, %v2172
    %v2181 = vmul.f32 %v904, %v2173
    %v2182 = vmul.f32 %v904, %v2174
    %v2183 = vmul.f32 %v904, %v2175
    %v2184 = vmul.f32 %v904, %v2176
    %v2185 = vadd.f32 %v2161, %v2177
    %v2186 = vadd.f32 %v2162, %v2178
    %v2187 = vadd.f32 %v2163, %v2179
    %v2188 = vadd.f32 %v2164, %v2180
    %v2189 = vadd.f32 %v2165, %v2181
    %v2190 = vadd.f32 %v2166, %v2182
    %v2191 = vadd.f32 %v2167, %v2183
    %v2192 = vadd.f32 %v2168, %v2184
    %v2193 = vadd.f32 %v2097, %v2137
    %v2194 = vadd.f32 %v2098, %v2138
    %v2195 = vadd.f32 %v2099, %v2139
    %v2196 = vadd.f32 %v2100, %v2140
    %v2197 = vadd.f32 %v2101, %v2141
    %v2198 = vadd.f32 %v2102, %v2142
    %v2199 = vadd.f32 %v2103, %v2143
    %v2200 = vadd.f32 %v2104, %v2144
    %v2201 = vadd.f32 %v2193, %v2185
    %v2202 = vadd.f32 %v2194, %v2186
    %v2203 = vadd.f32 %v2195, %v2187
    %v2204 = vadd.f32 %v2196, %v2188
    %v2205 = vadd.f32 %v2197, %v2189
    %v2206 = vadd.f32 %v2198, %v2190
    %v2207 = vadd.f32 %v2199, %v2191
    %v2208 = vadd.f32 %v2200, %v2192
    %v2209 = vmax.f32 %v2057, %v2201
    %v2210 = vmax.f32 %v2058, %v2202
    %v2211 = vmax.f32 %v2059, %v2203
    %v2212 = vmax.f32 %v2060, %v2204
    %v2213 = vmax.f32 %v2061, %v2205
    %v2214 = vmax.f32 %v2062, %v2206
    %v2215 = vmax.f32 %v2063, %v2207
    %v2216 = vmax.f32 %v2064, %v2208
    %s2217 = sld [smem:[#allocation5]]
    %v2218 = vstv %s2217
    %v2219 = vadd.f32 %v2209, %v2218
    %v2220 = vadd.f32 %v2210, %v2218
    %v2221 = vadd.f32 %v2211, %v2218
    %v2222 = vadd.f32 %v2212, %v2218
    %v2223 = vadd.f32 %v2213, %v2218
    %v2224 = vadd.f32 %v2214, %v2218
    %v2225 = vadd.f32 %v2215, %v2218
    %v2226 = vadd.f32 %v2216, %v2218
    %v2227 = vmax.f32 %v2219, 0.0
    %v2228 = vmax.f32 %v2220, 0.0
    %v2229 = vmax.f32 %v2221, 0.0
    %v2230 = vmax.f32 %v2222, 0.0
    %v2231 = vmax.f32 %v2223, 0.0
    %v2232 = vmax.f32 %v2224, 0.0
    %v2233 = vmax.f32 %v2225, 0.0
    %v2234 = vmax.f32 %v2226, 0.0
    %v2235 = vld [vmem:[%s3] sm:$0xff]
    %v2236 = vld [vmem:[%s3 + $0x8] sm:$0x3]
    %v2237 = vstv %s702
    %v2238 = vmul.f32 %v2237, %v720
    %v2239 = vmul.f32 %v2237, %v721
    %v2240 = vmul.f32 %v2237, %v722
    %v2241 = vmul.f32 %v2237, %v723
    %v2242 = vmul.f32 %v2237, %v724
    %v2243 = vmul.f32 %v2237, %v725
    %v2244 = vmul.f32 %v2237, %v726
    %v2245 = vmul.f32 %v2237, %v727
    %v2246 = vstv %s703
    %v2247 = vmul.f32 %v2246, %v737
    %v2248 = vmul.f32 %v2246, %v738
    %v2249 = vmul.f32 %v2246, %v739
    %v2250 = vmul.f32 %v2246, %v740
    %v2251 = vmul.f32 %v2246, %v741
    %v2252 = vmul.f32 %v2246, %v742
    %v2253 = vmul.f32 %v2246, %v743
    %v2254 = vmul.f32 %v2246, %v744
    %v2255 = vadd.f32 %v2238, %v2247
    %v2256 = vadd.f32 %v2239, %v2248
    %v2257 = vadd.f32 %v2240, %v2249
    %v2258 = vadd.f32 %v2241, %v2250
    %v2259 = vadd.f32 %v2242, %v2251
    %v2260 = vadd.f32 %v2243, %v2252
    %v2261 = vadd.f32 %v2244, %v2253
    %v2262 = vadd.f32 %v2245, %v2254
    %v2263 = vstv %s704
    %v2264 = vmul.f32 %v2263, %v762
    %v2265 = vmul.f32 %v2263, %v763
    %v2266 = vmul.f32 %v2263, %v764
    %v2267 = vmul.f32 %v2263, %v765
    %v2268 = vmul.f32 %v2263, %v766
    %v2269 = vmul.f32 %v2263, %v767
    %v2270 = vmul.f32 %v2263, %v768
    %v2271 = vmul.f32 %v2263, %v769
    %v2272 = vadd.f32 %v2255, %v2264
    %v2273 = vadd.f32 %v2256, %v2265
    %v2274 = vadd.f32 %v2257, %v2266
    %v2275 = vadd.f32 %v2258, %v2267
    %v2276 = vadd.f32 %v2259, %v2268
    %v2277 = vadd.f32 %v2260, %v2269
    %v2278 = vadd.f32 %v2261, %v2270
    %v2279 = vadd.f32 %v2262, %v2271
    %v2280 = vstv %s705
    %v2281 = vmul.f32 %v2280, %v787
    %v2282 = vmul.f32 %v2280, %v788
    %v2283 = vmul.f32 %v2280, %v789
    %v2284 = vmul.f32 %v2280, %v790
    %v2285 = vmul.f32 %v2280, %v791
    %v2286 = vmul.f32 %v2280, %v792
    %v2287 = vmul.f32 %v2280, %v793
    %v2288 = vmul.f32 %v2280, %v794
    %v2289 = vstv %s706
    %v2290 = vmul.f32 %v2289, %v804
    %v2291 = vmul.f32 %v2289, %v805
    %v2292 = vmul.f32 %v2289, %v806
    %v2293 = vmul.f32 %v2289, %v807
    %v2294 = vmul.f32 %v2289, %v808
    %v2295 = vmul.f32 %v2289, %v809
    %v2296 = vmul.f32 %v2289, %v810
    %v2297 = vmul.f32 %v2289, %v811
    %v2298 = vadd.f32 %v2281, %v2290
    %v2299 = vadd.f32 %v2282, %v2291
    %v2300 = vadd.f32 %v2283, %v2292
    %v2301 = vadd.f32 %v2284, %v2293
    %v2302 = vadd.f32 %v2285, %v2294
    %v2303 = vadd.f32 %v2286, %v2295
    %v2304 = vadd.f32 %v2287, %v2296
    %v2305 = vadd.f32 %v2288, %v2297
    %v2306 = vstv %s707
    %v2307 = vmul.f32 %v2306, %v829
    %v2308 = vmul.f32 %v2306, %v830
    %v2309 = vmul.f32 %v2306, %v831
    %v2310 = vmul.f32 %v2306, %v832
    %v2311 = vmul.f32 %v2306, %v833
    %v2312 = vmul.f32 %v2306, %v834
    %v2313 = vmul.f32 %v2306, %v835
    %v2314 = vmul.f32 %v2306, %v836
    %v2315 = vadd.f32 %v2298, %v2307
    %v2316 = vadd.f32 %v2299, %v2308
    %v2317 = vadd.f32 %v2300, %v2309
    %v2318 = vadd.f32 %v2301, %v2310
    %v2319 = vadd.f32 %v2302, %v2311
    %v2320 = vadd.f32 %v2303, %v2312
    %v2321 = vadd.f32 %v2304, %v2313
    %v2322 = vadd.f32 %v2305, %v2314
    %v2323 = vstv %s708
    %v2324 = vmul.f32 %v2323, %v854
    %v2325 = vmul.f32 %v2323, %v855
    %v2326 = vmul.f32 %v2323, %v856
    %v2327 = vmul.f32 %v2323, %v857
    %v2328 = vmul.f32 %v2323, %v858
    %v2329 = vmul.f32 %v2323, %v859
    %v2330 = vmul.f32 %v2323, %v860
    %v2331 = vmul.f32 %v2323, %v861
    %v2332 = vstv %s709
    %v2333 = vmul.f32 %v2332, %v871
    %v2334 = vmul.f32 %v2332, %v872
    %v2335 = vmul.f32 %v2332, %v873
    %v2336 = vmul.f32 %v2332, %v874
    %v2337 = vmul.f32 %v2332, %v875
    %v2338 = vmul.f32 %v2332, %v876
    %v2339 = vmul.f32 %v2332, %v877
    %v2340 = vmul.f32 %v2332, %v878
    %v2341 = vadd.f32 %v2324, %v2333
    %v2342 = vadd.f32 %v2325, %v2334
    %v2343 = vadd.f32 %v2326, %v2335
    %v2344 = vadd.f32 %v2327, %v2336
    %v2345 = vadd.f32 %v2328, %v2337
    %v2346 = vadd.f32 %v2329, %v2338
    %v2347 = vadd.f32 %v2330, %v2339
    %v2348 = vadd.f32 %v2331, %v2340
    %v2349 = vstv %s710
    %v2350 = vmul.f32 %v2349, %v896
    %v2351 = vmul.f32 %v2349, %v897
    %v2352 = vmul.f32 %v2349, %v898
    %v2353 = vmul.f32 %v2349, %v899
    %v2354 = vmul.f32 %v2349, %v900
    %v2355 = vmul.f32 %v2349, %v901
    %v2356 = vmul.f32 %v2349, %v902
    %v2357 = vmul.f32 %v2349, %v903
    %v2358 = vadd.f32 %v2341, %v2350
    %v2359 = vadd.f32 %v2342, %v2351
    %v2360 = vadd.f32 %v2343, %v2352
    %v2361 = vadd.f32 %v2344, %v2353
    %v2362 = vadd.f32 %v2345, %v2354
    %v2363 = vadd.f32 %v2346, %v2355
    %v2364 = vadd.f32 %v2347, %v2356
    %v2365 = vadd.f32 %v2348, %v2357
    %v2366 = vadd.f32 %v2272, %v2315
    %v2367 = vadd.f32 %v2273, %v2316
    %v2368 = vadd.f32 %v2274, %v2317
    %v2369 = vadd.f32 %v2275, %v2318
    %v2370 = vadd.f32 %v2276, %v2319
    %v2371 = vadd.f32 %v2277, %v2320
    %v2372 = vadd.f32 %v2278, %v2321
    %v2373 = vadd.f32 %v2279, %v2322
    %v2374 = vadd.f32 %v2366, %v2358
    %v2375 = vadd.f32 %v2367, %v2359
    %v2376 = vadd.f32 %v2368, %v2360
    %v2377 = vadd.f32 %v2369, %v2361
    %v2378 = vadd.f32 %v2370, %v2362
    %v2379 = vadd.f32 %v2371, %v2363
    %v2380 = vadd.f32 %v2372, %v2364
    %v2381 = vadd.f32 %v2373, %v2365
    %v2382 = vmul.f32 %v2237, %v737
    %v2383 = vmul.f32 %v2237, %v738
    %v2384 = vmul.f32 %v2237, %v739
    %v2385 = vmul.f32 %v2237, %v740
    %v2386 = vmul.f32 %v2237, %v741
    %v2387 = vmul.f32 %v2237, %v742
    %v2388 = vmul.f32 %v2237, %v743
    %v2389 = vmul.f32 %v2237, %v744
    %v2390 = vmul.f32 %v2246, %v762
    %v2391 = vmul.f32 %v2246, %v763
    %v2392 = vmul.f32 %v2246, %v764
    %v2393 = vmul.f32 %v2246, %v765
    %v2394 = vmul.f32 %v2246, %v766
    %v2395 = vmul.f32 %v2246, %v767
    %v2396 = vmul.f32 %v2246, %v768
    %v2397 = vmul.f32 %v2246, %v769
    %v2398 = vadd.f32 %v2382, %v2390
    %v2399 = vadd.f32 %v2383, %v2391
    %v2400 = vadd.f32 %v2384, %v2392
    %v2401 = vadd.f32 %v2385, %v2393
    %v2402 = vadd.f32 %v2386, %v2394
    %v2403 = vadd.f32 %v2387, %v2395
    %v2404 = vadd.f32 %v2388, %v2396
    %v2405 = vadd.f32 %v2389, %v2397
    %v2406 = vmul.f32 %v2263, %v961
    %v2407 = vmul.f32 %v2263, %v962
    %v2408 = vmul.f32 %v2263, %v963
    %v2409 = vmul.f32 %v2263, %v964
    %v2410 = vmul.f32 %v2263, %v965
    %v2411 = vmul.f32 %v2263, %v966
    %v2412 = vmul.f32 %v2263, %v967
    %v2413 = vmul.f32 %v2263, %v968
    %v2414 = vadd.f32 %v2398, %v2406
    %v2415 = vadd.f32 %v2399, %v2407
    %v2416 = vadd.f32 %v2400, %v2408
    %v2417 = vadd.f32 %v2401, %v2409
    %v2418 = vadd.f32 %v2402, %v2410
    %v2419 = vadd.f32 %v2403, %v2411
    %v2420 = vadd.f32 %v2404, %v2412
    %v2421 = vadd.f32 %v2405, %v2413
    %v2422 = vmul.f32 %v2280, %v804
    %v2423 = vmul.f32 %v2280, %v805
    %v2424 = vmul.f32 %v2280, %v806
    %v2425 = vmul.f32 %v2280, %v807
    %v2426 = vmul.f32 %v2280, %v808
    %v2427 = vmul.f32 %v2280, %v809
    %v2428 = vmul.f32 %v2280, %v810
    %v2429 = vmul.f32 %v2280, %v811
    %v2430 = vmul.f32 %v2289, %v829
    %v2431 = vmul.f32 %v2289, %v830
    %v2432 = vmul.f32 %v2289, %v831
    %v2433 = vmul.f32 %v2289, %v832
    %v2434 = vmul.f32 %v2289, %v833
    %v2435 = vmul.f32 %v2289, %v834
    %v2436 = vmul.f32 %v2289, %v835
    %v2437 = vmul.f32 %v2289, %v836
    %v2438 = vadd.f32 %v2422, %v2430
    %v2439 = vadd.f32 %v2423, %v2431
    %v2440 = vadd.f32 %v2424, %v2432
    %v2441 = vadd.f32 %v2425, %v2433
    %v2442 = vadd.f32 %v2426, %v2434
    %v2443 = vadd.f32 %v2427, %v2435
    %v2444 = vadd.f32 %v2428, %v2436
    %v2445 = vadd.f32 %v2429, %v2437
    %v2446 = vmul.f32 %v2306, %v1009
    %v2447 = vmul.f32 %v2306, %v1010
    %v2448 = vmul.f32 %v2306, %v1011
    %v2449 = vmul.f32 %v2306, %v1012
    %v2450 = vmul.f32 %v2306, %v1013
    %v2451 = vmul.f32 %v2306, %v1014
    %v2452 = vmul.f32 %v2306, %v1015
    %v2453 = vmul.f32 %v2306, %v1016
    %v2454 = vadd.f32 %v2438, %v2446
    %v2455 = vadd.f32 %v2439, %v2447
    %v2456 = vadd.f32 %v2440, %v2448
    %v2457 = vadd.f32 %v2441, %v2449
    %v2458 = vadd.f32 %v2442, %v2450
    %v2459 = vadd.f32 %v2443, %v2451
    %v2460 = vadd.f32 %v2444, %v2452
    %v2461 = vadd.f32 %v2445, %v2453
    %v2462 = vmul.f32 %v2323, %v871
    %v2463 = vmul.f32 %v2323, %v872
    %v2464 = vmul.f32 %v2323, %v873
    %v2465 = vmul.f32 %v2323, %v874
    %v2466 = vmul.f32 %v2323, %v875
    %v2467 = vmul.f32 %v2323, %v876
    %v2468 = vmul.f32 %v2323, %v877
    %v2469 = vmul.f32 %v2323, %v878
    %v2470 = vmul.f32 %v2332, %v896
    %v2471 = vmul.f32 %v2332, %v897
    %v2472 = vmul.f32 %v2332, %v898
    %v2473 = vmul.f32 %v2332, %v899
    %v2474 = vmul.f32 %v2332, %v900
    %v2475 = vmul.f32 %v2332, %v901
    %v2476 = vmul.f32 %v2332, %v902
    %v2477 = vmul.f32 %v2332, %v903
    %v2478 = vadd.f32 %v2462, %v2470
    %v2479 = vadd.f32 %v2463, %v2471
    %v2480 = vadd.f32 %v2464, %v2472
    %v2481 = vadd.f32 %v2465, %v2473
    %v2482 = vadd.f32 %v2466, %v2474
    %v2483 = vadd.f32 %v2467, %v2475
    %v2484 = vadd.f32 %v2468, %v2476
    %v2485 = vadd.f32 %v2469, %v2477
    %v2486 = vmul.f32 %v2349, %v1057
    %v2487 = vmul.f32 %v2349, %v1058
    %v2488 = vmul.f32 %v2349, %v1059
    %v2489 = vmul.f32 %v2349, %v1060
    %v2490 = vmul.f32 %v2349, %v1061
    %v2491 = vmul.f32 %v2349, %v1062
    %v2492 = vmul.f32 %v2349, %v1063
    %v2493 = vmul.f32 %v2349, %v1064
    %v2494 = vadd.f32 %v2478, %v2486
    %v2495 = vadd.f32 %v2479, %v2487
    %v2496 = vadd.f32 %v2480, %v2488
    %v2497 = vadd.f32 %v2481, %v2489
    %v2498 = vadd.f32 %v2482, %v2490
    %v2499 = vadd.f32 %v2483, %v2491
    %v2500 = vadd.f32 %v2484, %v2492
    %v2501 = vadd.f32 %v2485, %v2493
    %v2502 = vadd.f32 %v2414, %v2454
    %v2503 = vadd.f32 %v2415, %v2455
    %v2504 = vadd.f32 %v2416, %v2456
    %v2505 = vadd.f32 %v2417, %v2457
    %v2506 = vadd.f32 %v2418, %v2458
    %v2507 = vadd.f32 %v2419, %v2459
    %v2508 = vadd.f32 %v2420, %v2460
    %v2509 = vadd.f32 %v2421, %v2461
    %v2510 = vadd.f32 %v2502, %v2494
    %v2511 = vadd.f32 %v2503, %v2495
    %v2512 = vadd.f32 %v2504, %v2496
    %v2513 = vadd.f32 %v2505, %v2497
    %v2514 = vadd.f32 %v2506, %v2498
    %v2515 = vadd.f32 %v2507, %v2499
    %v2516 = vadd.f32 %v2508, %v2500
    %v2517 = vadd.f32 %v2509, %v2501
    %v2518 = vmax.f32 %v2374, %v2510
    %v2519 = vmax.f32 %v2375, %v2511
    %v2520 = vmax.f32 %v2376, %v2512
    %v2521 = vmax.f32 %v2377, %v2513
    %v2522 = vmax.f32 %v2378, %v2514
    %v2523 = vmax.f32 %v2379, %v2515
    %v2524 = vmax.f32 %v2380, %v2516
    %v2525 = vmax.f32 %v2381, %v2517
    %v2526 = vmul.f32 %v2237, %v762
    %v2527 = vmul.f32 %v2237, %v763
    %v2528 = vmul.f32 %v2237, %v764
    %v2529 = vmul.f32 %v2237, %v765
    %v2530 = vmul.f32 %v2237, %v766
    %v2531 = vmul.f32 %v2237, %v767
    %v2532 = vmul.f32 %v2237, %v768
    %v2533 = vmul.f32 %v2237, %v769
    %v2534 = vmul.f32 %v2246, %v961
    %v2535 = vmul.f32 %v2246, %v962
    %v2536 = vmul.f32 %v2246, %v963
    %v2537 = vmul.f32 %v2246, %v964
    %v2538 = vmul.f32 %v2246, %v965
    %v2539 = vmul.f32 %v2246, %v966
    %v2540 = vmul.f32 %v2246, %v967
    %v2541 = vmul.f32 %v2246, %v968
    %v2542 = vadd.f32 %v2526, %v2534
    %v2543 = vadd.f32 %v2527, %v2535
    %v2544 = vadd.f32 %v2528, %v2536
    %v2545 = vadd.f32 %v2529, %v2537
    %v2546 = vadd.f32 %v2530, %v2538
    %v2547 = vadd.f32 %v2531, %v2539
    %v2548 = vadd.f32 %v2532, %v2540
    %v2549 = vadd.f32 %v2533, %v2541
    %v2550 = vmul.f32 %v2263, %v1129
    %v2551 = vmul.f32 %v2263, %v1130
    %v2552 = vmul.f32 %v2263, %v1131
    %v2553 = vmul.f32 %v2263, %v1132
    %v2554 = vmul.f32 %v2263, %v1133
    %v2555 = vmul.f32 %v2263, %v1134
    %v2556 = vmul.f32 %v2263, %v1135
    %v2557 = vmul.f32 %v2263, %v1136
    %v2558 = vadd.f32 %v2542, %v2550
    %v2559 = vadd.f32 %v2543, %v2551
    %v2560 = vadd.f32 %v2544, %v2552
    %v2561 = vadd.f32 %v2545, %v2553
    %v2562 = vadd.f32 %v2546, %v2554
    %v2563 = vadd.f32 %v2547, %v2555
    %v2564 = vadd.f32 %v2548, %v2556
    %v2565 = vadd.f32 %v2549, %v2557
    %v2566 = vmul.f32 %v2280, %v829
    %v2567 = vmul.f32 %v2280, %v830
    %v2568 = vmul.f32 %v2280, %v831
    %v2569 = vmul.f32 %v2280, %v832
    %v2570 = vmul.f32 %v2280, %v833
    %v2571 = vmul.f32 %v2280, %v834
    %v2572 = vmul.f32 %v2280, %v835
    %v2573 = vmul.f32 %v2280, %v836
    %v2574 = vmul.f32 %v2289, %v1009
    %v2575 = vmul.f32 %v2289, %v1010
    %v2576 = vmul.f32 %v2289, %v1011
    %v2577 = vmul.f32 %v2289, %v1012
    %v2578 = vmul.f32 %v2289, %v1013
    %v2579 = vmul.f32 %v2289, %v1014
    %v2580 = vmul.f32 %v2289, %v1015
    %v2581 = vmul.f32 %v2289, %v1016
    %v2582 = vadd.f32 %v2566, %v2574
    %v2583 = vadd.f32 %v2567, %v2575
    %v2584 = vadd.f32 %v2568, %v2576
    %v2585 = vadd.f32 %v2569, %v2577
    %v2586 = vadd.f32 %v2570, %v2578
    %v2587 = vadd.f32 %v2571, %v2579
    %v2588 = vadd.f32 %v2572, %v2580
    %v2589 = vadd.f32 %v2573, %v2581
    %v2590 = vmul.f32 %v2306, %v1177
    %v2591 = vmul.f32 %v2306, %v1178
    %v2592 = vmul.f32 %v2306, %v1179
    %v2593 = vmul.f32 %v2306, %v1180
    %v2594 = vmul.f32 %v2306, %v1181
    %v2595 = vmul.f32 %v2306, %v1182
    %v2596 = vmul.f32 %v2306, %v1183
    %v2597 = vmul.f32 %v2306, %v1184
    %v2598 = vadd.f32 %v2582, %v2590
    %v2599 = vadd.f32 %v2583, %v2591
    %v2600 = vadd.f32 %v2584, %v2592
    %v2601 = vadd.f32 %v2585, %v2593
    %v2602 = vadd.f32 %v2586, %v2594
    %v2603 = vadd.f32 %v2587, %v2595
    %v2604 = vadd.f32 %v2588, %v2596
    %v2605 = vadd.f32 %v2589, %v2597
    %v2606 = vmul.f32 %v2323, %v896
    %v2607 = vmul.f32 %v2323, %v897
    %v2608 = vmul.f32 %v2323, %v898
    %v2609 = vmul.f32 %v2323, %v899
    %v2610 = vmul.f32 %v2323, %v900
    %v2611 = vmul.f32 %v2323, %v901
    %v2612 = vmul.f32 %v2323, %v902
    %v2613 = vmul.f32 %v2323, %v903
    %v2614 = vmul.f32 %v2332, %v1057
    %v2615 = vmul.f32 %v2332, %v1058
    %v2616 = vmul.f32 %v2332, %v1059
    %v2617 = vmul.f32 %v2332, %v1060
    %v2618 = vmul.f32 %v2332, %v1061
    %v2619 = vmul.f32 %v2332, %v1062
    %v2620 = vmul.f32 %v2332, %v1063
    %v2621 = vmul.f32 %v2332, %v1064
    %v2622 = vadd.f32 %v2606, %v2614
    %v2623 = vadd.f32 %v2607, %v2615
    %v2624 = vadd.f32 %v2608, %v2616
    %v2625 = vadd.f32 %v2609, %v2617
    %v2626 = vadd.f32 %v2610, %v2618
    %v2627 = vadd.f32 %v2611, %v2619
    %v2628 = vadd.f32 %v2612, %v2620
    %v2629 = vadd.f32 %v2613, %v2621
    %v2630 = vmul.f32 %v2349, %v1225
    %v2631 = vmul.f32 %v2349, %v1226
    %v2632 = vmul.f32 %v2349, %v1227
    %v2633 = vmul.f32 %v2349, %v1228
    %v2634 = vmul.f32 %v2349, %v1229
    %v2635 = vmul.f32 %v2349, %v1230
    %v2636 = vmul.f32 %v2349, %v1231
    %v2637 = vmul.f32 %v2349, %v1232
    %v2638 = vadd.f32 %v2622, %v2630
    %v2639 = vadd.f32 %v2623, %v2631
    %v2640 = vadd.f32 %v2624, %v2632
    %v2641 = vadd.f32 %v2625, %v2633
    %v2642 = vadd.f32 %v2626, %v2634
    %v2643 = vadd.f32 %v2627, %v2635
    %v2644 = vadd.f32 %v2628, %v2636
    %v2645 = vadd.f32 %v2629, %v2637
    %v2646 = vadd.f32 %v2558, %v2598
    %v2647 = vadd.f32 %v2559, %v2599
    %v2648 = vadd.f32 %v2560, %v2600
    %v2649 = vadd.f32 %v2561, %v2601
    %v2650 = vadd.f32 %v2562, %v2602
    %v2651 = vadd.f32 %v2563, %v2603
    %v2652 = vadd.f32 %v2564, %v2604
    %v2653 = vadd.f32 %v2565, %v2605
    %v2654 = vadd.f32 %v2646, %v2638
    %v2655 = vadd.f32 %v2647, %v2639
    %v2656 = vadd.f32 %v2648, %v2640
    %v2657 = vadd.f32 %v2649, %v2641
    %v2658 = vadd.f32 %v2650, %v2642
    %v2659 = vadd.f32 %v2651, %v2643
    %v2660 = vadd.f32 %v2652, %v2644
    %v2661 = vadd.f32 %v2653, %v2645
    %v2662 = vmax.f32 %v2518, %v2654
    %v2663 = vmax.f32 %v2519, %v2655
    %v2664 = vmax.f32 %v2520, %v2656
    %v2665 = vmax.f32 %v2521, %v2657
    %v2666 = vmax.f32 %v2522, %v2658
    %v2667 = vmax.f32 %v2523, %v2659
    %v2668 = vmax.f32 %v2524, %v2660
    %v2669 = vmax.f32 %v2525, %v2661
    %v2670 = vmul.f32 %v2237, %v787
    %v2671 = vmul.f32 %v2237, %v788
    %v2672 = vmul.f32 %v2237, %v789
    %v2673 = vmul.f32 %v2237, %v790
    %v2674 = vmul.f32 %v2237, %v791
    %v2675 = vmul.f32 %v2237, %v792
    %v2676 = vmul.f32 %v2237, %v793
    %v2677 = vmul.f32 %v2237, %v794
    %v2678 = vmul.f32 %v2246, %v804
    %v2679 = vmul.f32 %v2246, %v805
    %v2680 = vmul.f32 %v2246, %v806
    %v2681 = vmul.f32 %v2246, %v807
    %v2682 = vmul.f32 %v2246, %v808
    %v2683 = vmul.f32 %v2246, %v809
    %v2684 = vmul.f32 %v2246, %v810
    %v2685 = vmul.f32 %v2246, %v811
    %v2686 = vadd.f32 %v2670, %v2678
    %v2687 = vadd.f32 %v2671, %v2679
    %v2688 = vadd.f32 %v2672, %v2680
    %v2689 = vadd.f32 %v2673, %v2681
    %v2690 = vadd.f32 %v2674, %v2682
    %v2691 = vadd.f32 %v2675, %v2683
    %v2692 = vadd.f32 %v2676, %v2684
    %v2693 = vadd.f32 %v2677, %v2685
    %v2694 = vmul.f32 %v2263, %v829
    %v2695 = vmul.f32 %v2263, %v830
    %v2696 = vmul.f32 %v2263, %v831
    %v2697 = vmul.f32 %v2263, %v832
    %v2698 = vmul.f32 %v2263, %v833
    %v2699 = vmul.f32 %v2263, %v834
    %v2700 = vmul.f32 %v2263, %v835
    %v2701 = vmul.f32 %v2263, %v836
    %v2702 = vadd.f32 %v2686, %v2694
    %v2703 = vadd.f32 %v2687, %v2695
    %v2704 = vadd.f32 %v2688, %v2696
    %v2705 = vadd.f32 %v2689, %v2697
    %v2706 = vadd.f32 %v2690, %v2698
    %v2707 = vadd.f32 %v2691, %v2699
    %v2708 = vadd.f32 %v2692, %v2700
    %v2709 = vadd.f32 %v2693, %v2701
    %v2710 = vmul.f32 %v2280, %v854
    %v2711 = vmul.f32 %v2280, %v855
    %v2712 = vmul.f32 %v2280, %v856
    %v2713 = vmul.f32 %v2280, %v857
    %v2714 = vmul.f32 %v2280, %v858
    %v2715 = vmul.f32 %v2280, %v859
    %v2716 = vmul.f32 %v2280, %v860
    %v2717 = vmul.f32 %v2280, %v861
    %v2718 = vmul.f32 %v2289, %v871
    %v2719 = vmul.f32 %v2289, %v872
    %v2720 = vmul.f32 %v2289, %v873
    %v2721 = vmul.f32 %v2289, %v874
    %v2722 = vmul.f32 %v2289, %v875
    %v2723 = vmul.f32 %v2289, %v876
    %v2724 = vmul.f32 %v2289, %v877
    %v2725 = vmul.f32 %v2289, %v878
    %v2726 = vadd.f32 %v2710, %v2718
    %v2727 = vadd.f32 %v2711, %v2719
    %v2728 = vadd.f32 %v2712, %v2720
    %v2729 = vadd.f32 %v2713, %v2721
    %v2730 = vadd.f32 %v2714, %v2722
    %v2731 = vadd.f32 %v2715, %v2723
    %v2732 = vadd.f32 %v2716, %v2724
    %v2733 = vadd.f32 %v2717, %v2725
    %v2734 = vmul.f32 %v2306, %v896
    %v2735 = vmul.f32 %v2306, %v897
    %v2736 = vmul.f32 %v2306, %v898
    %v2737 = vmul.f32 %v2306, %v899
    %v2738 = vmul.f32 %v2306, %v900
    %v2739 = vmul.f32 %v2306, %v901
    %v2740 = vmul.f32 %v2306, %v902
    %v2741 = vmul.f32 %v2306, %v903
    %v2742 = vadd.f32 %v2726, %v2734
    %v2743 = vadd.f32 %v2727, %v2735
    %v2744 = vadd.f32 %v2728, %v2736
    %v2745 = vadd.f32 %v2729, %v2737
    %v2746 = vadd.f32 %v2730, %v2738
    %v2747 = vadd.f32 %v2731, %v2739
    %v2748 = vadd.f32 %v2732, %v2740
    %v2749 = vadd.f32 %v2733, %v2741
    %v2750 = vmul.f32 %v2323, %v1353
    %v2751 = vmul.f32 %v2323, %v1354
    %v2752 = vmul.f32 %v2323, %v1355
    %v2753 = vmul.f32 %v2323, %v1356
    %v2754 = vmul.f32 %v2323, %v1357
    %v2755 = vmul.f32 %v2323, %v1358
    %v2756 = vmul.f32 %v2323, %v1359
    %v2757 = vmul.f32 %v2323, %v1360
    %v2758 = vmul.f32 %v2332, %v1369
    %v2759 = vmul.f32 %v2332, %v1370
    %v2760 = vmul.f32 %v2332, %v1371
    %v2761 = vmul.f32 %v2332, %v1372
    %v2762 = vmul.f32 %v2332, %v1373
    %v2763 = vmul.f32 %v2332, %v1374
    %v2764 = vmul.f32 %v2332, %v1375
    %v2765 = vmul.f32 %v2332, %v1376
    %v2766 = vadd.f32 %v2750, %v2758
    %v2767 = vadd.f32 %v2751, %v2759
    %v2768 = vadd.f32 %v2752, %v2760
    %v2769 = vadd.f32 %v2753, %v2761
    %v2770 = vadd.f32 %v2754, %v2762
    %v2771 = vadd.f32 %v2755, %v2763
    %v2772 = vadd.f32 %v2756, %v2764
    %v2773 = vadd.f32 %v2757, %v2765
    %v2774 = vmul.f32 %v2349, %v1393
    %v2775 = vmul.f32 %v2349, %v1394
    %v2776 = vmul.f32 %v2349, %v1395
    %v2777 = vmul.f32 %v2349, %v1396
    %v2778 = vmul.f32 %v2349, %v1397
    %v2779 = vmul.f32 %v2349, %v1398
    %v2780 = vmul.f32 %v2349, %v1399
    %v2781 = vmul.f32 %v2349, %v1400
    %v2782 = vadd.f32 %v2766, %v2774
    %v2783 = vadd.f32 %v2767, %v2775
    %v2784 = vadd.f32 %v2768, %v2776
    %v2785 = vadd.f32 %v2769, %v2777
    %v2786 = vadd.f32 %v2770, %v2778
    %v2787 = vadd.f32 %v2771, %v2779
    %v2788 = vadd.f32 %v2772, %v2780
    %v2789 = vadd.f32 %v2773, %v2781
    %v2790 = vadd.f32 %v2702, %v2742
    %v2791 = vadd.f32 %v2703, %v2743
    %v2792 = vadd.f32 %v2704, %v2744
    %v2793 = vadd.f32 %v2705, %v2745
    %v2794 = vadd.f32 %v2706, %v2746
    %v2795 = vadd.f32 %v2707, %v2747
    %v2796 = vadd.f32 %v2708, %v2748
    %v2797 = vadd.f32 %v2709, %v2749
    %v2798 = vadd.f32 %v2790, %v2782
    %v2799 = vadd.f32 %v2791, %v2783
    %v2800 = vadd.f32 %v2792, %v2784
    %v2801 = vadd.f32 %v2793, %v2785
    %v2802 = vadd.f32 %v2794, %v2786
    %v2803 = vadd.f32 %v2795, %v2787
    %v2804 = vadd.f32 %v2796, %v2788
    %v2805 = vadd.f32 %v2797, %v2789
    %v2806 = vmax.f32 %v2662, %v2798
    %v2807 = vmax.f32 %v2663, %v2799
    %v2808 = vmax.f32 %v2664, %v2800
    %v2809 = vmax.f32 %v2665, %v2801
    %v2810 = vmax.f32 %v2666, %v2802
    %v2811 = vmax.f32 %v2667, %v2803
    %v2812 = vmax.f32 %v2668, %v2804
    %v2813 = vmax.f32 %v2669, %v2805
    %v2814 = vmul.f32 %v2237, %v804
    %v2815 = vmul.f32 %v2237, %v805
    %v2816 = vmul.f32 %v2237, %v806
    %v2817 = vmul.f32 %v2237, %v807
    %v2818 = vmul.f32 %v2237, %v808
    %v2819 = vmul.f32 %v2237, %v809
    %v2820 = vmul.f32 %v2237, %v810
    %v2821 = vmul.f32 %v2237, %v811
    %v2822 = vmul.f32 %v2246, %v829
    %v2823 = vmul.f32 %v2246, %v830
    %v2824 = vmul.f32 %v2246, %v831
    %v2825 = vmul.f32 %v2246, %v832
    %v2826 = vmul.f32 %v2246, %v833
    %v2827 = vmul.f32 %v2246, %v834
    %v2828 = vmul.f32 %v2246, %v835
    %v2829 = vmul.f32 %v2246, %v836
    %v2830 = vadd.f32 %v2814, %v2822
    %v2831 = vadd.f32 %v2815, %v2823
    %v2832 = vadd.f32 %v2816, %v2824
    %v2833 = vadd.f32 %v2817, %v2825
    %v2834 = vadd.f32 %v2818, %v2826
    %v2835 = vadd.f32 %v2819, %v2827
    %v2836 = vadd.f32 %v2820, %v2828
    %v2837 = vadd.f32 %v2821, %v2829
    %v2838 = vmul.f32 %v2263, %v1009
    %v2839 = vmul.f32 %v2263, %v1010
    %v2840 = vmul.f32 %v2263, %v1011
    %v2841 = vmul.f32 %v2263, %v1012
    %v2842 = vmul.f32 %v2263, %v1013
    %v2843 = vmul.f32 %v2263, %v1014
    %v2844 = vmul.f32 %v2263, %v1015
    %v2845 = vmul.f32 %v2263, %v1016
    %v2846 = vadd.f32 %v2830, %v2838
    %v2847 = vadd.f32 %v2831, %v2839
    %v2848 = vadd.f32 %v2832, %v2840
    %v2849 = vadd.f32 %v2833, %v2841
    %v2850 = vadd.f32 %v2834, %v2842
    %v2851 = vadd.f32 %v2835, %v2843
    %v2852 = vadd.f32 %v2836, %v2844
    %v2853 = vadd.f32 %v2837, %v2845
    %v2854 = vmul.f32 %v2280, %v871
    %v2855 = vmul.f32 %v2280, %v872
    %v2856 = vmul.f32 %v2280, %v873
    %v2857 = vmul.f32 %v2280, %v874
    %v2858 = vmul.f32 %v2280, %v875
    %v2859 = vmul.f32 %v2280, %v876
    %v2860 = vmul.f32 %v2280, %v877
    %v2861 = vmul.f32 %v2280, %v878
    %v2862 = vmul.f32 %v2289, %v896
    %v2863 = vmul.f32 %v2289, %v897
    %v2864 = vmul.f32 %v2289, %v898
    %v2865 = vmul.f32 %v2289, %v899
    %v2866 = vmul.f32 %v2289, %v900
    %v2867 = vmul.f32 %v2289, %v901
    %v2868 = vmul.f32 %v2289, %v902
    %v2869 = vmul.f32 %v2289, %v903
    %v2870 = vadd.f32 %v2854, %v2862
    %v2871 = vadd.f32 %v2855, %v2863
    %v2872 = vadd.f32 %v2856, %v2864
    %v2873 = vadd.f32 %v2857, %v2865
    %v2874 = vadd.f32 %v2858, %v2866
    %v2875 = vadd.f32 %v2859, %v2867
    %v2876 = vadd.f32 %v2860, %v2868
    %v2877 = vadd.f32 %v2861, %v2869
    %v2878 = vmul.f32 %v2306, %v1057
    %v2879 = vmul.f32 %v2306, %v1058
    %v2880 = vmul.f32 %v2306, %v1059
    %v2881 = vmul.f32 %v2306, %v1060
    %v2882 = vmul.f32 %v2306, %v1061
    %v2883 = vmul.f32 %v2306, %v1062
    %v2884 = vmul.f32 %v2306, %v1063
    %v2885 = vmul.f32 %v2306, %v1064
    %v2886 = vadd.f32 %v2870, %v2878
    %v2887 = vadd.f32 %v2871, %v2879
    %v2888 = vadd.f32 %v2872, %v2880
    %v2889 = vadd.f32 %v2873, %v2881
    %v2890 = vadd.f32 %v2874, %v2882
    %v2891 = vadd.f32 %v2875, %v2883
    %v2892 = vadd.f32 %v2876, %v2884
    %v2893 = vadd.f32 %v2877, %v2885
    %v2894 = vmul.f32 %v2323, %v1369
    %v2895 = vmul.f32 %v2323, %v1370
    %v2896 = vmul.f32 %v2323, %v1371
    %v2897 = vmul.f32 %v2323, %v1372
    %v2898 = vmul.f32 %v2323, %v1373
    %v2899 = vmul.f32 %v2323, %v1374
    %v2900 = vmul.f32 %v2323, %v1375
    %v2901 = vmul.f32 %v2323, %v1376
    %v2902 = vmul.f32 %v2332, %v1393
    %v2903 = vmul.f32 %v2332, %v1394
    %v2904 = vmul.f32 %v2332, %v1395
    %v2905 = vmul.f32 %v2332, %v1396
    %v2906 = vmul.f32 %v2332, %v1397
    %v2907 = vmul.f32 %v2332, %v1398
    %v2908 = vmul.f32 %v2332, %v1399
    %v2909 = vmul.f32 %v2332, %v1400
    %v2910 = vadd.f32 %v2894, %v2902
    %v2911 = vadd.f32 %v2895, %v2903
    %v2912 = vadd.f32 %v2896, %v2904
    %v2913 = vadd.f32 %v2897, %v2905
    %v2914 = vadd.f32 %v2898, %v2906
    %v2915 = vadd.f32 %v2899, %v2907
    %v2916 = vadd.f32 %v2900, %v2908
    %v2917 = vadd.f32 %v2901, %v2909
    %v2918 = vmul.f32 %v2349, %v1545
    %v2919 = vmul.f32 %v2349, %v1546
    %v2920 = vmul.f32 %v2349, %v1547
    %v2921 = vmul.f32 %v2349, %v1548
    %v2922 = vmul.f32 %v2349, %v1549
    %v2923 = vmul.f32 %v2349, %v1550
    %v2924 = vmul.f32 %v2349, %v1551
    %v2925 = vmul.f32 %v2349, %v1552
    %v2926 = vadd.f32 %v2910, %v2918
    %v2927 = vadd.f32 %v2911, %v2919
    %v2928 = vadd.f32 %v2912, %v2920
    %v2929 = vadd.f32 %v2913, %v2921
    %v2930 = vadd.f32 %v2914, %v2922
    %v2931 = vadd.f32 %v2915, %v2923
    %v2932 = vadd.f32 %v2916, %v2924
    %v2933 = vadd.f32 %v2917, %v2925
    %v2934 = vadd.f32 %v2846, %v2886
    %v2935 = vadd.f32 %v2847, %v2887
    %v2936 = vadd.f32 %v2848, %v2888
    %v2937 = vadd.f32 %v2849, %v2889
    %v2938 = vadd.f32 %v2850, %v2890
    %v2939 = vadd.f32 %v2851, %v2891
    %v2940 = vadd.f32 %v2852, %v2892
    %v2941 = vadd.f32 %v2853, %v2893
    %v2942 = vadd.f32 %v2934, %v2926
    %v2943 = vadd.f32 %v2935, %v2927
    %v2944 = vadd.f32 %v2936, %v2928
    %v2945 = vadd.f32 %v2937, %v2929
    %v2946 = vadd.f32 %v2938, %v2930
    %v2947 = vadd.f32 %v2939, %v2931
    %v2948 = vadd.f32 %v2940, %v2932
    %v2949 = vadd.f32 %v2941, %v2933
    %v2950 = vmax.f32 %v2806, %v2942
    %v2951 = vmax.f32 %v2807, %v2943
    %v2952 = vmax.f32 %v2808, %v2944
    %v2953 = vmax.f32 %v2809, %v2945
    %v2954 = vmax.f32 %v2810, %v2946
    %v2955 = vmax.f32 %v2811, %v2947
    %v2956 = vmax.f32 %v2812, %v2948
    %v2957 = vmax.f32 %v2813, %v2949
    %v2958 = vmul.f32 %v2237, %v829
    %v2959 = vmul.f32 %v2237, %v830
    %v2960 = vmul.f32 %v2237, %v831
    %v2961 = vmul.f32 %v2237, %v832
    %v2962 = vmul.f32 %v2237, %v833
    %v2963 = vmul.f32 %v2237, %v834
    %v2964 = vmul.f32 %v2237, %v835
    %v2965 = vmul.f32 %v2237, %v836
    %v2966 = vmul.f32 %v2246, %v1009
    %v2967 = vmul.f32 %v2246, %v1010
    %v2968 = vmul.f32 %v2246, %v1011
    %v2969 = vmul.f32 %v2246, %v1012
    %v2970 = vmul.f32 %v2246, %v1013
    %v2971 = vmul.f32 %v2246, %v1014
    %v2972 = vmul.f32 %v2246, %v1015
    %v2973 = vmul.f32 %v2246, %v1016
    %v2974 = vadd.f32 %v2958, %v2966
    %v2975 = vadd.f32 %v2959, %v2967
    %v2976 = vadd.f32 %v2960, %v2968
    %v2977 = vadd.f32 %v2961, %v2969
    %v2978 = vadd.f32 %v2962, %v2970
    %v2979 = vadd.f32 %v2963, %v2971
    %v2980 = vadd.f32 %v2964, %v2972
    %v2981 = vadd.f32 %v2965, %v2973
    %v2982 = vmul.f32 %v2263, %v1177
    %v2983 = vmul.f32 %v2263, %v1178
    %v2984 = vmul.f32 %v2263, %v1179
    %v2985 = vmul.f32 %v2263, %v1180
    %v2986 = vmul.f32 %v2263, %v1181
    %v2987 = vmul.f32 %v2263, %v1182
    %v2988 = vmul.f32 %v2263, %v1183
    %v2989 = vmul.f32 %v2263, %v1184
    %v2990 = vadd.f32 %v2974, %v2982
    %v2991 = vadd.f32 %v2975, %v2983
    %v2992 = vadd.f32 %v2976, %v2984
    %v2993 = vadd.f32 %v2977, %v2985
    %v2994 = vadd.f32 %v2978, %v2986
    %v2995 = vadd.f32 %v2979, %v2987
    %v2996 = vadd.f32 %v2980, %v2988
    %v2997 = vadd.f32 %v2981, %v2989
    %v2998 = vmul.f32 %v2280, %v896
    %v2999 = vmul.f32 %v2280, %v897
    %v3000 = vmul.f32 %v2280, %v898
    %v3001 = vmul.f32 %v2280, %v899
    %v3002 = vmul.f32 %v2280, %v900
    %v3003 = vmul.f32 %v2280, %v901
    %v3004 = vmul.f32 %v2280, %v902
    %v3005 = vmul.f32 %v2280, %v903
    %v3006 = vmul.f32 %v2289, %v1057
    %v3007 = vmul.f32 %v2289, %v1058
    %v3008 = vmul.f32 %v2289, %v1059
    %v3009 = vmul.f32 %v2289, %v1060
    %v3010 = vmul.f32 %v2289, %v1061
    %v3011 = vmul.f32 %v2289, %v1062
    %v3012 = vmul.f32 %v2289, %v1063
    %v3013 = vmul.f32 %v2289, %v1064
    %v3014 = vadd.f32 %v2998, %v3006
    %v3015 = vadd.f32 %v2999, %v3007
    %v3016 = vadd.f32 %v3000, %v3008
    %v3017 = vadd.f32 %v3001, %v3009
    %v3018 = vadd.f32 %v3002, %v3010
    %v3019 = vadd.f32 %v3003, %v3011
    %v3020 = vadd.f32 %v3004, %v3012
    %v3021 = vadd.f32 %v3005, %v3013
    %v3022 = vmul.f32 %v2306, %v1225
    %v3023 = vmul.f32 %v2306, %v1226
    %v3024 = vmul.f32 %v2306, %v1227
    %v3025 = vmul.f32 %v2306, %v1228
    %v3026 = vmul.f32 %v2306, %v1229
    %v3027 = vmul.f32 %v2306, %v1230
    %v3028 = vmul.f32 %v2306, %v1231
    %v3029 = vmul.f32 %v2306, %v1232
    %v3030 = vadd.f32 %v3014, %v3022
    %v3031 = vadd.f32 %v3015, %v3023
    %v3032 = vadd.f32 %v3016, %v3024
    %v3033 = vadd.f32 %v3017, %v3025
    %v3034 = vadd.f32 %v3018, %v3026
    %v3035 = vadd.f32 %v3019, %v3027
    %v3036 = vadd.f32 %v3020, %v3028
    %v3037 = vadd.f32 %v3021, %v3029
    %v3038 = vmul.f32 %v2323, %v1393
    %v3039 = vmul.f32 %v2323, %v1394
    %v3040 = vmul.f32 %v2323, %v1395
    %v3041 = vmul.f32 %v2323, %v1396
    %v3042 = vmul.f32 %v2323, %v1397
    %v3043 = vmul.f32 %v2323, %v1398
    %v3044 = vmul.f32 %v2323, %v1399
    %v3045 = vmul.f32 %v2323, %v1400
    %v3046 = vmul.f32 %v2332, %v1545
    %v3047 = vmul.f32 %v2332, %v1546
    %v3048 = vmul.f32 %v2332, %v1547
    %v3049 = vmul.f32 %v2332, %v1548
    %v3050 = vmul.f32 %v2332, %v1549
    %v3051 = vmul.f32 %v2332, %v1550
    %v3052 = vmul.f32 %v2332, %v1551
    %v3053 = vmul.f32 %v2332, %v1552
    %v3054 = vadd.f32 %v3038, %v3046
    %v3055 = vadd.f32 %v3039, %v3047
    %v3056 = vadd.f32 %v3040, %v3048
    %v3057 = vadd.f32 %v3041, %v3049
    %v3058 = vadd.f32 %v3042, %v3050
    %v3059 = vadd.f32 %v3043, %v3051
    %v3060 = vadd.f32 %v3044, %v3052
    %v3061 = vadd.f32 %v3045, %v3053
    %v3062 = vmul.f32 %v2349, %v1697
    %v3063 = vmul.f32 %v2349, %v1698
    %v3064 = vmul.f32 %v2349, %v1699
    %v3065 = vmul.f32 %v2349, %v1700
    %v3066 = vmul.f32 %v2349, %v1701
    %v3067 = vmul.f32 %v2349, %v1702
    %v3068 = vmul.f32 %v2349, %v1703
    %v3069 = vmul.f32 %v2349, %v1704
    %v3070 = vadd.f32 %v3054, %v3062
    %v3071 = vadd.f32 %v3055, %v3063
    %v3072 = vadd.f32 %v3056, %v3064
    %v3073 = vadd.f32 %v3057, %v3065
    %v3074 = vadd.f32 %v3058, %v3066
    %v3075 = vadd.f32 %v3059, %v3067
    %v3076 = vadd.f32 %v3060, %v3068
    %v3077 = vadd.f32 %v3061, %v3069
    %v3078 = vadd.f32 %v2990, %v3030
    %v3079 = vadd.f32 %v2991, %v3031
    %v3080 = vadd.f32 %v2992, %v3032
    %v3081 = vadd.f32 %v2993, %v3033
    %v3082 = vadd.f32 %v2994, %v3034
    %v3083 = vadd.f32 %v2995, %v3035
    %v3084 = vadd.f32 %v2996, %v3036
    %v3085 = vadd.f32 %v2997, %v3037
    %v3086 = vadd.f32 %v3078, %v3070
    %v3087 = vadd.f32 %v3079, %v3071
    %v3088 = vadd.f32 %v3080, %v3072
    %v3089 = vadd.f32 %v3081, %v3073
    %v3090 = vadd.f32 %v3082, %v3074
    %v3091 = vadd.f32 %v3083, %v3075
    %v3092 = vadd.f32 %v3084, %v3076
    %v3093 = vadd.f32 %v3085, %v3077
    %v3094 = vmax.f32 %v2950, %v3086
    %v3095 = vmax.f32 %v2951, %v3087
    %v3096 = vmax.f32 %v2952, %v3088
    %v3097 = vmax.f32 %v2953, %v3089
    %v3098 = vmax.f32 %v2954, %v3090
    %v3099 = vmax.f32 %v2955, %v3091
    %v3100 = vmax.f32 %v2956, %v3092
    %v3101 = vmax.f32 %v2957, %v3093
    %v3102 = vmul.f32 %v2237, %v854
    %v3103 = vmul.f32 %v2237, %v855
    %v3104 = vmul.f32 %v2237, %v856
    %v3105 = vmul.f32 %v2237, %v857
    %v3106 = vmul.f32 %v2237, %v858
    %v3107 = vmul.f32 %v2237, %v859
    %v3108 = vmul.f32 %v2237, %v860
    %v3109 = vmul.f32 %v2237, %v861
    %v3110 = vmul.f32 %v2246, %v871
    %v3111 = vmul.f32 %v2246, %v872
    %v3112 = vmul.f32 %v2246, %v873
    %v3113 = vmul.f32 %v2246, %v874
    %v3114 = vmul.f32 %v2246, %v875
    %v3115 = vmul.f32 %v2246, %v876
    %v3116 = vmul.f32 %v2246, %v877
    %v3117 = vmul.f32 %v2246, %v878
    %v3118 = vadd.f32 %v3102, %v3110
    %v3119 = vadd.f32 %v3103, %v3111
    %v3120 = vadd.f32 %v3104, %v3112
    %v3121 = vadd.f32 %v3105, %v3113
    %v3122 = vadd.f32 %v3106, %v3114
    %v3123 = vadd.f32 %v3107, %v3115
    %v3124 = vadd.f32 %v3108, %v3116
    %v3125 = vadd.f32 %v3109, %v3117
    %v3126 = vmul.f32 %v2263, %v896
    %v3127 = vmul.f32 %v2263, %v897
    %v3128 = vmul.f32 %v2263, %v898
    %v3129 = vmul.f32 %v2263, %v899
    %v3130 = vmul.f32 %v2263, %v900
    %v3131 = vmul.f32 %v2263, %v901
    %v3132 = vmul.f32 %v2263, %v902
    %v3133 = vmul.f32 %v2263, %v903
    %v3134 = vadd.f32 %v3118, %v3126
    %v3135 = vadd.f32 %v3119, %v3127
    %v3136 = vadd.f32 %v3120, %v3128
    %v3137 = vadd.f32 %v3121, %v3129
    %v3138 = vadd.f32 %v3122, %v3130
    %v3139 = vadd.f32 %v3123, %v3131
    %v3140 = vadd.f32 %v3124, %v3132
    %v3141 = vadd.f32 %v3125, %v3133
    %v3142 = vmul.f32 %v2280, %v1353
    %v3143 = vmul.f32 %v2280, %v1354
    %v3144 = vmul.f32 %v2280, %v1355
    %v3145 = vmul.f32 %v2280, %v1356
    %v3146 = vmul.f32 %v2280, %v1357
    %v3147 = vmul.f32 %v2280, %v1358
    %v3148 = vmul.f32 %v2280, %v1359
    %v3149 = vmul.f32 %v2280, %v1360
    %v3150 = vmul.f32 %v2289, %v1369
    %v3151 = vmul.f32 %v2289, %v1370
    %v3152 = vmul.f32 %v2289, %v1371
    %v3153 = vmul.f32 %v2289, %v1372
    %v3154 = vmul.f32 %v2289, %v1373
    %v3155 = vmul.f32 %v2289, %v1374
    %v3156 = vmul.f32 %v2289, %v1375
    %v3157 = vmul.f32 %v2289, %v1376
    %v3158 = vadd.f32 %v3142, %v3150
    %v3159 = vadd.f32 %v3143, %v3151
    %v3160 = vadd.f32 %v3144, %v3152
    %v3161 = vadd.f32 %v3145, %v3153
    %v3162 = vadd.f32 %v3146, %v3154
    %v3163 = vadd.f32 %v3147, %v3155
    %v3164 = vadd.f32 %v3148, %v3156
    %v3165 = vadd.f32 %v3149, %v3157
    %v3166 = vmul.f32 %v2306, %v1393
    %v3167 = vmul.f32 %v2306, %v1394
    %v3168 = vmul.f32 %v2306, %v1395
    %v3169 = vmul.f32 %v2306, %v1396
    %v3170 = vmul.f32 %v2306, %v1397
    %v3171 = vmul.f32 %v2306, %v1398
    %v3172 = vmul.f32 %v2306, %v1399
    %v3173 = vmul.f32 %v2306, %v1400
    %v3174 = vadd.f32 %v3158, %v3166
    %v3175 = vadd.f32 %v3159, %v3167
    %v3176 = vadd.f32 %v3160, %v3168
    %v3177 = vadd.f32 %v3161, %v3169
    %v3178 = vadd.f32 %v3162, %v3170
    %v3179 = vadd.f32 %v3163, %v3171
    %v3180 = vadd.f32 %v3164, %v3172
    %v3181 = vadd.f32 %v3165, %v3173
    %v3182 = vmul.f32 %v2323, %v1825
    %v3183 = vmul.f32 %v2323, %v1826
    %v3184 = vmul.f32 %v2323, %v1827
    %v3185 = vmul.f32 %v2323, %v1828
    %v3186 = vmul.f32 %v2323, %v1829
    %v3187 = vmul.f32 %v2323, %v1830
    %v3188 = vmul.f32 %v2323, %v1831
    %v3189 = vmul.f32 %v2323, %v1832
    %v3190 = vmul.f32 %v2332, %v1841
    %v3191 = vmul.f32 %v2332, %v1842
    %v3192 = vmul.f32 %v2332, %v1843
    %v3193 = vmul.f32 %v2332, %v1844
    %v3194 = vmul.f32 %v2332, %v1845
    %v3195 = vmul.f32 %v2332, %v1846
    %v3196 = vmul.f32 %v2332, %v1847
    %v3197 = vmul.f32 %v2332, %v1848
    %v3198 = vadd.f32 %v3182, %v3190
    %v3199 = vadd.f32 %v3183, %v3191
    %v3200 = vadd.f32 %v3184, %v3192
    %v3201 = vadd.f32 %v3185, %v3193
    %v3202 = vadd.f32 %v3186, %v3194
    %v3203 = vadd.f32 %v3187, %v3195
    %v3204 = vadd.f32 %v3188, %v3196
    %v3205 = vadd.f32 %v3189, %v3197
    %v3206 = vmul.f32 %v2349, %v1865
    %v3207 = vmul.f32 %v2349, %v1866
    %v3208 = vmul.f32 %v2349, %v1867
    %v3209 = vmul.f32 %v2349, %v1868
    %v3210 = vmul.f32 %v2349, %v1869
    %v3211 = vmul.f32 %v2349, %v1870
    %v3212 = vmul.f32 %v2349, %v1871
    %v3213 = vmul.f32 %v2349, %v1872
    %v3214 = vadd.f32 %v3198, %v3206
    %v3215 = vadd.f32 %v3199, %v3207
    %v3216 = vadd.f32 %v3200, %v3208
    %v3217 = vadd.f32 %v3201, %v3209
    %v3218 = vadd.f32 %v3202, %v3210
    %v3219 = vadd.f32 %v3203, %v3211
    %v3220 = vadd.f32 %v3204, %v3212
    %v3221 = vadd.f32 %v3205, %v3213
    %v3222 = vadd.f32 %v3134, %v3174
    %v3223 = vadd.f32 %v3135, %v3175
    %v3224 = vadd.f32 %v3136, %v3176
    %v3225 = vadd.f32 %v3137, %v3177
    %v3226 = vadd.f32 %v3138, %v3178
    %v3227 = vadd.f32 %v3139, %v3179
    %v3228 = vadd.f32 %v3140, %v3180
    %v3229 = vadd.f32 %v3141, %v3181
    %v3230 = vadd.f32 %v3222, %v3214
    %v3231 = vadd.f32 %v3223, %v3215
    %v3232 = vadd.f32 %v3224, %v3216
    %v3233 = vadd.f32 %v3225, %v3217
    %v3234 = vadd.f32 %v3226, %v3218
    %v3235 = vadd.f32 %v3227, %v3219
    %v3236 = vadd.f32 %v3228, %v3220
    %v3237 = vadd.f32 %v3229, %v3221
    %v3238 = vmax.f32 %v3094, %v3230
    %v3239 = vmax.f32 %v3095, %v3231
    %v3240 = vmax.f32 %v3096, %v3232
    %v3241 = vmax.f32 %v3097, %v3233
    %v3242 = vmax.f32 %v3098, %v3234
    %v3243 = vmax.f32 %v3099, %v3235
    %v3244 = vmax.f32 %v3100, %v3236
    %v3245 = vmax.f32 %v3101, %v3237
    %v3246 = vmul.f32 %v2237, %v871
    %v3247 = vmul.f32 %v2237, %v872
    %v3248 = vmul.f32 %v2237, %v873
    %v3249 = vmul.f32 %v2237, %v874
    %v3250 = vmul.f32 %v2237, %v875
    %v3251 = vmul.f32 %v2237, %v876
    %v3252 = vmul.f32 %v2237, %v877
    %v3253 = vmul.f32 %v2237, %v878
    %v3254 = vmul.f32 %v2246, %v896
    %v3255 = vmul.f32 %v2246, %v897
    %v3256 = vmul.f32 %v2246, %v898
    %v3257 = vmul.f32 %v2246, %v899
    %v3258 = vmul.f32 %v2246, %v900
    %v3259 = vmul.f32 %v2246, %v901
    %v3260 = vmul.f32 %v2246, %v902
    %v3261 = vmul.f32 %v2246, %v903
    %v3262 = vadd.f32 %v3246, %v3254
    %v3263 = vadd.f32 %v3247, %v3255
    %v3264 = vadd.f32 %v3248, %v3256
    %v3265 = vadd.f32 %v3249, %v3257
    %v3266 = vadd.f32 %v3250, %v3258
    %v3267 = vadd.f32 %v3251, %v3259
    %v3268 = vadd.f32 %v3252, %v3260
    %v3269 = vadd.f32 %v3253, %v3261
    %v3270 = vmul.f32 %v2263, %v1057
    %v3271 = vmul.f32 %v2263, %v1058
    %v3272 = vmul.f32 %v2263, %v1059
    %v3273 = vmul.f32 %v2263, %v1060
    %v3274 = vmul.f32 %v2263, %v1061
    %v3275 = vmul.f32 %v2263, %v1062
    %v3276 = vmul.f32 %v2263, %v1063
    %v3277 = vmul.f32 %v2263, %v1064
    %v3278 = vadd.f32 %v3262, %v3270
    %v3279 = vadd.f32 %v3263, %v3271
    %v3280 = vadd.f32 %v3264, %v3272
    %v3281 = vadd.f32 %v3265, %v3273
    %v3282 = vadd.f32 %v3266, %v3274
    %v3283 = vadd.f32 %v3267, %v3275
    %v3284 = vadd.f32 %v3268, %v3276
    %v3285 = vadd.f32 %v3269, %v3277
    %v3286 = vmul.f32 %v2280, %v1369
    %v3287 = vmul.f32 %v2280, %v1370
    %v3288 = vmul.f32 %v2280, %v1371
    %v3289 = vmul.f32 %v2280, %v1372
    %v3290 = vmul.f32 %v2280, %v1373
    %v3291 = vmul.f32 %v2280, %v1374
    %v3292 = vmul.f32 %v2280, %v1375
    %v3293 = vmul.f32 %v2280, %v1376
    %v3294 = vmul.f32 %v2289, %v1393
    %v3295 = vmul.f32 %v2289, %v1394
    %v3296 = vmul.f32 %v2289, %v1395
    %v3297 = vmul.f32 %v2289, %v1396
    %v3298 = vmul.f32 %v2289, %v1397
    %v3299 = vmul.f32 %v2289, %v1398
    %v3300 = vmul.f32 %v2289, %v1399
    %v3301 = vmul.f32 %v2289, %v1400
    %v3302 = vadd.f32 %v3286, %v3294
    %v3303 = vadd.f32 %v3287, %v3295
    %v3304 = vadd.f32 %v3288, %v3296
    %v3305 = vadd.f32 %v3289, %v3297
    %v3306 = vadd.f32 %v3290, %v3298
    %v3307 = vadd.f32 %v3291, %v3299
    %v3308 = vadd.f32 %v3292, %v3300
    %v3309 = vadd.f32 %v3293, %v3301
    %v3310 = vmul.f32 %v2306, %v1545
    %v3311 = vmul.f32 %v2306, %v1546
    %v3312 = vmul.f32 %v2306, %v1547
    %v3313 = vmul.f32 %v2306, %v1548
    %v3314 = vmul.f32 %v2306, %v1549
    %v3315 = vmul.f32 %v2306, %v1550
    %v3316 = vmul.f32 %v2306, %v1551
    %v3317 = vmul.f32 %v2306, %v1552
    %v3318 = vadd.f32 %v3302, %v3310
    %v3319 = vadd.f32 %v3303, %v3311
    %v3320 = vadd.f32 %v3304, %v3312
    %v3321 = vadd.f32 %v3305, %v3313
    %v3322 = vadd.f32 %v3306, %v3314
    %v3323 = vadd.f32 %v3307, %v3315
    %v3324 = vadd.f32 %v3308, %v3316
    %v3325 = vadd.f32 %v3309, %v3317
    %v3326 = vmul.f32 %v2323, %v1841
    %v3327 = vmul.f32 %v2323, %v1842
    %v3328 = vmul.f32 %v2323, %v1843
    %v3329 = vmul.f32 %v2323, %v1844
    %v3330 = vmul.f32 %v2323, %v1845
    %v3331 = vmul.f32 %v2323, %v1846
    %v3332 = vmul.f32 %v2323, %v1847
    %v3333 = vmul.f32 %v2323, %v1848
    %v3334 = vmul.f32 %v2332, %v1865
    %v3335 = vmul.f32 %v2332, %v1866
    %v3336 = vmul.f32 %v2332, %v1867
    %v3337 = vmul.f32 %v2332, %v1868
    %v3338 = vmul.f32 %v2332, %v1869
    %v3339 = vmul.f32 %v2332, %v1870
    %v3340 = vmul.f32 %v2332, %v1871
    %v3341 = vmul.f32 %v2332, %v1872
    %v3342 = vadd.f32 %v3326, %v3334
    %v3343 = vadd.f32 %v3327, %v3335
    %v3344 = vadd.f32 %v3328, %v3336
    %v3345 = vadd.f32 %v3329, %v3337
    %v3346 = vadd.f32 %v3330, %v3338
    %v3347 = vadd.f32 %v3331, %v3339
    %v3348 = vadd.f32 %v3332, %v3340
    %v3349 = vadd.f32 %v3333, %v3341
    %v3350 = vmul.f32 %v2349, %v2017
    %v3351 = vmul.f32 %v2349, %v2018
    %v3352 = vmul.f32 %v2349, %v2019
    %v3353 = vmul.f32 %v2349, %v2020
    %v3354 = vmul.f32 %v2349, %v2021
    %v3355 = vmul.f32 %v2349, %v2022
    %v3356 = vmul.f32 %v2349, %v2023
    %v3357 = vmul.f32 %v2349, %v2024
    %v3358 = vadd.f32 %v3342, %v3350
    %v3359 = vadd.f32 %v3343, %v3351
    %v3360 = vadd.f32 %v3344, %v3352
    %v3361 = vadd.f32 %v3345, %v3353
    %v3362 = vadd.f32 %v3346, %v3354
    %v3363 = vadd.f32 %v3347, %v3355
    %v3364 = vadd.f32 %v3348, %v3356
    %v3365 = vadd.f32 %v3349, %v3357
    %v3366 = vadd.f32 %v3278, %v3318
    %v3367 = vadd.f32 %v3279, %v3319
    %v3368 = vadd.f32 %v3280, %v3320
    %v3369 = vadd.f32 %v3281, %v3321
    %v3370 = vadd.f32 %v3282, %v3322
    %v3371 = vadd.f32 %v3283, %v3323
    %v3372 = vadd.f32 %v3284, %v3324
    %v3373 = vadd.f32 %v3285, %v3325
    %v3374 = vadd.f32 %v3366, %v3358
    %v3375 = vadd.f32 %v3367, %v3359
    %v3376 = vadd.f32 %v3368, %v3360
    %v3377 = vadd.f32 %v3369, %v3361
    %v3378 = vadd.f32 %v3370, %v3362
    %v3379 = vadd.f32 %v3371, %v3363
    %v3380 = vadd.f32 %v3372, %v3364
    %v3381 = vadd.f32 %v3373, %v3365
    %v3382 = vmax.f32 %v3238, %v3374
    %v3383 = vmax.f32 %v3239, %v3375
    %v3384 = vmax.f32 %v3240, %v3376
    %v3385 = vmax.f32 %v3241, %v3377
    %v3386 = vmax.f32 %v3242, %v3378
    %v3387 = vmax.f32 %v3243, %v3379
    %v3388 = vmax.f32 %v3244, %v3380
    %v3389 = vmax.f32 %v3245, %v3381
    %v3390 = vmul.f32 %v2237, %v896
    %v3391 = vmul.f32 %v2237, %v897
    %v3392 = vmul.f32 %v2237, %v898
    %v3393 = vmul.f32 %v2237, %v899
    %v3394 = vmul.f32 %v2237, %v900
    %v3395 = vmul.f32 %v2237, %v901
    %v3396 = vmul.f32 %v2237, %v902
    %v3397 = vmul.f32 %v2237, %v903
    %v3398 = vmul.f32 %v2246, %v1057
    %v3399 = vmul.f32 %v2246, %v1058
    %v3400 = vmul.f32 %v2246, %v1059
    %v3401 = vmul.f32 %v2246, %v1060
    %v3402 = vmul.f32 %v2246, %v1061
    %v3403 = vmul.f32 %v2246, %v1062
    %v3404 = vmul.f32 %v2246, %v1063
    %v3405 = vmul.f32 %v2246, %v1064
    %v3406 = vadd.f32 %v3390, %v3398
    %v3407 = vadd.f32 %v3391, %v3399
    %v3408 = vadd.f32 %v3392, %v3400
    %v3409 = vadd.f32 %v3393, %v3401
    %v3410 = vadd.f32 %v3394, %v3402
    %v3411 = vadd.f32 %v3395, %v3403
    %v3412 = vadd.f32 %v3396, %v3404
    %v3413 = vadd.f32 %v3397, %v3405
    %v3414 = vmul.f32 %v2263, %v1225
    %v3415 = vmul.f32 %v2263, %v1226
    %v3416 = vmul.f32 %v2263, %v1227
    %v3417 = vmul.f32 %v2263, %v1228
    %v3418 = vmul.f32 %v2263, %v1229
    %v3419 = vmul.f32 %v2263, %v1230
    %v3420 = vmul.f32 %v2263, %v1231
    %v3421 = vmul.f32 %v2263, %v1232
    %v3422 = vadd.f32 %v3406, %v3414
    %v3423 = vadd.f32 %v3407, %v3415
    %v3424 = vadd.f32 %v3408, %v3416
    %v3425 = vadd.f32 %v3409, %v3417
    %v3426 = vadd.f32 %v3410, %v3418
    %v3427 = vadd.f32 %v3411, %v3419
    %v3428 = vadd.f32 %v3412, %v3420
    %v3429 = vadd.f32 %v3413, %v3421
    %v3430 = vmul.f32 %v2280, %v1393
    %v3431 = vmul.f32 %v2280, %v1394
    %v3432 = vmul.f32 %v2280, %v1395
    %v3433 = vmul.f32 %v2280, %v1396
    %v3434 = vmul.f32 %v2280, %v1397
    %v3435 = vmul.f32 %v2280, %v1398
    %v3436 = vmul.f32 %v2280, %v1399
    %v3437 = vmul.f32 %v2280, %v1400
    %v3438 = vmul.f32 %v2289, %v1545
    %v3439 = vmul.f32 %v2289, %v1546
    %v3440 = vmul.f32 %v2289, %v1547
    %v3441 = vmul.f32 %v2289, %v1548
    %v3442 = vmul.f32 %v2289, %v1549
    %v3443 = vmul.f32 %v2289, %v1550
    %v3444 = vmul.f32 %v2289, %v1551
    %v3445 = vmul.f32 %v2289, %v1552
    %v3446 = vadd.f32 %v3430, %v3438
    %v3447 = vadd.f32 %v3431, %v3439
    %v3448 = vadd.f32 %v3432, %v3440
    %v3449 = vadd.f32 %v3433, %v3441
    %v3450 = vadd.f32 %v3434, %v3442
    %v3451 = vadd.f32 %v3435, %v3443
    %v3452 = vadd.f32 %v3436, %v3444
    %v3453 = vadd.f32 %v3437, %v3445
    %v3454 = vmul.f32 %v2306, %v1697
    %v3455 = vmul.f32 %v2306, %v1698
    %v3456 = vmul.f32 %v2306, %v1699
    %v3457 = vmul.f32 %v2306, %v1700
    %v3458 = vmul.f32 %v2306, %v1701
    %v3459 = vmul.f32 %v2306, %v1702
    %v3460 = vmul.f32 %v2306, %v1703
    %v3461 = vmul.f32 %v2306, %v1704
    %v3462 = vadd.f32 %v3446, %v3454
    %v3463 = vadd.f32 %v3447, %v3455
    %v3464 = vadd.f32 %v3448, %v3456
    %v3465 = vadd.f32 %v3449, %v3457
    %v3466 = vadd.f32 %v3450, %v3458
    %v3467 = vadd.f32 %v3451, %v3459
    %v3468 = vadd.f32 %v3452, %v3460
    %v3469 = vadd.f32 %v3453, %v3461
    %v3470 = vmul.f32 %v2323, %v1865
    %v3471 = vmul.f32 %v2323, %v1866
    %v3472 = vmul.f32 %v2323, %v1867
    %v3473 = vmul.f32 %v2323, %v1868
    %v3474 = vmul.f32 %v2323, %v1869
    %v3475 = vmul.f32 %v2323, %v1870
    %v3476 = vmul.f32 %v2323, %v1871
    %v3477 = vmul.f32 %v2323, %v1872
    %v3478 = vmul.f32 %v2332, %v2017
    %v3479 = vmul.f32 %v2332, %v2018
    %v3480 = vmul.f32 %v2332, %v2019
    %v3481 = vmul.f32 %v2332, %v2020
    %v3482 = vmul.f32 %v2332, %v2021
    %v3483 = vmul.f32 %v2332, %v2022
    %v3484 = vmul.f32 %v2332, %v2023
    %v3485 = vmul.f32 %v2332, %v2024
    %v3486 = vadd.f32 %v3470, %v3478
    %v3487 = vadd.f32 %v3471, %v3479
    %v3488 = vadd.f32 %v3472, %v3480
    %v3489 = vadd.f32 %v3473, %v3481
    %v3490 = vadd.f32 %v3474, %v3482
    %v3491 = vadd.f32 %v3475, %v3483
    %v3492 = vadd.f32 %v3476, %v3484
    %v3493 = vadd.f32 %v3477, %v3485
    %v3494 = vmul.f32 %v2349, %v2169
    %v3495 = vmul.f32 %v2349, %v2170
    %v3496 = vmul.f32 %v2349, %v2171
    %v3497 = vmul.f32 %v2349, %v2172
    %v3498 = vmul.f32 %v2349, %v2173
    %v3499 = vmul.f32 %v2349, %v2174
    %v3500 = vmul.f32 %v2349, %v2175
    %v3501 = vmul.f32 %v2349, %v2176
    %v3502 = vadd.f32 %v3486, %v3494
    %v3503 = vadd.f32 %v3487, %v3495
    %v3504 = vadd.f32 %v3488, %v3496
    %v3505 = vadd.f32 %v3489, %v3497
    %v3506 = vadd.f32 %v3490, %v3498
    %v3507 = vadd.f32 %v3491, %v3499
    %v3508 = vadd.f32 %v3492, %v3500
    %v3509 = vadd.f32 %v3493, %v3501
    %v3510 = vadd.f32 %v3422, %v3462
    %v3511 = vadd.f32 %v3423, %v3463
    %v3512 = vadd.f32 %v3424, %v3464
    %v3513 = vadd.f32 %v3425, %v3465
    %v3514 = vadd.f32 %v3426, %v3466
    %v3515 = vadd.f32 %v3427, %v3467
    %v3516 = vadd.f32 %v3428, %v3468
    %v3517 = vadd.f32 %v3429, %v3469
    %v3518 = vadd.f32 %v3510, %v3502
    %v3519 = vadd.f32 %v3511, %v3503
    %v3520 = vadd.f32 %v3512, %v3504
    %v3521 = vadd.f32 %v3513, %v3505
    %v3522 = vadd.f32 %v3514, %v3506
    %v3523 = vadd.f32 %v3515, %v3507
    %v3524 = vadd.f32 %v3516, %v3508
    %v3525 = vadd.f32 %v3517, %v3509
    %v3526 = vmax.f32 %v3382, %v3518
    %v3527 = vmax.f32 %v3383, %v3519
    %v3528 = vmax.f32 %v3384, %v3520
    %v3529 = vmax.f32 %v3385, %v3521
    %v3530 = vmax.f32 %v3386, %v3522
    %v3531 = vmax.f32 %v3387, %v3523
    %v3532 = vmax.f32 %v3388, %v3524
    %v3533 = vmax.f32 %v3389, %v3525
    %s3534 = sld [smem:[#allocation5 + $0x1]]
    %v3535 = vstv %s3534
    %v3536 = vadd.f32 %v3526, %v3535
    %v3537 = vadd.f32 %v3527, %v3535
    %v3538 = vadd.f32 %v3528, %v3535
    %v3539 = vadd.f32 %v3529, %v3535
    %v3540 = vadd.f32 %v3530, %v3535
    %v3541 = vadd.f32 %v3531, %v3535
    %v3542 = vadd.f32 %v3532, %v3535
    %v3543 = vadd.f32 %v3533, %v3535
    %v3544 = vmax.f32 %v3536, 0.0
    %v3545 = vmax.f32 %v3537, 0.0
    %v3546 = vmax.f32 %v3538, 0.0
    %v3547 = vmax.f32 %v3539, 0.0
    %v3548 = vmax.f32 %v3540, 0.0
    %v3549 = vmax.f32 %v3541, 0.0
    %v3550 = vmax.f32 %v3542, 0.0
    %v3551 = vmax.f32 %v3543, 0.0
    %s3552 = scalar_lea.vmem %s3, 16
    %v3553 = vld [vmem:[%s3552] sm:$0xff]
    %v3554 = vld [vmem:[%s3552 + $0x8] sm:$0x3]
    %vm3555 = vcmask 523264
    %v3557 = vsel %vm3555, %v3553, 0
    %v3560 = vsel %vm3555, %v3554, 0
    %3562 = vmatprep.subr.mxu0 0.0
    %3563 = vmatpush1.msra.mxu0 0.0
    %3564 = vmatprep.subr.mxu0 0.0
    %3565 = vmatpush1.msra.mxu0 0.0
    %3566 = vmatprep.subr.mxu0 0.0
    %3567 = vmatpush1.msra.mxu0 0.0
    %3568 = vmatprep.subr.mxu0 0.0
    %3569 = vmatpush1.msra.mxu0 0.0
    %3570 = vmatprep.subr.mxu0 0.0
    %3571 = vmatpush1.msra.mxu0 0.0
    %3572 = vmatprep.subr.mxu0 0.0
    %3573 = vmatpush1.msra.mxu0 0.0
    %3574 = vmatprep.subr.mxu0 0.0
    %3575 = vmatpush1.msra.mxu0 0.0
    %3576 = vmatprep.subr.mxu0 0.0
    %3577 = vmatpush1.msra.mxu0 0.0
    %3578 = vmatprep.subr.mxu0 0.0
    %3579 = vmatpush1.msra.mxu0 %v3551
    %3580 = vmatprep.subr.mxu0 0.0
    %3581 = vmatpush1.msra.mxu0 %v3550
    %3582 = vmatprep.subr.mxu0 0.0
    %3583 = vmatpush1.msra.mxu0 %v3549
    %3584 = vmatprep.subr.mxu0 0.0
    %3585 = vmatpush1.msra.mxu0 %v3548
    %3586 = vmatprep.subr.mxu0 0.0
    %3587 = vmatpush1.msra.mxu0 %v3547
    %3588 = vmatprep.subr.mxu0 0.0
    %3589 = vmatpush1.msra.mxu0 %v3546
    %3590 = vmatprep.subr.mxu0 0.0
    %3591 = vmatpush1.msra.mxu0 %v3545
    %3592 = vmatprep.subr.mxu0 0.0
    %3593 = vmatpush1.msra.mxu0 %v3544
    %3594 = vmatprep.subr.mxu0 0.0
    %3595 = vmatpush2.msra.mxu0 0.0
    %3596 = vmatprep.subr.mxu0 0.0
    %3597 = vmatpush2.msra.mxu0 0.0
    %3598 = vmatprep.subr.mxu0 0.0
    %3599 = vmatpush2.msra.mxu0 0.0
    %3600 = vmatprep.subr.mxu0 0.0
    %3601 = vmatpush2.msra.mxu0 0.0
    %3602 = vmatprep.subr.mxu0 0.0
    %3603 = vmatpush2.msra.mxu0 0.0
    %3604 = vmatprep.subr.mxu0 0.0
    %3605 = vmatpush2.msra.mxu0 0.0
    %3606 = vmatprep.subr.mxu0 0.0
    %3607 = vmatpush2.msra.mxu0 0.0
    %3608 = vmatprep.subr.mxu0 0.0
    %3609 = vmatpush2.msra.mxu0 0.0
    %3610 = vmatprep.subr.mxu0 0.0
    %3611 = vmatpush2.msra.mxu0 0.0
    %3612 = vmatprep.subr.mxu0 0.0
    %3613 = vmatpush2.msra.mxu0 0.0
    %3614 = vmatprep.subr.mxu0 0.0
    %3615 = vmatpush2.msra.mxu0 0.0
    %3616 = vmatprep.subr.mxu0 0.0
    %3617 = vmatpush2.msra.mxu0 0.0
    %3618 = vmatprep.subr.mxu0 0.0
    %3619 = vmatpush2.msra.mxu0 0.0
    %3620 = vmatprep.subr.mxu0 0.0
    %3621 = vmatpush2.msra.mxu0 0.0
    %3622 = vmatprep.subr.mxu0 0.0
    %3623 = vmatpush2.msra.mxu0 0.0
    %3624 = vmatprep.subr.mxu0 0.0
    %3625 = vmatpush2.msra.mxu0 0.0
    %3626 = vmatprep.mubr.f32.mxu0 0.0
    %3627 = vmatmul.mubr.f32.gmra.mxu0 %v3557
    %v3628 = vpop.f32.mrf.mxu0
    %v3629 = vadd.f32 0.0, %v3628
    %v3630 = vpop.f32.mrf.mxu0
    %3631 = vmatprep.mubr.f32.mxu0 0.0
    %3632 = vmatmul.mubr.f32.gmra.mxu0 %v3560
    %v3633 = vpop.f32.mrf.mxu0
    %v3634 = vadd.f32 0.0, %v3633
    %v3635 = vpop.f32.mrf.mxu0
    %3636 = vdwg.mxu0
    %v3638 = vsel %vm3555, %v2235, 0
    %v3641 = vsel %vm3555, %v2236, 0
    %3643 = vmatprep.subr.mxu0 0.0
    %3644 = vmatpush1.msra.mxu0 0.0
    %3645 = vmatprep.subr.mxu0 0.0
    %3646 = vmatpush1.msra.mxu0 0.0
    %3647 = vmatprep.subr.mxu0 0.0
    %3648 = vmatpush1.msra.mxu0 0.0
    %3649 = vmatprep.subr.mxu0 0.0
    %3650 = vmatpush1.msra.mxu0 0.0
    %3651 = vmatprep.subr.mxu0 0.0
    %3652 = vmatpush1.msra.mxu0 0.0
    %3653 = vmatprep.subr.mxu0 0.0
    %3654 = vmatpush1.msra.mxu0 0.0
    %3655 = vmatprep.subr.mxu0 0.0
    %3656 = vmatpush1.msra.mxu0 0.0
    %3657 = vmatprep.subr.mxu0 0.0
    %3658 = vmatpush1.msra.mxu0 0.0
    %3659 = vmatprep.subr.mxu0 0.0
    %3660 = vmatpush1.msra.mxu0 %v2234
    %3661 = vmatprep.subr.mxu0 0.0
    %3662 = vmatpush1.msra.mxu0 %v2233
    %3663 = vmatprep.subr.mxu0 0.0
    %3664 = vmatpush1.msra.mxu0 %v2232
    %3665 = vmatprep.subr.mxu0 0.0
    %3666 = vmatpush1.msra.mxu0 %v2231
    %3667 = vmatprep.subr.mxu0 0.0
    %3668 = vmatpush1.msra.mxu0 %v2230
    %3669 = vmatprep.subr.mxu0 0.0
    %3670 = vmatpush1.msra.mxu0 %v2229
    %3671 = vmatprep.subr.mxu0 0.0
    %3672 = vmatpush1.msra.mxu0 %v2228
    %3673 = vmatprep.subr.mxu0 0.0
    %3674 = vmatpush1.msra.mxu0 %v2227
    %3675 = vmatprep.subr.mxu0 0.0
    %3676 = vmatpush2.msra.mxu0 0.0
    %3677 = vmatprep.subr.mxu0 0.0
    %3678 = vmatpush2.msra.mxu0 0.0
    %3679 = vmatprep.subr.mxu0 0.0
    %3680 = vmatpush2.msra.mxu0 0.0
    %3681 = vmatprep.subr.mxu0 0.0
    %3682 = vmatpush2.msra.mxu0 0.0
    %3683 = vmatprep.subr.mxu0 0.0
    %3684 = vmatpush2.msra.mxu0 0.0
    %3685 = vmatprep.subr.mxu0 0.0
    %3686 = vmatpush2.msra.mxu0 0.0
    %3687 = vmatprep.subr.mxu0 0.0
    %3688 = vmatpush2.msra.mxu0 0.0
    %3689 = vmatprep.subr.mxu0 0.0
    %3690 = vmatpush2.msra.mxu0 0.0
    %3691 = vmatprep.subr.mxu0 0.0
    %3692 = vmatpush2.msra.mxu0 0.0
    %3693 = vmatprep.subr.mxu0 0.0
    %3694 = vmatpush2.msra.mxu0 0.0
    %3695 = vmatprep.subr.mxu0 0.0
    %3696 = vmatpush2.msra.mxu0 0.0
    %3697 = vmatprep.subr.mxu0 0.0
    %3698 = vmatpush2.msra.mxu0 0.0
    %3699 = vmatprep.subr.mxu0 0.0
    %3700 = vmatpush2.msra.mxu0 0.0
    %3701 = vmatprep.subr.mxu0 0.0
    %3702 = vmatpush2.msra.mxu0 0.0
    %3703 = vmatprep.subr.mxu0 0.0
    %3704 = vmatpush2.msra.mxu0 0.0
    %3705 = vmatprep.subr.mxu0 0.0
    %3706 = vmatpush2.msra.mxu0 0.0
    %3707 = vmatprep.mubr.f32.mxu0 0.0
    %3708 = vmatmul.mubr.f32.gmra.mxu0 %v3638
    %v3709 = vpop.f32.mrf.mxu0
    %v3710 = vadd.f32 %v3629, %v3709
    %v3711 = vpop.f32.mrf.mxu0
    %3712 = vmatprep.mubr.f32.mxu0 0.0
    %3713 = vmatmul.mubr.f32.gmra.mxu0 %v3641
    %v3714 = vpop.f32.mrf.mxu0
    %v3715 = vadd.f32 %v3634, %v3714
    %v3716 = vpop.f32.mrf.mxu0
    %3717 = vdwg.mxu0
    %v3718 = vstv %s711
    %v3719 = vmul.f32 %v3718, %v720
    %v3720 = vmul.f32 %v3718, %v721
    %v3721 = vmul.f32 %v3718, %v722
    %v3722 = vmul.f32 %v3718, %v723
    %v3723 = vmul.f32 %v3718, %v724
    %v3724 = vmul.f32 %v3718, %v725
    %v3725 = vmul.f32 %v3718, %v726
    %v3726 = vmul.f32 %v3718, %v727
    %v3727 = vstv %s712
    %v3728 = vmul.f32 %v3727, %v737
    %v3729 = vmul.f32 %v3727, %v738
    %v3730 = vmul.f32 %v3727, %v739
    %v3731 = vmul.f32 %v3727, %v740
    %v3732 = vmul.f32 %v3727, %v741
    %v3733 = vmul.f32 %v3727, %v742
    %v3734 = vmul.f32 %v3727, %v743
    %v3735 = vmul.f32 %v3727, %v744
    %v3736 = vadd.f32 %v3719, %v3728
    %v3737 = vadd.f32 %v3720, %v3729
    %v3738 = vadd.f32 %v3721, %v3730
    %v3739 = vadd.f32 %v3722, %v3731
    %v3740 = vadd.f32 %v3723, %v3732
    %v3741 = vadd.f32 %v3724, %v3733
    %v3742 = vadd.f32 %v3725, %v3734
    %v3743 = vadd.f32 %v3726, %v3735
    %v3744 = vstv %s713
    %v3745 = vmul.f32 %v3744, %v762
    %v3746 = vmul.f32 %v3744, %v763
    %v3747 = vmul.f32 %v3744, %v764
    %v3748 = vmul.f32 %v3744, %v765
    %v3749 = vmul.f32 %v3744, %v766
    %v3750 = vmul.f32 %v3744, %v767
    %v3751 = vmul.f32 %v3744, %v768
    %v3752 = vmul.f32 %v3744, %v769
    %v3753 = vadd.f32 %v3736, %v3745
    %v3754 = vadd.f32 %v3737, %v3746
    %v3755 = vadd.f32 %v3738, %v3747
    %v3756 = vadd.f32 %v3739, %v3748
    %v3757 = vadd.f32 %v3740, %v3749
    %v3758 = vadd.f32 %v3741, %v3750
    %v3759 = vadd.f32 %v3742, %v3751
    %v3760 = vadd.f32 %v3743, %v3752
    %v3761 = vstv %s714
    %v3762 = vmul.f32 %v3761, %v787
    %v3763 = vmul.f32 %v3761, %v788
    %v3764 = vmul.f32 %v3761, %v789
    %v3765 = vmul.f32 %v3761, %v790
    %v3766 = vmul.f32 %v3761, %v791
    %v3767 = vmul.f32 %v3761, %v792
    %v3768 = vmul.f32 %v3761, %v793
    %v3769 = vmul.f32 %v3761, %v794
    %v3770 = vstv %s715
    %v3771 = vmul.f32 %v3770, %v804
    %v3772 = vmul.f32 %v3770, %v805
    %v3773 = vmul.f32 %v3770, %v806
    %v3774 = vmul.f32 %v3770, %v807
    %v3775 = vmul.f32 %v3770, %v808
    %v3776 = vmul.f32 %v3770, %v809
    %v3777 = vmul.f32 %v3770, %v810
    %v3778 = vmul.f32 %v3770, %v811
    %v3779 = vadd.f32 %v3762, %v3771
    %v3780 = vadd.f32 %v3763, %v3772
    %v3781 = vadd.f32 %v3764, %v3773
    %v3782 = vadd.f32 %v3765, %v3774
    %v3783 = vadd.f32 %v3766, %v3775
    %v3784 = vadd.f32 %v3767, %v3776
    %v3785 = vadd.f32 %v3768, %v3777
    %v3786 = vadd.f32 %v3769, %v3778
    %v3787 = vstv %s716
    %v3788 = vmul.f32 %v3787, %v829
    %v3789 = vmul.f32 %v3787, %v830
    %v3790 = vmul.f32 %v3787, %v831
    %v3791 = vmul.f32 %v3787, %v832
    %v3792 = vmul.f32 %v3787, %v833
    %v3793 = vmul.f32 %v3787, %v834
    %v3794 = vmul.f32 %v3787, %v835
    %v3795 = vmul.f32 %v3787, %v836
    %v3796 = vadd.f32 %v3779, %v3788
    %v3797 = vadd.f32 %v3780, %v3789
    %v3798 = vadd.f32 %v3781, %v3790
    %v3799 = vadd.f32 %v3782, %v3791
    %v3800 = vadd.f32 %v3783, %v3792
    %v3801 = vadd.f32 %v3784, %v3793
    %v3802 = vadd.f32 %v3785, %v3794
    %v3803 = vadd.f32 %v3786, %v3795
    %v3804 = vstv %s717
    %v3805 = vmul.f32 %v3804, %v854
    %v3806 = vmul.f32 %v3804, %v855
    %v3807 = vmul.f32 %v3804, %v856
    %v3808 = vmul.f32 %v3804, %v857
    %v3809 = vmul.f32 %v3804, %v858
    %v3810 = vmul.f32 %v3804, %v859
    %v3811 = vmul.f32 %v3804, %v860
    %v3812 = vmul.f32 %v3804, %v861
    %v3813 = vstv %s718
    %v3814 = vmul.f32 %v3813, %v871
    %v3815 = vmul.f32 %v3813, %v872
    %v3816 = vmul.f32 %v3813, %v873
    %v3817 = vmul.f32 %v3813, %v874
    %v3818 = vmul.f32 %v3813, %v875
    %v3819 = vmul.f32 %v3813, %v876
    %v3820 = vmul.f32 %v3813, %v877
    %v3821 = vmul.f32 %v3813, %v878
    %v3822 = vadd.f32 %v3805, %v3814
    %v3823 = vadd.f32 %v3806, %v3815
    %v3824 = vadd.f32 %v3807, %v3816
    %v3825 = vadd.f32 %v3808, %v3817
    %v3826 = vadd.f32 %v3809, %v3818
    %v3827 = vadd.f32 %v3810, %v3819
    %v3828 = vadd.f32 %v3811, %v3820
    %v3829 = vadd.f32 %v3812, %v3821
    %v3830 = vstv %s719
    %v3831 = vmul.f32 %v3830, %v896
    %v3832 = vmul.f32 %v3830, %v897
    %v3833 = vmul.f32 %v3830, %v898
    %v3834 = vmul.f32 %v3830, %v899
    %v3835 = vmul.f32 %v3830, %v900
    %v3836 = vmul.f32 %v3830, %v901
    %v3837 = vmul.f32 %v3830, %v902
    %v3838 = vmul.f32 %v3830, %v903
    %v3839 = vadd.f32 %v3822, %v3831
    %v3840 = vadd.f32 %v3823, %v3832
    %v3841 = vadd.f32 %v3824, %v3833
    %v3842 = vadd.f32 %v3825, %v3834
    %v3843 = vadd.f32 %v3826, %v3835
    %v3844 = vadd.f32 %v3827, %v3836
    %v3845 = vadd.f32 %v3828, %v3837
    %v3846 = vadd.f32 %v3829, %v3838
    %v3847 = vadd.f32 %v3753, %v3796
    %v3848 = vadd.f32 %v3754, %v3797
    %v3849 = vadd.f32 %v3755, %v3798
    %v3850 = vadd.f32 %v3756, %v3799
    %v3851 = vadd.f32 %v3757, %v3800
    %v3852 = vadd.f32 %v3758, %v3801
    %v3853 = vadd.f32 %v3759, %v3802
    %v3854 = vadd.f32 %v3760, %v3803
    %v3855 = vadd.f32 %v3847, %v3839
    %v3856 = vadd.f32 %v3848, %v3840
    %v3857 = vadd.f32 %v3849, %v3841
    %v3858 = vadd.f32 %v3850, %v3842
    %v3859 = vadd.f32 %v3851, %v3843
    %v3860 = vadd.f32 %v3852, %v3844
    %v3861 = vadd.f32 %v3853, %v3845
    %v3862 = vadd.f32 %v3854, %v3846
    %v3863 = vmul.f32 %v3718, %v737
    %v3864 = vmul.f32 %v3718, %v738
    %v3865 = vmul.f32 %v3718, %v739
    %v3866 = vmul.f32 %v3718, %v740
    %v3867 = vmul.f32 %v3718, %v741
    %v3868 = vmul.f32 %v3718, %v742
    %v3869 = vmul.f32 %v3718, %v743
    %v3870 = vmul.f32 %v3718, %v744
    %v3871 = vmul.f32 %v3727, %v762
    %v3872 = vmul.f32 %v3727, %v763
    %v3873 = vmul.f32 %v3727, %v764
    %v3874 = vmul.f32 %v3727, %v765
    %v3875 = vmul.f32 %v3727, %v766
    %v3876 = vmul.f32 %v3727, %v767
    %v3877 = vmul.f32 %v3727, %v768
    %v3878 = vmul.f32 %v3727, %v769
    %v3879 = vadd.f32 %v3863, %v3871
    %v3880 = vadd.f32 %v3864, %v3872
    %v3881 = vadd.f32 %v3865, %v3873
    %v3882 = vadd.f32 %v3866, %v3874
    %v3883 = vadd.f32 %v3867, %v3875
    %v3884 = vadd.f32 %v3868, %v3876
    %v3885 = vadd.f32 %v3869, %v3877
    %v3886 = vadd.f32 %v3870, %v3878
    %v3887 = vmul.f32 %v3744, %v961
    %v3888 = vmul.f32 %v3744, %v962
    %v3889 = vmul.f32 %v3744, %v963
    %v3890 = vmul.f32 %v3744, %v964
    %v3891 = vmul.f32 %v3744, %v965
    %v3892 = vmul.f32 %v3744, %v966
    %v3893 = vmul.f32 %v3744, %v967
    %v3894 = vmul.f32 %v3744, %v968
    %v3895 = vadd.f32 %v3879, %v3887
    %v3896 = vadd.f32 %v3880, %v3888
    %v3897 = vadd.f32 %v3881, %v3889
    %v3898 = vadd.f32 %v3882, %v3890
    %v3899 = vadd.f32 %v3883, %v3891
    %v3900 = vadd.f32 %v3884, %v3892
    %v3901 = vadd.f32 %v3885, %v3893
    %v3902 = vadd.f32 %v3886, %v3894
    %v3903 = vmul.f32 %v3761, %v804
    %v3904 = vmul.f32 %v3761, %v805
    %v3905 = vmul.f32 %v3761, %v806
    %v3906 = vmul.f32 %v3761, %v807
    %v3907 = vmul.f32 %v3761, %v808
    %v3908 = vmul.f32 %v3761, %v809
    %v3909 = vmul.f32 %v3761, %v810
    %v3910 = vmul.f32 %v3761, %v811
    %v3911 = vmul.f32 %v3770, %v829
    %v3912 = vmul.f32 %v3770, %v830
    %v3913 = vmul.f32 %v3770, %v831
    %v3914 = vmul.f32 %v3770, %v832
    %v3915 = vmul.f32 %v3770, %v833
    %v3916 = vmul.f32 %v3770, %v834
    %v3917 = vmul.f32 %v3770, %v835
    %v3918 = vmul.f32 %v3770, %v836
    %v3919 = vadd.f32 %v3903, %v3911
    %v3920 = vadd.f32 %v3904, %v3912
    %v3921 = vadd.f32 %v3905, %v3913
    %v3922 = vadd.f32 %v3906, %v3914
    %v3923 = vadd.f32 %v3907, %v3915
    %v3924 = vadd.f32 %v3908, %v3916
    %v3925 = vadd.f32 %v3909, %v3917
    %v3926 = vadd.f32 %v3910, %v3918
    %v3927 = vmul.f32 %v3787, %v1009
    %v3928 = vmul.f32 %v3787, %v1010
    %v3929 = vmul.f32 %v3787, %v1011
    %v3930 = vmul.f32 %v3787, %v1012
    %v3931 = vmul.f32 %v3787, %v1013
    %v3932 = vmul.f32 %v3787, %v1014
    %v3933 = vmul.f32 %v3787, %v1015
    %v3934 = vmul.f32 %v3787, %v1016
    %v3935 = vadd.f32 %v3919, %v3927
    %v3936 = vadd.f32 %v3920, %v3928
    %v3937 = vadd.f32 %v3921, %v3929
    %v3938 = vadd.f32 %v3922, %v3930
    %v3939 = vadd.f32 %v3923, %v3931
    %v3940 = vadd.f32 %v3924, %v3932
    %v3941 = vadd.f32 %v3925, %v3933
    %v3942 = vadd.f32 %v3926, %v3934
    %v3943 = vmul.f32 %v3804, %v871
    %v3944 = vmul.f32 %v3804, %v872
    %v3945 = vmul.f32 %v3804, %v873
    %v3946 = vmul.f32 %v3804, %v874
    %v3947 = vmul.f32 %v3804, %v875
    %v3948 = vmul.f32 %v3804, %v876
    %v3949 = vmul.f32 %v3804, %v877
    %v3950 = vmul.f32 %v3804, %v878
    %v3951 = vmul.f32 %v3813, %v896
    %v3952 = vmul.f32 %v3813, %v897
    %v3953 = vmul.f32 %v3813, %v898
    %v3954 = vmul.f32 %v3813, %v899
    %v3955 = vmul.f32 %v3813, %v900
    %v3956 = vmul.f32 %v3813, %v901
    %v3957 = vmul.f32 %v3813, %v902
    %v3958 = vmul.f32 %v3813, %v903
    %v3959 = vadd.f32 %v3943, %v3951
    %v3960 = vadd.f32 %v3944, %v3952
    %v3961 = vadd.f32 %v3945, %v3953
    %v3962 = vadd.f32 %v3946, %v3954
    %v3963 = vadd.f32 %v3947, %v3955
    %v3964 = vadd.f32 %v3948, %v3956
    %v3965 = vadd.f32 %v3949, %v3957
    %v3966 = vadd.f32 %v3950, %v3958
    %v3967 = vmul.f32 %v3830, %v1057
    %v3968 = vmul.f32 %v3830, %v1058
    %v3969 = vmul.f32 %v3830, %v1059
    %v3970 = vmul.f32 %v3830, %v1060
    %v3971 = vmul.f32 %v3830, %v1061
    %v3972 = vmul.f32 %v3830, %v1062
    %v3973 = vmul.f32 %v3830, %v1063
    %v3974 = vmul.f32 %v3830, %v1064
    %v3975 = vadd.f32 %v3959, %v3967
    %v3976 = vadd.f32 %v3960, %v3968
    %v3977 = vadd.f32 %v3961, %v3969
    %v3978 = vadd.f32 %v3962, %v3970
    %v3979 = vadd.f32 %v3963, %v3971
    %v3980 = vadd.f32 %v3964, %v3972
    %v3981 = vadd.f32 %v3965, %v3973
    %v3982 = vadd.f32 %v3966, %v3974
    %v3983 = vadd.f32 %v3895, %v3935
    %v3984 = vadd.f32 %v3896, %v3936
    %v3985 = vadd.f32 %v3897, %v3937
    %v3986 = vadd.f32 %v3898, %v3938
    %v3987 = vadd.f32 %v3899, %v3939
    %v3988 = vadd.f32 %v3900, %v3940
    %v3989 = vadd.f32 %v3901, %v3941
    %v3990 = vadd.f32 %v3902, %v3942
    %v3991 = vadd.f32 %v3983, %v3975
    %v3992 = vadd.f32 %v3984, %v3976
    %v3993 = vadd.f32 %v3985, %v3977
    %v3994 = vadd.f32 %v3986, %v3978
    %v3995 = vadd.f32 %v3987, %v3979
    %v3996 = vadd.f32 %v3988, %v3980
    %v3997 = vadd.f32 %v3989, %v3981
    %v3998 = vadd.f32 %v3990, %v3982
    %v3999 = vmax.f32 %v3855, %v3991
    %v4000 = vmax.f32 %v3856, %v3992
    %v4001 = vmax.f32 %v3857, %v3993
    %v4002 = vmax.f32 %v3858, %v3994
    %v4003 = vmax.f32 %v3859, %v3995
    %v4004 = vmax.f32 %v3860, %v3996
    %v4005 = vmax.f32 %v3861, %v3997
    %v4006 = vmax.f32 %v3862, %v3998
    %v4007 = vmul.f32 %v3718, %v762
    %v4008 = vmul.f32 %v3718, %v763
    %v4009 = vmul.f32 %v3718, %v764
    %v4010 = vmul.f32 %v3718, %v765
    %v4011 = vmul.f32 %v3718, %v766
    %v4012 = vmul.f32 %v3718, %v767
    %v4013 = vmul.f32 %v3718, %v768
    %v4014 = vmul.f32 %v3718, %v769
    %v4015 = vmul.f32 %v3727, %v961
    %v4016 = vmul.f32 %v3727, %v962
    %v4017 = vmul.f32 %v3727, %v963
    %v4018 = vmul.f32 %v3727, %v964
    %v4019 = vmul.f32 %v3727, %v965
    %v4020 = vmul.f32 %v3727, %v966
    %v4021 = vmul.f32 %v3727, %v967
    %v4022 = vmul.f32 %v3727, %v968
    %v4023 = vadd.f32 %v4007, %v4015
    %v4024 = vadd.f32 %v4008, %v4016
    %v4025 = vadd.f32 %v4009, %v4017
    %v4026 = vadd.f32 %v4010, %v4018
    %v4027 = vadd.f32 %v4011, %v4019
    %v4028 = vadd.f32 %v4012, %v4020
    %v4029 = vadd.f32 %v4013, %v4021
    %v4030 = vadd.f32 %v4014, %v4022
    %v4031 = vmul.f32 %v3744, %v1129
    %v4032 = vmul.f32 %v3744, %v1130
    %v4033 = vmul.f32 %v3744, %v1131
    %v4034 = vmul.f32 %v3744, %v1132
    %v4035 = vmul.f32 %v3744, %v1133
    %v4036 = vmul.f32 %v3744, %v1134
    %v4037 = vmul.f32 %v3744, %v1135
    %v4038 = vmul.f32 %v3744, %v1136
    %v4039 = vadd.f32 %v4023, %v4031
    %v4040 = vadd.f32 %v4024, %v4032
    %v4041 = vadd.f32 %v4025, %v4033
    %v4042 = vadd.f32 %v4026, %v4034
    %v4043 = vadd.f32 %v4027, %v4035
    %v4044 = vadd.f32 %v4028, %v4036
    %v4045 = vadd.f32 %v4029, %v4037
    %v4046 = vadd.f32 %v4030, %v4038
    %v4047 = vmul.f32 %v3761, %v829
    %v4048 = vmul.f32 %v3761, %v830
    %v4049 = vmul.f32 %v3761, %v831
    %v4050 = vmul.f32 %v3761, %v832
    %v4051 = vmul.f32 %v3761, %v833
    %v4052 = vmul.f32 %v3761, %v834
    %v4053 = vmul.f32 %v3761, %v835
    %v4054 = vmul.f32 %v3761, %v836
    %v4055 = vmul.f32 %v3770, %v1009
    %v4056 = vmul.f32 %v3770, %v1010
    %v4057 = vmul.f32 %v3770, %v1011
    %v4058 = vmul.f32 %v3770, %v1012
    %v4059 = vmul.f32 %v3770, %v1013
    %v4060 = vmul.f32 %v3770, %v1014
    %v4061 = vmul.f32 %v3770, %v1015
    %v4062 = vmul.f32 %v3770, %v1016
    %v4063 = vadd.f32 %v4047, %v4055
    %v4064 = vadd.f32 %v4048, %v4056
    %v4065 = vadd.f32 %v4049, %v4057
    %v4066 = vadd.f32 %v4050, %v4058
    %v4067 = vadd.f32 %v4051, %v4059
    %v4068 = vadd.f32 %v4052, %v4060
    %v4069 = vadd.f32 %v4053, %v4061
    %v4070 = vadd.f32 %v4054, %v4062
    %v4071 = vmul.f32 %v3787, %v1177
    %v4072 = vmul.f32 %v3787, %v1178
    %v4073 = vmul.f32 %v3787, %v1179
    %v4074 = vmul.f32 %v3787, %v1180
    %v4075 = vmul.f32 %v3787, %v1181
    %v4076 = vmul.f32 %v3787, %v1182
    %v4077 = vmul.f32 %v3787, %v1183
    %v4078 = vmul.f32 %v3787, %v1184
    %v4079 = vadd.f32 %v4063, %v4071
    %v4080 = vadd.f32 %v4064, %v4072
    %v4081 = vadd.f32 %v4065, %v4073
    %v4082 = vadd.f32 %v4066, %v4074
    %v4083 = vadd.f32 %v4067, %v4075
    %v4084 = vadd.f32 %v4068, %v4076
    %v4085 = vadd.f32 %v4069, %v4077
    %v4086 = vadd.f32 %v4070, %v4078
    %v4087 = vmul.f32 %v3804, %v896
    %v4088 = vmul.f32 %v3804, %v897
    %v4089 = vmul.f32 %v3804, %v898
    %v4090 = vmul.f32 %v3804, %v899
    %v4091 = vmul.f32 %v3804, %v900
    %v4092 = vmul.f32 %v3804, %v901
    %v4093 = vmul.f32 %v3804, %v902
    %v4094 = vmul.f32 %v3804, %v903
    %v4095 = vmul.f32 %v3813, %v1057
    %v4096 = vmul.f32 %v3813, %v1058
    %v4097 = vmul.f32 %v3813, %v1059
    %v4098 = vmul.f32 %v3813, %v1060
    %v4099 = vmul.f32 %v3813, %v1061
    %v4100 = vmul.f32 %v3813, %v1062
    %v4101 = vmul.f32 %v3813, %v1063
    %v4102 = vmul.f32 %v3813, %v1064
    %v4103 = vadd.f32 %v4087, %v4095
    %v4104 = vadd.f32 %v4088, %v4096
    %v4105 = vadd.f32 %v4089, %v4097
    %v4106 = vadd.f32 %v4090, %v4098
    %v4107 = vadd.f32 %v4091, %v4099
    %v4108 = vadd.f32 %v4092, %v4100
    %v4109 = vadd.f32 %v4093, %v4101
    %v4110 = vadd.f32 %v4094, %v4102
    %v4111 = vmul.f32 %v3830, %v1225
    %v4112 = vmul.f32 %v3830, %v1226
    %v4113 = vmul.f32 %v3830, %v1227
    %v4114 = vmul.f32 %v3830, %v1228
    %v4115 = vmul.f32 %v3830, %v1229
    %v4116 = vmul.f32 %v3830, %v1230
    %v4117 = vmul.f32 %v3830, %v1231
    %v4118 = vmul.f32 %v3830, %v1232
    %v4119 = vadd.f32 %v4103, %v4111
    %v4120 = vadd.f32 %v4104, %v4112
    %v4121 = vadd.f32 %v4105, %v4113
    %v4122 = vadd.f32 %v4106, %v4114
    %v4123 = vadd.f32 %v4107, %v4115
    %v4124 = vadd.f32 %v4108, %v4116
    %v4125 = vadd.f32 %v4109, %v4117
    %v4126 = vadd.f32 %v4110, %v4118
    %v4127 = vadd.f32 %v4039, %v4079
    %v4128 = vadd.f32 %v4040, %v4080
    %v4129 = vadd.f32 %v4041, %v4081
    %v4130 = vadd.f32 %v4042, %v4082
    %v4131 = vadd.f32 %v4043, %v4083
    %v4132 = vadd.f32 %v4044, %v4084
    %v4133 = vadd.f32 %v4045, %v4085
    %v4134 = vadd.f32 %v4046, %v4086
    %v4135 = vadd.f32 %v4127, %v4119
    %v4136 = vadd.f32 %v4128, %v4120
    %v4137 = vadd.f32 %v4129, %v4121
    %v4138 = vadd.f32 %v4130, %v4122
    %v4139 = vadd.f32 %v4131, %v4123
    %v4140 = vadd.f32 %v4132, %v4124
    %v4141 = vadd.f32 %v4133, %v4125
    %v4142 = vadd.f32 %v4134, %v4126
    %v4143 = vmax.f32 %v3999, %v4135
    %v4144 = vmax.f32 %v4000, %v4136
    %v4145 = vmax.f32 %v4001, %v4137
    %v4146 = vmax.f32 %v4002, %v4138
    %v4147 = vmax.f32 %v4003, %v4139
    %v4148 = vmax.f32 %v4004, %v4140
    %v4149 = vmax.f32 %v4005, %v4141
    %v4150 = vmax.f32 %v4006, %v4142
    %v4151 = vmul.f32 %v3718, %v787
    %v4152 = vmul.f32 %v3718, %v788
    %v4153 = vmul.f32 %v3718, %v789
    %v4154 = vmul.f32 %v3718, %v790
    %v4155 = vmul.f32 %v3718, %v791
    %v4156 = vmul.f32 %v3718, %v792
    %v4157 = vmul.f32 %v3718, %v793
    %v4158 = vmul.f32 %v3718, %v794
    %v4159 = vmul.f32 %v3727, %v804
    %v4160 = vmul.f32 %v3727, %v805
    %v4161 = vmul.f32 %v3727, %v806
    %v4162 = vmul.f32 %v3727, %v807
    %v4163 = vmul.f32 %v3727, %v808
    %v4164 = vmul.f32 %v3727, %v809
    %v4165 = vmul.f32 %v3727, %v810
    %v4166 = vmul.f32 %v3727, %v811
    %v4167 = vadd.f32 %v4151, %v4159
    %v4168 = vadd.f32 %v4152, %v4160
    %v4169 = vadd.f32 %v4153, %v4161
    %v4170 = vadd.f32 %v4154, %v4162
    %v4171 = vadd.f32 %v4155, %v4163
    %v4172 = vadd.f32 %v4156, %v4164
    %v4173 = vadd.f32 %v4157, %v4165
    %v4174 = vadd.f32 %v4158, %v4166
    %v4175 = vmul.f32 %v3744, %v829
    %v4176 = vmul.f32 %v3744, %v830
    %v4177 = vmul.f32 %v3744, %v831
    %v4178 = vmul.f32 %v3744, %v832
    %v4179 = vmul.f32 %v3744, %v833
    %v4180 = vmul.f32 %v3744, %v834
    %v4181 = vmul.f32 %v3744, %v835
    %v4182 = vmul.f32 %v3744, %v836
    %v4183 = vadd.f32 %v4167, %v4175
    %v4184 = vadd.f32 %v4168, %v4176
    %v4185 = vadd.f32 %v4169, %v4177
    %v4186 = vadd.f32 %v4170, %v4178
    %v4187 = vadd.f32 %v4171, %v4179
    %v4188 = vadd.f32 %v4172, %v4180
    %v4189 = vadd.f32 %v4173, %v4181
    %v4190 = vadd.f32 %v4174, %v4182
    %v4191 = vmul.f32 %v3761, %v854
    %v4192 = vmul.f32 %v3761, %v855
    %v4193 = vmul.f32 %v3761, %v856
    %v4194 = vmul.f32 %v3761, %v857
    %v4195 = vmul.f32 %v3761, %v858
    %v4196 = vmul.f32 %v3761, %v859
    %v4197 = vmul.f32 %v3761, %v860
    %v4198 = vmul.f32 %v3761, %v861
    %v4199 = vmul.f32 %v3770, %v871
    %v4200 = vmul.f32 %v3770, %v872
    %v4201 = vmul.f32 %v3770, %v873
    %v4202 = vmul.f32 %v3770, %v874
    %v4203 = vmul.f32 %v3770, %v875
    %v4204 = vmul.f32 %v3770, %v876
    %v4205 = vmul.f32 %v3770, %v877
    %v4206 = vmul.f32 %v3770, %v878
    %v4207 = vadd.f32 %v4191, %v4199
    %v4208 = vadd.f32 %v4192, %v4200
    %v4209 = vadd.f32 %v4193, %v4201
    %v4210 = vadd.f32 %v4194, %v4202
    %v4211 = vadd.f32 %v4195, %v4203
    %v4212 = vadd.f32 %v4196, %v4204
    %v4213 = vadd.f32 %v4197, %v4205
    %v4214 = vadd.f32 %v4198, %v4206
    %v4215 = vmul.f32 %v3787, %v896
    %v4216 = vmul.f32 %v3787, %v897
    %v4217 = vmul.f32 %v3787, %v898
    %v4218 = vmul.f32 %v3787, %v899
    %v4219 = vmul.f32 %v3787, %v900
    %v4220 = vmul.f32 %v3787, %v901
    %v4221 = vmul.f32 %v3787, %v902
    %v4222 = vmul.f32 %v3787, %v903
    %v4223 = vadd.f32 %v4207, %v4215
    %v4224 = vadd.f32 %v4208, %v4216
    %v4225 = vadd.f32 %v4209, %v4217
    %v4226 = vadd.f32 %v4210, %v4218
    %v4227 = vadd.f32 %v4211, %v4219
    %v4228 = vadd.f32 %v4212, %v4220
    %v4229 = vadd.f32 %v4213, %v4221
    %v4230 = vadd.f32 %v4214, %v4222
    %v4231 = vmul.f32 %v3804, %v1353
    %v4232 = vmul.f32 %v3804, %v1354
    %v4233 = vmul.f32 %v3804, %v1355
    %v4234 = vmul.f32 %v3804, %v1356
    %v4235 = vmul.f32 %v3804, %v1357
    %v4236 = vmul.f32 %v3804, %v1358
    %v4237 = vmul.f32 %v3804, %v1359
    %v4238 = vmul.f32 %v3804, %v1360
    %v4239 = vmul.f32 %v3813, %v1369
    %v4240 = vmul.f32 %v3813, %v1370
    %v4241 = vmul.f32 %v3813, %v1371
    %v4242 = vmul.f32 %v3813, %v1372
    %v4243 = vmul.f32 %v3813, %v1373
    %v4244 = vmul.f32 %v3813, %v1374
    %v4245 = vmul.f32 %v3813, %v1375
    %v4246 = vmul.f32 %v3813, %v1376
    %v4247 = vadd.f32 %v4231, %v4239
    %v4248 = vadd.f32 %v4232, %v4240
    %v4249 = vadd.f32 %v4233, %v4241
    %v4250 = vadd.f32 %v4234, %v4242
    %v4251 = vadd.f32 %v4235, %v4243
    %v4252 = vadd.f32 %v4236, %v4244
    %v4253 = vadd.f32 %v4237, %v4245
    %v4254 = vadd.f32 %v4238, %v4246
    %v4255 = vmul.f32 %v3830, %v1393
    %v4256 = vmul.f32 %v3830, %v1394
    %v4257 = vmul.f32 %v3830, %v1395
    %v4258 = vmul.f32 %v3830, %v1396
    %v4259 = vmul.f32 %v3830, %v1397
    %v4260 = vmul.f32 %v3830, %v1398
    %v4261 = vmul.f32 %v3830, %v1399
    %v4262 = vmul.f32 %v3830, %v1400
    %v4263 = vadd.f32 %v4247, %v4255
    %v4264 = vadd.f32 %v4248, %v4256
    %v4265 = vadd.f32 %v4249, %v4257
    %v4266 = vadd.f32 %v4250, %v4258
    %v4267 = vadd.f32 %v4251, %v4259
    %v4268 = vadd.f32 %v4252, %v4260
    %v4269 = vadd.f32 %v4253, %v4261
    %v4270 = vadd.f32 %v4254, %v4262
    %v4271 = vadd.f32 %v4183, %v4223
    %v4272 = vadd.f32 %v4184, %v4224
    %v4273 = vadd.f32 %v4185, %v4225
    %v4274 = vadd.f32 %v4186, %v4226
    %v4275 = vadd.f32 %v4187, %v4227
    %v4276 = vadd.f32 %v4188, %v4228
    %v4277 = vadd.f32 %v4189, %v4229
    %v4278 = vadd.f32 %v4190, %v4230
    %v4279 = vadd.f32 %v4271, %v4263
    %v4280 = vadd.f32 %v4272, %v4264
    %v4281 = vadd.f32 %v4273, %v4265
    %v4282 = vadd.f32 %v4274, %v4266
    %v4283 = vadd.f32 %v4275, %v4267
    %v4284 = vadd.f32 %v4276, %v4268
    %v4285 = vadd.f32 %v4277, %v4269
    %v4286 = vadd.f32 %v4278, %v4270
    %v4287 = vmax.f32 %v4143, %v4279
    %v4288 = vmax.f32 %v4144, %v4280
    %v4289 = vmax.f32 %v4145, %v4281
    %v4290 = vmax.f32 %v4146, %v4282
    %v4291 = vmax.f32 %v4147, %v4283
    %v4292 = vmax.f32 %v4148, %v4284
    %v4293 = vmax.f32 %v4149, %v4285
    %v4294 = vmax.f32 %v4150, %v4286
    %v4295 = vmul.f32 %v3718, %v804
    %v4296 = vmul.f32 %v3718, %v805
    %v4297 = vmul.f32 %v3718, %v806
    %v4298 = vmul.f32 %v3718, %v807
    %v4299 = vmul.f32 %v3718, %v808
    %v4300 = vmul.f32 %v3718, %v809
    %v4301 = vmul.f32 %v3718, %v810
    %v4302 = vmul.f32 %v3718, %v811
    %v4303 = vmul.f32 %v3727, %v829
    %v4304 = vmul.f32 %v3727, %v830
    %v4305 = vmul.f32 %v3727, %v831
    %v4306 = vmul.f32 %v3727, %v832
    %v4307 = vmul.f32 %v3727, %v833
    %v4308 = vmul.f32 %v3727, %v834
    %v4309 = vmul.f32 %v3727, %v835
    %v4310 = vmul.f32 %v3727, %v836
    %v4311 = vadd.f32 %v4295, %v4303
    %v4312 = vadd.f32 %v4296, %v4304
    %v4313 = vadd.f32 %v4297, %v4305
    %v4314 = vadd.f32 %v4298, %v4306
    %v4315 = vadd.f32 %v4299, %v4307
    %v4316 = vadd.f32 %v4300, %v4308
    %v4317 = vadd.f32 %v4301, %v4309
    %v4318 = vadd.f32 %v4302, %v4310
    %v4319 = vmul.f32 %v3744, %v1009
    %v4320 = vmul.f32 %v3744, %v1010
    %v4321 = vmul.f32 %v3744, %v1011
    %v4322 = vmul.f32 %v3744, %v1012
    %v4323 = vmul.f32 %v3744, %v1013
    %v4324 = vmul.f32 %v3744, %v1014
    %v4325 = vmul.f32 %v3744, %v1015
    %v4326 = vmul.f32 %v3744, %v1016
    %v4327 = vadd.f32 %v4311, %v4319
    %v4328 = vadd.f32 %v4312, %v4320
    %v4329 = vadd.f32 %v4313, %v4321
    %v4330 = vadd.f32 %v4314, %v4322
    %v4331 = vadd.f32 %v4315, %v4323
    %v4332 = vadd.f32 %v4316, %v4324
    %v4333 = vadd.f32 %v4317, %v4325
    %v4334 = vadd.f32 %v4318, %v4326
    %v4335 = vmul.f32 %v3761, %v871
    %v4336 = vmul.f32 %v3761, %v872
    %v4337 = vmul.f32 %v3761, %v873
    %v4338 = vmul.f32 %v3761, %v874
    %v4339 = vmul.f32 %v3761, %v875
    %v4340 = vmul.f32 %v3761, %v876
    %v4341 = vmul.f32 %v3761, %v877
    %v4342 = vmul.f32 %v3761, %v878
    %v4343 = vmul.f32 %v3770, %v896
    %v4344 = vmul.f32 %v3770, %v897
    %v4345 = vmul.f32 %v3770, %v898
    %v4346 = vmul.f32 %v3770, %v899
    %v4347 = vmul.f32 %v3770, %v900
    %v4348 = vmul.f32 %v3770, %v901
    %v4349 = vmul.f32 %v3770, %v902
    %v4350 = vmul.f32 %v3770, %v903
    %v4351 = vadd.f32 %v4335, %v4343
    %v4352 = vadd.f32 %v4336, %v4344
    %v4353 = vadd.f32 %v4337, %v4345
    %v4354 = vadd.f32 %v4338, %v4346
    %v4355 = vadd.f32 %v4339, %v4347
    %v4356 = vadd.f32 %v4340, %v4348
    %v4357 = vadd.f32 %v4341, %v4349
    %v4358 = vadd.f32 %v4342, %v4350
    %v4359 = vmul.f32 %v3787, %v1057
    %v4360 = vmul.f32 %v3787, %v1058
    %v4361 = vmul.f32 %v3787, %v1059
    %v4362 = vmul.f32 %v3787, %v1060
    %v4363 = vmul.f32 %v3787, %v1061
    %v4364 = vmul.f32 %v3787, %v1062
    %v4365 = vmul.f32 %v3787, %v1063
    %v4366 = vmul.f32 %v3787, %v1064
    %v4367 = vadd.f32 %v4351, %v4359
    %v4368 = vadd.f32 %v4352, %v4360
    %v4369 = vadd.f32 %v4353, %v4361
    %v4370 = vadd.f32 %v4354, %v4362
    %v4371 = vadd.f32 %v4355, %v4363
    %v4372 = vadd.f32 %v4356, %v4364
    %v4373 = vadd.f32 %v4357, %v4365
    %v4374 = vadd.f32 %v4358, %v4366
    %v4375 = vmul.f32 %v3804, %v1369
    %v4376 = vmul.f32 %v3804, %v1370
    %v4377 = vmul.f32 %v3804, %v1371
    %v4378 = vmul.f32 %v3804, %v1372
    %v4379 = vmul.f32 %v3804, %v1373
    %v4380 = vmul.f32 %v3804, %v1374
    %v4381 = vmul.f32 %v3804, %v1375
    %v4382 = vmul.f32 %v3804, %v1376
    %v4383 = vmul.f32 %v3813, %v1393
    %v4384 = vmul.f32 %v3813, %v1394
    %v4385 = vmul.f32 %v3813, %v1395
    %v4386 = vmul.f32 %v3813, %v1396
    %v4387 = vmul.f32 %v3813, %v1397
    %v4388 = vmul.f32 %v3813, %v1398
    %v4389 = vmul.f32 %v3813, %v1399
    %v4390 = vmul.f32 %v3813, %v1400
    %v4391 = vadd.f32 %v4375, %v4383
    %v4392 = vadd.f32 %v4376, %v4384
    %v4393 = vadd.f32 %v4377, %v4385
    %v4394 = vadd.f32 %v4378, %v4386
    %v4395 = vadd.f32 %v4379, %v4387
    %v4396 = vadd.f32 %v4380, %v4388
    %v4397 = vadd.f32 %v4381, %v4389
    %v4398 = vadd.f32 %v4382, %v4390
    %v4399 = vmul.f32 %v3830, %v1545
    %v4400 = vmul.f32 %v3830, %v1546
    %v4401 = vmul.f32 %v3830, %v1547
    %v4402 = vmul.f32 %v3830, %v1548
    %v4403 = vmul.f32 %v3830, %v1549
    %v4404 = vmul.f32 %v3830, %v1550
    %v4405 = vmul.f32 %v3830, %v1551
    %v4406 = vmul.f32 %v3830, %v1552
    %v4407 = vadd.f32 %v4391, %v4399
    %v4408 = vadd.f32 %v4392, %v4400
    %v4409 = vadd.f32 %v4393, %v4401
    %v4410 = vadd.f32 %v4394, %v4402
    %v4411 = vadd.f32 %v4395, %v4403
    %v4412 = vadd.f32 %v4396, %v4404
    %v4413 = vadd.f32 %v4397, %v4405
    %v4414 = vadd.f32 %v4398, %v4406
    %v4415 = vadd.f32 %v4327, %v4367
    %v4416 = vadd.f32 %v4328, %v4368
    %v4417 = vadd.f32 %v4329, %v4369
    %v4418 = vadd.f32 %v4330, %v4370
    %v4419 = vadd.f32 %v4331, %v4371
    %v4420 = vadd.f32 %v4332, %v4372
    %v4421 = vadd.f32 %v4333, %v4373
    %v4422 = vadd.f32 %v4334, %v4374
    %v4423 = vadd.f32 %v4415, %v4407
    %v4424 = vadd.f32 %v4416, %v4408
    %v4425 = vadd.f32 %v4417, %v4409
    %v4426 = vadd.f32 %v4418, %v4410
    %v4427 = vadd.f32 %v4419, %v4411
    %v4428 = vadd.f32 %v4420, %v4412
    %v4429 = vadd.f32 %v4421, %v4413
    %v4430 = vadd.f32 %v4422, %v4414
    %v4431 = vmax.f32 %v4287, %v4423
    %v4432 = vmax.f32 %v4288, %v4424
    %v4433 = vmax.f32 %v4289, %v4425
    %v4434 = vmax.f32 %v4290, %v4426
    %v4435 = vmax.f32 %v4291, %v4427
    %v4436 = vmax.f32 %v4292, %v4428
    %v4437 = vmax.f32 %v4293, %v4429
    %v4438 = vmax.f32 %v4294, %v4430
    %v4439 = vmul.f32 %v3718, %v829
    %v4440 = vmul.f32 %v3718, %v830
    %v4441 = vmul.f32 %v3718, %v831
    %v4442 = vmul.f32 %v3718, %v832
    %v4443 = vmul.f32 %v3718, %v833
    %v4444 = vmul.f32 %v3718, %v834
    %v4445 = vmul.f32 %v3718, %v835
    %v4446 = vmul.f32 %v3718, %v836
    %v4447 = vmul.f32 %v3727, %v1009
    %v4448 = vmul.f32 %v3727, %v1010
    %v4449 = vmul.f32 %v3727, %v1011
    %v4450 = vmul.f32 %v3727, %v1012
    %v4451 = vmul.f32 %v3727, %v1013
    %v4452 = vmul.f32 %v3727, %v1014
    %v4453 = vmul.f32 %v3727, %v1015
    %v4454 = vmul.f32 %v3727, %v1016
    %v4455 = vadd.f32 %v4439, %v4447
    %v4456 = vadd.f32 %v4440, %v4448
    %v4457 = vadd.f32 %v4441, %v4449
    %v4458 = vadd.f32 %v4442, %v4450
    %v4459 = vadd.f32 %v4443, %v4451
    %v4460 = vadd.f32 %v4444, %v4452
    %v4461 = vadd.f32 %v4445, %v4453
    %v4462 = vadd.f32 %v4446, %v4454
    %v4463 = vmul.f32 %v3744, %v1177
    %v4464 = vmul.f32 %v3744, %v1178
    %v4465 = vmul.f32 %v3744, %v1179
    %v4466 = vmul.f32 %v3744, %v1180
    %v4467 = vmul.f32 %v3744, %v1181
    %v4468 = vmul.f32 %v3744, %v1182
    %v4469 = vmul.f32 %v3744, %v1183
    %v4470 = vmul.f32 %v3744, %v1184
    %v4471 = vadd.f32 %v4455, %v4463
    %v4472 = vadd.f32 %v4456, %v4464
    %v4473 = vadd.f32 %v4457, %v4465
    %v4474 = vadd.f32 %v4458, %v4466
    %v4475 = vadd.f32 %v4459, %v4467
    %v4476 = vadd.f32 %v4460, %v4468
    %v4477 = vadd.f32 %v4461, %v4469
    %v4478 = vadd.f32 %v4462, %v4470
    %v4479 = vmul.f32 %v3761, %v896
    %v4480 = vmul.f32 %v3761, %v897
    %v4481 = vmul.f32 %v3761, %v898
    %v4482 = vmul.f32 %v3761, %v899
    %v4483 = vmul.f32 %v3761, %v900
    %v4484 = vmul.f32 %v3761, %v901
    %v4485 = vmul.f32 %v3761, %v902
    %v4486 = vmul.f32 %v3761, %v903
    %v4487 = vmul.f32 %v3770, %v1057
    %v4488 = vmul.f32 %v3770, %v1058
    %v4489 = vmul.f32 %v3770, %v1059
    %v4490 = vmul.f32 %v3770, %v1060
    %v4491 = vmul.f32 %v3770, %v1061
    %v4492 = vmul.f32 %v3770, %v1062
    %v4493 = vmul.f32 %v3770, %v1063
    %v4494 = vmul.f32 %v3770, %v1064
    %v4495 = vadd.f32 %v4479, %v4487
    %v4496 = vadd.f32 %v4480, %v4488
    %v4497 = vadd.f32 %v4481, %v4489
    %v4498 = vadd.f32 %v4482, %v4490
    %v4499 = vadd.f32 %v4483, %v4491
    %v4500 = vadd.f32 %v4484, %v4492
    %v4501 = vadd.f32 %v4485, %v4493
    %v4502 = vadd.f32 %v4486, %v4494
    %v4503 = vmul.f32 %v3787, %v1225
    %v4504 = vmul.f32 %v3787, %v1226
    %v4505 = vmul.f32 %v3787, %v1227
    %v4506 = vmul.f32 %v3787, %v1228
    %v4507 = vmul.f32 %v3787, %v1229
    %v4508 = vmul.f32 %v3787, %v1230
    %v4509 = vmul.f32 %v3787, %v1231
    %v4510 = vmul.f32 %v3787, %v1232
    %v4511 = vadd.f32 %v4495, %v4503
    %v4512 = vadd.f32 %v4496, %v4504
    %v4513 = vadd.f32 %v4497, %v4505
    %v4514 = vadd.f32 %v4498, %v4506
    %v4515 = vadd.f32 %v4499, %v4507
    %v4516 = vadd.f32 %v4500, %v4508
    %v4517 = vadd.f32 %v4501, %v4509
    %v4518 = vadd.f32 %v4502, %v4510
    %v4519 = vmul.f32 %v3804, %v1393
    %v4520 = vmul.f32 %v3804, %v1394
    %v4521 = vmul.f32 %v3804, %v1395
    %v4522 = vmul.f32 %v3804, %v1396
    %v4523 = vmul.f32 %v3804, %v1397
    %v4524 = vmul.f32 %v3804, %v1398
    %v4525 = vmul.f32 %v3804, %v1399
    %v4526 = vmul.f32 %v3804, %v1400
    %v4527 = vmul.f32 %v3813, %v1545
    %v4528 = vmul.f32 %v3813, %v1546
    %v4529 = vmul.f32 %v3813, %v1547
    %v4530 = vmul.f32 %v3813, %v1548
    %v4531 = vmul.f32 %v3813, %v1549
    %v4532 = vmul.f32 %v3813, %v1550
    %v4533 = vmul.f32 %v3813, %v1551
    %v4534 = vmul.f32 %v3813, %v1552
    %v4535 = vadd.f32 %v4519, %v4527
    %v4536 = vadd.f32 %v4520, %v4528
    %v4537 = vadd.f32 %v4521, %v4529
    %v4538 = vadd.f32 %v4522, %v4530
    %v4539 = vadd.f32 %v4523, %v4531
    %v4540 = vadd.f32 %v4524, %v4532
    %v4541 = vadd.f32 %v4525, %v4533
    %v4542 = vadd.f32 %v4526, %v4534
    %v4543 = vmul.f32 %v3830, %v1697
    %v4544 = vmul.f32 %v3830, %v1698
    %v4545 = vmul.f32 %v3830, %v1699
    %v4546 = vmul.f32 %v3830, %v1700
    %v4547 = vmul.f32 %v3830, %v1701
    %v4548 = vmul.f32 %v3830, %v1702
    %v4549 = vmul.f32 %v3830, %v1703
    %v4550 = vmul.f32 %v3830, %v1704
    %v4551 = vadd.f32 %v4535, %v4543
    %v4552 = vadd.f32 %v4536, %v4544
    %v4553 = vadd.f32 %v4537, %v4545
    %v4554 = vadd.f32 %v4538, %v4546
    %v4555 = vadd.f32 %v4539, %v4547
    %v4556 = vadd.f32 %v4540, %v4548
    %v4557 = vadd.f32 %v4541, %v4549
    %v4558 = vadd.f32 %v4542, %v4550
    %v4559 = vadd.f32 %v4471, %v4511
    %v4560 = vadd.f32 %v4472, %v4512
    %v4561 = vadd.f32 %v4473, %v4513
    %v4562 = vadd.f32 %v4474, %v4514
    %v4563 = vadd.f32 %v4475, %v4515
    %v4564 = vadd.f32 %v4476, %v4516
    %v4565 = vadd.f32 %v4477, %v4517
    %v4566 = vadd.f32 %v4478, %v4518
    %v4567 = vadd.f32 %v4559, %v4551
    %v4568 = vadd.f32 %v4560, %v4552
    %v4569 = vadd.f32 %v4561, %v4553
    %v4570 = vadd.f32 %v4562, %v4554
    %v4571 = vadd.f32 %v4563, %v4555
    %v4572 = vadd.f32 %v4564, %v4556
    %v4573 = vadd.f32 %v4565, %v4557
    %v4574 = vadd.f32 %v4566, %v4558
    %v4575 = vmax.f32 %v4431, %v4567
    %v4576 = vmax.f32 %v4432, %v4568
    %v4577 = vmax.f32 %v4433, %v4569
    %v4578 = vmax.f32 %v4434, %v4570
    %v4579 = vmax.f32 %v4435, %v4571
    %v4580 = vmax.f32 %v4436, %v4572
    %v4581 = vmax.f32 %v4437, %v4573
    %v4582 = vmax.f32 %v4438, %v4574
    %v4583 = vmul.f32 %v3718, %v854
    %v4584 = vmul.f32 %v3718, %v855
    %v4585 = vmul.f32 %v3718, %v856
    %v4586 = vmul.f32 %v3718, %v857
    %v4587 = vmul.f32 %v3718, %v858
    %v4588 = vmul.f32 %v3718, %v859
    %v4589 = vmul.f32 %v3718, %v860
    %v4590 = vmul.f32 %v3718, %v861
    %v4591 = vmul.f32 %v3727, %v871
    %v4592 = vmul.f32 %v3727, %v872
    %v4593 = vmul.f32 %v3727, %v873
    %v4594 = vmul.f32 %v3727, %v874
    %v4595 = vmul.f32 %v3727, %v875
    %v4596 = vmul.f32 %v3727, %v876
    %v4597 = vmul.f32 %v3727, %v877
    %v4598 = vmul.f32 %v3727, %v878
    %v4599 = vadd.f32 %v4583, %v4591
    %v4600 = vadd.f32 %v4584, %v4592
    %v4601 = vadd.f32 %v4585, %v4593
    %v4602 = vadd.f32 %v4586, %v4594
    %v4603 = vadd.f32 %v4587, %v4595
    %v4604 = vadd.f32 %v4588, %v4596
    %v4605 = vadd.f32 %v4589, %v4597
    %v4606 = vadd.f32 %v4590, %v4598
    %v4607 = vmul.f32 %v3744, %v896
    %v4608 = vmul.f32 %v3744, %v897
    %v4609 = vmul.f32 %v3744, %v898
    %v4610 = vmul.f32 %v3744, %v899
    %v4611 = vmul.f32 %v3744, %v900
    %v4612 = vmul.f32 %v3744, %v901
    %v4613 = vmul.f32 %v3744, %v902
    %v4614 = vmul.f32 %v3744, %v903
    %v4615 = vadd.f32 %v4599, %v4607
    %v4616 = vadd.f32 %v4600, %v4608
    %v4617 = vadd.f32 %v4601, %v4609
    %v4618 = vadd.f32 %v4602, %v4610
    %v4619 = vadd.f32 %v4603, %v4611
    %v4620 = vadd.f32 %v4604, %v4612
    %v4621 = vadd.f32 %v4605, %v4613
    %v4622 = vadd.f32 %v4606, %v4614
    %v4623 = vmul.f32 %v3761, %v1353
    %v4624 = vmul.f32 %v3761, %v1354
    %v4625 = vmul.f32 %v3761, %v1355
    %v4626 = vmul.f32 %v3761, %v1356
    %v4627 = vmul.f32 %v3761, %v1357
    %v4628 = vmul.f32 %v3761, %v1358
    %v4629 = vmul.f32 %v3761, %v1359
    %v4630 = vmul.f32 %v3761, %v1360
    %v4631 = vmul.f32 %v3770, %v1369
    %v4632 = vmul.f32 %v3770, %v1370
    %v4633 = vmul.f32 %v3770, %v1371
    %v4634 = vmul.f32 %v3770, %v1372
    %v4635 = vmul.f32 %v3770, %v1373
    %v4636 = vmul.f32 %v3770, %v1374
    %v4637 = vmul.f32 %v3770, %v1375
    %v4638 = vmul.f32 %v3770, %v1376
    %v4639 = vadd.f32 %v4623, %v4631
    %v4640 = vadd.f32 %v4624, %v4632
    %v4641 = vadd.f32 %v4625, %v4633
    %v4642 = vadd.f32 %v4626, %v4634
    %v4643 = vadd.f32 %v4627, %v4635
    %v4644 = vadd.f32 %v4628, %v4636
    %v4645 = vadd.f32 %v4629, %v4637
    %v4646 = vadd.f32 %v4630, %v4638
    %v4647 = vmul.f32 %v3787, %v1393
    %v4648 = vmul.f32 %v3787, %v1394
    %v4649 = vmul.f32 %v3787, %v1395
    %v4650 = vmul.f32 %v3787, %v1396
    %v4651 = vmul.f32 %v3787, %v1397
    %v4652 = vmul.f32 %v3787, %v1398
    %v4653 = vmul.f32 %v3787, %v1399
    %v4654 = vmul.f32 %v3787, %v1400
    %v4655 = vadd.f32 %v4639, %v4647
    %v4656 = vadd.f32 %v4640, %v4648
    %v4657 = vadd.f32 %v4641, %v4649
    %v4658 = vadd.f32 %v4642, %v4650
    %v4659 = vadd.f32 %v4643, %v4651
    %v4660 = vadd.f32 %v4644, %v4652
    %v4661 = vadd.f32 %v4645, %v4653
    %v4662 = vadd.f32 %v4646, %v4654
    %v4663 = vmul.f32 %v3804, %v1825
    %v4664 = vmul.f32 %v3804, %v1826
    %v4665 = vmul.f32 %v3804, %v1827
    %v4666 = vmul.f32 %v3804, %v1828
    %v4667 = vmul.f32 %v3804, %v1829
    %v4668 = vmul.f32 %v3804, %v1830
    %v4669 = vmul.f32 %v3804, %v1831
    %v4670 = vmul.f32 %v3804, %v1832
    %v4671 = vmul.f32 %v3813, %v1841
    %v4672 = vmul.f32 %v3813, %v1842
    %v4673 = vmul.f32 %v3813, %v1843
    %v4674 = vmul.f32 %v3813, %v1844
    %v4675 = vmul.f32 %v3813, %v1845
    %v4676 = vmul.f32 %v3813, %v1846
    %v4677 = vmul.f32 %v3813, %v1847
    %v4678 = vmul.f32 %v3813, %v1848
    %v4679 = vadd.f32 %v4663, %v4671
    %v4680 = vadd.f32 %v4664, %v4672
    %v4681 = vadd.f32 %v4665, %v4673
    %v4682 = vadd.f32 %v4666, %v4674
    %v4683 = vadd.f32 %v4667, %v4675
    %v4684 = vadd.f32 %v4668, %v4676
    %v4685 = vadd.f32 %v4669, %v4677
    %v4686 = vadd.f32 %v4670, %v4678
    %v4687 = vmul.f32 %v3830, %v1865
    %v4688 = vmul.f32 %v3830, %v1866
    %v4689 = vmul.f32 %v3830, %v1867
    %v4690 = vmul.f32 %v3830, %v1868
    %v4691 = vmul.f32 %v3830, %v1869
    %v4692 = vmul.f32 %v3830, %v1870
    %v4693 = vmul.f32 %v3830, %v1871
    %v4694 = vmul.f32 %v3830, %v1872
    %v4695 = vadd.f32 %v4679, %v4687
    %v4696 = vadd.f32 %v4680, %v4688
    %v4697 = vadd.f32 %v4681, %v4689
    %v4698 = vadd.f32 %v4682, %v4690
    %v4699 = vadd.f32 %v4683, %v4691
    %v4700 = vadd.f32 %v4684, %v4692
    %v4701 = vadd.f32 %v4685, %v4693
    %v4702 = vadd.f32 %v4686, %v4694
    %v4703 = vadd.f32 %v4615, %v4655
    %v4704 = vadd.f32 %v4616, %v4656
    %v4705 = vadd.f32 %v4617, %v4657
    %v4706 = vadd.f32 %v4618, %v4658
    %v4707 = vadd.f32 %v4619, %v4659
    %v4708 = vadd.f32 %v4620, %v4660
    %v4709 = vadd.f32 %v4621, %v4661
    %v4710 = vadd.f32 %v4622, %v4662
    %v4711 = vadd.f32 %v4703, %v4695
    %v4712 = vadd.f32 %v4704, %v4696
    %v4713 = vadd.f32 %v4705, %v4697
    %v4714 = vadd.f32 %v4706, %v4698
    %v4715 = vadd.f32 %v4707, %v4699
    %v4716 = vadd.f32 %v4708, %v4700
    %v4717 = vadd.f32 %v4709, %v4701
    %v4718 = vadd.f32 %v4710, %v4702
    %v4719 = vmax.f32 %v4575, %v4711
    %v4720 = vmax.f32 %v4576, %v4712
    %v4721 = vmax.f32 %v4577, %v4713
    %v4722 = vmax.f32 %v4578, %v4714
    %v4723 = vmax.f32 %v4579, %v4715
    %v4724 = vmax.f32 %v4580, %v4716
    %v4725 = vmax.f32 %v4581, %v4717
    %v4726 = vmax.f32 %v4582, %v4718
    %v4727 = vmul.f32 %v3718, %v871
    %v4728 = vmul.f32 %v3718, %v872
    %v4729 = vmul.f32 %v3718, %v873
    %v4730 = vmul.f32 %v3718, %v874
    %v4731 = vmul.f32 %v3718, %v875
    %v4732 = vmul.f32 %v3718, %v876
    %v4733 = vmul.f32 %v3718, %v877
    %v4734 = vmul.f32 %v3718, %v878
    %v4735 = vmul.f32 %v3727, %v896
    %v4736 = vmul.f32 %v3727, %v897
    %v4737 = vmul.f32 %v3727, %v898
    %v4738 = vmul.f32 %v3727, %v899
    %v4739 = vmul.f32 %v3727, %v900
    %v4740 = vmul.f32 %v3727, %v901
    %v4741 = vmul.f32 %v3727, %v902
    %v4742 = vmul.f32 %v3727, %v903
    %v4743 = vadd.f32 %v4727, %v4735
    %v4744 = vadd.f32 %v4728, %v4736
    %v4745 = vadd.f32 %v4729, %v4737
    %v4746 = vadd.f32 %v4730, %v4738
    %v4747 = vadd.f32 %v4731, %v4739
    %v4748 = vadd.f32 %v4732, %v4740
    %v4749 = vadd.f32 %v4733, %v4741
    %v4750 = vadd.f32 %v4734, %v4742
    %v4751 = vmul.f32 %v3744, %v1057
    %v4752 = vmul.f32 %v3744, %v1058
    %v4753 = vmul.f32 %v3744, %v1059
    %v4754 = vmul.f32 %v3744, %v1060
    %v4755 = vmul.f32 %v3744, %v1061
    %v4756 = vmul.f32 %v3744, %v1062
    %v4757 = vmul.f32 %v3744, %v1063
    %v4758 = vmul.f32 %v3744, %v1064
    %v4759 = vadd.f32 %v4743, %v4751
    %v4760 = vadd.f32 %v4744, %v4752
    %v4761 = vadd.f32 %v4745, %v4753
    %v4762 = vadd.f32 %v4746, %v4754
    %v4763 = vadd.f32 %v4747, %v4755
    %v4764 = vadd.f32 %v4748, %v4756
    %v4765 = vadd.f32 %v4749, %v4757
    %v4766 = vadd.f32 %v4750, %v4758
    %v4767 = vmul.f32 %v3761, %v1369
    %v4768 = vmul.f32 %v3761, %v1370
    %v4769 = vmul.f32 %v3761, %v1371
    %v4770 = vmul.f32 %v3761, %v1372
    %v4771 = vmul.f32 %v3761, %v1373
    %v4772 = vmul.f32 %v3761, %v1374
    %v4773 = vmul.f32 %v3761, %v1375
    %v4774 = vmul.f32 %v3761, %v1376
    %v4775 = vmul.f32 %v3770, %v1393
    %v4776 = vmul.f32 %v3770, %v1394
    %v4777 = vmul.f32 %v3770, %v1395
    %v4778 = vmul.f32 %v3770, %v1396
    %v4779 = vmul.f32 %v3770, %v1397
    %v4780 = vmul.f32 %v3770, %v1398
    %v4781 = vmul.f32 %v3770, %v1399
    %v4782 = vmul.f32 %v3770, %v1400
    %v4783 = vadd.f32 %v4767, %v4775
    %v4784 = vadd.f32 %v4768, %v4776
    %v4785 = vadd.f32 %v4769, %v4777
    %v4786 = vadd.f32 %v4770, %v4778
    %v4787 = vadd.f32 %v4771, %v4779
    %v4788 = vadd.f32 %v4772, %v4780
    %v4789 = vadd.f32 %v4773, %v4781
    %v4790 = vadd.f32 %v4774, %v4782
    %v4791 = vmul.f32 %v3787, %v1545
    %v4792 = vmul.f32 %v3787, %v1546
    %v4793 = vmul.f32 %v3787, %v1547
    %v4794 = vmul.f32 %v3787, %v1548
    %v4795 = vmul.f32 %v3787, %v1549
    %v4796 = vmul.f32 %v3787, %v1550
    %v4797 = vmul.f32 %v3787, %v1551
    %v4798 = vmul.f32 %v3787, %v1552
    %v4799 = vadd.f32 %v4783, %v4791
    %v4800 = vadd.f32 %v4784, %v4792
    %v4801 = vadd.f32 %v4785, %v4793
    %v4802 = vadd.f32 %v4786, %v4794
    %v4803 = vadd.f32 %v4787, %v4795
    %v4804 = vadd.f32 %v4788, %v4796
    %v4805 = vadd.f32 %v4789, %v4797
    %v4806 = vadd.f32 %v4790, %v4798
    %v4807 = vmul.f32 %v3804, %v1841
    %v4808 = vmul.f32 %v3804, %v1842
    %v4809 = vmul.f32 %v3804, %v1843
    %v4810 = vmul.f32 %v3804, %v1844
    %v4811 = vmul.f32 %v3804, %v1845
    %v4812 = vmul.f32 %v3804, %v1846
    %v4813 = vmul.f32 %v3804, %v1847
    %v4814 = vmul.f32 %v3804, %v1848
    %v4815 = vmul.f32 %v3813, %v1865
    %v4816 = vmul.f32 %v3813, %v1866
    %v4817 = vmul.f32 %v3813, %v1867
    %v4818 = vmul.f32 %v3813, %v1868
    %v4819 = vmul.f32 %v3813, %v1869
    %v4820 = vmul.f32 %v3813, %v1870
    %v4821 = vmul.f32 %v3813, %v1871
    %v4822 = vmul.f32 %v3813, %v1872
    %v4823 = vadd.f32 %v4807, %v4815
    %v4824 = vadd.f32 %v4808, %v4816
    %v4825 = vadd.f32 %v4809, %v4817
    %v4826 = vadd.f32 %v4810, %v4818
    %v4827 = vadd.f32 %v4811, %v4819
    %v4828 = vadd.f32 %v4812, %v4820
    %v4829 = vadd.f32 %v4813, %v4821
    %v4830 = vadd.f32 %v4814, %v4822
    %v4831 = vmul.f32 %v3830, %v2017
    %v4832 = vmul.f32 %v3830, %v2018
    %v4833 = vmul.f32 %v3830, %v2019
    %v4834 = vmul.f32 %v3830, %v2020
    %v4835 = vmul.f32 %v3830, %v2021
    %v4836 = vmul.f32 %v3830, %v2022
    %v4837 = vmul.f32 %v3830, %v2023
    %v4838 = vmul.f32 %v3830, %v2024
    %v4839 = vadd.f32 %v4823, %v4831
    %v4840 = vadd.f32 %v4824, %v4832
    %v4841 = vadd.f32 %v4825, %v4833
    %v4842 = vadd.f32 %v4826, %v4834
    %v4843 = vadd.f32 %v4827, %v4835
    %v4844 = vadd.f32 %v4828, %v4836
    %v4845 = vadd.f32 %v4829, %v4837
    %v4846 = vadd.f32 %v4830, %v4838
    %v4847 = vadd.f32 %v4759, %v4799
    %v4848 = vadd.f32 %v4760, %v4800
    %v4849 = vadd.f32 %v4761, %v4801
    %v4850 = vadd.f32 %v4762, %v4802
    %v4851 = vadd.f32 %v4763, %v4803
    %v4852 = vadd.f32 %v4764, %v4804
    %v4853 = vadd.f32 %v4765, %v4805
    %v4854 = vadd.f32 %v4766, %v4806
    %v4855 = vadd.f32 %v4847, %v4839
    %v4856 = vadd.f32 %v4848, %v4840
    %v4857 = vadd.f32 %v4849, %v4841
    %v4858 = vadd.f32 %v4850, %v4842
    %v4859 = vadd.f32 %v4851, %v4843
    %v4860 = vadd.f32 %v4852, %v4844
    %v4861 = vadd.f32 %v4853, %v4845
    %v4862 = vadd.f32 %v4854, %v4846
    %v4863 = vmax.f32 %v4719, %v4855
    %v4864 = vmax.f32 %v4720, %v4856
    %v4865 = vmax.f32 %v4721, %v4857
    %v4866 = vmax.f32 %v4722, %v4858
    %v4867 = vmax.f32 %v4723, %v4859
    %v4868 = vmax.f32 %v4724, %v4860
    %v4869 = vmax.f32 %v4725, %v4861
    %v4870 = vmax.f32 %v4726, %v4862
    %v4871 = vmul.f32 %v3718, %v896
    %v4872 = vmul.f32 %v3718, %v897
    %v4873 = vmul.f32 %v3718, %v898
    %v4874 = vmul.f32 %v3718, %v899
    %v4875 = vmul.f32 %v3718, %v900
    %v4876 = vmul.f32 %v3718, %v901
    %v4877 = vmul.f32 %v3718, %v902
    %v4878 = vmul.f32 %v3718, %v903
    %v4879 = vmul.f32 %v3727, %v1057
    %v4880 = vmul.f32 %v3727, %v1058
    %v4881 = vmul.f32 %v3727, %v1059
    %v4882 = vmul.f32 %v3727, %v1060
    %v4883 = vmul.f32 %v3727, %v1061
    %v4884 = vmul.f32 %v3727, %v1062
    %v4885 = vmul.f32 %v3727, %v1063
    %v4886 = vmul.f32 %v3727, %v1064
    %v4887 = vadd.f32 %v4871, %v4879
    %v4888 = vadd.f32 %v4872, %v4880
    %v4889 = vadd.f32 %v4873, %v4881
    %v4890 = vadd.f32 %v4874, %v4882
    %v4891 = vadd.f32 %v4875, %v4883
    %v4892 = vadd.f32 %v4876, %v4884
    %v4893 = vadd.f32 %v4877, %v4885
    %v4894 = vadd.f32 %v4878, %v4886
    %v4895 = vmul.f32 %v3744, %v1225
    %v4896 = vmul.f32 %v3744, %v1226
    %v4897 = vmul.f32 %v3744, %v1227
    %v4898 = vmul.f32 %v3744, %v1228
    %v4899 = vmul.f32 %v3744, %v1229
    %v4900 = vmul.f32 %v3744, %v1230
    %v4901 = vmul.f32 %v3744, %v1231
    %v4902 = vmul.f32 %v3744, %v1232
    %v4903 = vadd.f32 %v4887, %v4895
    %v4904 = vadd.f32 %v4888, %v4896
    %v4905 = vadd.f32 %v4889, %v4897
    %v4906 = vadd.f32 %v4890, %v4898
    %v4907 = vadd.f32 %v4891, %v4899
    %v4908 = vadd.f32 %v4892, %v4900
    %v4909 = vadd.f32 %v4893, %v4901
    %v4910 = vadd.f32 %v4894, %v4902
    %v4911 = vmul.f32 %v3761, %v1393
    %v4912 = vmul.f32 %v3761, %v1394
    %v4913 = vmul.f32 %v3761, %v1395
    %v4914 = vmul.f32 %v3761, %v1396
    %v4915 = vmul.f32 %v3761, %v1397
    %v4916 = vmul.f32 %v3761, %v1398
    %v4917 = vmul.f32 %v3761, %v1399
    %v4918 = vmul.f32 %v3761, %v1400
    %v4919 = vmul.f32 %v3770, %v1545
    %v4920 = vmul.f32 %v3770, %v1546
    %v4921 = vmul.f32 %v3770, %v1547
    %v4922 = vmul.f32 %v3770, %v1548
    %v4923 = vmul.f32 %v3770, %v1549
    %v4924 = vmul.f32 %v3770, %v1550
    %v4925 = vmul.f32 %v3770, %v1551
    %v4926 = vmul.f32 %v3770, %v1552
    %v4927 = vadd.f32 %v4911, %v4919
    %v4928 = vadd.f32 %v4912, %v4920
    %v4929 = vadd.f32 %v4913, %v4921
    %v4930 = vadd.f32 %v4914, %v4922
    %v4931 = vadd.f32 %v4915, %v4923
    %v4932 = vadd.f32 %v4916, %v4924
    %v4933 = vadd.f32 %v4917, %v4925
    %v4934 = vadd.f32 %v4918, %v4926
    %v4935 = vmul.f32 %v3787, %v1697
    %v4936 = vmul.f32 %v3787, %v1698
    %v4937 = vmul.f32 %v3787, %v1699
    %v4938 = vmul.f32 %v3787, %v1700
    %v4939 = vmul.f32 %v3787, %v1701
    %v4940 = vmul.f32 %v3787, %v1702
    %v4941 = vmul.f32 %v3787, %v1703
    %v4942 = vmul.f32 %v3787, %v1704
    %v4943 = vadd.f32 %v4927, %v4935
    %v4944 = vadd.f32 %v4928, %v4936
    %v4945 = vadd.f32 %v4929, %v4937
    %v4946 = vadd.f32 %v4930, %v4938
    %v4947 = vadd.f32 %v4931, %v4939
    %v4948 = vadd.f32 %v4932, %v4940
    %v4949 = vadd.f32 %v4933, %v4941
    %v4950 = vadd.f32 %v4934, %v4942
    %v4951 = vmul.f32 %v3804, %v1865
    %v4952 = vmul.f32 %v3804, %v1866
    %v4953 = vmul.f32 %v3804, %v1867
    %v4954 = vmul.f32 %v3804, %v1868
    %v4955 = vmul.f32 %v3804, %v1869
    %v4956 = vmul.f32 %v3804, %v1870
    %v4957 = vmul.f32 %v3804, %v1871
    %v4958 = vmul.f32 %v3804, %v1872
    %v4959 = vmul.f32 %v3813, %v2017
    %v4960 = vmul.f32 %v3813, %v2018
    %v4961 = vmul.f32 %v3813, %v2019
    %v4962 = vmul.f32 %v3813, %v2020
    %v4963 = vmul.f32 %v3813, %v2021
    %v4964 = vmul.f32 %v3813, %v2022
    %v4965 = vmul.f32 %v3813, %v2023
    %v4966 = vmul.f32 %v3813, %v2024
    %v4967 = vadd.f32 %v4951, %v4959
    %v4968 = vadd.f32 %v4952, %v4960
    %v4969 = vadd.f32 %v4953, %v4961
    %v4970 = vadd.f32 %v4954, %v4962
    %v4971 = vadd.f32 %v4955, %v4963
    %v4972 = vadd.f32 %v4956, %v4964
    %v4973 = vadd.f32 %v4957, %v4965
    %v4974 = vadd.f32 %v4958, %v4966
    %v4975 = vmul.f32 %v3830, %v2169
    %v4976 = vmul.f32 %v3830, %v2170
    %v4977 = vmul.f32 %v3830, %v2171
    %v4978 = vmul.f32 %v3830, %v2172
    %v4979 = vmul.f32 %v3830, %v2173
    %v4980 = vmul.f32 %v3830, %v2174
    %v4981 = vmul.f32 %v3830, %v2175
    %v4982 = vmul.f32 %v3830, %v2176
    %v4983 = vadd.f32 %v4967, %v4975
    %v4984 = vadd.f32 %v4968, %v4976
    %v4985 = vadd.f32 %v4969, %v4977
    %v4986 = vadd.f32 %v4970, %v4978
    %v4987 = vadd.f32 %v4971, %v4979
    %v4988 = vadd.f32 %v4972, %v4980
    %v4989 = vadd.f32 %v4973, %v4981
    %v4990 = vadd.f32 %v4974, %v4982
    %v4991 = vadd.f32 %v4903, %v4943
    %v4992 = vadd.f32 %v4904, %v4944
    %v4993 = vadd.f32 %v4905, %v4945
    %v4994 = vadd.f32 %v4906, %v4946
    %v4995 = vadd.f32 %v4907, %v4947
    %v4996 = vadd.f32 %v4908, %v4948
    %v4997 = vadd.f32 %v4909, %v4949
    %v4998 = vadd.f32 %v4910, %v4950
    %v4999 = vadd.f32 %v4991, %v4983
    %v5000 = vadd.f32 %v4992, %v4984
    %v5001 = vadd.f32 %v4993, %v4985
    %v5002 = vadd.f32 %v4994, %v4986
    %v5003 = vadd.f32 %v4995, %v4987
    %v5004 = vadd.f32 %v4996, %v4988
    %v5005 = vadd.f32 %v4997, %v4989
    %v5006 = vadd.f32 %v4998, %v4990
    %v5007 = vmax.f32 %v4863, %v4999
    %v5008 = vmax.f32 %v4864, %v5000
    %v5009 = vmax.f32 %v4865, %v5001
    %v5010 = vmax.f32 %v4866, %v5002
    %v5011 = vmax.f32 %v4867, %v5003
    %v5012 = vmax.f32 %v4868, %v5004
    %v5013 = vmax.f32 %v4869, %v5005
    %v5014 = vmax.f32 %v4870, %v5006
    %s5015 = sld [smem:[#allocation5 + $0x2]]
    %v5016 = vstv %s5015
    %v5017 = vadd.f32 %v5007, %v5016
    %v5018 = vadd.f32 %v5008, %v5016
    %v5019 = vadd.f32 %v5009, %v5016
    %v5020 = vadd.f32 %v5010, %v5016
    %v5021 = vadd.f32 %v5011, %v5016
    %v5022 = vadd.f32 %v5012, %v5016
    %v5023 = vadd.f32 %v5013, %v5016
    %v5024 = vadd.f32 %v5014, %v5016
    %v5025 = vmax.f32 %v5017, 0.0
    %v5026 = vmax.f32 %v5018, 0.0
    %v5027 = vmax.f32 %v5019, 0.0
    %v5028 = vmax.f32 %v5020, 0.0
    %v5029 = vmax.f32 %v5021, 0.0
    %v5030 = vmax.f32 %v5022, 0.0
    %v5031 = vmax.f32 %v5023, 0.0
    %v5032 = vmax.f32 %v5024, 0.0
    %s5033 = scalar_lea.vmem %s3, 32
    %v5034 = vld [vmem:[%s5033] sm:$0xff]
    %v5035 = vld [vmem:[%s5033 + $0x8] sm:$0x3]
    %v5037 = vsel %vm3555, %v5034, 0
    %v5040 = vsel %vm3555, %v5035, 0
    %5042 = vmatprep.subr.mxu0 0.0
    %5043 = vmatpush1.msra.mxu0 0.0
    %5044 = vmatprep.subr.mxu0 0.0
    %5045 = vmatpush1.msra.mxu0 0.0
    %5046 = vmatprep.subr.mxu0 0.0
    %5047 = vmatpush1.msra.mxu0 0.0
    %5048 = vmatprep.subr.mxu0 0.0
    %5049 = vmatpush1.msra.mxu0 0.0
    %5050 = vmatprep.subr.mxu0 0.0
    %5051 = vmatpush1.msra.mxu0 0.0
    %5052 = vmatprep.subr.mxu0 0.0
    %5053 = vmatpush1.msra.mxu0 0.0
    %5054 = vmatprep.subr.mxu0 0.0
    %5055 = vmatpush1.msra.mxu0 0.0
    %5056 = vmatprep.subr.mxu0 0.0
    %5057 = vmatpush1.msra.mxu0 0.0
    %5058 = vmatprep.subr.mxu0 0.0
    %5059 = vmatpush1.msra.mxu0 %v5032
    %5060 = vmatprep.subr.mxu0 0.0
    %5061 = vmatpush1.msra.mxu0 %v5031
    %5062 = vmatprep.subr.mxu0 0.0
    %5063 = vmatpush1.msra.mxu0 %v5030
    %5064 = vmatprep.subr.mxu0 0.0
    %5065 = vmatpush1.msra.mxu0 %v5029
    %5066 = vmatprep.subr.mxu0 0.0
    %5067 = vmatpush1.msra.mxu0 %v5028
    %5068 = vmatprep.subr.mxu0 0.0
    %5069 = vmatpush1.msra.mxu0 %v5027
    %5070 = vmatprep.subr.mxu0 0.0
    %5071 = vmatpush1.msra.mxu0 %v5026
    %5072 = vmatprep.subr.mxu0 0.0
    %5073 = vmatpush1.msra.mxu0 %v5025
    %5074 = vmatprep.subr.mxu0 0.0
    %5075 = vmatpush2.msra.mxu0 0.0
    %5076 = vmatprep.subr.mxu0 0.0
    %5077 = vmatpush2.msra.mxu0 0.0
    %5078 = vmatprep.subr.mxu0 0.0
    %5079 = vmatpush2.msra.mxu0 0.0
    %5080 = vmatprep.subr.mxu0 0.0
    %5081 = vmatpush2.msra.mxu0 0.0
    %5082 = vmatprep.subr.mxu0 0.0
    %5083 = vmatpush2.msra.mxu0 0.0
    %5084 = vmatprep.subr.mxu0 0.0
    %5085 = vmatpush2.msra.mxu0 0.0
    %5086 = vmatprep.subr.mxu0 0.0
    %5087 = vmatpush2.msra.mxu0 0.0
    %5088 = vmatprep.subr.mxu0 0.0
    %5089 = vmatpush2.msra.mxu0 0.0
    %5090 = vmatprep.subr.mxu0 0.0
    %5091 = vmatpush2.msra.mxu0 0.0
    %5092 = vmatprep.subr.mxu0 0.0
    %5093 = vmatpush2.msra.mxu0 0.0
    %5094 = vmatprep.subr.mxu0 0.0
    %5095 = vmatpush2.msra.mxu0 0.0
    %5096 = vmatprep.subr.mxu0 0.0
    %5097 = vmatpush2.msra.mxu0 0.0
    %5098 = vmatprep.subr.mxu0 0.0
    %5099 = vmatpush2.msra.mxu0 0.0
    %5100 = vmatprep.subr.mxu0 0.0
    %5101 = vmatpush2.msra.mxu0 0.0
    %5102 = vmatprep.subr.mxu0 0.0
    %5103 = vmatpush2.msra.mxu0 0.0
    %5104 = vmatprep.subr.mxu0 0.0
    %5105 = vmatpush2.msra.mxu0 0.0
    %5106 = vmatprep.mubr.f32.mxu0 0.0
    %5107 = vmatmul.mubr.f32.gmra.mxu0 %v5037
    %v5108 = vpop.f32.mrf.mxu0
    %v5109 = vadd.f32 0.0, %v5108
    %v5110 = vpop.f32.mrf.mxu0
    %5111 = vmatprep.mubr.f32.mxu0 0.0
    %5112 = vmatmul.mubr.f32.gmra.mxu0 %v5040
    %v5113 = vpop.f32.mrf.mxu0
    %v5114 = vadd.f32 0.0, %v5113
    %v5115 = vpop.f32.mrf.mxu0
    %5116 = vdwg.mxu0
    %v5117 = vadd.f32 %v3710, %v5109
    %v5118 = vadd.f32 %v3715, %v5114
    %v5119 = vld [vmem:[%s4] sm:$0xff]
    %v5120 = vld [vmem:[%s4 + $0x8] sm:$0x3]
    %5122 = vset.pattern.permute.xlu0 0
    %5123 = vperm.xlu0 %5122, %v5119
    %v5124 = vpop.permute.xlu0 %5123
    %5127 = vset.pattern.permute.xlu0 0
    %5128 = vperm.xlu0 %5127, %v5120
    %v5129 = vpop.permute.xlu0 %5128
    %v5131 = vadd.f32 %v5117, %v5124
    %v5132 = vadd.f32 %v5118, %v5129
    %vm5133 = vcmask 1041408
    %v5134 = vsel %vm5133, %v5132, -inf
    %v5135 = vmax.f32 %v5131, %v5134
    %v5136 = vrot.slane %v5135, 4
    %v5137 = vmax.f32 %v5135, %v5136
    %v5138 = vrot.slane %v5137, 2
    %v5139 = vmax.f32 %v5137, %v5138
    %v5140 = vrot.slane %v5139, 1
    %v5141 = vmax.f32 %v5139, %v5140
    %v5142 = vsub.f32 %v5131, %v5141
    %v5143 = vsub.f32 %v5132, %v5141
    %v5144 = vmul.f32 %v5142, 1.442695
    %v5145 = vpow.pop %v5144
    %v5146 = vmul.f32 %v5143, 1.442695
    %v5147 = vpow.pop %v5146
    %v5148 = vsel %vm5133, %v5147, 0.0
    %v5149 = vadd.f32 %v5145, %v5148
    %v5150 = vrot.slane %v5149, 4
    %v5151 = vadd.f32 %v5149, %v5150
    %v5152 = vrot.slane %v5151, 2
    %v5153 = vadd.f32 %v5151, %v5152
    %v5154 = vrot.slane %v5153, 1
    %v5155 = vadd.f32 %v5153, %v5154
    %v5156 = vlog2.pop %v5155
    %v5157 = vmul.f32 %v5156, 0.6931472
    %v5158 = vsub.f32 %v5142, %v5157
    %v5159 = vsub.f32 %v5143, %v5157
    %5160 = vst [vmem:[%s5] sm:$0xff] %v5158
    %5161 = vst [vmem:[%s5 + $0x8] sm:$0x3] %v5159
    // Predicated region
    $region30: #{convnet_forward.1} parent=1 // pred_check
      _
    $region31: #{convnet_forward.1} parent=1 // pred_check_branch
      %5163 = sbr.rel (0) target = $region33
    $region32: #{convnet_forward.1} parent=1 // pred_region
      _
    $region33: #{convnet_forward.1} parent=1 // pred_fallthru
      _
    // Predicated region
    $region34: #{convnet_forward.1} parent=1 // pred_check
      _
    $region35: #{convnet_forward.1} parent=1 // pred_check_branch
      %5165 = sbr.rel (0) target = $region37
    $region36: #{convnet_forward.1} parent=1 // pred_region
      _
    $region37: #{convnet_forward.1} parent=1 // pred_fallthru
      _
    %5166 = vsyncpa [#allocation4], 1
    %5167 = vsyncpa [#allocation6], 1

</llo_original>
